<compile_context>
chip_gen: v7x
topology: tpu7x:2x2x1
jax: 0.10.0
libtpu: 0.0.40
codegen_flags: <defaults>
</compile_context>

<pallas_src>
import math
import functools

import jax
import jax.numpy as jnp
import numpy as np
from jax import lax
from jax.experimental import pallas as pl
from jax.experimental.pallas import tpu as pltpu


ATTN_KEYS = ("wq", "bq", "wk", "bk", "wv", "bv", "wo", "bo")
BLOCK_KEYS = ("g1", "be1", "w1", "b1", "w2", "b2", "g2", "be2")
_MASK_NEG = -1e9   # additive mask value; exp(-1e9 - m) underflows to exactly 0


# ----------------------------------------------------------------------------
# In-kernel helpers (operate on values loaded from refs; everything 2-D, f32)
# ----------------------------------------------------------------------------
def _layernorm(x, g, b, eps=1e-5):
    mu = jnp.mean(x, axis=-1, keepdims=True)
    var = jnp.mean((x - mu) * (x - mu), axis=-1, keepdims=True)
    return (x - mu) * lax.rsqrt(var + eps) * g + b


def _gelu(x):
    # Exact (erf) GELU, matching torch.nn.GELU default.
    return 0.5 * x * (1.0 + lax.erf(x * (1.0 / math.sqrt(2.0))))


def _masked_softmax(s, bias):
    # bias is 0 for valid (query, key) pairs and -1e9 for pairs that belong to
    # different (batch-row) groups -- this is how the einops rearranges of the
    # PyTorch module are realized without any transpose.
    s = s + bias
    m = jnp.max(s, axis=-1, keepdims=True)
    e = jnp.exp(s - m)
    denom = jnp.sum(e, axis=-1, keepdims=True)
    return e * pl.reciprocal(denom, approx=True)     # EUP slot, ~free after exp


def _mha(q, kv, bias, prefs, n_heads):
    """Flat multi-head attention.  q: (Lq, D); kv: (Lk, D); bias: (Lq, Lk).

    Matches Informer/Crossformer AttentionLayer + FullAttention:
    scale = 1/sqrt(E), softmax over keys, output projection.  Heads are
    accumulated through the matching sublane slice of W_o (no lane concat).
    All matmuls are plain 2-D -> single MXU invocation per operand pair.
    For production d_model/d_ff on v6e/v7x, cast the jnp.dot operands to bf16
    here (keep preferred_element_type=f32); keep elementwise math f32 on v5e.
    """
    wq_r, bq_r, wk_r, bk_r, wv_r, bv_r, wo_r, bo_r = prefs
    D = q.shape[-1]
    E = D // n_heads
    scale = 1.0 / math.sqrt(E)

    Q = jnp.dot(q, wq_r[...], preferred_element_type=jnp.float32) + bq_r[...]
    K = jnp.dot(kv, wk_r[...], preferred_element_type=jnp.float32) + bk_r[...]
    V = jnp.dot(kv, wv_r[...], preferred_element_type=jnp.float32) + bv_r[...]
    wo = wo_r[...]

    out = jnp.zeros((q.shape[0], D), jnp.float32)
    for h in range(n_heads):                         # static loop; 8-aligned slices
        sl = slice(h * E, (h + 1) * E)
        s = lax.dot_general(Q[:, sl], K[:, sl], (((1,), (1,)), ((), ())),
                            preferred_element_type=jnp.float32) * scale
        p = _masked_softmax(s, bias)
        oh = jnp.dot(p, V[:, sl], preferred_element_type=jnp.float32)
        out = out + jnp.dot(oh, wo[sl, :], preferred_element_type=jnp.float32)
    return out + bo_r[...]


def _addnorm_mlp(x, res, prefs):
    """norm_b( y + MLP(y) ) with y = norm_a(x + res); MLP = Linear-GELU-Linear."""
    g1_r, be1_r, w1_r, b1_r, w2_r, b2_r, g2_r, be2_r = prefs
    y = _layernorm(x + res, g1_r[...], be1_r[...])
    h = _gelu(jnp.dot(y, w1_r[...], preferred_element_type=jnp.float32) + b1_r[...])
    m = jnp.dot(h, w2_r[...], preferred_element_type=jnp.float32) + b2_r[...]
    return _layernorm(y + m, g2_r[...], be2_r[...])


# ----------------------------------------------------------------------------
# Fused kernel: one batch element per grid step, both stages, no HBM round-trip
# ----------------------------------------------------------------------------
def _encoder_layer_kernel(*refs, n_heads):
    x_ref, router_ref, mt_ref, ms_ref, mr_ref = refs[:5]
    time_p = refs[5:13]
    send_p = refs[13:21]
    recv_p = refs[21:29]
    blk1_p = refs[29:37]
    blk2_p = refs[37:45]
    out_ref = refs[45]

    x = x_ref[0]                       # (ts_d*seg_num, d_model), t-major rows
    router = router_ref[...]           # (seg_num*factor, d_model), s-major rows

    # ---- stage 1: time attention (within each ts_d group) + norm1/MLP1/norm2
    attn = _mha(x, x, mt_ref[...], time_p, n_heads)
    dim_in = _addnorm_mlp(x, attn, blk1_p)

    # ---- stage 2: router sender / receiver attention + norm3/MLP2/norm4.
    # The '(b seg_num) ts_d' rearrange is encoded in the masks, so dim_in stays
    # in vregs/VMEM in its original row order and lines up with the residuals.
    buf = _mha(router, dim_in, ms_ref[...], send_p, n_heads)     # (S*F, D)
    recv = _mha(dim_in, buf, mr_ref[...], recv_p, n_heads)       # (T*S, D)
    out = _addnorm_mlp(dim_in, recv, blk2_p)

    # Row i = t*seg_num + s already matches final_out[b, t, s, :].
    out_ref[0] = out.astype(out_ref.dtype)


# ----------------------------------------------------------------------------
# Host-side mask construction (trace-time numpy; encodes the rearranges)
# ----------------------------------------------------------------------------
def _attention_bias_masks(ts_d, seg_num, factor):
    x_rows = np.arange(ts_d * seg_num)
    t_of_x = x_rows // seg_num          # row -> ts_d index
    s_of_x = x_rows % seg_num           # row -> seg index
    s_of_r = np.arange(seg_num * factor) // factor   # router row -> seg index

    def bias(valid):
        return np.where(valid, 0.0, _MASK_NEG).astype(np.float32)

    mask_time = bias(t_of_x[:, None] == t_of_x[None, :])   # (T*S, T*S)
    mask_send = bias(s_of_r[:, None] == s_of_x[None, :])   # (S*F, T*S)
    mask_recv = bias(s_of_x[:, None] == s_of_r[None, :])   # (T*S, S*F)
    return mask_time, mask_send, mask_recv


def _const_spec(arr):
    # Whole-array block, constant index map -> DMA'd once, stays VMEM-resident.
    # TODO(synk): at production d_model/d_ff add pipeline_mode=pl.Buffered(1)
    # here (single-buffer the never-changing weights; matters for v7x 64 MiB).
    nd = arr.ndim
    return pl.BlockSpec(arr.shape, lambda i, _nd=nd: (0,) * _nd)


def _cost_estimate(b, T, S, F, D, dff, n_heads, const_bytes):
    Lx, Lr = T * S, S * F
    mm = 0
    mm += 4 * 2 * Lx * D * D                                   # time attn q,k,v,o
    mm += 2 * 2 * Lx * Lx * D                                  # time scores + P@V
    mm += 2 * (2 * Lr * D * D) + 2 * (2 * Lx * D * D)          # sender q,o / k,v
    mm += 2 * 2 * Lr * Lx * D                                  # sender scores + P@V
    mm += 2 * (2 * Lx * D * D) + 2 * (2 * Lr * D * D)          # receiver q,o / k,v
    mm += 2 * 2 * Lx * Lr * D                                  # receiver scores + P@V
    mm += 2 * (2 * Lx * D * dff + 2 * Lx * dff * D)            # MLP1 + MLP2
    flops = b * mm
    transcendentals = b * (n_heads * (Lx * Lx + 2 * Lr * Lx)   # exp
                           + 2 * Lx * dff                      # erf (GELU)
                           + n_heads * (2 * Lx + Lr))          # approx reciprocal
    bytes_accessed = b * 2 * Lx * D * 4 + const_bytes
    return pl.CostEstimate(flops=int(flops),
                           transcendentals=int(transcendentals),
                           bytes_accessed=int(bytes_accessed))


# ----------------------------------------------------------------------------
# EncoderLayer forward (single pallas_call)
# ----------------------------------------------------------------------------
@functools.partial(jax.jit, static_argnames=("n_heads",))
def encoder_layer_forward(x, params, n_heads):
    # x: (b, ts_d, seg_num, d_model)
    b, T, S, D = x.shape
    F = params["router"].shape[1]
    dff = params["block1"]["w1"].shape[1]
    Lx, Lr = T * S, S * F

    x_flat = x.reshape(b, Lx, D)                    # layout-preserving, free
    router_flat = params["router"].reshape(Lr, D)
    mt, ms, mr = (jnp.asarray(m) for m in _attention_bias_masks(T, S, F))

    consts = ([router_flat, mt, ms, mr]
              + [params["time_attention"][k] for k in ATTN_KEYS]
              + [params["dim_sender"][k] for k in ATTN_KEYS]
              + [params["dim_receiver"][k] for k in ATTN_KEYS]
              + [params["block1"][k] for k in BLOCK_KEYS]
              + [params["block2"][k] for k in BLOCK_KEYS])

    const_bytes = sum(int(np.prod(c.shape)) * 4 for c in consts)
    block_bytes = 2 * Lx * D * 4                     # x block + out block (f32)
    # Double-buffered blocks + generous headroom; sized explicitly so the same
    # formula keeps production configs inside v7x's 64 MiB VMEM.
    vmem_limit = int(min(max(4 * (const_bytes + block_bytes) + (8 << 20),
                             16 << 20), 64 << 20))

    out_flat = pl.pallas_call(
        functools.partial(_encoder_layer_kernel, n_heads=n_heads),
        out_shape=jax.ShapeDtypeStruct((b, Lx, D), jnp.float32),
        grid=(b,),
        in_specs=[pl.BlockSpec((1, Lx, D), lambda i: (i, 0, 0))]
                 + [_const_spec(c) for c in consts],
        out_specs=pl.BlockSpec((1, Lx, D), lambda i: (i, 0, 0)),
        compiler_params=pltpu.CompilerParams(
            dimension_semantics=("parallel",),       # b=2 -> both v7x TCs busy
            vmem_limit_bytes=vmem_limit),
        cost_estimate=_cost_estimate(b, T, S, F, D, dff, n_heads, const_bytes),
    )(x_flat, *consts)

    return out_flat.reshape(b, T, S, D)              # layout-preserving, free


# ----------------------------------------------------------------------------
# Pure-JAX reference (same math, no Pallas) for validation
# ----------------------------------------------------------------------------
def _ref_attn(q, k, v, p, n_heads):
    B, Lq, D = q.shape
    E = D // n_heads
    Q = (q @ p["wq"] + p["bq"]).reshape(B, Lq, n_heads, E)
    K = (k @ p["wk"] + p["bk"]).reshape(B, -1, n_heads, E)
    V = (v @ p["wv"] + p["bv"]).reshape(B, -1, n_heads, E)
    s = jnp.einsum("blhe,bshe->bhls", Q, K) / math.sqrt(E)
    a = jax.nn.softmax(s, axis=-1)
    o = jnp.einsum("bhls,bshd->blhd", a, V).reshape(B, Lq, D)
    return o @ p["wo"] + p["bo"]


def _ref_ln(x, g, be, eps=1e-5):
    mu = jnp.mean(x, axis=-1, keepdims=True)
    var = jnp.mean((x - mu) ** 2, axis=-1, keepdims=True)
    return (x - mu) / jnp.sqrt(var + eps) * g + be


def _ref_block(x, res, p):
    y = _ref_ln(x + res, p["g1"], p["be1"])
    h = jax.nn.gelu(y @ p["w1"] + p["b1"], approximate=False)
    m = h @ p["w2"] + p["b2"]
    return _ref_ln(y + m, p["g2"], p["be2"])


def _ref_forward(x, params, n_heads):
    b, ts_d, seg_num, d = x.shape
    time_in = x.reshape(b * ts_d, seg_num, d)
    time_enc = _ref_attn(time_in, time_in, time_in, params["time_attention"], n_heads)
    dim_in = _ref_block(time_in, time_enc, params["block1"])
    dim_send = dim_in.reshape(b, ts_d, seg_num, d).transpose(0, 2, 1, 3) \
                     .reshape(b * seg_num, ts_d, d)
    batch_router = jnp.tile(params["router"], (b, 1, 1))
    dim_buffer = _ref_attn(batch_router, dim_send, dim_send, params["dim_sender"], n_heads)
    dim_receive = _ref_attn(dim_send, dim_buffer, dim_buffer, params["dim_receiver"], n_heads)
    dim_enc = _ref_block(dim_send, dim_receive, params["block2"])
    return dim_enc.reshape(b, seg_num, ts_d, d).transpose(0, 2, 1, 3)


# ----------------------------------------------------------------------------
# Deterministic parameter construction
# ----------------------------------------------------------------------------
def make_params(key, d_model, d_ff, seg_num, factor):
    def attn_params(k):
        ks = jax.random.split(k, 8)
        return {
            "wq": 0.1 * jax.random.normal(ks[0], (d_model, d_model), jnp.float32),
            "bq": 0.1 * jax.random.normal(ks[1], (1, d_model), jnp.float32),
            "wk": 0.1 * jax.random.normal(ks[2], (d_model, d_model), jnp.float32),
            "bk": 0.1 * jax.random.normal(ks[3], (1, d_model), jnp.float32),
            "wv": 0.1 * jax.random.normal(ks[4], (d_model, d_model), jnp.float32),
            "bv": 0.1 * jax.random.normal(ks[5], (1, d_model), jnp.float32),
            "wo": 0.1 * jax.random.normal(ks[6], (d_model, d_model), jnp.float32),
            "bo": 0.1 * jax.random.normal(ks[7], (1, d_model), jnp.float32),
        }

    def block_params(k):
        ks = jax.random.split(k, 4)
        return {
            "g1": jnp.ones((1, d_model), jnp.float32),
            "be1": jnp.zeros((1, d_model), jnp.float32),
            "w1": 0.1 * jax.random.normal(ks[0], (d_model, d_ff), jnp.float32),
            "b1": 0.1 * jax.random.normal(ks[1], (1, d_ff), jnp.float32),
            "w2": 0.1 * jax.random.normal(ks[2], (d_ff, d_model), jnp.float32),
            "b2": 0.1 * jax.random.normal(ks[3], (1, d_model), jnp.float32),
            "g2": jnp.ones((1, d_model), jnp.float32),
            "be2": jnp.zeros((1, d_model), jnp.float32),
        }

    k1, k2, k3, k4, k5, k6 = jax.random.split(key, 6)
    return {
        "time_attention": attn_params(k1),
        "dim_sender": attn_params(k2),
        "dim_receiver": attn_params(k3),
        "block1": block_params(k4),   # norm1 + MLP1 + norm2
        "block2": block_params(k5),   # norm3 + MLP2 + norm4
        "router": jax.random.normal(k6, (seg_num, factor, d_model), jnp.float32),
    }


if __name__ == "__main__":
    # Small shapes consistent with the module (seg_num/factor fixed to 10).
    b, ts_d, seg_num, d_model = 2, 3, 10, 32
    n_heads, d_ff, factor = 4, 64, 10

    key = jax.random.PRNGKey(0)
    kx, kp = jax.random.split(key)
    x = jax.random.normal(kx, (b, ts_d, seg_num, d_model), jnp.float32)
    params = make_params(kp, d_model, d_ff, seg_num, factor)

    out = jax.block_until_ready(encoder_layer_forward(x, params, n_heads=n_heads))
    ref = jax.block_until_ready(_ref_forward(x, params, n_heads))

    assert out.shape == (b, ts_d, seg_num, d_model)
    # Tolerance loosened (2e-4 -> 2e-3) for the approx EUP reciprocal in softmax.
    np.testing.assert_allclose(np.asarray(out), np.asarray(ref), atol=2e-3, rtol=2e-3)

    print("KERNEL_OK")
</pallas_src>

<mosaic_0001>
module attributes {stable_mosaic.version = 11 : i64} {
  func.func @_encoder_layer_kernel(%arg0: i32, %arg1: memref<1x30x32xf32, #tpu.memory_space<vmem>>, %arg2: memref<100x32xf32, #tpu.memory_space<vmem>>, %arg3: memref<30x30xf32, #tpu.memory_space<vmem>>, %arg4: memref<100x30xf32, #tpu.memory_space<vmem>>, %arg5: memref<30x100xf32, #tpu.memory_space<vmem>>, %arg6: memref<32x32xf32, #tpu.memory_space<vmem>>, %arg7: memref<1x32xf32, #tpu.memory_space<vmem>>, %arg8: memref<32x32xf32, #tpu.memory_space<vmem>>, %arg9: memref<1x32xf32, #tpu.memory_space<vmem>>, %arg10: memref<32x32xf32, #tpu.memory_space<vmem>>, %arg11: memref<1x32xf32, #tpu.memory_space<vmem>>, %arg12: memref<32x32xf32, #tpu.memory_space<vmem>>, %arg13: memref<1x32xf32, #tpu.memory_space<vmem>>, %arg14: memref<32x32xf32, #tpu.memory_space<vmem>>, %arg15: memref<1x32xf32, #tpu.memory_space<vmem>>, %arg16: memref<32x32xf32, #tpu.memory_space<vmem>>, %arg17: memref<1x32xf32, #tpu.memory_space<vmem>>, %arg18: memref<32x32xf32, #tpu.memory_space<vmem>>, %arg19: memref<1x32xf32, #tpu.memory_space<vmem>>, %arg20: memref<32x32xf32, #tpu.memory_space<vmem>>, %arg21: memref<1x32xf32, #tpu.memory_space<vmem>>, %arg22: memref<32x32xf32, #tpu.memory_space<vmem>>, %arg23: memref<1x32xf32, #tpu.memory_space<vmem>>, %arg24: memref<32x32xf32, #tpu.memory_space<vmem>>, %arg25: memref<1x32xf32, #tpu.memory_space<vmem>>, %arg26: memref<32x32xf32, #tpu.memory_space<vmem>>, %arg27: memref<1x32xf32, #tpu.memory_space<vmem>>, %arg28: memref<32x32xf32, #tpu.memory_space<vmem>>, %arg29: memref<1x32xf32, #tpu.memory_space<vmem>>, %arg30: memref<1x32xf32, #tpu.memory_space<vmem>>, %arg31: memref<1x32xf32, #tpu.memory_space<vmem>>, %arg32: memref<32x64xf32, #tpu.memory_space<vmem>>, %arg33: memref<1x64xf32, #tpu.memory_space<vmem>>, %arg34: memref<64x32xf32, #tpu.memory_space<vmem>>, %arg35: memref<1x32xf32, #tpu.memory_space<vmem>>, %arg36: memref<1x32xf32, #tpu.memory_space<vmem>>, %arg37: memref<1x32xf32, #tpu.memory_space<vmem>>, %arg38: memref<1x32xf32, #tpu.memory_space<vmem>>, %arg39: memref<1x32xf32, #tpu.memory_space<vmem>>, %arg40: memref<32x64xf32, #tpu.memory_space<vmem>>, %arg41: memref<1x64xf32, #tpu.memory_space<vmem>>, %arg42: memref<64x32xf32, #tpu.memory_space<vmem>>, %arg43: memref<1x32xf32, #tpu.memory_space<vmem>>, %arg44: memref<1x32xf32, #tpu.memory_space<vmem>>, %arg45: memref<1x32xf32, #tpu.memory_space<vmem>>, %arg46: memref<1x30x32xf32, #tpu.memory_space<vmem>>) attributes {dimension_semantics = [#tpu.dimension_semantics<parallel>], iteration_bounds = array<i64: 2>, scalar_prefetch = 0 : i64, scratch_operands = 0 : i64, tpu.core_type = #tpu.core_type<tc>, window_params = [{transform_indices = @transform_0, window_bounds = array<i64: 1, 30, 32>}, {pipeline_mode = #tpu.pipeline_mode<synchronous>, transform_indices = @transform_1, window_bounds = array<i64: 100, 32>}, {pipeline_mode = #tpu.pipeline_mode<synchronous>, transform_indices = @transform_2, window_bounds = array<i64: 30, 30>}, {pipeline_mode = #tpu.pipeline_mode<synchronous>, transform_indices = @transform_3, window_bounds = array<i64: 100, 30>}, {pipeline_mode = #tpu.pipeline_mode<synchronous>, transform_indices = @transform_4, window_bounds = array<i64: 30, 100>}, {pipeline_mode = #tpu.pipeline_mode<synchronous>, transform_indices = @transform_5, window_bounds = array<i64: 32, 32>}, {pipeline_mode = #tpu.pipeline_mode<synchronous>, transform_indices = @transform_6, window_bounds = array<i64: 1, 32>}, {pipeline_mode = #tpu.pipeline_mode<synchronous>, transform_indices = @transform_7, window_bounds = array<i64: 32, 32>}, {pipeline_mode = #tpu.pipeline_mode<synchronous>, transform_indices = @transform_8, window_bounds = array<i64: 1, 32>}, {pipeline_mode = #tpu.pipeline_mode<synchronous>, transform_indices = @transform_9, window_bounds = array<i64: 32, 32>}, {pipeline_mode = #tpu.pipeline_mode<synchronous>, transform_indices = @transform_10, window_bounds = array<i64: 1, 32>}, {pipeline_mode = #tpu.pipeline_mode<synchronous>, transform_indices = @transform_11, window_bounds = array<i64: 32, 32>}, {pipeline_mode = #tpu.pipeline_mode<synchronous>, transform_indices = @transform_12, window_bounds = array<i64: 1, 32>}, {pipeline_mode = #tpu.pipeline_mode<synchronous>, transform_indices = @transform_13, window_bounds = array<i64: 32, 32>}, {pipeline_mode = #tpu.pipeline_mode<synchronous>, transform_indices = @transform_14, window_bounds = array<i64: 1, 32>}, {pipeline_mode = #tpu.pipeline_mode<synchronous>, transform_indices = @transform_15, window_bounds = array<i64: 32, 32>}, {pipeline_mode = #tpu.pipeline_mode<synchronous>, transform_indices = @transform_16, window_bounds = array<i64: 1, 32>}, {pipeline_mode = #tpu.pipeline_mode<synchronous>, transform_indices = @transform_17, window_bounds = array<i64: 32, 32>}, {pipeline_mode = #tpu.pipeline_mode<synchronous>, transform_indices = @transform_18, window_bounds = array<i64: 1, 32>}, {pipeline_mode = #tpu.pipeline_mode<synchronous>, transform_indices = @transform_19, window_bounds = array<i64: 32, 32>}, {pipeline_mode = #tpu.pipeline_mode<synchronous>, transform_indices = @transform_20, window_bounds = array<i64: 1, 32>}, {pipeline_mode = #tpu.pipeline_mode<synchronous>, transform_indices = @transform_21, window_bounds = array<i64: 32, 32>}, {pipeline_mode = #tpu.pipeline_mode<synchronous>, transform_indices = @transform_22, window_bounds = array<i64: 1, 32>}, {pipeline_mode = #tpu.pipeline_mode<synchronous>, transform_indices = @transform_23, window_bounds = array<i64: 32, 32>}, {pipeline_mode = #tpu.pipeline_mode<synchronous>, transform_indices = @transform_24, window_bounds = array<i64: 1, 32>}, {pipeline_mode = #tpu.pipeline_mode<synchronous>, transform_indices = @transform_25, window_bounds = array<i64: 32, 32>}, {pipeline_mode = #tpu.pipeline_mode<synchronous>, transform_indices = @transform_26, window_bounds = array<i64: 1, 32>}, {pipeline_mode = #tpu.pipeline_mode<synchronous>, transform_indices = @transform_27, window_bounds = array<i64: 32, 32>}, {pipeline_mode = #tpu.pipeline_mode<synchronous>, transform_indices = @transform_28, window_bounds = array<i64: 1, 32>}, {pipeline_mode = #tpu.pipeline_mode<synchronous>, transform_indices = @transform_29, window_bounds = array<i64: 1, 32>}, {pipeline_mode = #tpu.pipeline_mode<synchronous>, transform_indices = @transform_30, window_bounds = array<i64: 1, 32>}, {pipeline_mode = #tpu.pipeline_mode<synchronous>, transform_indices = @transform_31, window_bounds = array<i64: 32, 64>}, {pipeline_mode = #tpu.pipeline_mode<synchronous>, transform_indices = @transform_32, window_bounds = array<i64: 1, 64>}, {pipeline_mode = #tpu.pipeline_mode<synchronous>, transform_indices = @transform_33, window_bounds = array<i64: 64, 32>}, {pipeline_mode = #tpu.pipeline_mode<synchronous>, transform_indices = @transform_34, window_bounds = array<i64: 1, 32>}, {pipeline_mode = #tpu.pipeline_mode<synchronous>, transform_indices = @transform_35, window_bounds = array<i64: 1, 32>}, {pipeline_mode = #tpu.pipeline_mode<synchronous>, transform_indices = @transform_36, window_bounds = array<i64: 1, 32>}, {pipeline_mode = #tpu.pipeline_mode<synchronous>, transform_indices = @transform_37, window_bounds = array<i64: 1, 32>}, {pipeline_mode = #tpu.pipeline_mode<synchronous>, transform_indices = @transform_38, window_bounds = array<i64: 1, 32>}, {pipeline_mode = #tpu.pipeline_mode<synchronous>, transform_indices = @transform_39, window_bounds = array<i64: 32, 64>}, {pipeline_mode = #tpu.pipeline_mode<synchronous>, transform_indices = @transform_40, window_bounds = array<i64: 1, 64>}, {pipeline_mode = #tpu.pipeline_mode<synchronous>, transform_indices = @transform_41, window_bounds = array<i64: 64, 32>}, {pipeline_mode = #tpu.pipeline_mode<synchronous>, transform_indices = @transform_42, window_bounds = array<i64: 1, 32>}, {pipeline_mode = #tpu.pipeline_mode<synchronous>, transform_indices = @transform_43, window_bounds = array<i64: 1, 32>}, {pipeline_mode = #tpu.pipeline_mode<synchronous>, transform_indices = @transform_44, window_bounds = array<i64: 1, 32>}, {transform_indices = @transform_45, window_bounds = array<i64: 1, 30, 32>}]} {
    %c0 = arith.constant 0 : index
    %c0_0 = arith.constant 0 : index
    %c0_1 = arith.constant 0 : index
    %0 = vector.load %arg1[%c0, %c0_0, %c0_1] : memref<1x30x32xf32, #tpu.memory_space<vmem>>, vector<1x30x32xf32>
    %1 = vector.shape_cast %0 : vector<1x30x32xf32> to vector<30x32xf32>
    %c0_2 = arith.constant 0 : index
    %c0_3 = arith.constant 0 : index
    %2 = vector.load %arg2[%c0_2, %c0_3] : memref<100x32xf32, #tpu.memory_space<vmem>>, vector<100x32xf32>
    %c0_4 = arith.constant 0 : index
    %c0_5 = arith.constant 0 : index
    %3 = vector.load %arg3[%c0_4, %c0_5] : memref<30x30xf32, #tpu.memory_space<vmem>>, vector<30x30xf32>
    %c0_6 = arith.constant 0 : index
    %c0_7 = arith.constant 0 : index
    %4 = vector.load %arg6[%c0_6, %c0_7] : memref<32x32xf32, #tpu.memory_space<vmem>>, vector<32x32xf32>
    %cst = arith.constant dense<0.000000e+00> : vector<30x32xf32>
    %5 = tpu.matmul %1, %4, %cst {dimension_numbers = #tpu.dot_dimension_numbers<[1], [0], [0], [1], [0, 0, 1, 1], [], []>} : vector<30x32xf32>, vector<32x32xf32>, vector<30x32xf32> -> vector<30x32xf32>
    %c0_8 = arith.constant 0 : index
    %c0_9 = arith.constant 0 : index
    %6 = vector.load %arg7[%c0_8, %c0_9] : memref<1x32xf32, #tpu.memory_space<vmem>>, vector<1x32xf32>
    %7 = vector.broadcast %6 : vector<1x32xf32> to vector<30x32xf32>
    %8 = arith.addf %5, %7 : vector<30x32xf32>
    %c0_10 = arith.constant 0 : index
    %c0_11 = arith.constant 0 : index
    %9 = vector.load %arg8[%c0_10, %c0_11] : memref<32x32xf32, #tpu.memory_space<vmem>>, vector<32x32xf32>
    %cst_12 = arith.constant dense<0.000000e+00> : vector<30x32xf32>
    %10 = tpu.matmul %1, %9, %cst_12 {dimension_numbers = #tpu.dot_dimension_numbers<[1], [0], [0], [1], [0, 0, 1, 1], [], []>} : vector<30x32xf32>, vector<32x32xf32>, vector<30x32xf32> -> vector<30x32xf32>
    %c0_13 = arith.constant 0 : index
    %c0_14 = arith.constant 0 : index
    %11 = vector.load %arg9[%c0_13, %c0_14] : memref<1x32xf32, #tpu.memory_space<vmem>>, vector<1x32xf32>
    %12 = vector.broadcast %11 : vector<1x32xf32> to vector<30x32xf32>
    %13 = arith.addf %10, %12 : vector<30x32xf32>
    %c0_15 = arith.constant 0 : index
    %c0_16 = arith.constant 0 : index
    %14 = vector.load %arg10[%c0_15, %c0_16] : memref<32x32xf32, #tpu.memory_space<vmem>>, vector<32x32xf32>
    %cst_17 = arith.constant dense<0.000000e+00> : vector<30x32xf32>
    %15 = tpu.matmul %1, %14, %cst_17 {dimension_numbers = #tpu.dot_dimension_numbers<[1], [0], [0], [1], [0, 0, 1, 1], [], []>} : vector<30x32xf32>, vector<32x32xf32>, vector<30x32xf32> -> vector<30x32xf32>
    %c0_18 = arith.constant 0 : index
    %c0_19 = arith.constant 0 : index
    %16 = vector.load %arg11[%c0_18, %c0_19] : memref<1x32xf32, #tpu.memory_space<vmem>>, vector<1x32xf32>
    %17 = vector.broadcast %16 : vector<1x32xf32> to vector<30x32xf32>
    %18 = arith.addf %15, %17 : vector<30x32xf32>
    %c0_20 = arith.constant 0 : index
    %c0_21 = arith.constant 0 : index
    %19 = vector.load %arg12[%c0_20, %c0_21] : memref<32x32xf32, #tpu.memory_space<vmem>>, vector<32x32xf32>
    %cst_22 = arith.constant 0.000000e+00 : f32
    %20 = vector.broadcast %cst_22 : f32 to vector<30x32xf32>
    %21 = vector.extract_strided_slice %8 {offsets = [0, 0], sizes = [30, 8], strides = [1, 1]} : vector<30x32xf32> to vector<30x8xf32>
    %22 = vector.extract_strided_slice %13 {offsets = [0, 0], sizes = [30, 8], strides = [1, 1]} : vector<30x32xf32> to vector<30x8xf32>
    %cst_23 = arith.constant dense<0.000000e+00> : vector<30x30xf32>
    %23 = tpu.matmul %21, %22, %cst_23 {dimension_numbers = #tpu.dot_dimension_numbers<[1], [1], [0], [0], [0, 0, 1, 0], [], []>} : vector<30x8xf32>, vector<30x8xf32>, vector<30x30xf32> -> vector<30x30xf32>
    %cst_24 = arith.constant 0.353553385 : f32
    %24 = vector.broadcast %cst_24 : f32 to vector<30x30xf32>
    %25 = arith.mulf %23, %24 : vector<30x30xf32>
    %26 = arith.addf %25, %3 : vector<30x30xf32>
    %cst_25 = arith.constant dense<0xFF800000> : vector<30xf32>
    %27 = vector.multi_reduction <maximumf>, %26, %cst_25 [1] : vector<30x30xf32> to vector<30xf32>
    %28 = vector.shape_cast %27 : vector<30xf32> to vector<30x1xf32>
    %29 = vector.broadcast %28 : vector<30x1xf32> to vector<30x30xf32>
    %30 = arith.subf %26, %29 : vector<30x30xf32>
    %31 = math.exp %30 : vector<30x30xf32>
    %cst_26 = arith.constant dense<0.000000e+00> : vector<30xf32>
    %32 = vector.multi_reduction <add>, %31, %cst_26 [1] : vector<30x30xf32> to vector<30xf32>
    %33 = vector.shape_cast %32 : vector<30xf32> to vector<30x1xf32>
    %34 = tpu.reciprocal %33 {approx = true} : vector<30x1xf32> -> vector<30x1xf32>
    %35 = vector.broadcast %34 : vector<30x1xf32> to vector<30x30xf32>
    %36 = arith.mulf %31, %35 : vector<30x30xf32>
    %37 = vector.extract_strided_slice %18 {offsets = [0, 0], sizes = [30, 8], strides = [1, 1]} : vector<30x32xf32> to vector<30x8xf32>
    %cst_27 = arith.constant dense<0.000000e+00> : vector<30x8xf32>
    %38 = tpu.matmul %36, %37, %cst_27 {dimension_numbers = #tpu.dot_dimension_numbers<[1], [0], [0], [1], [0, 0, 1, 1], [], []>} : vector<30x30xf32>, vector<30x8xf32>, vector<30x8xf32> -> vector<30x8xf32>
    %39 = vector.extract_strided_slice %19 {offsets = [0, 0], sizes = [8, 32], strides = [1, 1]} : vector<32x32xf32> to vector<8x32xf32>
    %cst_28 = arith.constant dense<0.000000e+00> : vector<30x32xf32>
    %40 = tpu.matmul %38, %39, %cst_28 {dimension_numbers = #tpu.dot_dimension_numbers<[1], [0], [0], [1], [0, 0, 1, 1], [], []>} : vector<30x8xf32>, vector<8x32xf32>, vector<30x32xf32> -> vector<30x32xf32>
    %41 = arith.addf %20, %40 : vector<30x32xf32>
    %42 = vector.extract_strided_slice %8 {offsets = [0, 8], sizes = [30, 8], strides = [1, 1]} : vector<30x32xf32> to vector<30x8xf32>
    %43 = vector.extract_strided_slice %13 {offsets = [0, 8], sizes = [30, 8], strides = [1, 1]} : vector<30x32xf32> to vector<30x8xf32>
    %cst_29 = arith.constant dense<0.000000e+00> : vector<30x30xf32>
    %44 = tpu.matmul %42, %43, %cst_29 {dimension_numbers = #tpu.dot_dimension_numbers<[1], [1], [0], [0], [0, 0, 1, 0], [], []>} : vector<30x8xf32>, vector<30x8xf32>, vector<30x30xf32> -> vector<30x30xf32>
    %cst_30 = arith.constant 0.353553385 : f32
    %45 = vector.broadcast %cst_30 : f32 to vector<30x30xf32>
    %46 = arith.mulf %44, %45 : vector<30x30xf32>
    %47 = arith.addf %46, %3 : vector<30x30xf32>
    %cst_31 = arith.constant dense<0xFF800000> : vector<30xf32>
    %48 = vector.multi_reduction <maximumf>, %47, %cst_31 [1] : vector<30x30xf32> to vector<30xf32>
    %49 = vector.shape_cast %48 : vector<30xf32> to vector<30x1xf32>
    %50 = vector.broadcast %49 : vector<30x1xf32> to vector<30x30xf32>
    %51 = arith.subf %47, %50 : vector<30x30xf32>
    %52 = math.exp %51 : vector<30x30xf32>
    %cst_32 = arith.constant dense<0.000000e+00> : vector<30xf32>
    %53 = vector.multi_reduction <add>, %52, %cst_32 [1] : vector<30x30xf32> to vector<30xf32>
    %54 = vector.shape_cast %53 : vector<30xf32> to vector<30x1xf32>
    %55 = tpu.reciprocal %54 {approx = true} : vector<30x1xf32> -> vector<30x1xf32>
    %56 = vector.broadcast %55 : vector<30x1xf32> to vector<30x30xf32>
    %57 = arith.mulf %52, %56 : vector<30x30xf32>
    %58 = vector.extract_strided_slice %18 {offsets = [0, 8], sizes = [30, 8], strides = [1, 1]} : vector<30x32xf32> to vector<30x8xf32>
    %cst_33 = arith.constant dense<0.000000e+00> : vector<30x8xf32>
    %59 = tpu.matmul %57, %58, %cst_33 {dimension_numbers = #tpu.dot_dimension_numbers<[1], [0], [0], [1], [0, 0, 1, 1], [], []>} : vector<30x30xf32>, vector<30x8xf32>, vector<30x8xf32> -> vector<30x8xf32>
    %60 = vector.extract_strided_slice %19 {offsets = [8, 0], sizes = [8, 32], strides = [1, 1]} : vector<32x32xf32> to vector<8x32xf32>
    %cst_34 = arith.constant dense<0.000000e+00> : vector<30x32xf32>
    %61 = tpu.matmul %59, %60, %cst_34 {dimension_numbers = #tpu.dot_dimension_numbers<[1], [0], [0], [1], [0, 0, 1, 1], [], []>} : vector<30x8xf32>, vector<8x32xf32>, vector<30x32xf32> -> vector<30x32xf32>
    %62 = arith.addf %41, %61 : vector<30x32xf32>
    %63 = vector.extract_strided_slice %8 {offsets = [0, 16], sizes = [30, 8], strides = [1, 1]} : vector<30x32xf32> to vector<30x8xf32>
    %64 = vector.extract_strided_slice %13 {offsets = [0, 16], sizes = [30, 8], strides = [1, 1]} : vector<30x32xf32> to vector<30x8xf32>
    %cst_35 = arith.constant dense<0.000000e+00> : vector<30x30xf32>
    %65 = tpu.matmul %63, %64, %cst_35 {dimension_numbers = #tpu.dot_dimension_numbers<[1], [1], [0], [0], [0, 0, 1, 0], [], []>} : vector<30x8xf32>, vector<30x8xf32>, vector<30x30xf32> -> vector<30x30xf32>
    %cst_36 = arith.constant 0.353553385 : f32
    %66 = vector.broadcast %cst_36 : f32 to vector<30x30xf32>
    %67 = arith.mulf %65, %66 : vector<30x30xf32>
    %68 = arith.addf %67, %3 : vector<30x30xf32>
    %cst_37 = arith.constant dense<0xFF800000> : vector<30xf32>
    %69 = vector.multi_reduction <maximumf>, %68, %cst_37 [1] : vector<30x30xf32> to vector<30xf32>
    %70 = vector.shape_cast %69 : vector<30xf32> to vector<30x1xf32>
    %71 = vector.broadcast %70 : vector<30x1xf32> to vector<30x30xf32>
    %72 = arith.subf %68, %71 : vector<30x30xf32>
    %73 = math.exp %72 : vector<30x30xf32>
    %cst_38 = arith.constant dense<0.000000e+00> : vector<30xf32>
    %74 = vector.multi_reduction <add>, %73, %cst_38 [1] : vector<30x30xf32> to vector<30xf32>
    %75 = vector.shape_cast %74 : vector<30xf32> to vector<30x1xf32>
    %76 = tpu.reciprocal %75 {approx = true} : vector<30x1xf32> -> vector<30x1xf32>
    %77 = vector.broadcast %76 : vector<30x1xf32> to vector<30x30xf32>
    %78 = arith.mulf %73, %77 : vector<30x30xf32>
    %79 = vector.extract_strided_slice %18 {offsets = [0, 16], sizes = [30, 8], strides = [1, 1]} : vector<30x32xf32> to vector<30x8xf32>
    %cst_39 = arith.constant dense<0.000000e+00> : vector<30x8xf32>
    %80 = tpu.matmul %78, %79, %cst_39 {dimension_numbers = #tpu.dot_dimension_numbers<[1], [0], [0], [1], [0, 0, 1, 1], [], []>} : vector<30x30xf32>, vector<30x8xf32>, vector<30x8xf32> -> vector<30x8xf32>
    %81 = vector.extract_strided_slice %19 {offsets = [16, 0], sizes = [8, 32], strides = [1, 1]} : vector<32x32xf32> to vector<8x32xf32>
    %cst_40 = arith.constant dense<0.000000e+00> : vector<30x32xf32>
    %82 = tpu.matmul %80, %81, %cst_40 {dimension_numbers = #tpu.dot_dimension_numbers<[1], [0], [0], [1], [0, 0, 1, 1], [], []>} : vector<30x8xf32>, vector<8x32xf32>, vector<30x32xf32> -> vector<30x32xf32>
    %83 = arith.addf %62, %82 : vector<30x32xf32>
    %84 = vector.extract_strided_slice %8 {offsets = [0, 24], sizes = [30, 8], strides = [1, 1]} : vector<30x32xf32> to vector<30x8xf32>
    %85 = vector.extract_strided_slice %13 {offsets = [0, 24], sizes = [30, 8], strides = [1, 1]} : vector<30x32xf32> to vector<30x8xf32>
    %cst_41 = arith.constant dense<0.000000e+00> : vector<30x30xf32>
    %86 = tpu.matmul %84, %85, %cst_41 {dimension_numbers = #tpu.dot_dimension_numbers<[1], [1], [0], [0], [0, 0, 1, 0], [], []>} : vector<30x8xf32>, vector<30x8xf32>, vector<30x30xf32> -> vector<30x30xf32>
    %cst_42 = arith.constant 0.353553385 : f32
    %87 = vector.broadcast %cst_42 : f32 to vector<30x30xf32>
    %88 = arith.mulf %86, %87 : vector<30x30xf32>
    %89 = arith.addf %88, %3 : vector<30x30xf32>
    %cst_43 = arith.constant dense<0xFF800000> : vector<30xf32>
    %90 = vector.multi_reduction <maximumf>, %89, %cst_43 [1] : vector<30x30xf32> to vector<30xf32>
    %91 = vector.shape_cast %90 : vector<30xf32> to vector<30x1xf32>
    %92 = vector.broadcast %91 : vector<30x1xf32> to vector<30x30xf32>
    %93 = arith.subf %89, %92 : vector<30x30xf32>
    %94 = math.exp %93 : vector<30x30xf32>
    %cst_44 = arith.constant dense<0.000000e+00> : vector<30xf32>
    %95 = vector.multi_reduction <add>, %94, %cst_44 [1] : vector<30x30xf32> to vector<30xf32>
    %96 = vector.shape_cast %95 : vector<30xf32> to vector<30x1xf32>
    %97 = tpu.reciprocal %96 {approx = true} : vector<30x1xf32> -> vector<30x1xf32>
    %98 = vector.broadcast %97 : vector<30x1xf32> to vector<30x30xf32>
    %99 = arith.mulf %94, %98 : vector<30x30xf32>
    %100 = vector.extract_strided_slice %18 {offsets = [0, 24], sizes = [30, 8], strides = [1, 1]} : vector<30x32xf32> to vector<30x8xf32>
    %cst_45 = arith.constant dense<0.000000e+00> : vector<30x8xf32>
    %101 = tpu.matmul %99, %100, %cst_45 {dimension_numbers = #tpu.dot_dimension_numbers<[1], [0], [0], [1], [0, 0, 1, 1], [], []>} : vector<30x30xf32>, vector<30x8xf32>, vector<30x8xf32> -> vector<30x8xf32>
    %102 = vector.extract_strided_slice %19 {offsets = [24, 0], sizes = [8, 32], strides = [1, 1]} : vector<32x32xf32> to vector<8x32xf32>
    %cst_46 = arith.constant dense<0.000000e+00> : vector<30x32xf32>
    %103 = tpu.matmul %101, %102, %cst_46 {dimension_numbers = #tpu.dot_dimension_numbers<[1], [0], [0], [1], [0, 0, 1, 1], [], []>} : vector<30x8xf32>, vector<8x32xf32>, vector<30x32xf32> -> vector<30x32xf32>
    %104 = arith.addf %83, %103 : vector<30x32xf32>
    %c0_47 = arith.constant 0 : index
    %c0_48 = arith.constant 0 : index
    %105 = vector.load %arg13[%c0_47, %c0_48] : memref<1x32xf32, #tpu.memory_space<vmem>>, vector<1x32xf32>
    %106 = vector.broadcast %105 : vector<1x32xf32> to vector<30x32xf32>
    %107 = arith.addf %104, %106 : vector<30x32xf32>
    %108 = arith.addf %1, %107 : vector<30x32xf32>
    %c0_49 = arith.constant 0 : index
    %c0_50 = arith.constant 0 : index
    %109 = vector.load %arg30[%c0_49, %c0_50] : memref<1x32xf32, #tpu.memory_space<vmem>>, vector<1x32xf32>
    %c0_51 = arith.constant 0 : index
    %c0_52 = arith.constant 0 : index
    %110 = vector.load %arg31[%c0_51, %c0_52] : memref<1x32xf32, #tpu.memory_space<vmem>>, vector<1x32xf32>
    %cst_53 = arith.constant dense<0.000000e+00> : vector<30xf32>
    %111 = vector.multi_reduction <add>, %108, %cst_53 [1] : vector<30x32xf32> to vector<30xf32>
    %112 = vector.shape_cast %111 : vector<30xf32> to vector<30x1xf32>
    %cst_54 = arith.constant 3.200000e+01 : f32
    %113 = vector.broadcast %cst_54 : f32 to vector<30x1xf32>
    %114 = arith.divf %112, %113 : vector<30x1xf32>
    %115 = vector.broadcast %114 : vector<30x1xf32> to vector<30x32xf32>
    %116 = arith.subf %108, %115 : vector<30x32xf32>
    %117 = vector.broadcast %114 : vector<30x1xf32> to vector<30x32xf32>
    %118 = arith.subf %108, %117 : vector<30x32xf32>
    %119 = arith.mulf %116, %118 : vector<30x32xf32>
    %cst_55 = arith.constant dense<0.000000e+00> : vector<30xf32>
    %120 = vector.multi_reduction <add>, %119, %cst_55 [1] : vector<30x32xf32> to vector<30xf32>
    %121 = vector.shape_cast %120 : vector<30xf32> to vector<30x1xf32>
    %cst_56 = arith.constant 3.200000e+01 : f32
    %122 = vector.broadcast %cst_56 : f32 to vector<30x1xf32>
    %123 = arith.divf %121, %122 : vector<30x1xf32>
    %124 = vector.broadcast %114 : vector<30x1xf32> to vector<30x32xf32>
    %125 = arith.subf %108, %124 : vector<30x32xf32>
    %cst_57 = arith.constant 9.99999974E-6 : f32
    %126 = vector.broadcast %cst_57 : f32 to vector<30x1xf32>
    %127 = arith.addf %123, %126 : vector<30x1xf32>
    %128 = math.rsqrt %127 : vector<30x1xf32>
    %129 = vector.broadcast %128 : vector<30x1xf32> to vector<30x32xf32>
    %130 = arith.mulf %125, %129 : vector<30x32xf32>
    %131 = vector.broadcast %109 : vector<1x32xf32> to vector<30x32xf32>
    %132 = arith.mulf %130, %131 : vector<30x32xf32>
    %133 = vector.broadcast %110 : vector<1x32xf32> to vector<30x32xf32>
    %134 = arith.addf %132, %133 : vector<30x32xf32>
    %c0_58 = arith.constant 0 : index
    %c0_59 = arith.constant 0 : index
    %135 = vector.load %arg32[%c0_58, %c0_59] : memref<32x64xf32, #tpu.memory_space<vmem>>, vector<32x64xf32>
    %cst_60 = arith.constant dense<0.000000e+00> : vector<30x64xf32>
    %136 = tpu.matmul %134, %135, %cst_60 {dimension_numbers = #tpu.dot_dimension_numbers<[1], [0], [0], [1], [0, 0, 1, 1], [], []>} : vector<30x32xf32>, vector<32x64xf32>, vector<30x64xf32> -> vector<30x64xf32>
    %c0_61 = arith.constant 0 : index
    %c0_62 = arith.constant 0 : index
    %137 = vector.load %arg33[%c0_61, %c0_62] : memref<1x64xf32, #tpu.memory_space<vmem>>, vector<1x64xf32>
    %138 = vector.broadcast %137 : vector<1x64xf32> to vector<30x64xf32>
    %139 = arith.addf %136, %138 : vector<30x64xf32>
    %cst_63 = arith.constant 5.000000e-01 : f32
    %140 = vector.broadcast %cst_63 : f32 to vector<30x64xf32>
    %141 = arith.mulf %140, %139 : vector<30x64xf32>
    %cst_64 = arith.constant 0.707106769 : f32
    %142 = vector.broadcast %cst_64 : f32 to vector<30x64xf32>
    %143 = arith.mulf %139, %142 : vector<30x64xf32>
    %144 = math.erf %143 : vector<30x64xf32>
    %cst_65 = arith.constant 1.000000e+00 : f32
    %145 = vector.broadcast %cst_65 : f32 to vector<30x64xf32>
    %146 = arith.addf %145, %144 : vector<30x64xf32>
    %147 = arith.mulf %141, %146 : vector<30x64xf32>
    %c0_66 = arith.constant 0 : index
    %c0_67 = arith.constant 0 : index
    %148 = vector.load %arg34[%c0_66, %c0_67] : memref<64x32xf32, #tpu.memory_space<vmem>>, vector<64x32xf32>
    %cst_68 = arith.constant dense<0.000000e+00> : vector<30x32xf32>
    %149 = tpu.matmul %147, %148, %cst_68 {dimension_numbers = #tpu.dot_dimension_numbers<[1], [0], [0], [1], [0, 0, 1, 1], [], []>} : vector<30x64xf32>, vector<64x32xf32>, vector<30x32xf32> -> vector<30x32xf32>
    %c0_69 = arith.constant 0 : index
    %c0_70 = arith.constant 0 : index
    %150 = vector.load %arg35[%c0_69, %c0_70] : memref<1x32xf32, #tpu.memory_space<vmem>>, vector<1x32xf32>
    %151 = vector.broadcast %150 : vector<1x32xf32> to vector<30x32xf32>
    %152 = arith.addf %149, %151 : vector<30x32xf32>
    %153 = arith.addf %134, %152 : vector<30x32xf32>
    %c0_71 = arith.constant 0 : index
    %c0_72 = arith.constant 0 : index
    %154 = vector.load %arg36[%c0_71, %c0_72] : memref<1x32xf32, #tpu.memory_space<vmem>>, vector<1x32xf32>
    %c0_73 = arith.constant 0 : index
    %c0_74 = arith.constant 0 : index
    %155 = vector.load %arg37[%c0_73, %c0_74] : memref<1x32xf32, #tpu.memory_space<vmem>>, vector<1x32xf32>
    %cst_75 = arith.constant dense<0.000000e+00> : vector<30xf32>
    %156 = vector.multi_reduction <add>, %153, %cst_75 [1] : vector<30x32xf32> to vector<30xf32>
    %157 = vector.shape_cast %156 : vector<30xf32> to vector<30x1xf32>
    %cst_76 = arith.constant 3.200000e+01 : f32
    %158 = vector.broadcast %cst_76 : f32 to vector<30x1xf32>
    %159 = arith.divf %157, %158 : vector<30x1xf32>
    %160 = vector.broadcast %159 : vector<30x1xf32> to vector<30x32xf32>
    %161 = arith.subf %153, %160 : vector<30x32xf32>
    %162 = vector.broadcast %159 : vector<30x1xf32> to vector<30x32xf32>
    %163 = arith.subf %153, %162 : vector<30x32xf32>
    %164 = arith.mulf %161, %163 : vector<30x32xf32>
    %cst_77 = arith.constant dense<0.000000e+00> : vector<30xf32>
    %165 = vector.multi_reduction <add>, %164, %cst_77 [1] : vector<30x32xf32> to vector<30xf32>
    %166 = vector.shape_cast %165 : vector<30xf32> to vector<30x1xf32>
    %cst_78 = arith.constant 3.200000e+01 : f32
    %167 = vector.broadcast %cst_78 : f32 to vector<30x1xf32>
    %168 = arith.divf %166, %167 : vector<30x1xf32>
    %169 = vector.broadcast %159 : vector<30x1xf32> to vector<30x32xf32>
    %170 = arith.subf %153, %169 : vector<30x32xf32>
    %cst_79 = arith.constant 9.99999974E-6 : f32
    %171 = vector.broadcast %cst_79 : f32 to vector<30x1xf32>
    %172 = arith.addf %168, %171 : vector<30x1xf32>
    %173 = math.rsqrt %172 : vector<30x1xf32>
    %174 = vector.broadcast %173 : vector<30x1xf32> to vector<30x32xf32>
    %175 = arith.mulf %170, %174 : vector<30x32xf32>
    %176 = vector.broadcast %154 : vector<1x32xf32> to vector<30x32xf32>
    %177 = arith.mulf %175, %176 : vector<30x32xf32>
    %178 = vector.broadcast %155 : vector<1x32xf32> to vector<30x32xf32>
    %179 = arith.addf %177, %178 : vector<30x32xf32>
    %c0_80 = arith.constant 0 : index
    %c0_81 = arith.constant 0 : index
    %180 = vector.load %arg4[%c0_80, %c0_81] : memref<100x30xf32, #tpu.memory_space<vmem>>, vector<100x30xf32>
    %c0_82 = arith.constant 0 : index
    %c0_83 = arith.constant 0 : index
    %181 = vector.load %arg14[%c0_82, %c0_83] : memref<32x32xf32, #tpu.memory_space<vmem>>, vector<32x32xf32>
    %cst_84 = arith.constant dense<0.000000e+00> : vector<100x32xf32>
    %182 = tpu.matmul %2, %181, %cst_84 {dimension_numbers = #tpu.dot_dimension_numbers<[1], [0], [0], [1], [0, 0, 1, 1], [], []>} : vector<100x32xf32>, vector<32x32xf32>, vector<100x32xf32> -> vector<100x32xf32>
    %c0_85 = arith.constant 0 : index
    %c0_86 = arith.constant 0 : index
    %183 = vector.load %arg15[%c0_85, %c0_86] : memref<1x32xf32, #tpu.memory_space<vmem>>, vector<1x32xf32>
    %184 = vector.broadcast %183 : vector<1x32xf32> to vector<100x32xf32>
    %185 = arith.addf %182, %184 : vector<100x32xf32>
    %c0_87 = arith.constant 0 : index
    %c0_88 = arith.constant 0 : index
    %186 = vector.load %arg16[%c0_87, %c0_88] : memref<32x32xf32, #tpu.memory_space<vmem>>, vector<32x32xf32>
    %cst_89 = arith.constant dense<0.000000e+00> : vector<30x32xf32>
    %187 = tpu.matmul %179, %186, %cst_89 {dimension_numbers = #tpu.dot_dimension_numbers<[1], [0], [0], [1], [0, 0, 1, 1], [], []>} : vector<30x32xf32>, vector<32x32xf32>, vector<30x32xf32> -> vector<30x32xf32>
    %c0_90 = arith.constant 0 : index
    %c0_91 = arith.constant 0 : index
    %188 = vector.load %arg17[%c0_90, %c0_91] : memref<1x32xf32, #tpu.memory_space<vmem>>, vector<1x32xf32>
    %189 = vector.broadcast %188 : vector<1x32xf32> to vector<30x32xf32>
    %190 = arith.addf %187, %189 : vector<30x32xf32>
    %c0_92 = arith.constant 0 : index
    %c0_93 = arith.constant 0 : index
    %191 = vector.load %arg18[%c0_92, %c0_93] : memref<32x32xf32, #tpu.memory_space<vmem>>, vector<32x32xf32>
    %cst_94 = arith.constant dense<0.000000e+00> : vector<30x32xf32>
    %192 = tpu.matmul %179, %191, %cst_94 {dimension_numbers = #tpu.dot_dimension_numbers<[1], [0], [0], [1], [0, 0, 1, 1], [], []>} : vector<30x32xf32>, vector<32x32xf32>, vector<30x32xf32> -> vector<30x32xf32>
    %c0_95 = arith.constant 0 : index
    %c0_96 = arith.constant 0 : index
    %193 = vector.load %arg19[%c0_95, %c0_96] : memref<1x32xf32, #tpu.memory_space<vmem>>, vector<1x32xf32>
    %194 = vector.broadcast %193 : vector<1x32xf32> to vector<30x32xf32>
    %195 = arith.addf %192, %194 : vector<30x32xf32>
    %c0_97 = arith.constant 0 : index
    %c0_98 = arith.constant 0 : index
    %196 = vector.load %arg20[%c0_97, %c0_98] : memref<32x32xf32, #tpu.memory_space<vmem>>, vector<32x32xf32>
    %cst_99 = arith.constant 0.000000e+00 : f32
    %197 = vector.broadcast %cst_99 : f32 to vector<100x32xf32>
    %198 = vector.extract_strided_slice %185 {offsets = [0, 0], sizes = [100, 8], strides = [1, 1]} : vector<100x32xf32> to vector<100x8xf32>
    %199 = vector.extract_strided_slice %190 {offsets = [0, 0], sizes = [30, 8], strides = [1, 1]} : vector<30x32xf32> to vector<30x8xf32>
    %cst_100 = arith.constant dense<0.000000e+00> : vector<100x30xf32>
    %200 = tpu.matmul %198, %199, %cst_100 {dimension_numbers = #tpu.dot_dimension_numbers<[1], [1], [0], [0], [0, 0, 1, 0], [], []>} : vector<100x8xf32>, vector<30x8xf32>, vector<100x30xf32> -> vector<100x30xf32>
    %cst_101 = arith.constant 0.353553385 : f32
    %201 = vector.broadcast %cst_101 : f32 to vector<100x30xf32>
    %202 = arith.mulf %200, %201 : vector<100x30xf32>
    %203 = arith.addf %202, %180 : vector<100x30xf32>
    %cst_102 = arith.constant dense<0xFF800000> : vector<100xf32>
    %204 = vector.multi_reduction <maximumf>, %203, %cst_102 [1] : vector<100x30xf32> to vector<100xf32>
    %205 = vector.shape_cast %204 : vector<100xf32> to vector<100x1xf32>
    %206 = vector.broadcast %205 : vector<100x1xf32> to vector<100x30xf32>
    %207 = arith.subf %203, %206 : vector<100x30xf32>
    %208 = math.exp %207 : vector<100x30xf32>
    %cst_103 = arith.constant dense<0.000000e+00> : vector<100xf32>
    %209 = vector.multi_reduction <add>, %208, %cst_103 [1] : vector<100x30xf32> to vector<100xf32>
    %210 = vector.shape_cast %209 : vector<100xf32> to vector<100x1xf32>
    %211 = tpu.reciprocal %210 {approx = true} : vector<100x1xf32> -> vector<100x1xf32>
    %212 = vector.broadcast %211 : vector<100x1xf32> to vector<100x30xf32>
    %213 = arith.mulf %208, %212 : vector<100x30xf32>
    %214 = vector.extract_strided_slice %195 {offsets = [0, 0], sizes = [30, 8], strides = [1, 1]} : vector<30x32xf32> to vector<30x8xf32>
    %cst_104 = arith.constant dense<0.000000e+00> : vector<100x8xf32>
    %215 = tpu.matmul %213, %214, %cst_104 {dimension_numbers = #tpu.dot_dimension_numbers<[1], [0], [0], [1], [0, 0, 1, 1], [], []>} : vector<100x30xf32>, vector<30x8xf32>, vector<100x8xf32> -> vector<100x8xf32>
    %216 = vector.extract_strided_slice %196 {offsets = [0, 0], sizes = [8, 32], strides = [1, 1]} : vector<32x32xf32> to vector<8x32xf32>
    %cst_105 = arith.constant dense<0.000000e+00> : vector<100x32xf32>
    %217 = tpu.matmul %215, %216, %cst_105 {dimension_numbers = #tpu.dot_dimension_numbers<[1], [0], [0], [1], [0, 0, 1, 1], [], []>} : vector<100x8xf32>, vector<8x32xf32>, vector<100x32xf32> -> vector<100x32xf32>
    %218 = arith.addf %197, %217 : vector<100x32xf32>
    %219 = vector.extract_strided_slice %185 {offsets = [0, 8], sizes = [100, 8], strides = [1, 1]} : vector<100x32xf32> to vector<100x8xf32>
    %220 = vector.extract_strided_slice %190 {offsets = [0, 8], sizes = [30, 8], strides = [1, 1]} : vector<30x32xf32> to vector<30x8xf32>
    %cst_106 = arith.constant dense<0.000000e+00> : vector<100x30xf32>
    %221 = tpu.matmul %219, %220, %cst_106 {dimension_numbers = #tpu.dot_dimension_numbers<[1], [1], [0], [0], [0, 0, 1, 0], [], []>} : vector<100x8xf32>, vector<30x8xf32>, vector<100x30xf32> -> vector<100x30xf32>
    %cst_107 = arith.constant 0.353553385 : f32
    %222 = vector.broadcast %cst_107 : f32 to vector<100x30xf32>
    %223 = arith.mulf %221, %222 : vector<100x30xf32>
    %224 = arith.addf %223, %180 : vector<100x30xf32>
    %cst_108 = arith.constant dense<0xFF800000> : vector<100xf32>
    %225 = vector.multi_reduction <maximumf>, %224, %cst_108 [1] : vector<100x30xf32> to vector<100xf32>
    %226 = vector.shape_cast %225 : vector<100xf32> to vector<100x1xf32>
    %227 = vector.broadcast %226 : vector<100x1xf32> to vector<100x30xf32>
    %228 = arith.subf %224, %227 : vector<100x30xf32>
    %229 = math.exp %228 : vector<100x30xf32>
    %cst_109 = arith.constant dense<0.000000e+00> : vector<100xf32>
    %230 = vector.multi_reduction <add>, %229, %cst_109 [1] : vector<100x30xf32> to vector<100xf32>
    %231 = vector.shape_cast %230 : vector<100xf32> to vector<100x1xf32>
    %232 = tpu.reciprocal %231 {approx = true} : vector<100x1xf32> -> vector<100x1xf32>
    %233 = vector.broadcast %232 : vector<100x1xf32> to vector<100x30xf32>
    %234 = arith.mulf %229, %233 : vector<100x30xf32>
    %235 = vector.extract_strided_slice %195 {offsets = [0, 8], sizes = [30, 8], strides = [1, 1]} : vector<30x32xf32> to vector<30x8xf32>
    %cst_110 = arith.constant dense<0.000000e+00> : vector<100x8xf32>
    %236 = tpu.matmul %234, %235, %cst_110 {dimension_numbers = #tpu.dot_dimension_numbers<[1], [0], [0], [1], [0, 0, 1, 1], [], []>} : vector<100x30xf32>, vector<30x8xf32>, vector<100x8xf32> -> vector<100x8xf32>
    %237 = vector.extract_strided_slice %196 {offsets = [8, 0], sizes = [8, 32], strides = [1, 1]} : vector<32x32xf32> to vector<8x32xf32>
    %cst_111 = arith.constant dense<0.000000e+00> : vector<100x32xf32>
    %238 = tpu.matmul %236, %237, %cst_111 {dimension_numbers = #tpu.dot_dimension_numbers<[1], [0], [0], [1], [0, 0, 1, 1], [], []>} : vector<100x8xf32>, vector<8x32xf32>, vector<100x32xf32> -> vector<100x32xf32>
    %239 = arith.addf %218, %238 : vector<100x32xf32>
    %240 = vector.extract_strided_slice %185 {offsets = [0, 16], sizes = [100, 8], strides = [1, 1]} : vector<100x32xf32> to vector<100x8xf32>
    %241 = vector.extract_strided_slice %190 {offsets = [0, 16], sizes = [30, 8], strides = [1, 1]} : vector<30x32xf32> to vector<30x8xf32>
    %cst_112 = arith.constant dense<0.000000e+00> : vector<100x30xf32>
    %242 = tpu.matmul %240, %241, %cst_112 {dimension_numbers = #tpu.dot_dimension_numbers<[1], [1], [0], [0], [0, 0, 1, 0], [], []>} : vector<100x8xf32>, vector<30x8xf32>, vector<100x30xf32> -> vector<100x30xf32>
    %cst_113 = arith.constant 0.353553385 : f32
    %243 = vector.broadcast %cst_113 : f32 to vector<100x30xf32>
    %244 = arith.mulf %242, %243 : vector<100x30xf32>
    %245 = arith.addf %244, %180 : vector<100x30xf32>
    %cst_114 = arith.constant dense<0xFF800000> : vector<100xf32>
    %246 = vector.multi_reduction <maximumf>, %245, %cst_114 [1] : vector<100x30xf32> to vector<100xf32>
    %247 = vector.shape_cast %246 : vector<100xf32> to vector<100x1xf32>
    %248 = vector.broadcast %247 : vector<100x1xf32> to vector<100x30xf32>
    %249 = arith.subf %245, %248 : vector<100x30xf32>
    %250 = math.exp %249 : vector<100x30xf32>
    %cst_115 = arith.constant dense<0.000000e+00> : vector<100xf32>
    %251 = vector.multi_reduction <add>, %250, %cst_115 [1] : vector<100x30xf32> to vector<100xf32>
    %252 = vector.shape_cast %251 : vector<100xf32> to vector<100x1xf32>
    %253 = tpu.reciprocal %252 {approx = true} : vector<100x1xf32> -> vector<100x1xf32>
    %254 = vector.broadcast %253 : vector<100x1xf32> to vector<100x30xf32>
    %255 = arith.mulf %250, %254 : vector<100x30xf32>
    %256 = vector.extract_strided_slice %195 {offsets = [0, 16], sizes = [30, 8], strides = [1, 1]} : vector<30x32xf32> to vector<30x8xf32>
    %cst_116 = arith.constant dense<0.000000e+00> : vector<100x8xf32>
    %257 = tpu.matmul %255, %256, %cst_116 {dimension_numbers = #tpu.dot_dimension_numbers<[1], [0], [0], [1], [0, 0, 1, 1], [], []>} : vector<100x30xf32>, vector<30x8xf32>, vector<100x8xf32> -> vector<100x8xf32>
    %258 = vector.extract_strided_slice %196 {offsets = [16, 0], sizes = [8, 32], strides = [1, 1]} : vector<32x32xf32> to vector<8x32xf32>
    %cst_117 = arith.constant dense<0.000000e+00> : vector<100x32xf32>
    %259 = tpu.matmul %257, %258, %cst_117 {dimension_numbers = #tpu.dot_dimension_numbers<[1], [0], [0], [1], [0, 0, 1, 1], [], []>} : vector<100x8xf32>, vector<8x32xf32>, vector<100x32xf32> -> vector<100x32xf32>
    %260 = arith.addf %239, %259 : vector<100x32xf32>
    %261 = vector.extract_strided_slice %185 {offsets = [0, 24], sizes = [100, 8], strides = [1, 1]} : vector<100x32xf32> to vector<100x8xf32>
    %262 = vector.extract_strided_slice %190 {offsets = [0, 24], sizes = [30, 8], strides = [1, 1]} : vector<30x32xf32> to vector<30x8xf32>
    %cst_118 = arith.constant dense<0.000000e+00> : vector<100x30xf32>
    %263 = tpu.matmul %261, %262, %cst_118 {dimension_numbers = #tpu.dot_dimension_numbers<[1], [1], [0], [0], [0, 0, 1, 0], [], []>} : vector<100x8xf32>, vector<30x8xf32>, vector<100x30xf32> -> vector<100x30xf32>
    %cst_119 = arith.constant 0.353553385 : f32
    %264 = vector.broadcast %cst_119 : f32 to vector<100x30xf32>
    %265 = arith.mulf %263, %264 : vector<100x30xf32>
    %266 = arith.addf %265, %180 : vector<100x30xf32>
    %cst_120 = arith.constant dense<0xFF800000> : vector<100xf32>
    %267 = vector.multi_reduction <maximumf>, %266, %cst_120 [1] : vector<100x30xf32> to vector<100xf32>
    %268 = vector.shape_cast %267 : vector<100xf32> to vector<100x1xf32>
    %269 = vector.broadcast %268 : vector<100x1xf32> to vector<100x30xf32>
    %270 = arith.subf %266, %269 : vector<100x30xf32>
    %271 = math.exp %270 : vector<100x30xf32>
    %cst_121 = arith.constant dense<0.000000e+00> : vector<100xf32>
    %272 = vector.multi_reduction <add>, %271, %cst_121 [1] : vector<100x30xf32> to vector<100xf32>
    %273 = vector.shape_cast %272 : vector<100xf32> to vector<100x1xf32>
    %274 = tpu.reciprocal %273 {approx = true} : vector<100x1xf32> -> vector<100x1xf32>
    %275 = vector.broadcast %274 : vector<100x1xf32> to vector<100x30xf32>
    %276 = arith.mulf %271, %275 : vector<100x30xf32>
    %277 = vector.extract_strided_slice %195 {offsets = [0, 24], sizes = [30, 8], strides = [1, 1]} : vector<30x32xf32> to vector<30x8xf32>
    %cst_122 = arith.constant dense<0.000000e+00> : vector<100x8xf32>
    %278 = tpu.matmul %276, %277, %cst_122 {dimension_numbers = #tpu.dot_dimension_numbers<[1], [0], [0], [1], [0, 0, 1, 1], [], []>} : vector<100x30xf32>, vector<30x8xf32>, vector<100x8xf32> -> vector<100x8xf32>
    %279 = vector.extract_strided_slice %196 {offsets = [24, 0], sizes = [8, 32], strides = [1, 1]} : vector<32x32xf32> to vector<8x32xf32>
    %cst_123 = arith.constant dense<0.000000e+00> : vector<100x32xf32>
    %280 = tpu.matmul %278, %279, %cst_123 {dimension_numbers = #tpu.dot_dimension_numbers<[1], [0], [0], [1], [0, 0, 1, 1], [], []>} : vector<100x8xf32>, vector<8x32xf32>, vector<100x32xf32> -> vector<100x32xf32>
    %281 = arith.addf %260, %280 : vector<100x32xf32>
    %c0_124 = arith.constant 0 : index
    %c0_125 = arith.constant 0 : index
    %282 = vector.load %arg21[%c0_124, %c0_125] : memref<1x32xf32, #tpu.memory_space<vmem>>, vector<1x32xf32>
    %283 = vector.broadcast %282 : vector<1x32xf32> to vector<100x32xf32>
    %284 = arith.addf %281, %283 : vector<100x32xf32>
    %c0_126 = arith.constant 0 : index
    %c0_127 = arith.constant 0 : index
    %285 = vector.load %arg5[%c0_126, %c0_127] : memref<30x100xf32, #tpu.memory_space<vmem>>, vector<30x100xf32>
    %c0_128 = arith.constant 0 : index
    %c0_129 = arith.constant 0 : index
    %286 = vector.load %arg22[%c0_128, %c0_129] : memref<32x32xf32, #tpu.memory_space<vmem>>, vector<32x32xf32>
    %cst_130 = arith.constant dense<0.000000e+00> : vector<30x32xf32>
    %287 = tpu.matmul %179, %286, %cst_130 {dimension_numbers = #tpu.dot_dimension_numbers<[1], [0], [0], [1], [0, 0, 1, 1], [], []>} : vector<30x32xf32>, vector<32x32xf32>, vector<30x32xf32> -> vector<30x32xf32>
    %c0_131 = arith.constant 0 : index
    %c0_132 = arith.constant 0 : index
    %288 = vector.load %arg23[%c0_131, %c0_132] : memref<1x32xf32, #tpu.memory_space<vmem>>, vector<1x32xf32>
    %289 = vector.broadcast %288 : vector<1x32xf32> to vector<30x32xf32>
    %290 = arith.addf %287, %289 : vector<30x32xf32>
    %c0_133 = arith.constant 0 : index
    %c0_134 = arith.constant 0 : index
    %291 = vector.load %arg24[%c0_133, %c0_134] : memref<32x32xf32, #tpu.memory_space<vmem>>, vector<32x32xf32>
    %cst_135 = arith.constant dense<0.000000e+00> : vector<100x32xf32>
    %292 = tpu.matmul %284, %291, %cst_135 {dimension_numbers = #tpu.dot_dimension_numbers<[1], [0], [0], [1], [0, 0, 1, 1], [], []>} : vector<100x32xf32>, vector<32x32xf32>, vector<100x32xf32> -> vector<100x32xf32>
    %c0_136 = arith.constant 0 : index
    %c0_137 = arith.constant 0 : index
    %293 = vector.load %arg25[%c0_136, %c0_137] : memref<1x32xf32, #tpu.memory_space<vmem>>, vector<1x32xf32>
    %294 = vector.broadcast %293 : vector<1x32xf32> to vector<100x32xf32>
    %295 = arith.addf %292, %294 : vector<100x32xf32>
    %c0_138 = arith.constant 0 : index
    %c0_139 = arith.constant 0 : index
    %296 = vector.load %arg26[%c0_138, %c0_139] : memref<32x32xf32, #tpu.memory_space<vmem>>, vector<32x32xf32>
    %cst_140 = arith.constant dense<0.000000e+00> : vector<100x32xf32>
    %297 = tpu.matmul %284, %296, %cst_140 {dimension_numbers = #tpu.dot_dimension_numbers<[1], [0], [0], [1], [0, 0, 1, 1], [], []>} : vector<100x32xf32>, vector<32x32xf32>, vector<100x32xf32> -> vector<100x32xf32>
    %c0_141 = arith.constant 0 : index
    %c0_142 = arith.constant 0 : index
    %298 = vector.load %arg27[%c0_141, %c0_142] : memref<1x32xf32, #tpu.memory_space<vmem>>, vector<1x32xf32>
    %299 = vector.broadcast %298 : vector<1x32xf32> to vector<100x32xf32>
    %300 = arith.addf %297, %299 : vector<100x32xf32>
    %c0_143 = arith.constant 0 : index
    %c0_144 = arith.constant 0 : index
    %301 = vector.load %arg28[%c0_143, %c0_144] : memref<32x32xf32, #tpu.memory_space<vmem>>, vector<32x32xf32>
    %cst_145 = arith.constant 0.000000e+00 : f32
    %302 = vector.broadcast %cst_145 : f32 to vector<30x32xf32>
    %303 = vector.extract_strided_slice %290 {offsets = [0, 0], sizes = [30, 8], strides = [1, 1]} : vector<30x32xf32> to vector<30x8xf32>
    %304 = vector.extract_strided_slice %295 {offsets = [0, 0], sizes = [100, 8], strides = [1, 1]} : vector<100x32xf32> to vector<100x8xf32>
    %cst_146 = arith.constant dense<0.000000e+00> : vector<30x100xf32>
    %305 = tpu.matmul %303, %304, %cst_146 {dimension_numbers = #tpu.dot_dimension_numbers<[1], [1], [0], [0], [0, 0, 1, 0], [], []>} : vector<30x8xf32>, vector<100x8xf32>, vector<30x100xf32> -> vector<30x100xf32>
    %cst_147 = arith.constant 0.353553385 : f32
    %306 = vector.broadcast %cst_147 : f32 to vector<30x100xf32>
    %307 = arith.mulf %305, %306 : vector<30x100xf32>
    %308 = arith.addf %307, %285 : vector<30x100xf32>
    %cst_148 = arith.constant dense<0xFF800000> : vector<30xf32>
    %309 = vector.multi_reduction <maximumf>, %308, %cst_148 [1] : vector<30x100xf32> to vector<30xf32>
    %310 = vector.shape_cast %309 : vector<30xf32> to vector<30x1xf32>
    %311 = vector.broadcast %310 : vector<30x1xf32> to vector<30x100xf32>
    %312 = arith.subf %308, %311 : vector<30x100xf32>
    %313 = math.exp %312 : vector<30x100xf32>
    %cst_149 = arith.constant dense<0.000000e+00> : vector<30xf32>
    %314 = vector.multi_reduction <add>, %313, %cst_149 [1] : vector<30x100xf32> to vector<30xf32>
    %315 = vector.shape_cast %314 : vector<30xf32> to vector<30x1xf32>
    %316 = tpu.reciprocal %315 {approx = true} : vector<30x1xf32> -> vector<30x1xf32>
    %317 = vector.broadcast %316 : vector<30x1xf32> to vector<30x100xf32>
    %318 = arith.mulf %313, %317 : vector<30x100xf32>
    %319 = vector.extract_strided_slice %300 {offsets = [0, 0], sizes = [100, 8], strides = [1, 1]} : vector<100x32xf32> to vector<100x8xf32>
    %cst_150 = arith.constant dense<0.000000e+00> : vector<30x8xf32>
    %320 = tpu.matmul %318, %319, %cst_150 {dimension_numbers = #tpu.dot_dimension_numbers<[1], [0], [0], [1], [0, 0, 1, 1], [], []>} : vector<30x100xf32>, vector<100x8xf32>, vector<30x8xf32> -> vector<30x8xf32>
    %321 = vector.extract_strided_slice %301 {offsets = [0, 0], sizes = [8, 32], strides = [1, 1]} : vector<32x32xf32> to vector<8x32xf32>
    %cst_151 = arith.constant dense<0.000000e+00> : vector<30x32xf32>
    %322 = tpu.matmul %320, %321, %cst_151 {dimension_numbers = #tpu.dot_dimension_numbers<[1], [0], [0], [1], [0, 0, 1, 1], [], []>} : vector<30x8xf32>, vector<8x32xf32>, vector<30x32xf32> -> vector<30x32xf32>
    %323 = arith.addf %302, %322 : vector<30x32xf32>
    %324 = vector.extract_strided_slice %290 {offsets = [0, 8], sizes = [30, 8], strides = [1, 1]} : vector<30x32xf32> to vector<30x8xf32>
    %325 = vector.extract_strided_slice %295 {offsets = [0, 8], sizes = [100, 8], strides = [1, 1]} : vector<100x32xf32> to vector<100x8xf32>
    %cst_152 = arith.constant dense<0.000000e+00> : vector<30x100xf32>
    %326 = tpu.matmul %324, %325, %cst_152 {dimension_numbers = #tpu.dot_dimension_numbers<[1], [1], [0], [0], [0, 0, 1, 0], [], []>} : vector<30x8xf32>, vector<100x8xf32>, vector<30x100xf32> -> vector<30x100xf32>
    %cst_153 = arith.constant 0.353553385 : f32
    %327 = vector.broadcast %cst_153 : f32 to vector<30x100xf32>
    %328 = arith.mulf %326, %327 : vector<30x100xf32>
    %329 = arith.addf %328, %285 : vector<30x100xf32>
    %cst_154 = arith.constant dense<0xFF800000> : vector<30xf32>
    %330 = vector.multi_reduction <maximumf>, %329, %cst_154 [1] : vector<30x100xf32> to vector<30xf32>
    %331 = vector.shape_cast %330 : vector<30xf32> to vector<30x1xf32>
    %332 = vector.broadcast %331 : vector<30x1xf32> to vector<30x100xf32>
    %333 = arith.subf %329, %332 : vector<30x100xf32>
    %334 = math.exp %333 : vector<30x100xf32>
    %cst_155 = arith.constant dense<0.000000e+00> : vector<30xf32>
    %335 = vector.multi_reduction <add>, %334, %cst_155 [1] : vector<30x100xf32> to vector<30xf32>
    %336 = vector.shape_cast %335 : vector<30xf32> to vector<30x1xf32>
    %337 = tpu.reciprocal %336 {approx = true} : vector<30x1xf32> -> vector<30x1xf32>
    %338 = vector.broadcast %337 : vector<30x1xf32> to vector<30x100xf32>
    %339 = arith.mulf %334, %338 : vector<30x100xf32>
    %340 = vector.extract_strided_slice %300 {offsets = [0, 8], sizes = [100, 8], strides = [1, 1]} : vector<100x32xf32> to vector<100x8xf32>
    %cst_156 = arith.constant dense<0.000000e+00> : vector<30x8xf32>
    %341 = tpu.matmul %339, %340, %cst_156 {dimension_numbers = #tpu.dot_dimension_numbers<[1], [0], [0], [1], [0, 0, 1, 1], [], []>} : vector<30x100xf32>, vector<100x8xf32>, vector<30x8xf32> -> vector<30x8xf32>
    %342 = vector.extract_strided_slice %301 {offsets = [8, 0], sizes = [8, 32], strides = [1, 1]} : vector<32x32xf32> to vector<8x32xf32>
    %cst_157 = arith.constant dense<0.000000e+00> : vector<30x32xf32>
    %343 = tpu.matmul %341, %342, %cst_157 {dimension_numbers = #tpu.dot_dimension_numbers<[1], [0], [0], [1], [0, 0, 1, 1], [], []>} : vector<30x8xf32>, vector<8x32xf32>, vector<30x32xf32> -> vector<30x32xf32>
    %344 = arith.addf %323, %343 : vector<30x32xf32>
    %345 = vector.extract_strided_slice %290 {offsets = [0, 16], sizes = [30, 8], strides = [1, 1]} : vector<30x32xf32> to vector<30x8xf32>
    %346 = vector.extract_strided_slice %295 {offsets = [0, 16], sizes = [100, 8], strides = [1, 1]} : vector<100x32xf32> to vector<100x8xf32>
    %cst_158 = arith.constant dense<0.000000e+00> : vector<30x100xf32>
    %347 = tpu.matmul %345, %346, %cst_158 {dimension_numbers = #tpu.dot_dimension_numbers<[1], [1], [0], [0], [0, 0, 1, 0], [], []>} : vector<30x8xf32>, vector<100x8xf32>, vector<30x100xf32> -> vector<30x100xf32>
    %cst_159 = arith.constant 0.353553385 : f32
    %348 = vector.broadcast %cst_159 : f32 to vector<30x100xf32>
    %349 = arith.mulf %347, %348 : vector<30x100xf32>
    %350 = arith.addf %349, %285 : vector<30x100xf32>
    %cst_160 = arith.constant dense<0xFF800000> : vector<30xf32>
    %351 = vector.multi_reduction <maximumf>, %350, %cst_160 [1] : vector<30x100xf32> to vector<30xf32>
    %352 = vector.shape_cast %351 : vector<30xf32> to vector<30x1xf32>
    %353 = vector.broadcast %352 : vector<30x1xf32> to vector<30x100xf32>
    %354 = arith.subf %350, %353 : vector<30x100xf32>
    %355 = math.exp %354 : vector<30x100xf32>
    %cst_161 = arith.constant dense<0.000000e+00> : vector<30xf32>
    %356 = vector.multi_reduction <add>, %355, %cst_161 [1] : vector<30x100xf32> to vector<30xf32>
    %357 = vector.shape_cast %356 : vector<30xf32> to vector<30x1xf32>
    %358 = tpu.reciprocal %357 {approx = true} : vector<30x1xf32> -> vector<30x1xf32>
    %359 = vector.broadcast %358 : vector<30x1xf32> to vector<30x100xf32>
    %360 = arith.mulf %355, %359 : vector<30x100xf32>
    %361 = vector.extract_strided_slice %300 {offsets = [0, 16], sizes = [100, 8], strides = [1, 1]} : vector<100x32xf32> to vector<100x8xf32>
    %cst_162 = arith.constant dense<0.000000e+00> : vector<30x8xf32>
    %362 = tpu.matmul %360, %361, %cst_162 {dimension_numbers = #tpu.dot_dimension_numbers<[1], [0], [0], [1], [0, 0, 1, 1], [], []>} : vector<30x100xf32>, vector<100x8xf32>, vector<30x8xf32> -> vector<30x8xf32>
    %363 = vector.extract_strided_slice %301 {offsets = [16, 0], sizes = [8, 32], strides = [1, 1]} : vector<32x32xf32> to vector<8x32xf32>
    %cst_163 = arith.constant dense<0.000000e+00> : vector<30x32xf32>
    %364 = tpu.matmul %362, %363, %cst_163 {dimension_numbers = #tpu.dot_dimension_numbers<[1], [0], [0], [1], [0, 0, 1, 1], [], []>} : vector<30x8xf32>, vector<8x32xf32>, vector<30x32xf32> -> vector<30x32xf32>
    %365 = arith.addf %344, %364 : vector<30x32xf32>
    %366 = vector.extract_strided_slice %290 {offsets = [0, 24], sizes = [30, 8], strides = [1, 1]} : vector<30x32xf32> to vector<30x8xf32>
    %367 = vector.extract_strided_slice %295 {offsets = [0, 24], sizes = [100, 8], strides = [1, 1]} : vector<100x32xf32> to vector<100x8xf32>
    %cst_164 = arith.constant dense<0.000000e+00> : vector<30x100xf32>
    %368 = tpu.matmul %366, %367, %cst_164 {dimension_numbers = #tpu.dot_dimension_numbers<[1], [1], [0], [0], [0, 0, 1, 0], [], []>} : vector<30x8xf32>, vector<100x8xf32>, vector<30x100xf32> -> vector<30x100xf32>
    %cst_165 = arith.constant 0.353553385 : f32
    %369 = vector.broadcast %cst_165 : f32 to vector<30x100xf32>
    %370 = arith.mulf %368, %369 : vector<30x100xf32>
    %371 = arith.addf %370, %285 : vector<30x100xf32>
    %cst_166 = arith.constant dense<0xFF800000> : vector<30xf32>
    %372 = vector.multi_reduction <maximumf>, %371, %cst_166 [1] : vector<30x100xf32> to vector<30xf32>
    %373 = vector.shape_cast %372 : vector<30xf32> to vector<30x1xf32>
    %374 = vector.broadcast %373 : vector<30x1xf32> to vector<30x100xf32>
    %375 = arith.subf %371, %374 : vector<30x100xf32>
    %376 = math.exp %375 : vector<30x100xf32>
    %cst_167 = arith.constant dense<0.000000e+00> : vector<30xf32>
    %377 = vector.multi_reduction <add>, %376, %cst_167 [1] : vector<30x100xf32> to vector<30xf32>
    %378 = vector.shape_cast %377 : vector<30xf32> to vector<30x1xf32>
    %379 = tpu.reciprocal %378 {approx = true} : vector<30x1xf32> -> vector<30x1xf32>
    %380 = vector.broadcast %379 : vector<30x1xf32> to vector<30x100xf32>
    %381 = arith.mulf %376, %380 : vector<30x100xf32>
    %382 = vector.extract_strided_slice %300 {offsets = [0, 24], sizes = [100, 8], strides = [1, 1]} : vector<100x32xf32> to vector<100x8xf32>
    %cst_168 = arith.constant dense<0.000000e+00> : vector<30x8xf32>
    %383 = tpu.matmul %381, %382, %cst_168 {dimension_numbers = #tpu.dot_dimension_numbers<[1], [0], [0], [1], [0, 0, 1, 1], [], []>} : vector<30x100xf32>, vector<100x8xf32>, vector<30x8xf32> -> vector<30x8xf32>
    %384 = vector.extract_strided_slice %301 {offsets = [24, 0], sizes = [8, 32], strides = [1, 1]} : vector<32x32xf32> to vector<8x32xf32>
    %cst_169 = arith.constant dense<0.000000e+00> : vector<30x32xf32>
    %385 = tpu.matmul %383, %384, %cst_169 {dimension_numbers = #tpu.dot_dimension_numbers<[1], [0], [0], [1], [0, 0, 1, 1], [], []>} : vector<30x8xf32>, vector<8x32xf32>, vector<30x32xf32> -> vector<30x32xf32>
    %386 = arith.addf %365, %385 : vector<30x32xf32>
    %c0_170 = arith.constant 0 : index
    %c0_171 = arith.constant 0 : index
    %387 = vector.load %arg29[%c0_170, %c0_171] : memref<1x32xf32, #tpu.memory_space<vmem>>, vector<1x32xf32>
    %388 = vector.broadcast %387 : vector<1x32xf32> to vector<30x32xf32>
    %389 = arith.addf %386, %388 : vector<30x32xf32>
    %390 = arith.addf %179, %389 : vector<30x32xf32>
    %c0_172 = arith.constant 0 : index
    %c0_173 = arith.constant 0 : index
    %391 = vector.load %arg38[%c0_172, %c0_173] : memref<1x32xf32, #tpu.memory_space<vmem>>, vector<1x32xf32>
    %c0_174 = arith.constant 0 : index
    %c0_175 = arith.constant 0 : index
    %392 = vector.load %arg39[%c0_174, %c0_175] : memref<1x32xf32, #tpu.memory_space<vmem>>, vector<1x32xf32>
    %cst_176 = arith.constant dense<0.000000e+00> : vector<30xf32>
    %393 = vector.multi_reduction <add>, %390, %cst_176 [1] : vector<30x32xf32> to vector<30xf32>
    %394 = vector.shape_cast %393 : vector<30xf32> to vector<30x1xf32>
    %cst_177 = arith.constant 3.200000e+01 : f32
    %395 = vector.broadcast %cst_177 : f32 to vector<30x1xf32>
    %396 = arith.divf %394, %395 : vector<30x1xf32>
    %397 = vector.broadcast %396 : vector<30x1xf32> to vector<30x32xf32>
    %398 = arith.subf %390, %397 : vector<30x32xf32>
    %399 = vector.broadcast %396 : vector<30x1xf32> to vector<30x32xf32>
    %400 = arith.subf %390, %399 : vector<30x32xf32>
    %401 = arith.mulf %398, %400 : vector<30x32xf32>
    %cst_178 = arith.constant dense<0.000000e+00> : vector<30xf32>
    %402 = vector.multi_reduction <add>, %401, %cst_178 [1] : vector<30x32xf32> to vector<30xf32>
    %403 = vector.shape_cast %402 : vector<30xf32> to vector<30x1xf32>
    %cst_179 = arith.constant 3.200000e+01 : f32
    %404 = vector.broadcast %cst_179 : f32 to vector<30x1xf32>
    %405 = arith.divf %403, %404 : vector<30x1xf32>
    %406 = vector.broadcast %396 : vector<30x1xf32> to vector<30x32xf32>
    %407 = arith.subf %390, %406 : vector<30x32xf32>
    %cst_180 = arith.constant 9.99999974E-6 : f32
    %408 = vector.broadcast %cst_180 : f32 to vector<30x1xf32>
    %409 = arith.addf %405, %408 : vector<30x1xf32>
    %410 = math.rsqrt %409 : vector<30x1xf32>
    %411 = vector.broadcast %410 : vector<30x1xf32> to vector<30x32xf32>
    %412 = arith.mulf %407, %411 : vector<30x32xf32>
    %413 = vector.broadcast %391 : vector<1x32xf32> to vector<30x32xf32>
    %414 = arith.mulf %412, %413 : vector<30x32xf32>
    %415 = vector.broadcast %392 : vector<1x32xf32> to vector<30x32xf32>
    %416 = arith.addf %414, %415 : vector<30x32xf32>
    %c0_181 = arith.constant 0 : index
    %c0_182 = arith.constant 0 : index
    %417 = vector.load %arg40[%c0_181, %c0_182] : memref<32x64xf32, #tpu.memory_space<vmem>>, vector<32x64xf32>
    %cst_183 = arith.constant dense<0.000000e+00> : vector<30x64xf32>
    %418 = tpu.matmul %416, %417, %cst_183 {dimension_numbers = #tpu.dot_dimension_numbers<[1], [0], [0], [1], [0, 0, 1, 1], [], []>} : vector<30x32xf32>, vector<32x64xf32>, vector<30x64xf32> -> vector<30x64xf32>
    %c0_184 = arith.constant 0 : index
    %c0_185 = arith.constant 0 : index
    %419 = vector.load %arg41[%c0_184, %c0_185] : memref<1x64xf32, #tpu.memory_space<vmem>>, vector<1x64xf32>
    %420 = vector.broadcast %419 : vector<1x64xf32> to vector<30x64xf32>
    %421 = arith.addf %418, %420 : vector<30x64xf32>
    %cst_186 = arith.constant 5.000000e-01 : f32
    %422 = vector.broadcast %cst_186 : f32 to vector<30x64xf32>
    %423 = arith.mulf %422, %421 : vector<30x64xf32>
    %cst_187 = arith.constant 0.707106769 : f32
    %424 = vector.broadcast %cst_187 : f32 to vector<30x64xf32>
    %425 = arith.mulf %421, %424 : vector<30x64xf32>
    %426 = math.erf %425 : vector<30x64xf32>
    %cst_188 = arith.constant 1.000000e+00 : f32
    %427 = vector.broadcast %cst_188 : f32 to vector<30x64xf32>
    %428 = arith.addf %427, %426 : vector<30x64xf32>
    %429 = arith.mulf %423, %428 : vector<30x64xf32>
    %c0_189 = arith.constant 0 : index
    %c0_190 = arith.constant 0 : index
    %430 = vector.load %arg42[%c0_189, %c0_190] : memref<64x32xf32, #tpu.memory_space<vmem>>, vector<64x32xf32>
    %cst_191 = arith.constant dense<0.000000e+00> : vector<30x32xf32>
    %431 = tpu.matmul %429, %430, %cst_191 {dimension_numbers = #tpu.dot_dimension_numbers<[1], [0], [0], [1], [0, 0, 1, 1], [], []>} : vector<30x64xf32>, vector<64x32xf32>, vector<30x32xf32> -> vector<30x32xf32>
    %c0_192 = arith.constant 0 : index
    %c0_193 = arith.constant 0 : index
    %432 = vector.load %arg43[%c0_192, %c0_193] : memref<1x32xf32, #tpu.memory_space<vmem>>, vector<1x32xf32>
    %433 = vector.broadcast %432 : vector<1x32xf32> to vector<30x32xf32>
    %434 = arith.addf %431, %433 : vector<30x32xf32>
    %435 = arith.addf %416, %434 : vector<30x32xf32>
    %c0_194 = arith.constant 0 : index
    %c0_195 = arith.constant 0 : index
    %436 = vector.load %arg44[%c0_194, %c0_195] : memref<1x32xf32, #tpu.memory_space<vmem>>, vector<1x32xf32>
    %c0_196 = arith.constant 0 : index
    %c0_197 = arith.constant 0 : index
    %437 = vector.load %arg45[%c0_196, %c0_197] : memref<1x32xf32, #tpu.memory_space<vmem>>, vector<1x32xf32>
    %cst_198 = arith.constant dense<0.000000e+00> : vector<30xf32>
    %438 = vector.multi_reduction <add>, %435, %cst_198 [1] : vector<30x32xf32> to vector<30xf32>
    %439 = vector.shape_cast %438 : vector<30xf32> to vector<30x1xf32>
    %cst_199 = arith.constant 3.200000e+01 : f32
    %440 = vector.broadcast %cst_199 : f32 to vector<30x1xf32>
    %441 = arith.divf %439, %440 : vector<30x1xf32>
    %442 = vector.broadcast %441 : vector<30x1xf32> to vector<30x32xf32>
    %443 = arith.subf %435, %442 : vector<30x32xf32>
    %444 = vector.broadcast %441 : vector<30x1xf32> to vector<30x32xf32>
    %445 = arith.subf %435, %444 : vector<30x32xf32>
    %446 = arith.mulf %443, %445 : vector<30x32xf32>
    %cst_200 = arith.constant dense<0.000000e+00> : vector<30xf32>
    %447 = vector.multi_reduction <add>, %446, %cst_200 [1] : vector<30x32xf32> to vector<30xf32>
    %448 = vector.shape_cast %447 : vector<30xf32> to vector<30x1xf32>
    %cst_201 = arith.constant 3.200000e+01 : f32
    %449 = vector.broadcast %cst_201 : f32 to vector<30x1xf32>
    %450 = arith.divf %448, %449 : vector<30x1xf32>
    %451 = vector.broadcast %441 : vector<30x1xf32> to vector<30x32xf32>
    %452 = arith.subf %435, %451 : vector<30x32xf32>
    %cst_202 = arith.constant 9.99999974E-6 : f32
    %453 = vector.broadcast %cst_202 : f32 to vector<30x1xf32>
    %454 = arith.addf %450, %453 : vector<30x1xf32>
    %455 = math.rsqrt %454 : vector<30x1xf32>
    %456 = vector.broadcast %455 : vector<30x1xf32> to vector<30x32xf32>
    %457 = arith.mulf %452, %456 : vector<30x32xf32>
    %458 = vector.broadcast %436 : vector<1x32xf32> to vector<30x32xf32>
    %459 = arith.mulf %457, %458 : vector<30x32xf32>
    %460 = vector.broadcast %437 : vector<1x32xf32> to vector<30x32xf32>
    %461 = arith.addf %459, %460 : vector<30x32xf32>
    %c0_203 = arith.constant 0 : index
    %c0_204 = arith.constant 0 : index
    %c0_205 = arith.constant 0 : index
    %462 = vector.load %arg46[%c0_203, %c0_204, %c0_205] : memref<1x30x32xf32, #tpu.memory_space<vmem>>, vector<1x30x32xf32>
    %463 = vector.shape_cast %462 : vector<1x30x32xf32> to vector<30x32xf32>
    %464 = vector.shape_cast %461 : vector<30x32xf32> to vector<1x30x32xf32>
    tpu.vector_store %arg46[%c0_203, %c0_204, %c0_205], %464 {strides = array<i32>} : memref<1x30x32xf32, #tpu.memory_space<vmem>>, vector<1x30x32xf32>,
    return
  }
  func.func @transform_0(%arg0: i32) -> (i32, i32, i32) {
    %c0_i32 = arith.constant 0 : i32
    %c0_i32_0 = arith.constant 0 : i32
    %c0_i32_1 = arith.constant 0 : i32
    return %arg0, %c0_i32, %c0_i32_0 : i32, i32, i32
  }
  func.func @transform_1(%arg0: i32) -> (i32, i32) {
    %c0_i32 = arith.constant 0 : i32
    %c0_i32_0 = arith.constant 0 : i32
    %c0_i32_1 = arith.constant 0 : i32
    return %c0_i32, %c0_i32_0 : i32, i32
  }
  func.func @transform_2(%arg0: i32) -> (i32, i32) {
    %c0_i32 = arith.constant 0 : i32
    %c0_i32_0 = arith.constant 0 : i32
    %c0_i32_1 = arith.constant 0 : i32
    return %c0_i32, %c0_i32_0 : i32, i32
  }
  func.func @transform_3(%arg0: i32) -> (i32, i32) {
    %c0_i32 = arith.constant 0 : i32
    %c0_i32_0 = arith.constant 0 : i32
    %c0_i32_1 = arith.constant 0 : i32
    return %c0_i32, %c0_i32_0 : i32, i32
  }
  func.func @transform_4(%arg0: i32) -> (i32, i32) {
    %c0_i32 = arith.constant 0 : i32
    %c0_i32_0 = arith.constant 0 : i32
    %c0_i32_1 = arith.constant 0 : i32
    return %c0_i32, %c0_i32_0 : i32, i32
  }
  func.func @transform_5(%arg0: i32) -> (i32, i32) {
    %c0_i32 = arith.constant 0 : i32
    %c0_i32_0 = arith.constant 0 : i32
    %c0_i32_1 = arith.constant 0 : i32
    return %c0_i32, %c0_i32_0 : i32, i32
  }
  func.func @transform_6(%arg0: i32) -> (i32, i32) {
    %c0_i32 = arith.constant 0 : i32
    %c0_i32_0 = arith.constant 0 : i32
    %c0_i32_1 = arith.constant 0 : i32
    return %c0_i32, %c0_i32_0 : i32, i32
  }
  func.func @transform_7(%arg0: i32) -> (i32, i32) {
    %c0_i32 = arith.constant 0 : i32
    %c0_i32_0 = arith.constant 0 : i32
    %c0_i32_1 = arith.constant 0 : i32
    return %c0_i32, %c0_i32_0 : i32, i32
  }
  func.func @transform_8(%arg0: i32) -> (i32, i32) {
    %c0_i32 = arith.constant 0 : i32
    %c0_i32_0 = arith.constant 0 : i32
    %c0_i32_1 = arith.constant 0 : i32
    return %c0_i32, %c0_i32_0 : i32, i32
  }
  func.func @transform_9(%arg0: i32) -> (i32, i32) {
    %c0_i32 = arith.constant 0 : i32
    %c0_i32_0 = arith.constant 0 : i32
    %c0_i32_1 = arith.constant 0 : i32
    return %c0_i32, %c0_i32_0 : i32, i32
  }
  func.func @transform_10(%arg0: i32) -> (i32, i32) {
    %c0_i32 = arith.constant 0 : i32
    %c0_i32_0 = arith.constant 0 : i32
    %c0_i32_1 = arith.constant 0 : i32
    return %c0_i32, %c0_i32_0 : i32, i32
  }
  func.func @transform_11(%arg0: i32) -> (i32, i32) {
    %c0_i32 = arith.constant 0 : i32
    %c0_i32_0 = arith.constant 0 : i32
    %c0_i32_1 = arith.constant 0 : i32
    return %c0_i32, %c0_i32_0 : i32, i32
  }
  func.func @transform_12(%arg0: i32) -> (i32, i32) {
    %c0_i32 = arith.constant 0 : i32
    %c0_i32_0 = arith.constant 0 : i32
    %c0_i32_1 = arith.constant 0 : i32
    return %c0_i32, %c0_i32_0 : i32, i32
  }
  func.func @transform_13(%arg0: i32) -> (i32, i32) {
    %c0_i32 = arith.constant 0 : i32
    %c0_i32_0 = arith.constant 0 : i32
    %c0_i32_1 = arith.constant 0 : i32
    return %c0_i32, %c0_i32_0 : i32, i32
  }
  func.func @transform_14(%arg0: i32) -> (i32, i32) {
    %c0_i32 = arith.constant 0 : i32
    %c0_i32_0 = arith.constant 0 : i32
    %c0_i32_1 = arith.constant 0 : i32
    return %c0_i32, %c0_i32_0 : i32, i32
  }
  func.func @transform_15(%arg0: i32) -> (i32, i32) {
    %c0_i32 = arith.constant 0 : i32
    %c0_i32_0 = arith.constant 0 : i32
    %c0_i32_1 = arith.constant 0 : i32
    return %c0_i32, %c0_i32_0 : i32, i32
  }
  func.func @transform_16(%arg0: i32) -> (i32, i32) {
    %c0_i32 = arith.constant 0 : i32
    %c0_i32_0 = arith.constant 0 : i32
    %c0_i32_1 = arith.constant 0 : i32
    return %c0_i32, %c0_i32_0 : i32, i32
  }
  func.func @transform_17(%arg0: i32) -> (i32, i32) {
    %c0_i32 = arith.constant 0 : i32
    %c0_i32_0 = arith.constant 0 : i32
    %c0_i32_1 = arith.constant 0 : i32
    return %c0_i32, %c0_i32_0 : i32, i32
  }
  func.func @transform_18(%arg0: i32) -> (i32, i32) {
    %c0_i32 = arith.constant 0 : i32
    %c0_i32_0 = arith.constant 0 : i32
    %c0_i32_1 = arith.constant 0 : i32
    return %c0_i32, %c0_i32_0 : i32, i32
  }
  func.func @transform_19(%arg0: i32) -> (i32, i32) {
    %c0_i32 = arith.constant 0 : i32
    %c0_i32_0 = arith.constant 0 : i32
    %c0_i32_1 = arith.constant 0 : i32
    return %c0_i32, %c0_i32_0 : i32, i32
  }
  func.func @transform_20(%arg0: i32) -> (i32, i32) {
    %c0_i32 = arith.constant 0 : i32
    %c0_i32_0 = arith.constant 0 : i32
    %c0_i32_1 = arith.constant 0 : i32
    return %c0_i32, %c0_i32_0 : i32, i32
  }
  func.func @transform_21(%arg0: i32) -> (i32, i32) {
    %c0_i32 = arith.constant 0 : i32
    %c0_i32_0 = arith.constant 0 : i32
    %c0_i32_1 = arith.constant 0 : i32
    return %c0_i32, %c0_i32_0 : i32, i32
  }
  func.func @transform_22(%arg0: i32) -> (i32, i32) {
    %c0_i32 = arith.constant 0 : i32
    %c0_i32_0 = arith.constant 0 : i32
    %c0_i32_1 = arith.constant 0 : i32
    return %c0_i32, %c0_i32_0 : i32, i32
  }
  func.func @transform_23(%arg0: i32) -> (i32, i32) {
    %c0_i32 = arith.constant 0 : i32
    %c0_i32_0 = arith.constant 0 : i32
    %c0_i32_1 = arith.constant 0 : i32
    return %c0_i32, %c0_i32_0 : i32, i32
  }
  func.func @transform_24(%arg0: i32) -> (i32, i32) {
    %c0_i32 = arith.constant 0 : i32
    %c0_i32_0 = arith.constant 0 : i32
    %c0_i32_1 = arith.constant 0 : i32
    return %c0_i32, %c0_i32_0 : i32, i32
  }
  func.func @transform_25(%arg0: i32) -> (i32, i32) {
    %c0_i32 = arith.constant 0 : i32
    %c0_i32_0 = arith.constant 0 : i32
    %c0_i32_1 = arith.constant 0 : i32
    return %c0_i32, %c0_i32_0 : i32, i32
  }
  func.func @transform_26(%arg0: i32) -> (i32, i32) {
    %c0_i32 = arith.constant 0 : i32
    %c0_i32_0 = arith.constant 0 : i32
    %c0_i32_1 = arith.constant 0 : i32
    return %c0_i32, %c0_i32_0 : i32, i32
  }
  func.func @transform_27(%arg0: i32) -> (i32, i32) {
    %c0_i32 = arith.constant 0 : i32
    %c0_i32_0 = arith.constant 0 : i32
    %c0_i32_1 = arith.constant 0 : i32
    return %c0_i32, %c0_i32_0 : i32, i32
  }
  func.func @transform_28(%arg0: i32) -> (i32, i32) {
    %c0_i32 = arith.constant 0 : i32
    %c0_i32_0 = arith.constant 0 : i32
    %c0_i32_1 = arith.constant 0 : i32
    return %c0_i32, %c0_i32_0 : i32, i32
  }
  func.func @transform_29(%arg0: i32) -> (i32, i32) {
    %c0_i32 = arith.constant 0 : i32
    %c0_i32_0 = arith.constant 0 : i32
    %c0_i32_1 = arith.constant 0 : i32
    return %c0_i32, %c0_i32_0 : i32, i32
  }
  func.func @transform_30(%arg0: i32) -> (i32, i32) {
    %c0_i32 = arith.constant 0 : i32
    %c0_i32_0 = arith.constant 0 : i32
    %c0_i32_1 = arith.constant 0 : i32
    return %c0_i32, %c0_i32_0 : i32, i32
  }
  func.func @transform_31(%arg0: i32) -> (i32, i32) {
    %c0_i32 = arith.constant 0 : i32
    %c0_i32_0 = arith.constant 0 : i32
    %c0_i32_1 = arith.constant 0 : i32
    return %c0_i32, %c0_i32_0 : i32, i32
  }
  func.func @transform_32(%arg0: i32) -> (i32, i32) {
    %c0_i32 = arith.constant 0 : i32
    %c0_i32_0 = arith.constant 0 : i32
    %c0_i32_1 = arith.constant 0 : i32
    return %c0_i32, %c0_i32_0 : i32, i32
  }
  func.func @transform_33(%arg0: i32) -> (i32, i32) {
    %c0_i32 = arith.constant 0 : i32
    %c0_i32_0 = arith.constant 0 : i32
    %c0_i32_1 = arith.constant 0 : i32
    return %c0_i32, %c0_i32_0 : i32, i32
  }
  func.func @transform_34(%arg0: i32) -> (i32, i32) {
    %c0_i32 = arith.constant 0 : i32
    %c0_i32_0 = arith.constant 0 : i32
    %c0_i32_1 = arith.constant 0 : i32
    return %c0_i32, %c0_i32_0 : i32, i32
  }
  func.func @transform_35(%arg0: i32) -> (i32, i32) {
    %c0_i32 = arith.constant 0 : i32
    %c0_i32_0 = arith.constant 0 : i32
    %c0_i32_1 = arith.constant 0 : i32
    return %c0_i32, %c0_i32_0 : i32, i32
  }
  func.func @transform_36(%arg0: i32) -> (i32, i32) {
    %c0_i32 = arith.constant 0 : i32
    %c0_i32_0 = arith.constant 0 : i32
    %c0_i32_1 = arith.constant 0 : i32
    return %c0_i32, %c0_i32_0 : i32, i32
  }
  func.func @transform_37(%arg0: i32) -> (i32, i32) {
    %c0_i32 = arith.constant 0 : i32
    %c0_i32_0 = arith.constant 0 : i32
    %c0_i32_1 = arith.constant 0 : i32
    return %c0_i32, %c0_i32_0 : i32, i32
  }
  func.func @transform_38(%arg0: i32) -> (i32, i32) {
    %c0_i32 = arith.constant 0 : i32
    %c0_i32_0 = arith.constant 0 : i32
    %c0_i32_1 = arith.constant 0 : i32
    return %c0_i32, %c0_i32_0 : i32, i32
  }
  func.func @transform_39(%arg0: i32) -> (i32, i32) {
    %c0_i32 = arith.constant 0 : i32
    %c0_i32_0 = arith.constant 0 : i32
    %c0_i32_1 = arith.constant 0 : i32
    return %c0_i32, %c0_i32_0 : i32, i32
  }
  func.func @transform_40(%arg0: i32) -> (i32, i32) {
    %c0_i32 = arith.constant 0 : i32
    %c0_i32_0 = arith.constant 0 : i32
    %c0_i32_1 = arith.constant 0 : i32
    return %c0_i32, %c0_i32_0 : i32, i32
  }
  func.func @transform_41(%arg0: i32) -> (i32, i32) {
    %c0_i32 = arith.constant 0 : i32
    %c0_i32_0 = arith.constant 0 : i32
    %c0_i32_1 = arith.constant 0 : i32
    return %c0_i32, %c0_i32_0 : i32, i32
  }
  func.func @transform_42(%arg0: i32) -> (i32, i32) {
    %c0_i32 = arith.constant 0 : i32
    %c0_i32_0 = arith.constant 0 : i32
    %c0_i32_1 = arith.constant 0 : i32
    return %c0_i32, %c0_i32_0 : i32, i32
  }
  func.func @transform_43(%arg0: i32) -> (i32, i32) {
    %c0_i32 = arith.constant 0 : i32
    %c0_i32_0 = arith.constant 0 : i32
    %c0_i32_1 = arith.constant 0 : i32
    return %c0_i32, %c0_i32_0 : i32, i32
  }
  func.func @transform_44(%arg0: i32) -> (i32, i32) {
    %c0_i32 = arith.constant 0 : i32
    %c0_i32_0 = arith.constant 0 : i32
    %c0_i32_1 = arith.constant 0 : i32
    return %c0_i32, %c0_i32_0 : i32, i32
  }
  func.func @transform_45(%arg0: i32) -> (i32, i32, i32) {
    %c0_i32 = arith.constant 0 : i32
    %c0_i32_0 = arith.constant 0 : i32
    %c0_i32_1 = arith.constant 0 : i32
    return %arg0, %c0_i32, %c0_i32_0 : i32, i32, i32
  }
}

</mosaic_0001>

<llo_original>
// kernel: encoder_layer_forward.1
$region0: #{encoder_layer_forward.1}
  #allocation0 [shape = 'u32[]', space=smem, size = 0x4, offset = 0x4, fixed_abs, tag = 'smem constant byte address 0x4 - core index']
  #allocation1 [shape = 'u32[144,128]{1,0:T(1,128)}', space=vmem, size = 0x12000, scoped, tag = 'internal scratch']
  %s0 = inlined_call_operand.smem [shape: u32[46], index: -1, kind: input, shape index: {}]
  %s1 = sld [smem:[%s0]]
  %s2 = scalar_lea.smem %s0, 1
  %s3 = sld [smem:[%s2]]
  %s4 = scalar_lea.smem %s0, 2
  %s5 = sld [smem:[%s4]]
  %s6 = scalar_lea.smem %s0, 3
  %s7 = sld [smem:[%s6]]
  %s8 = scalar_lea.smem %s0, 4
  %s9 = sld [smem:[%s8]]
  %s10 = scalar_lea.smem %s0, 5
  %s11 = sld [smem:[%s10]]
  %s12 = scalar_lea.smem %s0, 6
  %s13 = sld [smem:[%s12]]
  %s14 = scalar_lea.smem %s0, 7
  %s15 = sld [smem:[%s14]]
  %s16 = scalar_lea.smem %s0, 8
  %s17 = sld [smem:[%s16]]
  %s18 = scalar_lea.smem %s0, 9
  %s19 = sld [smem:[%s18]]
  %s20 = scalar_lea.smem %s0, 10
  %s21 = sld [smem:[%s20]]
  %s22 = scalar_lea.smem %s0, 11
  %s23 = sld [smem:[%s22]]
  %s24 = scalar_lea.smem %s0, 12
  %s25 = sld [smem:[%s24]]
  %s26 = scalar_lea.smem %s0, 13
  %s27 = sld [smem:[%s26]]
  %s28 = scalar_lea.smem %s0, 14
  %s29 = sld [smem:[%s28]]
  %s30 = scalar_lea.smem %s0, 15
  %s31 = sld [smem:[%s30]]
  %s32 = scalar_lea.smem %s0, 16
  %s33 = sld [smem:[%s32]]
  %s34 = scalar_lea.smem %s0, 17
  %s35 = sld [smem:[%s34]]
  %s36 = scalar_lea.smem %s0, 18
  %s37 = sld [smem:[%s36]]
  %s38 = scalar_lea.smem %s0, 19
  %s39 = sld [smem:[%s38]]
  %s40 = scalar_lea.smem %s0, 20
  %s41 = sld [smem:[%s40]]
  %s42 = scalar_lea.smem %s0, 21
  %s43 = sld [smem:[%s42]]
  %s44 = scalar_lea.smem %s0, 22
  %s45 = sld [smem:[%s44]]
  %s46 = scalar_lea.smem %s0, 23
  %s47 = sld [smem:[%s46]]
  %s48 = scalar_lea.smem %s0, 24
  %s49 = sld [smem:[%s48]]
  %s50 = scalar_lea.smem %s0, 25
  %s51 = sld [smem:[%s50]]
  %s52 = scalar_lea.smem %s0, 26
  %s53 = sld [smem:[%s52]]
  %s54 = scalar_lea.smem %s0, 27
  %s55 = sld [smem:[%s54]]
  %s56 = scalar_lea.smem %s0, 28
  %s57 = sld [smem:[%s56]]
  %s58 = scalar_lea.smem %s0, 29
  %s59 = sld [smem:[%s58]]
  %s60 = scalar_lea.smem %s0, 30
  %s61 = sld [smem:[%s60]]
  %s62 = scalar_lea.smem %s0, 31
  %s63 = sld [smem:[%s62]]
  %s64 = scalar_lea.smem %s0, 32
  %s65 = sld [smem:[%s64]]
  %s66 = scalar_lea.smem %s0, 33
  %s67 = sld [smem:[%s66]]
  %s68 = scalar_lea.smem %s0, 34
  %s69 = sld [smem:[%s68]]
  %s70 = scalar_lea.smem %s0, 35
  %s71 = sld [smem:[%s70]]
  %s72 = scalar_lea.smem %s0, 36
  %s73 = sld [smem:[%s72]]
  %s74 = scalar_lea.smem %s0, 37
  %s75 = sld [smem:[%s74]]
  %s76 = scalar_lea.smem %s0, 38
  %s77 = sld [smem:[%s76]]
  %s78 = scalar_lea.smem %s0, 39
  %s79 = sld [smem:[%s78]]
  %s80 = scalar_lea.smem %s0, 40
  %s81 = sld [smem:[%s80]]
  %s82 = scalar_lea.smem %s0, 41
  %s83 = sld [smem:[%s82]]
  %s84 = scalar_lea.smem %s0, 42
  %s85 = sld [smem:[%s84]]
  %s86 = scalar_lea.smem %s0, 43
  %s87 = sld [smem:[%s86]]
  %s88 = scalar_lea.smem %s0, 44
  %s89 = sld [smem:[%s88]]
  %s90 = scalar_lea.smem %s0, 45
  %s91 = sld [smem:[%s90]]
  %s92 = sld [smem:[#allocation0]]
  $region309: #{encoder_layer_forward.1} parent=0
    _
  %s94 = ssub.s32 1, %s92
  %s95 = scalar_select 0, %s94, %s92
  $region1: #{encoder_layer_forward.1} parent=0
    #allocation2 [shape = 'u8[512]{0}', space=vmem, size = 0x400, scoped, tag = 'input window, operand 14, single buffered']
    #allocation3 [shape = 's32[2]{0}', space=sflag, size = 0x8, scoped, tag = 'scoped memory for encoder_layer_forward.1']
    #allocation4 [shape = 'u8[512]{0}', space=vmem, size = 0x400, scoped, tag = 'input window, operand 16, single buffered']
    #allocation5 [shape = 's32[1]{0}', space=sflag, size = 0x4, scoped, tag = 'scoped memory for encoder_layer_forward.1']
    #allocation6 [shape = 'u8[512]{0}', space=vmem, size = 0x400, scoped, tag = 'input window, operand 18, single buffered']
    #allocation7 [shape = 'u8[512]{0}', space=vmem, size = 0x400, scoped, tag = 'input window, operand 20, single buffered']
    #allocation8 [shape = 's32[1]{0}', space=sflag, size = 0x4, scoped, tag = 'scoped memory for encoder_layer_forward.1']
    #allocation9 [shape = 'u8[512]{0}', space=vmem, size = 0x400, scoped, tag = 'input window, operand 22, single buffered']
    #allocation10 [shape = 'u8[512]{0}', space=vmem, size = 0x400, scoped, tag = 'input window, operand 24, single buffered']
    #allocation11 [shape = 's32[1]{0}', space=sflag, size = 0x4, scoped, tag = 'scoped memory for encoder_layer_forward.1']
    #allocation12 [shape = 'u8[16384]{0}', space=vmem, size = 0x4000, scoped, tag = 'input window, operand 25, single buffered']
    #allocation13 [shape = 'u8[512]{0}', space=vmem, size = 0x400, scoped, tag = 'input window, operand 26, single buffered']
    #allocation14 [shape = 's32[1]{0}', space=sflag, size = 0x4, scoped, tag = 'scoped memory for encoder_layer_forward.1']
    #allocation15 [shape = 'u8[16384]{0}', space=vmem, size = 0x4000, scoped, tag = 'input window, operand 27, single buffered']
    #allocation16 [shape = 'u8[512]{0}', space=vmem, size = 0x400, scoped, tag = 'input window, operand 28, single buffered']
    #allocation17 [shape = 's32[1]{0}', space=sflag, size = 0x4, scoped, tag = 'scoped memory for encoder_layer_forward.1']
    #allocation18 [shape = 'u8[512]{0}', space=vmem, size = 0x400, scoped, tag = 'input window, operand 29, single buffered']
    #allocation19 [shape = 'u8[512]{0}', space=vmem, size = 0x400, scoped, tag = 'input window, operand 30, single buffered']
    #allocation20 [shape = 's32[1]{0}', space=sflag, size = 0x4, scoped, tag = 'scoped memory for encoder_layer_forward.1']
    #allocation21 [shape = 'u8[16384]{0}', space=vmem, size = 0x4000, scoped, tag = 'input window, operand 31, single buffered']
    #allocation22 [shape = 'u8[512]{0}', space=vmem, size = 0x400, scoped, tag = 'input window, operand 32, single buffered']
    #allocation23 [shape = 's32[1]{0}', space=sflag, size = 0x4, scoped, tag = 'scoped memory for encoder_layer_forward.1']
    #allocation24 [shape = 'u8[512]{0}', space=vmem, size = 0x400, scoped, tag = 'input window, operand 34, single buffered']
    #allocation25 [shape = 'u8[512]{0}', space=vmem, size = 0x400, scoped, tag = 'input window, operand 35, single buffered']
    #allocation26 [shape = 's32[1]{0}', space=sflag, size = 0x4, scoped, tag = 'scoped memory for encoder_layer_forward.1']
    #allocation27 [shape = 'u8[512]{0}', space=vmem, size = 0x400, scoped, tag = 'input window, operand 36, single buffered']
    #allocation28 [shape = 'u8[512]{0}', space=vmem, size = 0x400, scoped, tag = 'input window, operand 37, single buffered']
    #allocation29 [shape = 's32[1]{0}', space=sflag, size = 0x4, scoped, tag = 'scoped memory for encoder_layer_forward.1']
    #allocation30 [shape = 'u8[512]{0}', space=vmem, size = 0x400, scoped, tag = 'input window, operand 38, single buffered']
    #allocation31 [shape = 'u8[16384]{0}', space=vmem, size = 0x4000, scoped, tag = 'input window, operand 39, single buffered']
    #allocation32 [shape = 's32[1]{0}', space=sflag, size = 0x4, scoped, tag = 'scoped memory for encoder_layer_forward.1']
    #allocation33 [shape = 'u8[512]{0}', space=vmem, size = 0x400, scoped, tag = 'input window, operand 40, single buffered']
    #allocation34 [shape = 'u8[512]{0}', space=vmem, size = 0x400, scoped, tag = 'input window, operand 42, single buffered']
    #allocation35 [shape = 's32[1]{0}', space=sflag, size = 0x4, scoped, tag = 'scoped memory for encoder_layer_forward.1']
    #allocation36 [shape = 'u8[512]{0}', space=vmem, size = 0x400, scoped, tag = 'input window, operand 43, single buffered']
    #allocation37 [shape = 'u8[512]{0}', space=vmem, size = 0x400, scoped, tag = 'input window, operand 44, single buffered']
    #allocation38 [shape = 's32[1]{0}', space=sflag, size = 0x4, scoped, tag = 'scoped memory for encoder_layer_forward.1']
    %96 = vsyncpa [#allocation3], 0
    %97 = vsyncpa [#allocation5], 0
    %98 = vsyncpa [#allocation8], 0
    %99 = vsyncpa [#allocation11], 0
    %100 = vsyncpa [#allocation14], 0
    %101 = vsyncpa [#allocation17], 0
    %102 = vsyncpa [#allocation20], 0
    %103 = vsyncpa [#allocation23], 0
    %104 = vsyncpa [#allocation26], 0
    %105 = vsyncpa [#allocation29], 0
    %106 = vsyncpa [#allocation32], 0
    %107 = vsyncpa [#allocation35], 0
    %108 = vsyncpa [#allocation38], 0
    loop: start=0, step=1, limit=4
    $region2: #{encoder_layer_forward.1} parent=1 // loop_pre_header
      _
    $region3: #{encoder_layer_forward.1} parent=1 // loop_header
      %s110 = sphi 0, %s114
      %p111 = scmp.ge.s32.totalorder %s110, 4
      %s120 = sphi 0, %s122
      %s123 = sphi 0, %s120
      %s124 = sphi 0, %s123
      %s140 = sphi 0, %s124
      %s144 = sphi 0, %s144
      %s146 = sphi 0, %s144
      %s147 = sphi 0, %s146
      %s161 = sphi 0, %s147
      %s165 = sphi 0, %s165
      %s167 = sphi 0, %s165
      %s168 = sphi 0, %s167
      %s182 = sphi 0, %s168
      %s186 = sphi 0, %s186
      %s188 = sphi 0, %s186
      %s189 = sphi 0, %s188
      %s203 = sphi 0, %s189
      %s207 = sphi 0, %s207
      %s209 = sphi 0, %s207
      %s210 = sphi 0, %s209
      %s224 = sphi 0, %s210
      %s228 = sphi 0, %s228
      %s230 = sphi 0, %s228
      %s231 = sphi 0, %s230
      %s245 = sphi 0, %s231
      %s249 = sphi 0, %s249
      %s251 = sphi 0, %s249
      %s252 = sphi 0, %s251
      %s266 = sphi 0, %s252
      %s270 = sphi 0, %s270
      %s272 = sphi 0, %s270
      %s273 = sphi 0, %s272
      %s287 = sphi 0, %s273
      %s291 = sphi 0, %s291
      %s293 = sphi 0, %s291
      %s294 = sphi 0, %s293
      %s308 = sphi 0, %s294
      %s312 = sphi 0, %s312
      %s314 = sphi 0, %s312
      %s315 = sphi 0, %s314
      %s329 = sphi 0, %s315
      %s333 = sphi 0, %s333
      %s335 = sphi 0, %s333
      %s336 = sphi 0, %s335
      %s350 = sphi 0, %s336
      %s354 = sphi 0, %s354
      %s356 = sphi 0, %s354
      %s357 = sphi 0, %s356
      %s371 = sphi 0, %s357
      %s375 = sphi 0, %s375
      %s377 = sphi 0, %s375
      %s378 = sphi 0, %s377
      %s392 = sphi 0, %s378
      %s396 = sphi 0, %s396
      %s398 = sphi 0, %s396
      %s399 = sphi 0, %s398
      %s413 = sphi 0, %s399
      %s417 = sphi 0, %s417
      %s419 = sphi 0, %s417
      %s420 = sphi 0, %s419
      %s434 = sphi 0, %s420
      %s438 = sphi 0, %s438
      %s440 = sphi 0, %s438
      %s441 = sphi 0, %s440
      %s455 = sphi 0, %s441
      %s459 = sphi 0, %s459
      %s461 = sphi 0, %s459
      %s462 = sphi 0, %s461
      %s476 = sphi 0, %s462
      %s480 = sphi 0, %s480
      %s482 = sphi 0, %s480
      %s483 = sphi 0, %s482
      %s497 = sphi 0, %s483
      %s501 = sphi 0, %s501
      %s503 = sphi 0, %s501
      %s504 = sphi 0, %s503
      %s518 = sphi 0, %s504
      %s522 = sphi 0, %s522
      %s524 = sphi 0, %s522
      %s525 = sphi 0, %s524
      %s539 = sphi 0, %s525
      %s543 = sphi 0, %s543
      %s545 = sphi 0, %s543
      %s546 = sphi 0, %s545
      %s560 = sphi 0, %s546
      %s564 = sphi 0, %s564
      %s566 = sphi 0, %s564
      %s567 = sphi 0, %s566
      %s581 = sphi 0, %s567
      %s585 = sphi 0, %s585
      %s587 = sphi 0, %s585
      %s588 = sphi 0, %s587
      %s602 = sphi 0, %s588
      %s606 = sphi 0, %s606
      %s608 = sphi 0, %s606
      %s609 = sphi 0, %s608
      %s623 = sphi 0, %s609
      %s627 = sphi 0, %s627
      %s629 = sphi 0, %s627
      %s630 = sphi 0, %s629
      %s644 = sphi 0, %s630
      %s648 = sphi 0, %s648
      %s650 = sphi 0, %s648
      %s651 = sphi 0, %s650
      %s665 = sphi 0, %s651
      %s669 = sphi 0, %s669
      %s671 = sphi 0, %s669
      %s672 = sphi 0, %s671
      %s686 = sphi 0, %s672
      %s690 = sphi 0, %s690
      %s692 = sphi 0, %s690
      %s693 = sphi 0, %s692
      %s707 = sphi 0, %s693
      %s711 = sphi 0, %s711
      %s713 = sphi 0, %s711
      %s714 = sphi 0, %s713
      %s728 = sphi 0, %s714
      %s732 = sphi 0, %s732
      %s734 = sphi 0, %s732
      %s735 = sphi 0, %s734
      %s749 = sphi 0, %s735
      %s753 = sphi 0, %s753
      %s755 = sphi 0, %s753
      %s756 = sphi 0, %s755
      %s770 = sphi 0, %s756
      %s774 = sphi 0, %s774
      %s776 = sphi 0, %s774
      %s777 = sphi 0, %s776
      %s791 = sphi 0, %s777
      %s795 = sphi 0, %s795
      %s797 = sphi 0, %s795
      %s798 = sphi 0, %s797
      %s812 = sphi 0, %s798
      %s816 = sphi 0, %s816
      %s818 = sphi 0, %s816
      %s819 = sphi 0, %s818
      %s833 = sphi 0, %s819
      %s837 = sphi 0, %s837
      %s839 = sphi 0, %s837
      %s840 = sphi 0, %s839
      %s854 = sphi 0, %s840
      %s858 = sphi 0, %s858
      %s860 = sphi 0, %s858
      %s861 = sphi 0, %s860
      %s875 = sphi 0, %s861
      %s879 = sphi 0, %s879
      %s881 = sphi 0, %s879
      %s882 = sphi 0, %s881
      %s896 = sphi 0, %s882
      %s900 = sphi 0, %s900
      %s902 = sphi 0, %s900
      %s903 = sphi 0, %s902
      %s917 = sphi 0, %s903
      %s921 = sphi 0, %s921
      %s923 = sphi 0, %s921
      %s924 = sphi 0, %s923
      %s938 = sphi 0, %s924
      %s942 = sphi 0, %s942
      %s944 = sphi 0, %s942
      %s945 = sphi 0, %s944
      %s959 = sphi 0, %s945
      %s963 = sphi 0, %s963
      %s965 = sphi 0, %s963
      %s966 = sphi 0, %s965
      %s980 = sphi 0, %s966
      %s984 = sphi 0, %s984
      %s986 = sphi 0, %s984
      %s987 = sphi 0, %s986
      %s1001 = sphi 0, %s987
      %s1005 = sphi 0, %s1005
      %s1007 = sphi 0, %s1005
      %s1008 = sphi 0, %s1007
      %s1022 = sphi 0, %s1008
      %s1026 = sphi 0, %s1026
      %s1028 = sphi 0, %s1026
      %s1029 = sphi 0, %s1028
      %s1043 = sphi 0, %s1029
      %s1047 = sphi 0, %s1047
      %s1049 = sphi 0, %s1047
      %s1050 = sphi 0, %s1049
      %s1064 = sphi 0, %s1050
      %s1070 = sphi 0, %s1072
      %s1073 = sphi 0, %s1070
      %s1074 = sphi 0, %s1073
      %s1090 = sphi 0, %s1074
    $region4: #{encoder_layer_forward.1} parent=1 // loop_header_branch
      %113 = sbr.rel (%p111) target = $region8
    $region5: #{encoder_layer_forward.1} parent=1 // loop_body
      %s115 = ssub.s32 %s110, 1
      %s116 = ssub.s32 %s110, 2
      %s117 = sadd.s32 %s110, 1
      %s118 = ssub.s32 %s110, %s117
      %p119 = scmp.eq.s32.totalorder %s118, 0
      %s121 = sadd.s32 %s120, 1
      %s122 = scalar_select %p119, %s120, %s121
      %p125 = pneg %p119
      %p126 = scmp.eq.s32.totalorder %s110, 1
      %p127 = por %p125, %p126
      %p128 = scmp.ne.s32.totalorder %s120, %s123
      %p129 = scmp.eq.s32.totalorder %s110, 0
      %p130 = por %p128, %p129
      %p131 = scmp.ne.s32.totalorder %s120, %s123
      %p132 = scmp.eq.s32.totalorder %s115, 1
      %p133 = por %p131, %p132
      %p134 = scmp.ne.s32.totalorder %s123, %s124
      %p135 = scmp.eq.s32.totalorder %s115, 0
      %p136 = por %p134, %p135
      %p137 = scmp.ne.s32.totalorder %s123, %s124
      %p138 = scmp.eq.s32.totalorder %s116, 1
      %p139 = por %p137, %p138
      %p141 = scmp.ne.s32.totalorder %s124, %s140
      %p142 = scmp.eq.s32.totalorder %s116, 0
      %p143 = por %p141, %p142
      %s145 = sadd.s32 %s144, 1
      %p148 = scmp.eq.s32.totalorder %s110, 1
      %p149 = scmp.ne.s32.totalorder %s144, %s146
      %p150 = scmp.eq.s32.totalorder %s110, 0
      %p151 = por %p149, %p150
      %p152 = scmp.ne.s32.totalorder %s144, %s146
      %p153 = scmp.eq.s32.totalorder %s115, 1
      %p154 = por %p152, %p153
      %p155 = scmp.ne.s32.totalorder %s146, %s147
      %p156 = scmp.eq.s32.totalorder %s115, 0
      %p157 = por %p155, %p156
      %p158 = scmp.ne.s32.totalorder %s146, %s147
      %p159 = scmp.eq.s32.totalorder %s116, 1
      %p160 = por %p158, %p159
      %p162 = scmp.ne.s32.totalorder %s147, %s161
      %p163 = scmp.eq.s32.totalorder %s116, 0
      %p164 = por %p162, %p163
      %s166 = sadd.s32 %s165, 1
      %p169 = scmp.eq.s32.totalorder %s110, 1
      %p170 = scmp.ne.s32.totalorder %s165, %s167
      %p171 = scmp.eq.s32.totalorder %s110, 0
      %p172 = por %p170, %p171
      %p173 = scmp.ne.s32.totalorder %s165, %s167
      %p174 = scmp.eq.s32.totalorder %s115, 1
      %p175 = por %p173, %p174
      %p176 = scmp.ne.s32.totalorder %s167, %s168
      %p177 = scmp.eq.s32.totalorder %s115, 0
      %p178 = por %p176, %p177
      %p179 = scmp.ne.s32.totalorder %s167, %s168
      %p180 = scmp.eq.s32.totalorder %s116, 1
      %p181 = por %p179, %p180
      %p183 = scmp.ne.s32.totalorder %s168, %s182
      %p184 = scmp.eq.s32.totalorder %s116, 0
      %p185 = por %p183, %p184
      %s187 = sadd.s32 %s186, 1
      %p190 = scmp.eq.s32.totalorder %s110, 1
      %p191 = scmp.ne.s32.totalorder %s186, %s188
      %p192 = scmp.eq.s32.totalorder %s110, 0
      %p193 = por %p191, %p192
      %p194 = scmp.ne.s32.totalorder %s186, %s188
      %p195 = scmp.eq.s32.totalorder %s115, 1
      %p196 = por %p194, %p195
      %p197 = scmp.ne.s32.totalorder %s188, %s189
      %p198 = scmp.eq.s32.totalorder %s115, 0
      %p199 = por %p197, %p198
      %p200 = scmp.ne.s32.totalorder %s188, %s189
      %p201 = scmp.eq.s32.totalorder %s116, 1
      %p202 = por %p200, %p201
      %p204 = scmp.ne.s32.totalorder %s189, %s203
      %p205 = scmp.eq.s32.totalorder %s116, 0
      %p206 = por %p204, %p205
      %s208 = sadd.s32 %s207, 1
      %p211 = scmp.eq.s32.totalorder %s110, 1
      %p212 = scmp.ne.s32.totalorder %s207, %s209
      %p213 = scmp.eq.s32.totalorder %s110, 0
      %p214 = por %p212, %p213
      %p215 = scmp.ne.s32.totalorder %s207, %s209
      %p216 = scmp.eq.s32.totalorder %s115, 1
      %p217 = por %p215, %p216
      %p218 = scmp.ne.s32.totalorder %s209, %s210
      %p219 = scmp.eq.s32.totalorder %s115, 0
      %p220 = por %p218, %p219
      %p221 = scmp.ne.s32.totalorder %s209, %s210
      %p222 = scmp.eq.s32.totalorder %s116, 1
      %p223 = por %p221, %p222
      %p225 = scmp.ne.s32.totalorder %s210, %s224
      %p226 = scmp.eq.s32.totalorder %s116, 0
      %p227 = por %p225, %p226
      %s229 = sadd.s32 %s228, 1
      %p232 = scmp.eq.s32.totalorder %s110, 1
      %p233 = scmp.ne.s32.totalorder %s228, %s230
      %p234 = scmp.eq.s32.totalorder %s110, 0
      %p235 = por %p233, %p234
      %p236 = scmp.ne.s32.totalorder %s228, %s230
      %p237 = scmp.eq.s32.totalorder %s115, 1
      %p238 = por %p236, %p237
      %p239 = scmp.ne.s32.totalorder %s230, %s231
      %p240 = scmp.eq.s32.totalorder %s115, 0
      %p241 = por %p239, %p240
      %p242 = scmp.ne.s32.totalorder %s230, %s231
      %p243 = scmp.eq.s32.totalorder %s116, 1
      %p244 = por %p242, %p243
      %p246 = scmp.ne.s32.totalorder %s231, %s245
      %p247 = scmp.eq.s32.totalorder %s116, 0
      %p248 = por %p246, %p247
      %s250 = sadd.s32 %s249, 1
      %p253 = scmp.eq.s32.totalorder %s110, 1
      %p254 = scmp.ne.s32.totalorder %s249, %s251
      %p255 = scmp.eq.s32.totalorder %s110, 0
      %p256 = por %p254, %p255
      %p257 = scmp.ne.s32.totalorder %s249, %s251
      %p258 = scmp.eq.s32.totalorder %s115, 1
      %p259 = por %p257, %p258
      %p260 = scmp.ne.s32.totalorder %s251, %s252
      %p261 = scmp.eq.s32.totalorder %s115, 0
      %p262 = por %p260, %p261
      %p263 = scmp.ne.s32.totalorder %s251, %s252
      %p264 = scmp.eq.s32.totalorder %s116, 1
      %p265 = por %p263, %p264
      %p267 = scmp.ne.s32.totalorder %s252, %s266
      %p268 = scmp.eq.s32.totalorder %s116, 0
      %p269 = por %p267, %p268
      %s271 = sadd.s32 %s270, 1
      %p274 = scmp.eq.s32.totalorder %s110, 1
      %p275 = scmp.ne.s32.totalorder %s270, %s272
      %p276 = scmp.eq.s32.totalorder %s110, 0
      %p277 = por %p275, %p276
      %p278 = scmp.ne.s32.totalorder %s270, %s272
      %p279 = scmp.eq.s32.totalorder %s115, 1
      %p280 = por %p278, %p279
      %p281 = scmp.ne.s32.totalorder %s272, %s273
      %p282 = scmp.eq.s32.totalorder %s115, 0
      %p283 = por %p281, %p282
      %p284 = scmp.ne.s32.totalorder %s272, %s273
      %p285 = scmp.eq.s32.totalorder %s116, 1
      %p286 = por %p284, %p285
      %p288 = scmp.ne.s32.totalorder %s273, %s287
      %p289 = scmp.eq.s32.totalorder %s116, 0
      %p290 = por %p288, %p289
      %s292 = sadd.s32 %s291, 1
      %p295 = scmp.eq.s32.totalorder %s110, 1
      %p296 = scmp.ne.s32.totalorder %s291, %s293
      %p297 = scmp.eq.s32.totalorder %s110, 0
      %p298 = por %p296, %p297
      %p299 = scmp.ne.s32.totalorder %s291, %s293
      %p300 = scmp.eq.s32.totalorder %s115, 1
      %p301 = por %p299, %p300
      %p302 = scmp.ne.s32.totalorder %s293, %s294
      %p303 = scmp.eq.s32.totalorder %s115, 0
      %p304 = por %p302, %p303
      %p305 = scmp.ne.s32.totalorder %s293, %s294
      %p306 = scmp.eq.s32.totalorder %s116, 1
      %p307 = por %p305, %p306
      %p309 = scmp.ne.s32.totalorder %s294, %s308
      %p310 = scmp.eq.s32.totalorder %s116, 0
      %p311 = por %p309, %p310
      %s313 = sadd.s32 %s312, 1
      %p316 = scmp.eq.s32.totalorder %s110, 1
      %p317 = scmp.ne.s32.totalorder %s312, %s314
      %p318 = scmp.eq.s32.totalorder %s110, 0
      %p319 = por %p317, %p318
      %p320 = scmp.ne.s32.totalorder %s312, %s314
      %p321 = scmp.eq.s32.totalorder %s115, 1
      %p322 = por %p320, %p321
      %p323 = scmp.ne.s32.totalorder %s314, %s315
      %p324 = scmp.eq.s32.totalorder %s115, 0
      %p325 = por %p323, %p324
      %p326 = scmp.ne.s32.totalorder %s314, %s315
      %p327 = scmp.eq.s32.totalorder %s116, 1
      %p328 = por %p326, %p327
      %p330 = scmp.ne.s32.totalorder %s315, %s329
      %p331 = scmp.eq.s32.totalorder %s116, 0
      %p332 = por %p330, %p331
      %s334 = sadd.s32 %s333, 1
      %p337 = scmp.eq.s32.totalorder %s110, 1
      %p338 = scmp.ne.s32.totalorder %s333, %s335
      %p339 = scmp.eq.s32.totalorder %s110, 0
      %p340 = por %p338, %p339
      %p341 = scmp.ne.s32.totalorder %s333, %s335
      %p342 = scmp.eq.s32.totalorder %s115, 1
      %p343 = por %p341, %p342
      %p344 = scmp.ne.s32.totalorder %s335, %s336
      %p345 = scmp.eq.s32.totalorder %s115, 0
      %p346 = por %p344, %p345
      %p347 = scmp.ne.s32.totalorder %s335, %s336
      %p348 = scmp.eq.s32.totalorder %s116, 1
      %p349 = por %p347, %p348
      %p351 = scmp.ne.s32.totalorder %s336, %s350
      %p352 = scmp.eq.s32.totalorder %s116, 0
      %p353 = por %p351, %p352
      %s355 = sadd.s32 %s354, 1
      %p358 = scmp.eq.s32.totalorder %s110, 1
      %p359 = scmp.ne.s32.totalorder %s354, %s356
      %p360 = scmp.eq.s32.totalorder %s110, 0
      %p361 = por %p359, %p360
      %p362 = scmp.ne.s32.totalorder %s354, %s356
      %p363 = scmp.eq.s32.totalorder %s115, 1
      %p364 = por %p362, %p363
      %p365 = scmp.ne.s32.totalorder %s356, %s357
      %p366 = scmp.eq.s32.totalorder %s115, 0
      %p367 = por %p365, %p366
      %p368 = scmp.ne.s32.totalorder %s356, %s357
      %p369 = scmp.eq.s32.totalorder %s116, 1
      %p370 = por %p368, %p369
      %p372 = scmp.ne.s32.totalorder %s357, %s371
      %p373 = scmp.eq.s32.totalorder %s116, 0
      %p374 = por %p372, %p373
      %s376 = sadd.s32 %s375, 1
      %p379 = scmp.eq.s32.totalorder %s110, 1
      %p380 = scmp.ne.s32.totalorder %s375, %s377
      %p381 = scmp.eq.s32.totalorder %s110, 0
      %p382 = por %p380, %p381
      %p383 = scmp.ne.s32.totalorder %s375, %s377
      %p384 = scmp.eq.s32.totalorder %s115, 1
      %p385 = por %p383, %p384
      %p386 = scmp.ne.s32.totalorder %s377, %s378
      %p387 = scmp.eq.s32.totalorder %s115, 0
      %p388 = por %p386, %p387
      %p389 = scmp.ne.s32.totalorder %s377, %s378
      %p390 = scmp.eq.s32.totalorder %s116, 1
      %p391 = por %p389, %p390
      %p393 = scmp.ne.s32.totalorder %s378, %s392
      %p394 = scmp.eq.s32.totalorder %s116, 0
      %p395 = por %p393, %p394
      %s397 = sadd.s32 %s396, 1
      %p400 = scmp.eq.s32.totalorder %s110, 1
      %p401 = scmp.ne.s32.totalorder %s396, %s398
      %p402 = scmp.eq.s32.totalorder %s110, 0
      %p403 = por %p401, %p402
      %p404 = scmp.ne.s32.totalorder %s396, %s398
      %p405 = scmp.eq.s32.totalorder %s115, 1
      %p406 = por %p404, %p405
      %p407 = scmp.ne.s32.totalorder %s398, %s399
      %p408 = scmp.eq.s32.totalorder %s115, 0
      %p409 = por %p407, %p408
      %p410 = scmp.ne.s32.totalorder %s398, %s399
      %p411 = scmp.eq.s32.totalorder %s116, 1
      %p412 = por %p410, %p411
      %p414 = scmp.ne.s32.totalorder %s399, %s413
      %p415 = scmp.eq.s32.totalorder %s116, 0
      %p416 = por %p414, %p415
      %s418 = sadd.s32 %s417, 1
      %p421 = scmp.eq.s32.totalorder %s110, 1
      %p422 = scmp.ne.s32.totalorder %s417, %s419
      %p423 = scmp.eq.s32.totalorder %s110, 0
      %p424 = por %p422, %p423
      %p425 = scmp.ne.s32.totalorder %s417, %s419
      %p426 = scmp.eq.s32.totalorder %s115, 1
      %p427 = por %p425, %p426
      %p428 = scmp.ne.s32.totalorder %s419, %s420
      %p429 = scmp.eq.s32.totalorder %s115, 0
      %p430 = por %p428, %p429
      %p431 = scmp.ne.s32.totalorder %s419, %s420
      %p432 = scmp.eq.s32.totalorder %s116, 1
      %p433 = por %p431, %p432
      %p435 = scmp.ne.s32.totalorder %s420, %s434
      %p436 = scmp.eq.s32.totalorder %s116, 0
      %p437 = por %p435, %p436
      %s439 = sadd.s32 %s438, 1
      %p442 = scmp.eq.s32.totalorder %s110, 1
      %p443 = scmp.ne.s32.totalorder %s438, %s440
      %p444 = scmp.eq.s32.totalorder %s110, 0
      %p445 = por %p443, %p444
      %p446 = scmp.ne.s32.totalorder %s438, %s440
      %p447 = scmp.eq.s32.totalorder %s115, 1
      %p448 = por %p446, %p447
      %p449 = scmp.ne.s32.totalorder %s440, %s441
      %p450 = scmp.eq.s32.totalorder %s115, 0
      %p451 = por %p449, %p450
      %p452 = scmp.ne.s32.totalorder %s440, %s441
      %p453 = scmp.eq.s32.totalorder %s116, 1
      %p454 = por %p452, %p453
      %p456 = scmp.ne.s32.totalorder %s441, %s455
      %p457 = scmp.eq.s32.totalorder %s116, 0
      %p458 = por %p456, %p457
      %s460 = sadd.s32 %s459, 1
      %p463 = scmp.eq.s32.totalorder %s110, 1
      %p464 = scmp.ne.s32.totalorder %s459, %s461
      %p465 = scmp.eq.s32.totalorder %s110, 0
      %p466 = por %p464, %p465
      %p467 = scmp.ne.s32.totalorder %s459, %s461
      %p468 = scmp.eq.s32.totalorder %s115, 1
      %p469 = por %p467, %p468
      %p470 = scmp.ne.s32.totalorder %s461, %s462
      %p471 = scmp.eq.s32.totalorder %s115, 0
      %p472 = por %p470, %p471
      %p473 = scmp.ne.s32.totalorder %s461, %s462
      %p474 = scmp.eq.s32.totalorder %s116, 1
      %p475 = por %p473, %p474
      %p477 = scmp.ne.s32.totalorder %s462, %s476
      %p478 = scmp.eq.s32.totalorder %s116, 0
      %p479 = por %p477, %p478
      %s481 = sadd.s32 %s480, 1
      %p484 = scmp.eq.s32.totalorder %s110, 1
      %p485 = scmp.ne.s32.totalorder %s480, %s482
      %p486 = scmp.eq.s32.totalorder %s110, 0
      %p487 = por %p485, %p486
      %p488 = scmp.ne.s32.totalorder %s480, %s482
      %p489 = scmp.eq.s32.totalorder %s115, 1
      %p490 = por %p488, %p489
      %p491 = scmp.ne.s32.totalorder %s482, %s483
      %p492 = scmp.eq.s32.totalorder %s115, 0
      %p493 = por %p491, %p492
      %p494 = scmp.ne.s32.totalorder %s482, %s483
      %p495 = scmp.eq.s32.totalorder %s116, 1
      %p496 = por %p494, %p495
      %p498 = scmp.ne.s32.totalorder %s483, %s497
      %p499 = scmp.eq.s32.totalorder %s116, 0
      %p500 = por %p498, %p499
      %s502 = sadd.s32 %s501, 1
      %p505 = scmp.eq.s32.totalorder %s110, 1
      %p506 = scmp.ne.s32.totalorder %s501, %s503
      %p507 = scmp.eq.s32.totalorder %s110, 0
      %p508 = por %p506, %p507
      %p509 = scmp.ne.s32.totalorder %s501, %s503
      %p510 = scmp.eq.s32.totalorder %s115, 1
      %p511 = por %p509, %p510
      %p512 = scmp.ne.s32.totalorder %s503, %s504
      %p513 = scmp.eq.s32.totalorder %s115, 0
      %p514 = por %p512, %p513
      %p515 = scmp.ne.s32.totalorder %s503, %s504
      %p516 = scmp.eq.s32.totalorder %s116, 1
      %p517 = por %p515, %p516
      %p519 = scmp.ne.s32.totalorder %s504, %s518
      %p520 = scmp.eq.s32.totalorder %s116, 0
      %p521 = por %p519, %p520
      %s523 = sadd.s32 %s522, 1
      %p526 = scmp.eq.s32.totalorder %s110, 1
      %p527 = scmp.ne.s32.totalorder %s522, %s524
      %p528 = scmp.eq.s32.totalorder %s110, 0
      %p529 = por %p527, %p528
      %p530 = scmp.ne.s32.totalorder %s522, %s524
      %p531 = scmp.eq.s32.totalorder %s115, 1
      %p532 = por %p530, %p531
      %p533 = scmp.ne.s32.totalorder %s524, %s525
      %p534 = scmp.eq.s32.totalorder %s115, 0
      %p535 = por %p533, %p534
      %p536 = scmp.ne.s32.totalorder %s524, %s525
      %p537 = scmp.eq.s32.totalorder %s116, 1
      %p538 = por %p536, %p537
      %p540 = scmp.ne.s32.totalorder %s525, %s539
      %p541 = scmp.eq.s32.totalorder %s116, 0
      %p542 = por %p540, %p541
      %s544 = sadd.s32 %s543, 1
      %p547 = scmp.eq.s32.totalorder %s110, 1
      %p548 = scmp.ne.s32.totalorder %s543, %s545
      %p549 = scmp.eq.s32.totalorder %s110, 0
      %p550 = por %p548, %p549
      %p551 = scmp.ne.s32.totalorder %s543, %s545
      %p552 = scmp.eq.s32.totalorder %s115, 1
      %p553 = por %p551, %p552
      %p554 = scmp.ne.s32.totalorder %s545, %s546
      %p555 = scmp.eq.s32.totalorder %s115, 0
      %p556 = por %p554, %p555
      %p557 = scmp.ne.s32.totalorder %s545, %s546
      %p558 = scmp.eq.s32.totalorder %s116, 1
      %p559 = por %p557, %p558
      %p561 = scmp.ne.s32.totalorder %s546, %s560
      %p562 = scmp.eq.s32.totalorder %s116, 0
      %p563 = por %p561, %p562
      %s565 = sadd.s32 %s564, 1
      %p568 = scmp.eq.s32.totalorder %s110, 1
      %p569 = scmp.ne.s32.totalorder %s564, %s566
      %p570 = scmp.eq.s32.totalorder %s110, 0
      %p571 = por %p569, %p570
      %p572 = scmp.ne.s32.totalorder %s564, %s566
      %p573 = scmp.eq.s32.totalorder %s115, 1
      %p574 = por %p572, %p573
      %p575 = scmp.ne.s32.totalorder %s566, %s567
      %p576 = scmp.eq.s32.totalorder %s115, 0
      %p577 = por %p575, %p576
      %p578 = scmp.ne.s32.totalorder %s566, %s567
      %p579 = scmp.eq.s32.totalorder %s116, 1
      %p580 = por %p578, %p579
      %p582 = scmp.ne.s32.totalorder %s567, %s581
      %p583 = scmp.eq.s32.totalorder %s116, 0
      %p584 = por %p582, %p583
      %s586 = sadd.s32 %s585, 1
      %p589 = scmp.eq.s32.totalorder %s110, 1
      %p590 = scmp.ne.s32.totalorder %s585, %s587
      %p591 = scmp.eq.s32.totalorder %s110, 0
      %p592 = por %p590, %p591
      %p593 = scmp.ne.s32.totalorder %s585, %s587
      %p594 = scmp.eq.s32.totalorder %s115, 1
      %p595 = por %p593, %p594
      %p596 = scmp.ne.s32.totalorder %s587, %s588
      %p597 = scmp.eq.s32.totalorder %s115, 0
      %p598 = por %p596, %p597
      %p599 = scmp.ne.s32.totalorder %s587, %s588
      %p600 = scmp.eq.s32.totalorder %s116, 1
      %p601 = por %p599, %p600
      %p603 = scmp.ne.s32.totalorder %s588, %s602
      %p604 = scmp.eq.s32.totalorder %s116, 0
      %p605 = por %p603, %p604
      %s607 = sadd.s32 %s606, 1
      %p610 = scmp.eq.s32.totalorder %s110, 1
      %p611 = scmp.ne.s32.totalorder %s606, %s608
      %p612 = scmp.eq.s32.totalorder %s110, 0
      %p613 = por %p611, %p612
      %p614 = scmp.ne.s32.totalorder %s606, %s608
      %p615 = scmp.eq.s32.totalorder %s115, 1
      %p616 = por %p614, %p615
      %p617 = scmp.ne.s32.totalorder %s608, %s609
      %p618 = scmp.eq.s32.totalorder %s115, 0
      %p619 = por %p617, %p618
      %p620 = scmp.ne.s32.totalorder %s608, %s609
      %p621 = scmp.eq.s32.totalorder %s116, 1
      %p622 = por %p620, %p621
      %p624 = scmp.ne.s32.totalorder %s609, %s623
      %p625 = scmp.eq.s32.totalorder %s116, 0
      %p626 = por %p624, %p625
      %s628 = sadd.s32 %s627, 1
      %p631 = scmp.eq.s32.totalorder %s110, 1
      %p632 = scmp.ne.s32.totalorder %s627, %s629
      %p633 = scmp.eq.s32.totalorder %s110, 0
      %p634 = por %p632, %p633
      %p635 = scmp.ne.s32.totalorder %s627, %s629
      %p636 = scmp.eq.s32.totalorder %s115, 1
      %p637 = por %p635, %p636
      %p638 = scmp.ne.s32.totalorder %s629, %s630
      %p639 = scmp.eq.s32.totalorder %s115, 0
      %p640 = por %p638, %p639
      %p641 = scmp.ne.s32.totalorder %s629, %s630
      %p642 = scmp.eq.s32.totalorder %s116, 1
      %p643 = por %p641, %p642
      %p645 = scmp.ne.s32.totalorder %s630, %s644
      %p646 = scmp.eq.s32.totalorder %s116, 0
      %p647 = por %p645, %p646
      %s649 = sadd.s32 %s648, 1
      %p652 = scmp.eq.s32.totalorder %s110, 1
      %p653 = scmp.ne.s32.totalorder %s648, %s650
      %p654 = scmp.eq.s32.totalorder %s110, 0
      %p655 = por %p653, %p654
      %p656 = scmp.ne.s32.totalorder %s648, %s650
      %p657 = scmp.eq.s32.totalorder %s115, 1
      %p658 = por %p656, %p657
      %p659 = scmp.ne.s32.totalorder %s650, %s651
      %p660 = scmp.eq.s32.totalorder %s115, 0
      %p661 = por %p659, %p660
      %p662 = scmp.ne.s32.totalorder %s650, %s651
      %p663 = scmp.eq.s32.totalorder %s116, 1
      %p664 = por %p662, %p663
      %p666 = scmp.ne.s32.totalorder %s651, %s665
      %p667 = scmp.eq.s32.totalorder %s116, 0
      %p668 = por %p666, %p667
      %s670 = sadd.s32 %s669, 1
      %p673 = scmp.eq.s32.totalorder %s110, 1
      %p674 = scmp.ne.s32.totalorder %s669, %s671
      %p675 = scmp.eq.s32.totalorder %s110, 0
      %p676 = por %p674, %p675
      %p677 = scmp.ne.s32.totalorder %s669, %s671
      %p678 = scmp.eq.s32.totalorder %s115, 1
      %p679 = por %p677, %p678
      %p680 = scmp.ne.s32.totalorder %s671, %s672
      %p681 = scmp.eq.s32.totalorder %s115, 0
      %p682 = por %p680, %p681
      %p683 = scmp.ne.s32.totalorder %s671, %s672
      %p684 = scmp.eq.s32.totalorder %s116, 1
      %p685 = por %p683, %p684
      %p687 = scmp.ne.s32.totalorder %s672, %s686
      %p688 = scmp.eq.s32.totalorder %s116, 0
      %p689 = por %p687, %p688
      %s691 = sadd.s32 %s690, 1
      %p694 = scmp.eq.s32.totalorder %s110, 1
      %p695 = scmp.ne.s32.totalorder %s690, %s692
      %p696 = scmp.eq.s32.totalorder %s110, 0
      %p697 = por %p695, %p696
      %p698 = scmp.ne.s32.totalorder %s690, %s692
      %p699 = scmp.eq.s32.totalorder %s115, 1
      %p700 = por %p698, %p699
      %p701 = scmp.ne.s32.totalorder %s692, %s693
      %p702 = scmp.eq.s32.totalorder %s115, 0
      %p703 = por %p701, %p702
      %p704 = scmp.ne.s32.totalorder %s692, %s693
      %p705 = scmp.eq.s32.totalorder %s116, 1
      %p706 = por %p704, %p705
      %p708 = scmp.ne.s32.totalorder %s693, %s707
      %p709 = scmp.eq.s32.totalorder %s116, 0
      %p710 = por %p708, %p709
      %s712 = sadd.s32 %s711, 1
      %p715 = scmp.eq.s32.totalorder %s110, 1
      %p716 = scmp.ne.s32.totalorder %s711, %s713
      %p717 = scmp.eq.s32.totalorder %s110, 0
      %p718 = por %p716, %p717
      %p719 = scmp.ne.s32.totalorder %s711, %s713
      %p720 = scmp.eq.s32.totalorder %s115, 1
      %p721 = por %p719, %p720
      %p722 = scmp.ne.s32.totalorder %s713, %s714
      %p723 = scmp.eq.s32.totalorder %s115, 0
      %p724 = por %p722, %p723
      %p725 = scmp.ne.s32.totalorder %s713, %s714
      %p726 = scmp.eq.s32.totalorder %s116, 1
      %p727 = por %p725, %p726
      %p729 = scmp.ne.s32.totalorder %s714, %s728
      %p730 = scmp.eq.s32.totalorder %s116, 0
      %p731 = por %p729, %p730
      %s733 = sadd.s32 %s732, 1
      %p736 = scmp.eq.s32.totalorder %s110, 1
      %p737 = scmp.ne.s32.totalorder %s732, %s734
      %p738 = scmp.eq.s32.totalorder %s110, 0
      %p739 = por %p737, %p738
      %p740 = scmp.ne.s32.totalorder %s732, %s734
      %p741 = scmp.eq.s32.totalorder %s115, 1
      %p742 = por %p740, %p741
      %p743 = scmp.ne.s32.totalorder %s734, %s735
      %p744 = scmp.eq.s32.totalorder %s115, 0
      %p745 = por %p743, %p744
      %p746 = scmp.ne.s32.totalorder %s734, %s735
      %p747 = scmp.eq.s32.totalorder %s116, 1
      %p748 = por %p746, %p747
      %p750 = scmp.ne.s32.totalorder %s735, %s749
      %p751 = scmp.eq.s32.totalorder %s116, 0
      %p752 = por %p750, %p751
      %s754 = sadd.s32 %s753, 1
      %p757 = scmp.eq.s32.totalorder %s110, 1
      %p758 = scmp.ne.s32.totalorder %s753, %s755
      %p759 = scmp.eq.s32.totalorder %s110, 0
      %p760 = por %p758, %p759
      %p761 = scmp.ne.s32.totalorder %s753, %s755
      %p762 = scmp.eq.s32.totalorder %s115, 1
      %p763 = por %p761, %p762
      %p764 = scmp.ne.s32.totalorder %s755, %s756
      %p765 = scmp.eq.s32.totalorder %s115, 0
      %p766 = por %p764, %p765
      %p767 = scmp.ne.s32.totalorder %s755, %s756
      %p768 = scmp.eq.s32.totalorder %s116, 1
      %p769 = por %p767, %p768
      %p771 = scmp.ne.s32.totalorder %s756, %s770
      %p772 = scmp.eq.s32.totalorder %s116, 0
      %p773 = por %p771, %p772
      %s775 = sadd.s32 %s774, 1
      %p778 = scmp.eq.s32.totalorder %s110, 1
      %p779 = scmp.ne.s32.totalorder %s774, %s776
      %p780 = scmp.eq.s32.totalorder %s110, 0
      %p781 = por %p779, %p780
      %p782 = scmp.ne.s32.totalorder %s774, %s776
      %p783 = scmp.eq.s32.totalorder %s115, 1
      %p784 = por %p782, %p783
      %p785 = scmp.ne.s32.totalorder %s776, %s777
      %p786 = scmp.eq.s32.totalorder %s115, 0
      %p787 = por %p785, %p786
      %p788 = scmp.ne.s32.totalorder %s776, %s777
      %p789 = scmp.eq.s32.totalorder %s116, 1
      %p790 = por %p788, %p789
      %p792 = scmp.ne.s32.totalorder %s777, %s791
      %p793 = scmp.eq.s32.totalorder %s116, 0
      %p794 = por %p792, %p793
      %s796 = sadd.s32 %s795, 1
      %p799 = scmp.eq.s32.totalorder %s110, 1
      %p800 = scmp.ne.s32.totalorder %s795, %s797
      %p801 = scmp.eq.s32.totalorder %s110, 0
      %p802 = por %p800, %p801
      %p803 = scmp.ne.s32.totalorder %s795, %s797
      %p804 = scmp.eq.s32.totalorder %s115, 1
      %p805 = por %p803, %p804
      %p806 = scmp.ne.s32.totalorder %s797, %s798
      %p807 = scmp.eq.s32.totalorder %s115, 0
      %p808 = por %p806, %p807
      %p809 = scmp.ne.s32.totalorder %s797, %s798
      %p810 = scmp.eq.s32.totalorder %s116, 1
      %p811 = por %p809, %p810
      %p813 = scmp.ne.s32.totalorder %s798, %s812
      %p814 = scmp.eq.s32.totalorder %s116, 0
      %p815 = por %p813, %p814
      %s817 = sadd.s32 %s816, 1
      %p820 = scmp.eq.s32.totalorder %s110, 1
      %p821 = scmp.ne.s32.totalorder %s816, %s818
      %p822 = scmp.eq.s32.totalorder %s110, 0
      %p823 = por %p821, %p822
      %p824 = scmp.ne.s32.totalorder %s816, %s818
      %p825 = scmp.eq.s32.totalorder %s115, 1
      %p826 = por %p824, %p825
      %p827 = scmp.ne.s32.totalorder %s818, %s819
      %p828 = scmp.eq.s32.totalorder %s115, 0
      %p829 = por %p827, %p828
      %p830 = scmp.ne.s32.totalorder %s818, %s819
      %p831 = scmp.eq.s32.totalorder %s116, 1
      %p832 = por %p830, %p831
      %p834 = scmp.ne.s32.totalorder %s819, %s833
      %p835 = scmp.eq.s32.totalorder %s116, 0
      %p836 = por %p834, %p835
      %s838 = sadd.s32 %s837, 1
      %p841 = scmp.eq.s32.totalorder %s110, 1
      %p842 = scmp.ne.s32.totalorder %s837, %s839
      %p843 = scmp.eq.s32.totalorder %s110, 0
      %p844 = por %p842, %p843
      %p845 = scmp.ne.s32.totalorder %s837, %s839
      %p846 = scmp.eq.s32.totalorder %s115, 1
      %p847 = por %p845, %p846
      %p848 = scmp.ne.s32.totalorder %s839, %s840
      %p849 = scmp.eq.s32.totalorder %s115, 0
      %p850 = por %p848, %p849
      %p851 = scmp.ne.s32.totalorder %s839, %s840
      %p852 = scmp.eq.s32.totalorder %s116, 1
      %p853 = por %p851, %p852
      %p855 = scmp.ne.s32.totalorder %s840, %s854
      %p856 = scmp.eq.s32.totalorder %s116, 0
      %p857 = por %p855, %p856
      %s859 = sadd.s32 %s858, 1
      %p862 = scmp.eq.s32.totalorder %s110, 1
      %p863 = scmp.ne.s32.totalorder %s858, %s860
      %p864 = scmp.eq.s32.totalorder %s110, 0
      %p865 = por %p863, %p864
      %p866 = scmp.ne.s32.totalorder %s858, %s860
      %p867 = scmp.eq.s32.totalorder %s115, 1
      %p868 = por %p866, %p867
      %p869 = scmp.ne.s32.totalorder %s860, %s861
      %p870 = scmp.eq.s32.totalorder %s115, 0
      %p871 = por %p869, %p870
      %p872 = scmp.ne.s32.totalorder %s860, %s861
      %p873 = scmp.eq.s32.totalorder %s116, 1
      %p874 = por %p872, %p873
      %p876 = scmp.ne.s32.totalorder %s861, %s875
      %p877 = scmp.eq.s32.totalorder %s116, 0
      %p878 = por %p876, %p877
      %s880 = sadd.s32 %s879, 1
      %p883 = scmp.eq.s32.totalorder %s110, 1
      %p884 = scmp.ne.s32.totalorder %s879, %s881
      %p885 = scmp.eq.s32.totalorder %s110, 0
      %p886 = por %p884, %p885
      %p887 = scmp.ne.s32.totalorder %s879, %s881
      %p888 = scmp.eq.s32.totalorder %s115, 1
      %p889 = por %p887, %p888
      %p890 = scmp.ne.s32.totalorder %s881, %s882
      %p891 = scmp.eq.s32.totalorder %s115, 0
      %p892 = por %p890, %p891
      %p893 = scmp.ne.s32.totalorder %s881, %s882
      %p894 = scmp.eq.s32.totalorder %s116, 1
      %p895 = por %p893, %p894
      %p897 = scmp.ne.s32.totalorder %s882, %s896
      %p898 = scmp.eq.s32.totalorder %s116, 0
      %p899 = por %p897, %p898
      %s901 = sadd.s32 %s900, 1
      %p904 = scmp.eq.s32.totalorder %s110, 1
      %p905 = scmp.ne.s32.totalorder %s900, %s902
      %p906 = scmp.eq.s32.totalorder %s110, 0
      %p907 = por %p905, %p906
      %p908 = scmp.ne.s32.totalorder %s900, %s902
      %p909 = scmp.eq.s32.totalorder %s115, 1
      %p910 = por %p908, %p909
      %p911 = scmp.ne.s32.totalorder %s902, %s903
      %p912 = scmp.eq.s32.totalorder %s115, 0
      %p913 = por %p911, %p912
      %p914 = scmp.ne.s32.totalorder %s902, %s903
      %p915 = scmp.eq.s32.totalorder %s116, 1
      %p916 = por %p914, %p915
      %p918 = scmp.ne.s32.totalorder %s903, %s917
      %p919 = scmp.eq.s32.totalorder %s116, 0
      %p920 = por %p918, %p919
      %s922 = sadd.s32 %s921, 1
      %p925 = scmp.eq.s32.totalorder %s110, 1
      %p926 = scmp.ne.s32.totalorder %s921, %s923
      %p927 = scmp.eq.s32.totalorder %s110, 0
      %p928 = por %p926, %p927
      %p929 = scmp.ne.s32.totalorder %s921, %s923
      %p930 = scmp.eq.s32.totalorder %s115, 1
      %p931 = por %p929, %p930
      %p932 = scmp.ne.s32.totalorder %s923, %s924
      %p933 = scmp.eq.s32.totalorder %s115, 0
      %p934 = por %p932, %p933
      %p935 = scmp.ne.s32.totalorder %s923, %s924
      %p936 = scmp.eq.s32.totalorder %s116, 1
      %p937 = por %p935, %p936
      %p939 = scmp.ne.s32.totalorder %s924, %s938
      %p940 = scmp.eq.s32.totalorder %s116, 0
      %p941 = por %p939, %p940
      %s943 = sadd.s32 %s942, 1
      %p946 = scmp.eq.s32.totalorder %s110, 1
      %p947 = scmp.ne.s32.totalorder %s942, %s944
      %p948 = scmp.eq.s32.totalorder %s110, 0
      %p949 = por %p947, %p948
      %p950 = scmp.ne.s32.totalorder %s942, %s944
      %p951 = scmp.eq.s32.totalorder %s115, 1
      %p952 = por %p950, %p951
      %p953 = scmp.ne.s32.totalorder %s944, %s945
      %p954 = scmp.eq.s32.totalorder %s115, 0
      %p955 = por %p953, %p954
      %p956 = scmp.ne.s32.totalorder %s944, %s945
      %p957 = scmp.eq.s32.totalorder %s116, 1
      %p958 = por %p956, %p957
      %p960 = scmp.ne.s32.totalorder %s945, %s959
      %p961 = scmp.eq.s32.totalorder %s116, 0
      %p962 = por %p960, %p961
      %s964 = sadd.s32 %s963, 1
      %p967 = scmp.eq.s32.totalorder %s110, 1
      %p968 = scmp.ne.s32.totalorder %s963, %s965
      %p969 = scmp.eq.s32.totalorder %s110, 0
      %p970 = por %p968, %p969
      %p971 = scmp.ne.s32.totalorder %s963, %s965
      %p972 = scmp.eq.s32.totalorder %s115, 1
      %p973 = por %p971, %p972
      %p974 = scmp.ne.s32.totalorder %s965, %s966
      %p975 = scmp.eq.s32.totalorder %s115, 0
      %p976 = por %p974, %p975
      %p977 = scmp.ne.s32.totalorder %s965, %s966
      %p978 = scmp.eq.s32.totalorder %s116, 1
      %p979 = por %p977, %p978
      %p981 = scmp.ne.s32.totalorder %s966, %s980
      %p982 = scmp.eq.s32.totalorder %s116, 0
      %p983 = por %p981, %p982
      %s985 = sadd.s32 %s984, 1
      %p988 = scmp.eq.s32.totalorder %s110, 1
      %p989 = scmp.ne.s32.totalorder %s984, %s986
      %p990 = scmp.eq.s32.totalorder %s110, 0
      %p991 = por %p989, %p990
      %p992 = scmp.ne.s32.totalorder %s984, %s986
      %p993 = scmp.eq.s32.totalorder %s115, 1
      %p994 = por %p992, %p993
      %p995 = scmp.ne.s32.totalorder %s986, %s987
      %p996 = scmp.eq.s32.totalorder %s115, 0
      %p997 = por %p995, %p996
      %p998 = scmp.ne.s32.totalorder %s986, %s987
      %p999 = scmp.eq.s32.totalorder %s116, 1
      %p1000 = por %p998, %p999
      %p1002 = scmp.ne.s32.totalorder %s987, %s1001
      %p1003 = scmp.eq.s32.totalorder %s116, 0
      %p1004 = por %p1002, %p1003
      %s1006 = sadd.s32 %s1005, 1
      %p1009 = scmp.eq.s32.totalorder %s110, 1
      %p1010 = scmp.ne.s32.totalorder %s1005, %s1007
      %p1011 = scmp.eq.s32.totalorder %s110, 0
      %p1012 = por %p1010, %p1011
      %p1013 = scmp.ne.s32.totalorder %s1005, %s1007
      %p1014 = scmp.eq.s32.totalorder %s115, 1
      %p1015 = por %p1013, %p1014
      %p1016 = scmp.ne.s32.totalorder %s1007, %s1008
      %p1017 = scmp.eq.s32.totalorder %s115, 0
      %p1018 = por %p1016, %p1017
      %p1019 = scmp.ne.s32.totalorder %s1007, %s1008
      %p1020 = scmp.eq.s32.totalorder %s116, 1
      %p1021 = por %p1019, %p1020
      %p1023 = scmp.ne.s32.totalorder %s1008, %s1022
      %p1024 = scmp.eq.s32.totalorder %s116, 0
      %p1025 = por %p1023, %p1024
      %s1027 = sadd.s32 %s1026, 1
      %p1030 = scmp.eq.s32.totalorder %s110, 1
      %p1031 = scmp.ne.s32.totalorder %s1026, %s1028
      %p1032 = scmp.eq.s32.totalorder %s110, 0
      %p1033 = por %p1031, %p1032
      %p1034 = scmp.ne.s32.totalorder %s1026, %s1028
      %p1035 = scmp.eq.s32.totalorder %s115, 1
      %p1036 = por %p1034, %p1035
      %p1037 = scmp.ne.s32.totalorder %s1028, %s1029
      %p1038 = scmp.eq.s32.totalorder %s115, 0
      %p1039 = por %p1037, %p1038
      %p1040 = scmp.ne.s32.totalorder %s1028, %s1029
      %p1041 = scmp.eq.s32.totalorder %s116, 1
      %p1042 = por %p1040, %p1041
      %p1044 = scmp.ne.s32.totalorder %s1029, %s1043
      %p1045 = scmp.eq.s32.totalorder %s116, 0
      %p1046 = por %p1044, %p1045
      %s1048 = sadd.s32 %s1047, 1
      %p1051 = scmp.eq.s32.totalorder %s110, 1
      %p1052 = scmp.ne.s32.totalorder %s1047, %s1049
      %p1053 = scmp.eq.s32.totalorder %s110, 0
      %p1054 = por %p1052, %p1053
      %p1055 = scmp.ne.s32.totalorder %s1047, %s1049
      %p1056 = scmp.eq.s32.totalorder %s115, 1
      %p1057 = por %p1055, %p1056
      %p1058 = scmp.ne.s32.totalorder %s1049, %s1050
      %p1059 = scmp.eq.s32.totalorder %s115, 0
      %p1060 = por %p1058, %p1059
      %p1061 = scmp.ne.s32.totalorder %s1049, %s1050
      %p1062 = scmp.eq.s32.totalorder %s116, 1
      %p1063 = por %p1061, %p1062
      %p1065 = scmp.ne.s32.totalorder %s1050, %s1064
      %p1066 = scmp.eq.s32.totalorder %s116, 0
      %p1067 = por %p1065, %p1066
      %s1068 = ssub.s32 %s110, %s117
      %p1069 = scmp.eq.s32.totalorder %s1068, 0
      %s1071 = sadd.s32 %s1070, 1
      %s1072 = scalar_select %p1069, %s1070, %s1071
      %p1075 = pneg %p1069
      %p1076 = scmp.eq.s32.totalorder %s110, 1
      %p1077 = por %p1075, %p1076
      %p1078 = scmp.ne.s32.totalorder %s1070, %s1073
      %p1079 = scmp.eq.s32.totalorder %s110, 0
      %p1080 = por %p1078, %p1079
      %p1081 = scmp.ne.s32.totalorder %s1070, %s1073
      %p1082 = scmp.eq.s32.totalorder %s115, 1
      %p1083 = por %p1081, %p1082
      %p1084 = scmp.ne.s32.totalorder %s1073, %s1074
      %p1085 = scmp.eq.s32.totalorder %s115, 0
      %p1086 = por %p1084, %p1085
      %p1087 = scmp.ne.s32.totalorder %s1073, %s1074
      %p1088 = scmp.eq.s32.totalorder %s116, 1
      %p1089 = por %p1087, %p1088
      %p1091 = scmp.ne.s32.totalorder %s1074, %s1090
      %p1092 = scmp.eq.s32.totalorder %s116, 0
      %p1093 = por %p1091, %p1092
      %p1094 = scmp.le.s32.totalorder 1, %s110
      %p1095 = scmp.lt.s32.totalorder %s110, 3
      %p1096 = pnand %p1094, %p1095
      %p1097 = pneg %p1096
      // Predicated region
      $region9: #{encoder_layer_forward.1} parent=5 // pred_check
        _
      $region10: #{encoder_layer_forward.1} parent=5 // pred_check_branch
        %1099 = sbr.rel (%p1096) target = $region12
      $region11: #{encoder_layer_forward.1} parent=5 // pred_region
        %s1100 = ssub.s32 %s110, 1
        // Predicated region
        $region13: #{encoder_layer_forward.1} parent=11 // pred_check
          %p1101 = pneg %p157
        $region14: #{encoder_layer_forward.1} parent=11 // pred_check_branch
          %1103 = sbr.rel (%p1101) target = $region16
        $region15: #{encoder_layer_forward.1} parent=11 // pred_region
          _
        $region16: #{encoder_layer_forward.1} parent=11 // pred_fallthru
          _
        // Predicated region
        $region17: #{encoder_layer_forward.1} parent=11 // pred_check
          %p1104 = pneg %p178
        $region18: #{encoder_layer_forward.1} parent=11 // pred_check_branch
          %1106 = sbr.rel (%p1104) target = $region20
        $region19: #{encoder_layer_forward.1} parent=11 // pred_region
          _
        $region20: #{encoder_layer_forward.1} parent=11 // pred_fallthru
          _
        // Predicated region
        $region21: #{encoder_layer_forward.1} parent=11 // pred_check
          %p1107 = pneg %p199
        $region22: #{encoder_layer_forward.1} parent=11 // pred_check_branch
          %1109 = sbr.rel (%p1107) target = $region24
        $region23: #{encoder_layer_forward.1} parent=11 // pred_region
          _
        $region24: #{encoder_layer_forward.1} parent=11 // pred_fallthru
          _
        // Predicated region
        $region25: #{encoder_layer_forward.1} parent=11 // pred_check
          %p1110 = pneg %p220
        $region26: #{encoder_layer_forward.1} parent=11 // pred_check_branch
          %1112 = sbr.rel (%p1110) target = $region28
        $region27: #{encoder_layer_forward.1} parent=11 // pred_region
          _
        $region28: #{encoder_layer_forward.1} parent=11 // pred_fallthru
          _
        // Predicated region
        $region29: #{encoder_layer_forward.1} parent=11 // pred_check
          %p1113 = pneg %p241
        $region30: #{encoder_layer_forward.1} parent=11 // pred_check_branch
          %1115 = sbr.rel (%p1113) target = $region32
        $region31: #{encoder_layer_forward.1} parent=11 // pred_region
          _
        $region32: #{encoder_layer_forward.1} parent=11 // pred_fallthru
          _
        // Predicated region
        $region33: #{encoder_layer_forward.1} parent=11 // pred_check
          %p1116 = pneg %p262
        $region34: #{encoder_layer_forward.1} parent=11 // pred_check_branch
          %1118 = sbr.rel (%p1116) target = $region36
        $region35: #{encoder_layer_forward.1} parent=11 // pred_region
          _
        $region36: #{encoder_layer_forward.1} parent=11 // pred_fallthru
          _
        // Predicated region
        $region37: #{encoder_layer_forward.1} parent=11 // pred_check
          %p1119 = pneg %p283
        $region38: #{encoder_layer_forward.1} parent=11 // pred_check_branch
          %1121 = sbr.rel (%p1119) target = $region40
        $region39: #{encoder_layer_forward.1} parent=11 // pred_region
          _
        $region40: #{encoder_layer_forward.1} parent=11 // pred_fallthru
          _
        // Predicated region
        $region41: #{encoder_layer_forward.1} parent=11 // pred_check
          %p1122 = pneg %p304
        $region42: #{encoder_layer_forward.1} parent=11 // pred_check_branch
          %1124 = sbr.rel (%p1122) target = $region44
        $region43: #{encoder_layer_forward.1} parent=11 // pred_region
          _
        $region44: #{encoder_layer_forward.1} parent=11 // pred_fallthru
          _
        // Predicated region
        $region45: #{encoder_layer_forward.1} parent=11 // pred_check
          %p1125 = pneg %p325
        $region46: #{encoder_layer_forward.1} parent=11 // pred_check_branch
          %1127 = sbr.rel (%p1125) target = $region48
        $region47: #{encoder_layer_forward.1} parent=11 // pred_region
          _
        $region48: #{encoder_layer_forward.1} parent=11 // pred_fallthru
          _
        // Predicated region
        $region49: #{encoder_layer_forward.1} parent=11 // pred_check
          %p1128 = pneg %p346
        $region50: #{encoder_layer_forward.1} parent=11 // pred_check_branch
          %1130 = sbr.rel (%p1128) target = $region52
        $region51: #{encoder_layer_forward.1} parent=11 // pred_region
          _
        $region52: #{encoder_layer_forward.1} parent=11 // pred_fallthru
          _
        // Predicated region
        $region53: #{encoder_layer_forward.1} parent=11 // pred_check
          %p1131 = pneg %p367
        $region54: #{encoder_layer_forward.1} parent=11 // pred_check_branch
          %1133 = sbr.rel (%p1131) target = $region56
        $region55: #{encoder_layer_forward.1} parent=11 // pred_region
          _
        $region56: #{encoder_layer_forward.1} parent=11 // pred_fallthru
          _
        // Predicated region
        $region57: #{encoder_layer_forward.1} parent=11 // pred_check
          %p1134 = pneg %p388
        $region58: #{encoder_layer_forward.1} parent=11 // pred_check_branch
          %1136 = sbr.rel (%p1134) target = $region60
        $region59: #{encoder_layer_forward.1} parent=11 // pred_region
          _
        $region60: #{encoder_layer_forward.1} parent=11 // pred_fallthru
          _
        // Predicated region
        $region61: #{encoder_layer_forward.1} parent=11 // pred_check
          %p1137 = pneg %p409
        $region62: #{encoder_layer_forward.1} parent=11 // pred_check_branch
          %1139 = sbr.rel (%p1137) target = $region64
        $region63: #{encoder_layer_forward.1} parent=11 // pred_region
          _
        $region64: #{encoder_layer_forward.1} parent=11 // pred_fallthru
          _
        // Predicated region
        $region65: #{encoder_layer_forward.1} parent=11 // pred_check
          %p1140 = pneg %p430
        $region66: #{encoder_layer_forward.1} parent=11 // pred_check_branch
          %1142 = sbr.rel (%p1140) target = $region68
        $region67: #{encoder_layer_forward.1} parent=11 // pred_region
          %s1144 = ssub.s32 16, 16
          %1145 = vsyncadd [#allocation3], %s1144
          %s1147 = sshll.u32 [#allocation2], 4
          %s1148 = int_to_ptr.vmem [resolvable:$true] %s1147
          %1150 = dma.hbm_to_vmem [thread:$0]  %s29, 16, %s1148, [#allocation3]
        $region68: #{encoder_layer_forward.1} parent=11 // pred_fallthru
          _
        // Predicated region
        $region69: #{encoder_layer_forward.1} parent=11 // pred_check
          %p1151 = pneg %p451
        $region70: #{encoder_layer_forward.1} parent=11 // pred_check_branch
          %1153 = sbr.rel (%p1151) target = $region72
        $region71: #{encoder_layer_forward.1} parent=11 // pred_region
          _
        $region72: #{encoder_layer_forward.1} parent=11 // pred_fallthru
          _
        // Predicated region
        $region73: #{encoder_layer_forward.1} parent=11 // pred_check
          %p1154 = pneg %p472
        $region74: #{encoder_layer_forward.1} parent=11 // pred_check_branch
          %1156 = sbr.rel (%p1154) target = $region76
        $region75: #{encoder_layer_forward.1} parent=11 // pred_region
          %s1158 = ssub.s32 16, 16
          %1159 = vsyncadd [#allocation5], %s1158
          %s1161 = sshll.u32 [#allocation4], 4
          %s1162 = int_to_ptr.vmem [resolvable:$true] %s1161
          %1164 = dma.hbm_to_vmem [thread:$0]  %s33, 16, %s1162, [#allocation5]
        $region76: #{encoder_layer_forward.1} parent=11 // pred_fallthru
          _
        // Predicated region
        $region77: #{encoder_layer_forward.1} parent=11 // pred_check
          %p1165 = pneg %p493
        $region78: #{encoder_layer_forward.1} parent=11 // pred_check_branch
          %1167 = sbr.rel (%p1165) target = $region80
        $region79: #{encoder_layer_forward.1} parent=11 // pred_region
          _
        $region80: #{encoder_layer_forward.1} parent=11 // pred_fallthru
          _
        // Predicated region
        $region81: #{encoder_layer_forward.1} parent=11 // pred_check
          %p1168 = pneg %p514
        $region82: #{encoder_layer_forward.1} parent=11 // pred_check_branch
          %1170 = sbr.rel (%p1168) target = $region84
        $region83: #{encoder_layer_forward.1} parent=11 // pred_region
          %s1172 = ssub.s32 16, 16
          %1173 = vsyncadd [#allocation5], %s1172
          %s1175 = sshll.u32 [#allocation6], 4
          %s1176 = int_to_ptr.vmem [resolvable:$true] %s1175
          %1178 = dma.hbm_to_vmem [thread:$0]  %s37, 16, %s1176, [#allocation5]
        $region84: #{encoder_layer_forward.1} parent=11 // pred_fallthru
          _
        // Predicated region
        $region85: #{encoder_layer_forward.1} parent=11 // pred_check
          %p1179 = pneg %p535
        $region86: #{encoder_layer_forward.1} parent=11 // pred_check_branch
          %1181 = sbr.rel (%p1179) target = $region88
        $region87: #{encoder_layer_forward.1} parent=11 // pred_region
          _
        $region88: #{encoder_layer_forward.1} parent=11 // pred_fallthru
          _
        // Predicated region
        $region89: #{encoder_layer_forward.1} parent=11 // pred_check
          %p1182 = pneg %p556
        $region90: #{encoder_layer_forward.1} parent=11 // pred_check_branch
          %1184 = sbr.rel (%p1182) target = $region92
        $region91: #{encoder_layer_forward.1} parent=11 // pred_region
          %s1186 = ssub.s32 16, 16
          %1187 = vsyncadd [#allocation8], %s1186
          %s1189 = sshll.u32 [#allocation7], 4
          %s1190 = int_to_ptr.vmem [resolvable:$true] %s1189
          %1192 = dma.hbm_to_vmem [thread:$0]  %s41, 16, %s1190, [#allocation8]
        $region92: #{encoder_layer_forward.1} parent=11 // pred_fallthru
          _
        // Predicated region
        $region93: #{encoder_layer_forward.1} parent=11 // pred_check
          %p1193 = pneg %p577
        $region94: #{encoder_layer_forward.1} parent=11 // pred_check_branch
          %1195 = sbr.rel (%p1193) target = $region96
        $region95: #{encoder_layer_forward.1} parent=11 // pred_region
          _
        $region96: #{encoder_layer_forward.1} parent=11 // pred_fallthru
          _
        // Predicated region
        $region97: #{encoder_layer_forward.1} parent=11 // pred_check
          %p1196 = pneg %p598
        $region98: #{encoder_layer_forward.1} parent=11 // pred_check_branch
          %1198 = sbr.rel (%p1196) target = $region100
        $region99: #{encoder_layer_forward.1} parent=11 // pred_region
          %s1200 = ssub.s32 16, 16
          %1201 = vsyncadd [#allocation8], %s1200
          %s1203 = sshll.u32 [#allocation9], 4
          %s1204 = int_to_ptr.vmem [resolvable:$true] %s1203
          %1206 = dma.hbm_to_vmem [thread:$0]  %s45, 16, %s1204, [#allocation8]
        $region100: #{encoder_layer_forward.1} parent=11 // pred_fallthru
          _
        // Predicated region
        $region101: #{encoder_layer_forward.1} parent=11 // pred_check
          %p1207 = pneg %p619
        $region102: #{encoder_layer_forward.1} parent=11 // pred_check_branch
          %1209 = sbr.rel (%p1207) target = $region104
        $region103: #{encoder_layer_forward.1} parent=11 // pred_region
          _
        $region104: #{encoder_layer_forward.1} parent=11 // pred_fallthru
          _
        // Predicated region
        $region105: #{encoder_layer_forward.1} parent=11 // pred_check
          %p1210 = pneg %p640
        $region106: #{encoder_layer_forward.1} parent=11 // pred_check_branch
          %1212 = sbr.rel (%p1210) target = $region108
        $region107: #{encoder_layer_forward.1} parent=11 // pred_region
          %s1214 = ssub.s32 16, 16
          %1215 = vsyncadd [#allocation11], %s1214
          %s1217 = sshll.u32 [#allocation10], 4
          %s1218 = int_to_ptr.vmem [resolvable:$true] %s1217
          %1220 = dma.hbm_to_vmem [thread:$0]  %s49, 16, %s1218, [#allocation11]
        $region108: #{encoder_layer_forward.1} parent=11 // pred_fallthru
          _
        // Predicated region
        $region109: #{encoder_layer_forward.1} parent=11 // pred_check
          %p1221 = pneg %p661
        $region110: #{encoder_layer_forward.1} parent=11 // pred_check_branch
          %1223 = sbr.rel (%p1221) target = $region112
        $region111: #{encoder_layer_forward.1} parent=11 // pred_region
          %s1225 = ssub.s32 512, 512
          %1226 = vsyncadd [#allocation11], %s1225
          %s1227 = sshll.u32 [#allocation12], 4
          %s1228 = int_to_ptr.vmem [resolvable:$true] %s1227
          %1233 = dma.hbm_to_vmem [thread:$0]  %s51, 512, %s1228, [#allocation11], 128, 128, 8
        $region112: #{encoder_layer_forward.1} parent=11 // pred_fallthru
          _
        // Predicated region
        $region113: #{encoder_layer_forward.1} parent=11 // pred_check
          %p1234 = pneg %p682
        $region114: #{encoder_layer_forward.1} parent=11 // pred_check_branch
          %1236 = sbr.rel (%p1234) target = $region116
        $region115: #{encoder_layer_forward.1} parent=11 // pred_region
          %s1238 = ssub.s32 16, 16
          %1239 = vsyncadd [#allocation14], %s1238
          %s1241 = sshll.u32 [#allocation13], 4
          %s1242 = int_to_ptr.vmem [resolvable:$true] %s1241
          %1244 = dma.hbm_to_vmem [thread:$0]  %s53, 16, %s1242, [#allocation14]
        $region116: #{encoder_layer_forward.1} parent=11 // pred_fallthru
          _
        // Predicated region
        $region117: #{encoder_layer_forward.1} parent=11 // pred_check
          %p1245 = pneg %p703
        $region118: #{encoder_layer_forward.1} parent=11 // pred_check_branch
          %1247 = sbr.rel (%p1245) target = $region120
        $region119: #{encoder_layer_forward.1} parent=11 // pred_region
          %s1249 = ssub.s32 512, 512
          %1250 = vsyncadd [#allocation14], %s1249
          %s1251 = sshll.u32 [#allocation15], 4
          %s1252 = int_to_ptr.vmem [resolvable:$true] %s1251
          %1257 = dma.hbm_to_vmem [thread:$0]  %s55, 512, %s1252, [#allocation14], 128, 128, 8
        $region120: #{encoder_layer_forward.1} parent=11 // pred_fallthru
          _
        // Predicated region
        $region121: #{encoder_layer_forward.1} parent=11 // pred_check
          %p1258 = pneg %p724
        $region122: #{encoder_layer_forward.1} parent=11 // pred_check_branch
          %1260 = sbr.rel (%p1258) target = $region124
        $region123: #{encoder_layer_forward.1} parent=11 // pred_region
          %s1262 = ssub.s32 16, 16
          %1263 = vsyncadd [#allocation17], %s1262
          %s1265 = sshll.u32 [#allocation16], 4
          %s1266 = int_to_ptr.vmem [resolvable:$true] %s1265
          %1268 = dma.hbm_to_vmem [thread:$0]  %s57, 16, %s1266, [#allocation17]
        $region124: #{encoder_layer_forward.1} parent=11 // pred_fallthru
          _
        // Predicated region
        $region125: #{encoder_layer_forward.1} parent=11 // pred_check
          %p1269 = pneg %p745
        $region126: #{encoder_layer_forward.1} parent=11 // pred_check_branch
          %1271 = sbr.rel (%p1269) target = $region128
        $region127: #{encoder_layer_forward.1} parent=11 // pred_region
          %s1273 = ssub.s32 16, 16
          %1274 = vsyncadd [#allocation17], %s1273
          %s1276 = sshll.u32 [#allocation18], 4
          %s1277 = int_to_ptr.vmem [resolvable:$true] %s1276
          %1279 = dma.hbm_to_vmem [thread:$0]  %s59, 16, %s1277, [#allocation17]
        $region128: #{encoder_layer_forward.1} parent=11 // pred_fallthru
          _
        // Predicated region
        $region129: #{encoder_layer_forward.1} parent=11 // pred_check
          %p1280 = pneg %p766
        $region130: #{encoder_layer_forward.1} parent=11 // pred_check_branch
          %1282 = sbr.rel (%p1280) target = $region132
        $region131: #{encoder_layer_forward.1} parent=11 // pred_region
          %s1284 = ssub.s32 16, 16
          %1285 = vsyncadd [#allocation20], %s1284
          %s1287 = sshll.u32 [#allocation19], 4
          %s1288 = int_to_ptr.vmem [resolvable:$true] %s1287
          %1290 = dma.hbm_to_vmem [thread:$0]  %s61, 16, %s1288, [#allocation20]
        $region132: #{encoder_layer_forward.1} parent=11 // pred_fallthru
          _
        // Predicated region
        $region133: #{encoder_layer_forward.1} parent=11 // pred_check
          %p1291 = pneg %p787
        $region134: #{encoder_layer_forward.1} parent=11 // pred_check_branch
          %1293 = sbr.rel (%p1291) target = $region136
        $region135: #{encoder_layer_forward.1} parent=11 // pred_region
          %s1295 = ssub.s32 512, 512
          %1296 = vsyncadd [#allocation20], %s1295
          %s1297 = sshll.u32 [#allocation21], 4
          %s1298 = int_to_ptr.vmem [resolvable:$true] %s1297
          %1303 = dma.hbm_to_vmem [thread:$0]  %s63, 512, %s1298, [#allocation20], 128, 128, 8
        $region136: #{encoder_layer_forward.1} parent=11 // pred_fallthru
          _
        // Predicated region
        $region137: #{encoder_layer_forward.1} parent=11 // pred_check
          %p1304 = pneg %p808
        $region138: #{encoder_layer_forward.1} parent=11 // pred_check_branch
          %1306 = sbr.rel (%p1304) target = $region140
        $region139: #{encoder_layer_forward.1} parent=11 // pred_region
          %s1308 = ssub.s32 16, 16
          %1309 = vsyncadd [#allocation23], %s1308
          %s1311 = sshll.u32 [#allocation22], 4
          %s1312 = int_to_ptr.vmem [resolvable:$true] %s1311
          %1314 = dma.hbm_to_vmem [thread:$0]  %s65, 16, %s1312, [#allocation23]
        $region140: #{encoder_layer_forward.1} parent=11 // pred_fallthru
          _
        // Predicated region
        $region141: #{encoder_layer_forward.1} parent=11 // pred_check
          %p1315 = pneg %p829
        $region142: #{encoder_layer_forward.1} parent=11 // pred_check_branch
          %1317 = sbr.rel (%p1315) target = $region144
        $region143: #{encoder_layer_forward.1} parent=11 // pred_region
          _
        $region144: #{encoder_layer_forward.1} parent=11 // pred_fallthru
          _
        // Predicated region
        $region145: #{encoder_layer_forward.1} parent=11 // pred_check
          %p1318 = pneg %p850
        $region146: #{encoder_layer_forward.1} parent=11 // pred_check_branch
          %1320 = sbr.rel (%p1318) target = $region148
        $region147: #{encoder_layer_forward.1} parent=11 // pred_region
          %s1322 = ssub.s32 16, 16
          %1323 = vsyncadd [#allocation23], %s1322
          %s1325 = sshll.u32 [#allocation24], 4
          %s1326 = int_to_ptr.vmem [resolvable:$true] %s1325
          %1328 = dma.hbm_to_vmem [thread:$0]  %s69, 16, %s1326, [#allocation23]
        $region148: #{encoder_layer_forward.1} parent=11 // pred_fallthru
          _
        // Predicated region
        $region149: #{encoder_layer_forward.1} parent=11 // pred_check
          %p1329 = pneg %p871
        $region150: #{encoder_layer_forward.1} parent=11 // pred_check_branch
          %1331 = sbr.rel (%p1329) target = $region152
        $region151: #{encoder_layer_forward.1} parent=11 // pred_region
          %s1333 = ssub.s32 16, 16
          %1334 = vsyncadd [#allocation26], %s1333
          %s1336 = sshll.u32 [#allocation25], 4
          %s1337 = int_to_ptr.vmem [resolvable:$true] %s1336
          %1339 = dma.hbm_to_vmem [thread:$0]  %s71, 16, %s1337, [#allocation26]
        $region152: #{encoder_layer_forward.1} parent=11 // pred_fallthru
          _
        // Predicated region
        $region153: #{encoder_layer_forward.1} parent=11 // pred_check
          %p1340 = pneg %p892
        $region154: #{encoder_layer_forward.1} parent=11 // pred_check_branch
          %1342 = sbr.rel (%p1340) target = $region156
        $region155: #{encoder_layer_forward.1} parent=11 // pred_region
          %s1344 = ssub.s32 16, 16
          %1345 = vsyncadd [#allocation26], %s1344
          %s1347 = sshll.u32 [#allocation27], 4
          %s1348 = int_to_ptr.vmem [resolvable:$true] %s1347
          %1350 = dma.hbm_to_vmem [thread:$0]  %s73, 16, %s1348, [#allocation26]
        $region156: #{encoder_layer_forward.1} parent=11 // pred_fallthru
          _
        // Predicated region
        $region157: #{encoder_layer_forward.1} parent=11 // pred_check
          %p1351 = pneg %p913
        $region158: #{encoder_layer_forward.1} parent=11 // pred_check_branch
          %1353 = sbr.rel (%p1351) target = $region160
        $region159: #{encoder_layer_forward.1} parent=11 // pred_region
          %s1355 = ssub.s32 16, 16
          %1356 = vsyncadd [#allocation29], %s1355
          %s1358 = sshll.u32 [#allocation28], 4
          %s1359 = int_to_ptr.vmem [resolvable:$true] %s1358
          %1361 = dma.hbm_to_vmem [thread:$0]  %s75, 16, %s1359, [#allocation29]
        $region160: #{encoder_layer_forward.1} parent=11 // pred_fallthru
          _
        // Predicated region
        $region161: #{encoder_layer_forward.1} parent=11 // pred_check
          %p1362 = pneg %p934
        $region162: #{encoder_layer_forward.1} parent=11 // pred_check_branch
          %1364 = sbr.rel (%p1362) target = $region164
        $region163: #{encoder_layer_forward.1} parent=11 // pred_region
          %s1366 = ssub.s32 16, 16
          %1367 = vsyncadd [#allocation29], %s1366
          %s1369 = sshll.u32 [#allocation30], 4
          %s1370 = int_to_ptr.vmem [resolvable:$true] %s1369
          %1372 = dma.hbm_to_vmem [thread:$0]  %s77, 16, %s1370, [#allocation29]
        $region164: #{encoder_layer_forward.1} parent=11 // pred_fallthru
          _
        // Predicated region
        $region165: #{encoder_layer_forward.1} parent=11 // pred_check
          %p1373 = pneg %p955
        $region166: #{encoder_layer_forward.1} parent=11 // pred_check_branch
          %1375 = sbr.rel (%p1373) target = $region168
        $region167: #{encoder_layer_forward.1} parent=11 // pred_region
          %s1377 = ssub.s32 512, 512
          %1378 = vsyncadd [#allocation32], %s1377
          %s1379 = sshll.u32 [#allocation31], 4
          %s1380 = int_to_ptr.vmem [resolvable:$true] %s1379
          %1385 = dma.hbm_to_vmem [thread:$0]  %s79, 512, %s1380, [#allocation32], 128, 128, 8
        $region168: #{encoder_layer_forward.1} parent=11 // pred_fallthru
          _
        // Predicated region
        $region169: #{encoder_layer_forward.1} parent=11 // pred_check
          %p1386 = pneg %p976
        $region170: #{encoder_layer_forward.1} parent=11 // pred_check_branch
          %1388 = sbr.rel (%p1386) target = $region172
        $region171: #{encoder_layer_forward.1} parent=11 // pred_region
          %s1390 = ssub.s32 16, 16
          %1391 = vsyncadd [#allocation32], %s1390
          %s1393 = sshll.u32 [#allocation33], 4
          %s1394 = int_to_ptr.vmem [resolvable:$true] %s1393
          %1396 = dma.hbm_to_vmem [thread:$0]  %s81, 16, %s1394, [#allocation32]
        $region172: #{encoder_layer_forward.1} parent=11 // pred_fallthru
          _
        // Predicated region
        $region173: #{encoder_layer_forward.1} parent=11 // pred_check
          %p1397 = pneg %p997
        $region174: #{encoder_layer_forward.1} parent=11 // pred_check_branch
          %1399 = sbr.rel (%p1397) target = $region176
        $region175: #{encoder_layer_forward.1} parent=11 // pred_region
          _
        $region176: #{encoder_layer_forward.1} parent=11 // pred_fallthru
          _
        // Predicated region
        $region177: #{encoder_layer_forward.1} parent=11 // pred_check
          %p1400 = pneg %p1018
        $region178: #{encoder_layer_forward.1} parent=11 // pred_check_branch
          %1402 = sbr.rel (%p1400) target = $region180
        $region179: #{encoder_layer_forward.1} parent=11 // pred_region
          %s1404 = ssub.s32 16, 16
          %1405 = vsyncadd [#allocation35], %s1404
          %s1407 = sshll.u32 [#allocation34], 4
          %s1408 = int_to_ptr.vmem [resolvable:$true] %s1407
          %1410 = dma.hbm_to_vmem [thread:$0]  %s85, 16, %s1408, [#allocation35]
        $region180: #{encoder_layer_forward.1} parent=11 // pred_fallthru
          _
        // Predicated region
        $region181: #{encoder_layer_forward.1} parent=11 // pred_check
          %p1411 = pneg %p1039
        $region182: #{encoder_layer_forward.1} parent=11 // pred_check_branch
          %1413 = sbr.rel (%p1411) target = $region184
        $region183: #{encoder_layer_forward.1} parent=11 // pred_region
          %s1415 = ssub.s32 16, 16
          %1416 = vsyncadd [#allocation35], %s1415
          %s1418 = sshll.u32 [#allocation36], 4
          %s1419 = int_to_ptr.vmem [resolvable:$true] %s1418
          %1421 = dma.hbm_to_vmem [thread:$0]  %s87, 16, %s1419, [#allocation35]
        $region184: #{encoder_layer_forward.1} parent=11 // pred_fallthru
          _
        // Predicated region
        $region185: #{encoder_layer_forward.1} parent=11 // pred_check
          %p1422 = pneg %p1060
        $region186: #{encoder_layer_forward.1} parent=11 // pred_check_branch
          %1424 = sbr.rel (%p1422) target = $region188
        $region187: #{encoder_layer_forward.1} parent=11 // pred_region
          %s1426 = ssub.s32 16, 16
          %1427 = vsyncadd [#allocation38], %s1426
          %s1429 = sshll.u32 [#allocation37], 4
          %s1430 = int_to_ptr.vmem [resolvable:$true] %s1429
          %1432 = dma.hbm_to_vmem [thread:$0]  %s89, 16, %s1430, [#allocation38]
        $region188: #{encoder_layer_forward.1} parent=11 // pred_fallthru
          _
      $region12: #{encoder_layer_forward.1} parent=5 // pred_fallthru
        _
      %p1433 = scmp.lt.s32.totalorder %s110, 2
      // Predicated region
      $region189: #{encoder_layer_forward.1} parent=5 // pred_check
        %p1434 = pneg %p1433
      $region190: #{encoder_layer_forward.1} parent=5 // pred_check_branch
        %1436 = sbr.rel (%p1434) target = $region192
      $region191: #{encoder_layer_forward.1} parent=5 // pred_region
        // Predicated region
        $region193: #{encoder_layer_forward.1} parent=191 // pred_check
          %p1437 = pneg %p130
        $region194: #{encoder_layer_forward.1} parent=191 // pred_check_branch
          %1439 = sbr.rel (%p1437) target = $region196
        $region195: #{encoder_layer_forward.1} parent=191 // pred_region
          %p1440 = scmp.lt.s32.totalorder %s110, 1
          %s1441 = scalar_select %p1440, %s110, 1
          %s1442 = smul.addr %s1441, 4
          %s1443 = smul.addr %s1442, 8
          %s1444 = scalar_lea.vmem %s1, %s1443
        $region196: #{encoder_layer_forward.1} parent=191 // pred_fallthru
          _
      $region192: #{encoder_layer_forward.1} parent=5 // pred_fallthru
        _
      %p1445 = scmp.le.s32.totalorder 1, %s110
      %p1446 = scmp.lt.s32.totalorder %s110, 3
      %p1447 = pnand %p1445, %p1446
      %p1448 = pneg %p1447
      // Predicated region
      $region197: #{encoder_layer_forward.1} parent=5 // pred_check
        _
      $region198: #{encoder_layer_forward.1} parent=5 // pred_check_branch
        %1450 = sbr.rel (%p1447) target = $region200
      $region199: #{encoder_layer_forward.1} parent=5 // pred_region
        %s1451 = ssub.s32 %s110, 1
        // Predicated region
        $region201: #{encoder_layer_forward.1} parent=199 // pred_check
          %p1452 = pneg %p430
        $region202: #{encoder_layer_forward.1} parent=199 // pred_check_branch
          %1454 = sbr.rel (%p1452) target = $region204
        $region203: #{encoder_layer_forward.1} parent=199 // pred_region
          %1455 = dma.done [#allocation3], 16
        $region204: #{encoder_layer_forward.1} parent=199 // pred_fallthru
          _
        // Predicated region
        $region205: #{encoder_layer_forward.1} parent=199 // pred_check
          %p1456 = pneg %p472
        $region206: #{encoder_layer_forward.1} parent=199 // pred_check_branch
          %1458 = sbr.rel (%p1456) target = $region208
        $region207: #{encoder_layer_forward.1} parent=199 // pred_region
          %1459 = dma.done [#allocation5], 16
        $region208: #{encoder_layer_forward.1} parent=199 // pred_fallthru
          _
        // Predicated region
        $region209: #{encoder_layer_forward.1} parent=199 // pred_check
          %p1460 = pneg %p514
        $region210: #{encoder_layer_forward.1} parent=199 // pred_check_branch
          %1462 = sbr.rel (%p1460) target = $region212
        $region211: #{encoder_layer_forward.1} parent=199 // pred_region
          %1463 = dma.done [#allocation5], 16
        $region212: #{encoder_layer_forward.1} parent=199 // pred_fallthru
          _
        // Predicated region
        $region213: #{encoder_layer_forward.1} parent=199 // pred_check
          %p1464 = pneg %p556
        $region214: #{encoder_layer_forward.1} parent=199 // pred_check_branch
          %1466 = sbr.rel (%p1464) target = $region216
        $region215: #{encoder_layer_forward.1} parent=199 // pred_region
          %1467 = dma.done [#allocation8], 16
        $region216: #{encoder_layer_forward.1} parent=199 // pred_fallthru
          _
        // Predicated region
        $region217: #{encoder_layer_forward.1} parent=199 // pred_check
          %p1468 = pneg %p598
        $region218: #{encoder_layer_forward.1} parent=199 // pred_check_branch
          %1470 = sbr.rel (%p1468) target = $region220
        $region219: #{encoder_layer_forward.1} parent=199 // pred_region
          %1471 = dma.done [#allocation8], 16
        $region220: #{encoder_layer_forward.1} parent=199 // pred_fallthru
          _
        // Predicated region
        $region221: #{encoder_layer_forward.1} parent=199 // pred_check
          %p1472 = pneg %p640
        $region222: #{encoder_layer_forward.1} parent=199 // pred_check_branch
          %1474 = sbr.rel (%p1472) target = $region224
        $region223: #{encoder_layer_forward.1} parent=199 // pred_region
          %1475 = dma.done [#allocation11], 16
        $region224: #{encoder_layer_forward.1} parent=199 // pred_fallthru
          _
        // Predicated region
        $region225: #{encoder_layer_forward.1} parent=199 // pred_check
          %p1476 = pneg %p661
        $region226: #{encoder_layer_forward.1} parent=199 // pred_check_branch
          %1478 = sbr.rel (%p1476) target = $region228
        $region227: #{encoder_layer_forward.1} parent=199 // pred_region
          %1479 = dma.done [#allocation11], 512
        $region228: #{encoder_layer_forward.1} parent=199 // pred_fallthru
          _
        // Predicated region
        $region229: #{encoder_layer_forward.1} parent=199 // pred_check
          %p1480 = pneg %p682
        $region230: #{encoder_layer_forward.1} parent=199 // pred_check_branch
          %1482 = sbr.rel (%p1480) target = $region232
        $region231: #{encoder_layer_forward.1} parent=199 // pred_region
          %1483 = dma.done [#allocation14], 16
        $region232: #{encoder_layer_forward.1} parent=199 // pred_fallthru
          _
        // Predicated region
        $region233: #{encoder_layer_forward.1} parent=199 // pred_check
          %p1484 = pneg %p703
        $region234: #{encoder_layer_forward.1} parent=199 // pred_check_branch
          %1486 = sbr.rel (%p1484) target = $region236
        $region235: #{encoder_layer_forward.1} parent=199 // pred_region
          %1487 = dma.done [#allocation14], 512
        $region236: #{encoder_layer_forward.1} parent=199 // pred_fallthru
          _
        // Predicated region
        $region237: #{encoder_layer_forward.1} parent=199 // pred_check
          %p1488 = pneg %p724
        $region238: #{encoder_layer_forward.1} parent=199 // pred_check_branch
          %1490 = sbr.rel (%p1488) target = $region240
        $region239: #{encoder_layer_forward.1} parent=199 // pred_region
          %1491 = dma.done [#allocation17], 16
        $region240: #{encoder_layer_forward.1} parent=199 // pred_fallthru
          _
        // Predicated region
        $region241: #{encoder_layer_forward.1} parent=199 // pred_check
          %p1492 = pneg %p745
        $region242: #{encoder_layer_forward.1} parent=199 // pred_check_branch
          %1494 = sbr.rel (%p1492) target = $region244
        $region243: #{encoder_layer_forward.1} parent=199 // pred_region
          %1495 = dma.done [#allocation17], 16
        $region244: #{encoder_layer_forward.1} parent=199 // pred_fallthru
          _
        // Predicated region
        $region245: #{encoder_layer_forward.1} parent=199 // pred_check
          %p1496 = pneg %p766
        $region246: #{encoder_layer_forward.1} parent=199 // pred_check_branch
          %1498 = sbr.rel (%p1496) target = $region248
        $region247: #{encoder_layer_forward.1} parent=199 // pred_region
          %1499 = dma.done [#allocation20], 16
        $region248: #{encoder_layer_forward.1} parent=199 // pred_fallthru
          _
        // Predicated region
        $region249: #{encoder_layer_forward.1} parent=199 // pred_check
          %p1500 = pneg %p787
        $region250: #{encoder_layer_forward.1} parent=199 // pred_check_branch
          %1502 = sbr.rel (%p1500) target = $region252
        $region251: #{encoder_layer_forward.1} parent=199 // pred_region
          %1503 = dma.done [#allocation20], 512
        $region252: #{encoder_layer_forward.1} parent=199 // pred_fallthru
          _
        // Predicated region
        $region253: #{encoder_layer_forward.1} parent=199 // pred_check
          %p1504 = pneg %p808
        $region254: #{encoder_layer_forward.1} parent=199 // pred_check_branch
          %1506 = sbr.rel (%p1504) target = $region256
        $region255: #{encoder_layer_forward.1} parent=199 // pred_region
          %1507 = dma.done [#allocation23], 16
        $region256: #{encoder_layer_forward.1} parent=199 // pred_fallthru
          _
        // Predicated region
        $region257: #{encoder_layer_forward.1} parent=199 // pred_check
          %p1508 = pneg %p850
        $region258: #{encoder_layer_forward.1} parent=199 // pred_check_branch
          %1510 = sbr.rel (%p1508) target = $region260
        $region259: #{encoder_layer_forward.1} parent=199 // pred_region
          %1511 = dma.done [#allocation23], 16
        $region260: #{encoder_layer_forward.1} parent=199 // pred_fallthru
          _
        // Predicated region
        $region261: #{encoder_layer_forward.1} parent=199 // pred_check
          %p1512 = pneg %p871
        $region262: #{encoder_layer_forward.1} parent=199 // pred_check_branch
          %1514 = sbr.rel (%p1512) target = $region264
        $region263: #{encoder_layer_forward.1} parent=199 // pred_region
          %1515 = dma.done [#allocation26], 16
        $region264: #{encoder_layer_forward.1} parent=199 // pred_fallthru
          _
        // Predicated region
        $region265: #{encoder_layer_forward.1} parent=199 // pred_check
          %p1516 = pneg %p892
        $region266: #{encoder_layer_forward.1} parent=199 // pred_check_branch
          %1518 = sbr.rel (%p1516) target = $region268
        $region267: #{encoder_layer_forward.1} parent=199 // pred_region
          %1519 = dma.done [#allocation26], 16
        $region268: #{encoder_layer_forward.1} parent=199 // pred_fallthru
          _
        // Predicated region
        $region269: #{encoder_layer_forward.1} parent=199 // pred_check
          %p1520 = pneg %p913
        $region270: #{encoder_layer_forward.1} parent=199 // pred_check_branch
          %1522 = sbr.rel (%p1520) target = $region272
        $region271: #{encoder_layer_forward.1} parent=199 // pred_region
          %1523 = dma.done [#allocation29], 16
        $region272: #{encoder_layer_forward.1} parent=199 // pred_fallthru
          _
        // Predicated region
        $region273: #{encoder_layer_forward.1} parent=199 // pred_check
          %p1524 = pneg %p934
        $region274: #{encoder_layer_forward.1} parent=199 // pred_check_branch
          %1526 = sbr.rel (%p1524) target = $region276
        $region275: #{encoder_layer_forward.1} parent=199 // pred_region
          %1527 = dma.done [#allocation29], 16
        $region276: #{encoder_layer_forward.1} parent=199 // pred_fallthru
          _
        // Predicated region
        $region277: #{encoder_layer_forward.1} parent=199 // pred_check
          %p1528 = pneg %p955
        $region278: #{encoder_layer_forward.1} parent=199 // pred_check_branch
          %1530 = sbr.rel (%p1528) target = $region280
        $region279: #{encoder_layer_forward.1} parent=199 // pred_region
          %1531 = dma.done [#allocation32], 512
        $region280: #{encoder_layer_forward.1} parent=199 // pred_fallthru
          _
        // Predicated region
        $region281: #{encoder_layer_forward.1} parent=199 // pred_check
          %p1532 = pneg %p976
        $region282: #{encoder_layer_forward.1} parent=199 // pred_check_branch
          %1534 = sbr.rel (%p1532) target = $region284
        $region283: #{encoder_layer_forward.1} parent=199 // pred_region
          %1535 = dma.done [#allocation32], 16
        $region284: #{encoder_layer_forward.1} parent=199 // pred_fallthru
          _
        // Predicated region
        $region285: #{encoder_layer_forward.1} parent=199 // pred_check
          %p1536 = pneg %p1018
        $region286: #{encoder_layer_forward.1} parent=199 // pred_check_branch
          %1538 = sbr.rel (%p1536) target = $region288
        $region287: #{encoder_layer_forward.1} parent=199 // pred_region
          %1539 = dma.done [#allocation35], 16
        $region288: #{encoder_layer_forward.1} parent=199 // pred_fallthru
          _
        // Predicated region
        $region289: #{encoder_layer_forward.1} parent=199 // pred_check
          %p1540 = pneg %p1039
        $region290: #{encoder_layer_forward.1} parent=199 // pred_check_branch
          %1542 = sbr.rel (%p1540) target = $region292
        $region291: #{encoder_layer_forward.1} parent=199 // pred_region
          %1543 = dma.done [#allocation35], 16
        $region292: #{encoder_layer_forward.1} parent=199 // pred_fallthru
          _
        // Predicated region
        $region293: #{encoder_layer_forward.1} parent=199 // pred_check
          %p1544 = pneg %p1060
        $region294: #{encoder_layer_forward.1} parent=199 // pred_check_branch
          %1546 = sbr.rel (%p1544) target = $region296
        $region295: #{encoder_layer_forward.1} parent=199 // pred_region
          %1547 = dma.done [#allocation38], 16
        $region296: #{encoder_layer_forward.1} parent=199 // pred_fallthru
          _
        %p1548 = scmp.lt.s32.totalorder %s115, 1
        %s1549 = scalar_select %p1548, %s115, 1
        %s1550 = smul.addr %s1549, 4
        %s1551 = smul.addr %s1550, 8
        %s1552 = scalar_lea.vmem %s1, %s1551
        %p1553 = pneg %p136
        %p1554 = pneg %p133
        %p1555 = pneg %p157
        %p1556 = pneg %p154
        %p1557 = pneg %p178
        %p1558 = pneg %p175
        %p1559 = pneg %p199
        %p1560 = pneg %p196
        %p1561 = pneg %p220
        %p1562 = pneg %p217
        %p1563 = pneg %p241
        %p1564 = pneg %p238
        %p1565 = pneg %p262
        %p1566 = pneg %p259
        %p1567 = pneg %p283
        %p1568 = pneg %p280
        %p1569 = pneg %p304
        %p1570 = pneg %p301
        %p1571 = pneg %p325
        %p1572 = pneg %p322
        %p1573 = pneg %p346
        %p1574 = pneg %p343
        %p1575 = pneg %p367
        %p1576 = pneg %p364
        %p1577 = pneg %p388
        %p1578 = pneg %p385
        %p1579 = pneg %p409
        %p1580 = pneg %p406
        %p1581 = pneg %p430
        %p1582 = pneg %p427
        %p1583 = pneg %p451
        %p1584 = pneg %p448
        %p1585 = pneg %p472
        %p1586 = pneg %p469
        %p1587 = pneg %p493
        %p1588 = pneg %p490
        %p1589 = pneg %p514
        %p1590 = pneg %p511
        %p1591 = pneg %p535
        %p1592 = pneg %p532
        %p1593 = pneg %p556
        %p1594 = pneg %p553
        %p1595 = pneg %p577
        %p1596 = pneg %p574
        %p1597 = pneg %p598
        %p1598 = pneg %p595
        %p1599 = pneg %p619
        %p1600 = pneg %p616
        %p1601 = pneg %p640
        %p1602 = pneg %p637
        %p1603 = pneg %p661
        %p1604 = pneg %p658
        %p1605 = pneg %p682
        %p1606 = pneg %p679
        %p1607 = pneg %p703
        %p1608 = pneg %p700
        %p1609 = pneg %p724
        %p1610 = pneg %p721
        %p1611 = pneg %p745
        %p1612 = pneg %p742
        %p1613 = pneg %p766
        %p1614 = pneg %p763
        %p1615 = pneg %p787
        %p1616 = pneg %p784
        %p1617 = pneg %p808
        %p1618 = pneg %p805
        %p1619 = pneg %p829
        %p1620 = pneg %p826
        %p1621 = pneg %p850
        %p1622 = pneg %p847
        %p1623 = pneg %p871
        %p1624 = pneg %p868
        %p1625 = pneg %p892
        %p1626 = pneg %p889
        %p1627 = pneg %p913
        %p1628 = pneg %p910
        %p1629 = pneg %p934
        %p1630 = pneg %p931
        %p1631 = pneg %p955
        %p1632 = pneg %p952
        %p1633 = pneg %p976
        %p1634 = pneg %p973
        %p1635 = pneg %p997
        %p1636 = pneg %p994
        %p1637 = pneg %p1018
        %p1638 = pneg %p1015
        %p1639 = pneg %p1039
        %p1640 = pneg %p1036
        %p1641 = pneg %p1060
        %p1642 = pneg %p1057
        %p1643 = pneg %p1086
        %p1644 = pneg %p1083
        %p1645 = scmp.lt.s32.totalorder %s115, 1
        %s1646 = scalar_select %p1645, %s115, 1
        %s1647 = smul.addr %s1646, 4
        %s1648 = smul.addr %s1647, 8
        %s1649 = scalar_lea.vmem %s91, %s1648
        %p1650 = scmp.lt.s32.totalorder %s115, 1
        %s1651 = scalar_select %p1650, %s115, 1
        %s1652 = smul.addr %s1651, 4
        %s1653 = smul.addr %s1652, 8
        %s1654 = scalar_lea.vmem %s1, %s1653
        %p1655 = scmp.lt.s32.totalorder %s115, 1
        %s1656 = scalar_select %p1655, %s115, 1
        %s1657 = smul.addr %s1656, 4
        %s1658 = smul.addr %s1657, 8
        %s1659 = scalar_lea.vmem %s91, %s1658
        %v1660 = vld [vmem:[%s1654] sm:$0xff]
        %v1661 = vld [vmem:[%s1654 + $0x8] sm:$0xff]
        %v1662 = vld [vmem:[%s1654 + $0x10] sm:$0xff]
        %v1663 = vld [vmem:[%s1654 + $0x18] sm:$0x3f]
        %v1664 = vld [vmem:[%s3] sm:$0xff]
        %v1665 = vld [vmem:[%s3 + $0x8] sm:$0xff]
        %v1666 = vld [vmem:[%s3 + $0x10] sm:$0xff]
        %v1667 = vld [vmem:[%s3 + $0x18] sm:$0xff]
        %v1668 = vld [vmem:[%s3 + $0x20] sm:$0xff]
        %v1669 = vld [vmem:[%s3 + $0x28] sm:$0xff]
        %v1670 = vld [vmem:[%s3 + $0x30] sm:$0xff]
        %v1671 = vld [vmem:[%s3 + $0x38] sm:$0xff]
        %v1672 = vld [vmem:[%s3 + $0x40] sm:$0xff]
        %v1673 = vld [vmem:[%s3 + $0x48] sm:$0xff]
        %v1674 = vld [vmem:[%s3 + $0x50] sm:$0xff]
        %v1675 = vld [vmem:[%s3 + $0x58] sm:$0xff]
        %v1676 = vld [vmem:[%s3 + $0x60] sm:$0xf]
        %v1677 = vld [vmem:[%s5] sm:$0xff]
        %v1678 = vld [vmem:[%s5 + $0x8] sm:$0xff]
        %v1679 = vld [vmem:[%s5 + $0x10] sm:$0xff]
        %v1680 = vld [vmem:[%s5 + $0x18] sm:$0x3f]
        %v1681 = vld [vmem:[%s11] sm:$0xff]
        %v1682 = vld [vmem:[%s11 + $0x8] sm:$0xff]
        %v1683 = vld [vmem:[%s11 + $0x10] sm:$0xff]
        %v1684 = vld [vmem:[%s11 + $0x18] sm:$0xff]
        %v1685 = vld [vmem:[%s13] sm:$0x1]
        %v1687 = vlaneseq
        %v1688 = vshrl.u32 %v1687, 7
        %v1689 = vsub.s32 0, %v1688
        %v1690 = vrot.slane %v1685, %v1689
        %vm1692 = vcmask 261120
        %v1694 = vsel %vm1692, %v1660, 0
        %v1697 = vsel %vm1692, %v1661, 0
        %v1700 = vsel %vm1692, %v1662, 0
        %v1703 = vsel %vm1692, %v1663, 0
        %1705 = vmatprep.subr.mxu0 0.0
        %1706 = vmatpush1.msra.mxu0 %v1681
        %1707 = vmatprep.subr.mxu0 0.0
        %1708 = vmatpush1.msra.mxu0 %v1682
        %1709 = vmatprep.subr.mxu0 0.0
        %1710 = vmatpush1.msra.mxu0 %v1683
        %1711 = vmatprep.subr.mxu0 0.0
        %1712 = vmatpush1.msra.mxu0 %v1684
        %1713 = vmatprep.subr.mxu0 0.0
        %1714 = vmatpush1.msra.mxu0 0.0
        %1715 = vmatprep.subr.mxu0 0.0
        %1716 = vmatpush1.msra.mxu0 0.0
        %1717 = vmatprep.subr.mxu0 0.0
        %1718 = vmatpush1.msra.mxu0 0.0
        %1719 = vmatprep.subr.mxu0 0.0
        %1720 = vmatpush1.msra.mxu0 0.0
        %1721 = vmatprep.subr.mxu0 0.0
        %1722 = vmatpush1.msra.mxu0 0.0
        %1723 = vmatprep.subr.mxu0 0.0
        %1724 = vmatpush1.msra.mxu0 0.0
        %1725 = vmatprep.subr.mxu0 0.0
        %1726 = vmatpush1.msra.mxu0 0.0
        %1727 = vmatprep.subr.mxu0 0.0
        %1728 = vmatpush1.msra.mxu0 0.0
        %1729 = vmatprep.subr.mxu0 0.0
        %1730 = vmatpush1.msra.mxu0 0.0
        %1731 = vmatprep.subr.mxu0 0.0
        %1732 = vmatpush1.msra.mxu0 0.0
        %1733 = vmatprep.subr.mxu0 0.0
        %1734 = vmatpush1.msra.mxu0 0.0
        %1735 = vmatprep.subr.mxu0 0.0
        %1736 = vmatpush1.msra.mxu0 0.0
        %1737 = vmatprep.subr.mxu0 0.0
        %1738 = vmatpush1.msra.mxu0 0.0
        %1739 = vmatprep.subr.mxu0 0.0
        %1740 = vmatpush1.msra.mxu0 0.0
        %1741 = vmatprep.subr.mxu0 0.0
        %1742 = vmatpush1.msra.mxu0 0.0
        %1743 = vmatprep.subr.mxu0 0.0
        %1744 = vmatpush1.msra.mxu0 0.0
        %1745 = vmatprep.subr.mxu0 0.0
        %1746 = vmatpush1.msra.mxu0 0.0
        %1747 = vmatprep.subr.mxu0 0.0
        %1748 = vmatpush1.msra.mxu0 0.0
        %1749 = vmatprep.subr.mxu0 0.0
        %1750 = vmatpush1.msra.mxu0 0.0
        %1751 = vmatprep.subr.mxu0 0.0
        %1752 = vmatpush1.msra.mxu0 0.0
        %1753 = vmatprep.subr.mxu0 0.0
        %1754 = vmatpush1.msra.mxu0 0.0
        %1755 = vmatprep.subr.mxu0 0.0
        %1756 = vmatpush1.msra.mxu0 0.0
        %1757 = vmatprep.subr.mxu0 0.0
        %1758 = vmatpush1.msra.mxu0 0.0
        %1759 = vmatprep.subr.mxu0 0.0
        %1760 = vmatpush1.msra.mxu0 0.0
        %1761 = vmatprep.subr.mxu0 0.0
        %1762 = vmatpush1.msra.mxu0 0.0
        %1763 = vmatprep.subr.mxu0 0.0
        %1764 = vmatpush1.msra.mxu0 0.0
        %1765 = vmatprep.subr.mxu0 0.0
        %1766 = vmatpush1.msra.mxu0 0.0
        %1767 = vmatprep.subr.mxu0 0.0
        %1768 = vmatpush1.msra.mxu0 0.0
        %1769 = vmatprep.mubr.f32.mxu0 0.0
        %1770 = vmatmul.mubr.f32.gmra.mrb[0].mxu0 %v1694
        %v1771 = vpop.f32.mrb[0].mxu0
        %v1772 = vadd.f32 %v1690, %v1771
        %v1773 = vpop.f32.mrb[0].mxu0
        %1774 = vmatprep.mubr.f32.mxu0 0.0
        %1775 = vmatmul.mubr.f32.gmra.mrb[0].mxu0 %v1697
        %v1776 = vpop.f32.mrb[0].mxu0
        %v1777 = vadd.f32 %v1690, %v1776
        %v1778 = vpop.f32.mrb[0].mxu0
        %1779 = vmatprep.mubr.f32.mxu0 0.0
        %1780 = vmatmul.mubr.f32.gmra.mrb[0].mxu0 %v1700
        %v1781 = vpop.f32.mrb[0].mxu0
        %v1782 = vadd.f32 %v1690, %v1781
        %v1783 = vpop.f32.mrb[0].mxu0
        %1784 = vmatprep.mubr.f32.mxu0 0.0
        %1785 = vmatmul.mubr.f32.gmra.mrb[0].mxu0 %v1703
        %v1786 = vpop.f32.mrb[0].mxu0
        %v1787 = vadd.f32 %v1690, %v1786
        %v1788 = vpop.f32.mrb[0].mxu0
        %1789 = vdwg.mxu0
        %v1790 = vld [vmem:[%s15] sm:$0xff]
        %v1791 = vld [vmem:[%s15 + $0x8] sm:$0xff]
        %v1792 = vld [vmem:[%s15 + $0x10] sm:$0xff]
        %v1793 = vld [vmem:[%s15 + $0x18] sm:$0xff]
        %v1794 = vld [vmem:[%s17] sm:$0x1]
        %v1796 = vlaneseq
        %v1797 = vshrl.u32 %v1796, 7
        %v1798 = vsub.s32 0, %v1797
        %v1799 = vrot.slane %v1794, %v1798
        %1801 = vmatprep.subr.mxu0 0.0
        %1802 = vmatpush1.msra.mxu0 %v1790
        %1803 = vmatprep.subr.mxu0 0.0
        %1804 = vmatpush1.msra.mxu0 %v1791
        %1805 = vmatprep.subr.mxu0 0.0
        %1806 = vmatpush1.msra.mxu0 %v1792
        %1807 = vmatprep.subr.mxu0 0.0
        %1808 = vmatpush1.msra.mxu0 %v1793
        %1809 = vmatprep.subr.mxu0 0.0
        %1810 = vmatpush1.msra.mxu0 0.0
        %1811 = vmatprep.subr.mxu0 0.0
        %1812 = vmatpush1.msra.mxu0 0.0
        %1813 = vmatprep.subr.mxu0 0.0
        %1814 = vmatpush1.msra.mxu0 0.0
        %1815 = vmatprep.subr.mxu0 0.0
        %1816 = vmatpush1.msra.mxu0 0.0
        %1817 = vmatprep.subr.mxu0 0.0
        %1818 = vmatpush1.msra.mxu0 0.0
        %1819 = vmatprep.subr.mxu0 0.0
        %1820 = vmatpush1.msra.mxu0 0.0
        %1821 = vmatprep.subr.mxu0 0.0
        %1822 = vmatpush1.msra.mxu0 0.0
        %1823 = vmatprep.subr.mxu0 0.0
        %1824 = vmatpush1.msra.mxu0 0.0
        %1825 = vmatprep.subr.mxu0 0.0
        %1826 = vmatpush1.msra.mxu0 0.0
        %1827 = vmatprep.subr.mxu0 0.0
        %1828 = vmatpush1.msra.mxu0 0.0
        %1829 = vmatprep.subr.mxu0 0.0
        %1830 = vmatpush1.msra.mxu0 0.0
        %1831 = vmatprep.subr.mxu0 0.0
        %1832 = vmatpush1.msra.mxu0 0.0
        %1833 = vmatprep.subr.mxu0 0.0
        %1834 = vmatpush1.msra.mxu0 0.0
        %1835 = vmatprep.subr.mxu0 0.0
        %1836 = vmatpush1.msra.mxu0 0.0
        %1837 = vmatprep.subr.mxu0 0.0
        %1838 = vmatpush1.msra.mxu0 0.0
        %1839 = vmatprep.subr.mxu0 0.0
        %1840 = vmatpush1.msra.mxu0 0.0
        %1841 = vmatprep.subr.mxu0 0.0
        %1842 = vmatpush1.msra.mxu0 0.0
        %1843 = vmatprep.subr.mxu0 0.0
        %1844 = vmatpush1.msra.mxu0 0.0
        %1845 = vmatprep.subr.mxu0 0.0
        %1846 = vmatpush1.msra.mxu0 0.0
        %1847 = vmatprep.subr.mxu0 0.0
        %1848 = vmatpush1.msra.mxu0 0.0
        %1849 = vmatprep.subr.mxu0 0.0
        %1850 = vmatpush1.msra.mxu0 0.0
        %1851 = vmatprep.subr.mxu0 0.0
        %1852 = vmatpush1.msra.mxu0 0.0
        %1853 = vmatprep.subr.mxu0 0.0
        %1854 = vmatpush1.msra.mxu0 0.0
        %1855 = vmatprep.subr.mxu0 0.0
        %1856 = vmatpush1.msra.mxu0 0.0
        %1857 = vmatprep.subr.mxu0 0.0
        %1858 = vmatpush1.msra.mxu0 0.0
        %1859 = vmatprep.subr.mxu0 0.0
        %1860 = vmatpush1.msra.mxu0 0.0
        %1861 = vmatprep.subr.mxu0 0.0
        %1862 = vmatpush1.msra.mxu0 0.0
        %1863 = vmatprep.subr.mxu0 0.0
        %1864 = vmatpush1.msra.mxu0 0.0
        %1865 = vmatprep.mubr.f32.mxu0 0.0
        %1866 = vmatmul.mubr.f32.gmra.mrb[0].mxu0 %v1694
        %v1867 = vpop.f32.mrb[0].mxu0
        %v1868 = vadd.f32 %v1799, %v1867
        %v1869 = vpop.f32.mrb[0].mxu0
        %1870 = vmatprep.mubr.f32.mxu0 0.0
        %1871 = vmatmul.mubr.f32.gmra.mrb[0].mxu0 %v1697
        %v1872 = vpop.f32.mrb[0].mxu0
        %v1873 = vadd.f32 %v1799, %v1872
        %v1874 = vpop.f32.mrb[0].mxu0
        %1875 = vmatprep.mubr.f32.mxu0 0.0
        %1876 = vmatmul.mubr.f32.gmra.mrb[0].mxu0 %v1700
        %v1877 = vpop.f32.mrb[0].mxu0
        %v1878 = vadd.f32 %v1799, %v1877
        %v1879 = vpop.f32.mrb[0].mxu0
        %1880 = vmatprep.mubr.f32.mxu0 0.0
        %1881 = vmatmul.mubr.f32.gmra.mrb[0].mxu0 %v1703
        %v1882 = vpop.f32.mrb[0].mxu0
        %v1883 = vadd.f32 %v1799, %v1882
        %v1884 = vpop.f32.mrb[0].mxu0
        %1885 = vdwg.mxu0
        %v1886 = vld [vmem:[%s19] sm:$0xff]
        %v1887 = vld [vmem:[%s19 + $0x8] sm:$0xff]
        %v1888 = vld [vmem:[%s19 + $0x10] sm:$0xff]
        %v1889 = vld [vmem:[%s19 + $0x18] sm:$0xff]
        %v1890 = vld [vmem:[%s21] sm:$0x1]
        %v1892 = vlaneseq
        %v1893 = vshrl.u32 %v1892, 7
        %v1894 = vsub.s32 0, %v1893
        %v1895 = vrot.slane %v1890, %v1894
        %1897 = vmatprep.subr.mxu0 0.0
        %1898 = vmatpush1.msra.mxu0 %v1886
        %1899 = vmatprep.subr.mxu0 0.0
        %1900 = vmatpush1.msra.mxu0 %v1887
        %1901 = vmatprep.subr.mxu0 0.0
        %1902 = vmatpush1.msra.mxu0 %v1888
        %1903 = vmatprep.subr.mxu0 0.0
        %1904 = vmatpush1.msra.mxu0 %v1889
        %1905 = vmatprep.subr.mxu0 0.0
        %1906 = vmatpush1.msra.mxu0 0.0
        %1907 = vmatprep.subr.mxu0 0.0
        %1908 = vmatpush1.msra.mxu0 0.0
        %1909 = vmatprep.subr.mxu0 0.0
        %1910 = vmatpush1.msra.mxu0 0.0
        %1911 = vmatprep.subr.mxu0 0.0
        %1912 = vmatpush1.msra.mxu0 0.0
        %1913 = vmatprep.subr.mxu0 0.0
        %1914 = vmatpush1.msra.mxu0 0.0
        %1915 = vmatprep.subr.mxu0 0.0
        %1916 = vmatpush1.msra.mxu0 0.0
        %1917 = vmatprep.subr.mxu0 0.0
        %1918 = vmatpush1.msra.mxu0 0.0
        %1919 = vmatprep.subr.mxu0 0.0
        %1920 = vmatpush1.msra.mxu0 0.0
        %1921 = vmatprep.subr.mxu0 0.0
        %1922 = vmatpush1.msra.mxu0 0.0
        %1923 = vmatprep.subr.mxu0 0.0
        %1924 = vmatpush1.msra.mxu0 0.0
        %1925 = vmatprep.subr.mxu0 0.0
        %1926 = vmatpush1.msra.mxu0 0.0
        %1927 = vmatprep.subr.mxu0 0.0
        %1928 = vmatpush1.msra.mxu0 0.0
        %1929 = vmatprep.subr.mxu0 0.0
        %1930 = vmatpush1.msra.mxu0 0.0
        %1931 = vmatprep.subr.mxu0 0.0
        %1932 = vmatpush1.msra.mxu0 0.0
        %1933 = vmatprep.subr.mxu0 0.0
        %1934 = vmatpush1.msra.mxu0 0.0
        %1935 = vmatprep.subr.mxu0 0.0
        %1936 = vmatpush1.msra.mxu0 0.0
        %1937 = vmatprep.subr.mxu0 0.0
        %1938 = vmatpush1.msra.mxu0 0.0
        %1939 = vmatprep.subr.mxu0 0.0
        %1940 = vmatpush1.msra.mxu0 0.0
        %1941 = vmatprep.subr.mxu0 0.0
        %1942 = vmatpush1.msra.mxu0 0.0
        %1943 = vmatprep.subr.mxu0 0.0
        %1944 = vmatpush1.msra.mxu0 0.0
        %1945 = vmatprep.subr.mxu0 0.0
        %1946 = vmatpush1.msra.mxu0 0.0
        %1947 = vmatprep.subr.mxu0 0.0
        %1948 = vmatpush1.msra.mxu0 0.0
        %1949 = vmatprep.subr.mxu0 0.0
        %1950 = vmatpush1.msra.mxu0 0.0
        %1951 = vmatprep.subr.mxu0 0.0
        %1952 = vmatpush1.msra.mxu0 0.0
        %1953 = vmatprep.subr.mxu0 0.0
        %1954 = vmatpush1.msra.mxu0 0.0
        %1955 = vmatprep.subr.mxu0 0.0
        %1956 = vmatpush1.msra.mxu0 0.0
        %1957 = vmatprep.subr.mxu0 0.0
        %1958 = vmatpush1.msra.mxu0 0.0
        %1959 = vmatprep.subr.mxu0 0.0
        %1960 = vmatpush1.msra.mxu0 0.0
        %1961 = vmatprep.mubr.f32.mxu0 0.0
        %1962 = vmatmul.mubr.f32.gmra.mrb[0].mxu0 %v1694
        %v1963 = vpop.f32.mrb[0].mxu0
        %v1964 = vadd.f32 %v1895, %v1963
        %v1965 = vpop.f32.mrb[0].mxu0
        %1966 = vmatprep.mubr.f32.mxu0 0.0
        %1967 = vmatmul.mubr.f32.gmra.mrb[0].mxu0 %v1697
        %v1968 = vpop.f32.mrb[0].mxu0
        %v1969 = vadd.f32 %v1895, %v1968
        %v1970 = vpop.f32.mrb[0].mxu0
        %1971 = vmatprep.mubr.f32.mxu0 0.0
        %1972 = vmatmul.mubr.f32.gmra.mrb[0].mxu0 %v1700
        %v1973 = vpop.f32.mrb[0].mxu0
        %v1974 = vadd.f32 %v1895, %v1973
        %v1975 = vpop.f32.mrb[0].mxu0
        %1976 = vmatprep.mubr.f32.mxu0 0.0
        %1977 = vmatmul.mubr.f32.gmra.mrb[0].mxu0 %v1703
        %v1978 = vpop.f32.mrb[0].mxu0
        %v1979 = vadd.f32 %v1895, %v1978
        %v1980 = vpop.f32.mrb[0].mxu0
        %1981 = vdwg.mxu0
        %v1982 = vld [vmem:[%s23] sm:$0xff]
        %v1983 = vld [vmem:[%s23 + $0x8] sm:$0xff]
        %v1984 = vld [vmem:[%s23 + $0x10] sm:$0xff]
        %v1985 = vld [vmem:[%s23 + $0x18] sm:$0xff]
        %vm1986 = vcmask 64512
        %v1988 = vsel %vm1986, %v1772, 0
        %v1991 = vsel %vm1986, %v1777, 0
        %v1994 = vsel %vm1986, %v1782, 0
        %v1997 = vsel %vm1986, %v1787, 0
        %v2000 = vsel %vm1986, %v1868, 0
        %v2003 = vsel %vm1986, %v1873, 0
        %v2006 = vsel %vm1986, %v1878, 0
        %v2009 = vsel %vm1986, %v1883, 0
        %2011 = vmatprep.subr.mxu0 0.0
        %2012 = vmatpush1.xpose.msra.mxu0 %v2000
        %2013 = vmatprep.subr.mxu0 0.0
        %2014 = vmatpush1.xpose.msra.mxu0 %v2003
        %2015 = vmatprep.subr.mxu0 0.0
        %2016 = vmatpush1.xpose.msra.mxu0 %v2006
        %2017 = vmatprep.subr.mxu0 0.0
        %2018 = vmatpush1.xpose.msra.mxu0 %v2009
        %2019 = vmatprep.subr.mxu0 0.0
        %2020 = vmatpush1.xpose.msra.mxu0 0.0
        %2021 = vmatprep.subr.mxu0 0.0
        %2022 = vmatpush1.xpose.msra.mxu0 0.0
        %2023 = vmatprep.subr.mxu0 0.0
        %2024 = vmatpush1.xpose.msra.mxu0 0.0
        %2025 = vmatprep.subr.mxu0 0.0
        %2026 = vmatpush1.xpose.msra.mxu0 0.0
        %2027 = vmatprep.subr.mxu0 0.0
        %2028 = vmatpush1.xpose.msra.mxu0 0.0
        %2029 = vmatprep.subr.mxu0 0.0
        %2030 = vmatpush1.xpose.msra.mxu0 0.0
        %2031 = vmatprep.subr.mxu0 0.0
        %2032 = vmatpush1.xpose.msra.mxu0 0.0
        %2033 = vmatprep.subr.mxu0 0.0
        %2034 = vmatpush1.xpose.msra.mxu0 0.0
        %2035 = vmatprep.subr.mxu0 0.0
        %2036 = vmatpush1.xpose.msra.mxu0 0.0
        %2037 = vmatprep.subr.mxu0 0.0
        %2038 = vmatpush1.xpose.msra.mxu0 0.0
        %2039 = vmatprep.subr.mxu0 0.0
        %2040 = vmatpush1.xpose.msra.mxu0 0.0
        %2041 = vmatprep.subr.mxu0 0.0
        %2042 = vmatpush1.xpose.msra.mxu0 0.0
        %2043 = vmatprep.subr.mxu0 0.0
        %2044 = vmatpush1.xpose.msra.mxu0 0.0
        %2045 = vmatprep.subr.mxu0 0.0
        %2046 = vmatpush1.xpose.msra.mxu0 0.0
        %2047 = vmatprep.subr.mxu0 0.0
        %2048 = vmatpush1.xpose.msra.mxu0 0.0
        %2049 = vmatprep.subr.mxu0 0.0
        %2050 = vmatpush1.xpose.msra.mxu0 0.0
        %2051 = vmatprep.subr.mxu0 0.0
        %2052 = vmatpush1.xpose.msra.mxu0 0.0
        %2053 = vmatprep.subr.mxu0 0.0
        %2054 = vmatpush1.xpose.msra.mxu0 0.0
        %2055 = vmatprep.subr.mxu0 0.0
        %2056 = vmatpush1.xpose.msra.mxu0 0.0
        %2057 = vmatprep.subr.mxu0 0.0
        %2058 = vmatpush1.xpose.msra.mxu0 0.0
        %2059 = vmatprep.subr.mxu0 0.0
        %2060 = vmatpush1.xpose.msra.mxu0 0.0
        %2061 = vmatprep.subr.mxu0 0.0
        %2062 = vmatpush1.xpose.msra.mxu0 0.0
        %2063 = vmatprep.subr.mxu0 0.0
        %2064 = vmatpush1.xpose.msra.mxu0 0.0
        %2065 = vmatprep.subr.mxu0 0.0
        %2066 = vmatpush1.xpose.msra.mxu0 0.0
        %2067 = vmatprep.subr.mxu0 0.0
        %2068 = vmatpush1.xpose.msra.mxu0 0.0
        %2069 = vmatprep.subr.mxu0 0.0
        %2070 = vmatpush1.xpose.msra.mxu0 0.0
        %2071 = vmatprep.subr.mxu0 0.0
        %2072 = vmatpush1.xpose.msra.mxu0 0.0
        %2073 = vmatprep.subr.mxu0 0.0
        %2074 = vmatpush1.xpose.msra.mxu0 0.0
        %2075 = vmatprep.mubr.f32.mxu0 0.0
        %2076 = vmatmul.mubr.f32.gmra.mrb[0].mxu0 %v1988
        %v2077 = vpop.f32.mrb[0].mxu0
        %v2078 = vadd.f32 0.0, %v2077
        %v2079 = vpop.f32.mrb[0].mxu0
        %2080 = vmatprep.mubr.f32.mxu0 0.0
        %2081 = vmatmul.mubr.f32.gmra.mrb[0].mxu0 %v1991
        %v2082 = vpop.f32.mrb[0].mxu0
        %v2083 = vadd.f32 0.0, %v2082
        %v2084 = vpop.f32.mrb[0].mxu0
        %2085 = vmatprep.mubr.f32.mxu0 0.0
        %2086 = vmatmul.mubr.f32.gmra.mrb[0].mxu0 %v1994
        %v2087 = vpop.f32.mrb[0].mxu0
        %v2088 = vadd.f32 0.0, %v2087
        %v2089 = vpop.f32.mrb[0].mxu0
        %2090 = vmatprep.mubr.f32.mxu0 0.0
        %2091 = vmatmul.mubr.f32.gmra.mrb[0].mxu0 %v1997
        %v2092 = vpop.f32.mrb[0].mxu0
        %v2093 = vadd.f32 0.0, %v2092
        %v2094 = vpop.f32.mrb[0].mxu0
        %2095 = vdwg.mxu0
        %v2096 = vmul.f32 %v2078, 0.35355338
        %v2097 = vmul.f32 %v2083, 0.35355338
        %v2098 = vmul.f32 %v2088, 0.35355338
        %v2099 = vmul.f32 %v2093, 0.35355338
        %v2100 = vadd.f32 %v2096, %v1677
        %v2101 = vadd.f32 %v2097, %v1678
        %v2102 = vadd.f32 %v2098, %v1679
        %v2103 = vadd.f32 %v2099, %v1680
        %vm2104 = vcmask 244736
        %v2105 = vsel %vm2104, %v2100, -inf
        %2106 = vmax.xlane.f32.xlu0 %v2105
        %v2107 = vpop.xlane.xlu0 %2106
        %v2108 = vsel %vm2104, %v2101, -inf
        %2109 = vmax.xlane.f32.xlu0 %v2108
        %v2110 = vpop.xlane.xlu0 %2109
        %v2111 = vsel %vm2104, %v2102, -inf
        %2112 = vmax.xlane.f32.xlu0 %v2111
        %v2113 = vpop.xlane.xlu0 %2112
        %vm2114 = vcmask 242688
        %v2115 = vsel %vm2114, %v2103, -inf
        %2116 = vmax.xlane.f32.xlu0 %v2115
        %v2117 = vpop.xlane.xlu0 %2116
        %v2118 = vsub.f32 %v2100, %v2107
        %v2119 = vsub.f32 %v2101, %v2110
        %v2120 = vsub.f32 %v2102, %v2113
        %v2121 = vsub.f32 %v2103, %v2117
        %v2122 = vmul.f32 %v2118, 1.442695
        %v2123 = vpow.pop %v2122
        %v2124 = vmul.f32 %v2119, 1.442695
        %v2125 = vpow.pop %v2124
        %v2126 = vmul.f32 %v2120, 1.442695
        %v2127 = vpow.pop %v2126
        %v2128 = vmul.f32 %v2121, 1.442695
        %v2129 = vpow.pop %v2128
        %v2130 = vsel %vm2104, %v2123, 0.0
        %2131 = vadd.xlane.f32.xlu0 %v2130
        %v2132 = vpop.xlane.xlu0 %2131
        %v2133 = vsel %vm2104, %v2125, 0.0
        %2134 = vadd.xlane.f32.xlu0 %v2133
        %v2135 = vpop.xlane.xlu0 %2134
        %v2136 = vsel %vm2104, %v2127, 0.0
        %2137 = vadd.xlane.f32.xlu0 %v2136
        %v2138 = vpop.xlane.xlu0 %2137
        %v2139 = vsel %vm2114, %v2129, 0.0
        %2140 = vadd.xlane.f32.xlu0 %v2139
        %v2141 = vpop.xlane.xlu0 %2140
        %v2142 = vrcp.pop %v2132
        %v2143 = vrcp.pop %v2135
        %v2144 = vrcp.pop %v2138
        %v2145 = vrcp.pop %v2141
        %v2146 = vmul.f32 %v2123, %v2142
        %v2147 = vmul.f32 %v2125, %v2143
        %v2148 = vmul.f32 %v2127, %v2144
        %v2149 = vmul.f32 %v2129, %v2145
        %v2151 = vsel %vm2104, %v2146, 0
        %v2154 = vsel %vm2104, %v2147, 0
        %v2157 = vsel %vm2104, %v2148, 0
        %v2160 = vsel %vm2104, %v2149, 0
        %vm2162 = vcmask 1045504
        %v2164 = vsel %vm2162, %v1979, 0
        %2166 = vmatprep.subr.mxu0 0.0
        %2167 = vmatpush1.msra.mxu0 %v1964
        %2168 = vmatprep.subr.mxu0 0.0
        %2169 = vmatpush1.msra.mxu0 %v1969
        %2170 = vmatprep.subr.mxu0 0.0
        %2171 = vmatpush1.msra.mxu0 %v1974
        %2172 = vmatprep.subr.mxu0 0.0
        %2173 = vmatpush1.msra.mxu0 %v2164
        %2174 = vmatprep.subr.mxu0 0.0
        %2175 = vmatpush1.msra.mxu0 0.0
        %2176 = vmatprep.subr.mxu0 0.0
        %2177 = vmatpush1.msra.mxu0 0.0
        %2178 = vmatprep.subr.mxu0 0.0
        %2179 = vmatpush1.msra.mxu0 0.0
        %2180 = vmatprep.subr.mxu0 0.0
        %2181 = vmatpush1.msra.mxu0 0.0
        %2182 = vmatprep.subr.mxu0 0.0
        %2183 = vmatpush1.msra.mxu0 0.0
        %2184 = vmatprep.subr.mxu0 0.0
        %2185 = vmatpush1.msra.mxu0 0.0
        %2186 = vmatprep.subr.mxu0 0.0
        %2187 = vmatpush1.msra.mxu0 0.0
        %2188 = vmatprep.subr.mxu0 0.0
        %2189 = vmatpush1.msra.mxu0 0.0
        %2190 = vmatprep.subr.mxu0 0.0
        %2191 = vmatpush1.msra.mxu0 0.0
        %2192 = vmatprep.subr.mxu0 0.0
        %2193 = vmatpush1.msra.mxu0 0.0
        %2194 = vmatprep.subr.mxu0 0.0
        %2195 = vmatpush1.msra.mxu0 0.0
        %2196 = vmatprep.subr.mxu0 0.0
        %2197 = vmatpush1.msra.mxu0 0.0
        %2198 = vmatprep.subr.mxu0 0.0
        %2199 = vmatpush1.msra.mxu0 0.0
        %2200 = vmatprep.subr.mxu0 0.0
        %2201 = vmatpush1.msra.mxu0 0.0
        %2202 = vmatprep.subr.mxu0 0.0
        %2203 = vmatpush1.msra.mxu0 0.0
        %2204 = vmatprep.subr.mxu0 0.0
        %2205 = vmatpush1.msra.mxu0 0.0
        %2206 = vmatprep.subr.mxu0 0.0
        %2207 = vmatpush1.msra.mxu0 0.0
        %2208 = vmatprep.subr.mxu0 0.0
        %2209 = vmatpush1.msra.mxu0 0.0
        %2210 = vmatprep.subr.mxu0 0.0
        %2211 = vmatpush1.msra.mxu0 0.0
        %2212 = vmatprep.subr.mxu0 0.0
        %2213 = vmatpush1.msra.mxu0 0.0
        %2214 = vmatprep.subr.mxu0 0.0
        %2215 = vmatpush1.msra.mxu0 0.0
        %2216 = vmatprep.subr.mxu0 0.0
        %2217 = vmatpush1.msra.mxu0 0.0
        %2218 = vmatprep.subr.mxu0 0.0
        %2219 = vmatpush1.msra.mxu0 0.0
        %2220 = vmatprep.subr.mxu0 0.0
        %2221 = vmatpush1.msra.mxu0 0.0
        %2222 = vmatprep.subr.mxu0 0.0
        %2223 = vmatpush1.msra.mxu0 0.0
        %2224 = vmatprep.subr.mxu0 0.0
        %2225 = vmatpush1.msra.mxu0 0.0
        %2226 = vmatprep.subr.mxu0 0.0
        %2227 = vmatpush1.msra.mxu0 0.0
        %2228 = vmatprep.subr.mxu0 0.0
        %2229 = vmatpush1.msra.mxu0 0.0
        %2230 = vmatprep.mubr.f32.mxu0 0.0
        %2231 = vmatmul.mubr.f32.gmra.mrb[0].mxu0 %v2151
        %v2232 = vpop.f32.mrb[0].mxu0
        %v2233 = vadd.f32 0.0, %v2232
        %v2234 = vpop.f32.mrb[0].mxu0
        %2235 = vmatprep.mubr.f32.mxu0 0.0
        %2236 = vmatmul.mubr.f32.gmra.mrb[0].mxu0 %v2154
        %v2237 = vpop.f32.mrb[0].mxu0
        %v2238 = vadd.f32 0.0, %v2237
        %v2239 = vpop.f32.mrb[0].mxu0
        %2240 = vmatprep.mubr.f32.mxu0 0.0
        %2241 = vmatmul.mubr.f32.gmra.mrb[0].mxu0 %v2157
        %v2242 = vpop.f32.mrb[0].mxu0
        %v2243 = vadd.f32 0.0, %v2242
        %v2244 = vpop.f32.mrb[0].mxu0
        %2245 = vmatprep.mubr.f32.mxu0 0.0
        %2246 = vmatmul.mubr.f32.gmra.mrb[0].mxu0 %v2160
        %v2247 = vpop.f32.mrb[0].mxu0
        %v2248 = vadd.f32 0.0, %v2247
        %v2249 = vpop.f32.mrb[0].mxu0
        %2250 = vdwg.mxu0
        %2251 = vrot.lane.b32.xlu0 %v1772, 120
        %v2252 = vpop.permute.xlu0 %2251
        %2253 = vrot.lane.b32.xlu0 %v1777, 120
        %v2254 = vpop.permute.xlu0 %2253
        %2255 = vrot.lane.b32.xlu0 %v1782, 120
        %v2256 = vpop.permute.xlu0 %2255
        %2257 = vrot.lane.b32.xlu0 %v1787, 120
        %v2258 = vpop.permute.xlu0 %2257
        %2259 = vrot.lane.b32.xlu0 %v1868, 120
        %v2260 = vpop.permute.xlu0 %2259
        %2261 = vrot.lane.b32.xlu0 %v1873, 120
        %v2262 = vpop.permute.xlu0 %2261
        %2263 = vrot.lane.b32.xlu0 %v1878, 120
        %v2264 = vpop.permute.xlu0 %2263
        %2265 = vrot.lane.b32.xlu0 %v1883, 120
        %v2266 = vpop.permute.xlu0 %2265
        %v2267 = vsel %vm1986, %v2252, 0
        %v2269 = vsel %vm1986, %v2254, 0
        %v2271 = vsel %vm1986, %v2256, 0
        %v2273 = vsel %vm1986, %v2258, 0
        %v2275 = vsel %vm1986, %v2260, 0
        %v2277 = vsel %vm1986, %v2262, 0
        %v2279 = vsel %vm1986, %v2264, 0
        %v2281 = vsel %vm1986, %v2266, 0
        %2283 = vmatprep.subr.mxu0 0.0
        %2284 = vmatpush1.xpose.msra.mxu0 %v2275
        %2285 = vmatprep.subr.mxu0 0.0
        %2286 = vmatpush1.xpose.msra.mxu0 %v2277
        %2287 = vmatprep.subr.mxu0 0.0
        %2288 = vmatpush1.xpose.msra.mxu0 %v2279
        %2289 = vmatprep.subr.mxu0 0.0
        %2290 = vmatpush1.xpose.msra.mxu0 %v2281
        %2291 = vmatprep.subr.mxu0 0.0
        %2292 = vmatpush1.xpose.msra.mxu0 0.0
        %2293 = vmatprep.subr.mxu0 0.0
        %2294 = vmatpush1.xpose.msra.mxu0 0.0
        %2295 = vmatprep.subr.mxu0 0.0
        %2296 = vmatpush1.xpose.msra.mxu0 0.0
        %2297 = vmatprep.subr.mxu0 0.0
        %2298 = vmatpush1.xpose.msra.mxu0 0.0
        %2299 = vmatprep.subr.mxu0 0.0
        %2300 = vmatpush1.xpose.msra.mxu0 0.0
        %2301 = vmatprep.subr.mxu0 0.0
        %2302 = vmatpush1.xpose.msra.mxu0 0.0
        %2303 = vmatprep.subr.mxu0 0.0
        %2304 = vmatpush1.xpose.msra.mxu0 0.0
        %2305 = vmatprep.subr.mxu0 0.0
        %2306 = vmatpush1.xpose.msra.mxu0 0.0
        %2307 = vmatprep.subr.mxu0 0.0
        %2308 = vmatpush1.xpose.msra.mxu0 0.0
        %2309 = vmatprep.subr.mxu0 0.0
        %2310 = vmatpush1.xpose.msra.mxu0 0.0
        %2311 = vmatprep.subr.mxu0 0.0
        %2312 = vmatpush1.xpose.msra.mxu0 0.0
        %2313 = vmatprep.subr.mxu0 0.0
        %2314 = vmatpush1.xpose.msra.mxu0 0.0
        %2315 = vmatprep.subr.mxu0 0.0
        %2316 = vmatpush1.xpose.msra.mxu0 0.0
        %2317 = vmatprep.subr.mxu0 0.0
        %2318 = vmatpush1.xpose.msra.mxu0 0.0
        %2319 = vmatprep.subr.mxu0 0.0
        %2320 = vmatpush1.xpose.msra.mxu0 0.0
        %2321 = vmatprep.subr.mxu0 0.0
        %2322 = vmatpush1.xpose.msra.mxu0 0.0
        %2323 = vmatprep.subr.mxu0 0.0
        %2324 = vmatpush1.xpose.msra.mxu0 0.0
        %2325 = vmatprep.subr.mxu0 0.0
        %2326 = vmatpush1.xpose.msra.mxu0 0.0
        %2327 = vmatprep.subr.mxu0 0.0
        %2328 = vmatpush1.xpose.msra.mxu0 0.0
        %2329 = vmatprep.subr.mxu0 0.0
        %2330 = vmatpush1.xpose.msra.mxu0 0.0
        %2331 = vmatprep.subr.mxu0 0.0
        %2332 = vmatpush1.xpose.msra.mxu0 0.0
        %2333 = vmatprep.subr.mxu0 0.0
        %2334 = vmatpush1.xpose.msra.mxu0 0.0
        %2335 = vmatprep.subr.mxu0 0.0
        %2336 = vmatpush1.xpose.msra.mxu0 0.0
        %2337 = vmatprep.subr.mxu0 0.0
        %2338 = vmatpush1.xpose.msra.mxu0 0.0
        %2339 = vmatprep.subr.mxu0 0.0
        %2340 = vmatpush1.xpose.msra.mxu0 0.0
        %2341 = vmatprep.subr.mxu0 0.0
        %2342 = vmatpush1.xpose.msra.mxu0 0.0
        %2343 = vmatprep.subr.mxu0 0.0
        %2344 = vmatpush1.xpose.msra.mxu0 0.0
        %2345 = vmatprep.subr.mxu0 0.0
        %2346 = vmatpush1.xpose.msra.mxu0 0.0
        %2347 = vmatprep.mubr.f32.mxu0 0.0
        %2348 = vmatmul.mubr.f32.gmra.mrb[0].mxu0 %v2267
        %v2349 = vpop.f32.mrb[0].mxu0
        %v2350 = vadd.f32 0.0, %v2349
        %v2351 = vpop.f32.mrb[0].mxu0
        %2352 = vmatprep.mubr.f32.mxu0 0.0
        %2353 = vmatmul.mubr.f32.gmra.mrb[0].mxu0 %v2269
        %v2354 = vpop.f32.mrb[0].mxu0
        %v2355 = vadd.f32 0.0, %v2354
        %v2356 = vpop.f32.mrb[0].mxu0
        %2357 = vmatprep.mubr.f32.mxu0 0.0
        %2358 = vmatmul.mubr.f32.gmra.mrb[0].mxu0 %v2271
        %v2359 = vpop.f32.mrb[0].mxu0
        %v2360 = vadd.f32 0.0, %v2359
        %v2361 = vpop.f32.mrb[0].mxu0
        %2362 = vmatprep.mubr.f32.mxu0 0.0
        %2363 = vmatmul.mubr.f32.gmra.mrb[0].mxu0 %v2273
        %v2364 = vpop.f32.mrb[0].mxu0
        %v2365 = vadd.f32 0.0, %v2364
        %v2366 = vpop.f32.mrb[0].mxu0
        %2367 = vdwg.mxu0
        %v2368 = vmul.f32 %v2350, 0.35355338
        %v2369 = vmul.f32 %v2355, 0.35355338
        %v2370 = vmul.f32 %v2360, 0.35355338
        %v2371 = vmul.f32 %v2365, 0.35355338
        %v2372 = vadd.f32 %v2368, %v1677
        %v2373 = vadd.f32 %v2369, %v1678
        %v2374 = vadd.f32 %v2370, %v1679
        %v2375 = vadd.f32 %v2371, %v1680
        %v2376 = vsel %vm2104, %v2372, -inf
        %2377 = vmax.xlane.f32.xlu0 %v2376
        %v2378 = vpop.xlane.xlu0 %2377
        %v2379 = vsel %vm2104, %v2373, -inf
        %2380 = vmax.xlane.f32.xlu0 %v2379
        %v2381 = vpop.xlane.xlu0 %2380
        %v2382 = vsel %vm2104, %v2374, -inf
        %2383 = vmax.xlane.f32.xlu0 %v2382
        %v2384 = vpop.xlane.xlu0 %2383
        %v2385 = vsel %vm2114, %v2375, -inf
        %2386 = vmax.xlane.f32.xlu0 %v2385
        %v2387 = vpop.xlane.xlu0 %2386
        %v2388 = vsub.f32 %v2372, %v2378
        %v2389 = vsub.f32 %v2373, %v2381
        %v2390 = vsub.f32 %v2374, %v2384
        %v2391 = vsub.f32 %v2375, %v2387
        %v2392 = vmul.f32 %v2388, 1.442695
        %v2393 = vpow.pop %v2392
        %v2394 = vmul.f32 %v2389, 1.442695
        %v2395 = vpow.pop %v2394
        %v2396 = vmul.f32 %v2390, 1.442695
        %v2397 = vpow.pop %v2396
        %v2398 = vmul.f32 %v2391, 1.442695
        %v2399 = vpow.pop %v2398
        %v2400 = vsel %vm2104, %v2393, 0.0
        %2401 = vadd.xlane.f32.xlu0 %v2400
        %v2402 = vpop.xlane.xlu0 %2401
        %v2403 = vsel %vm2104, %v2395, 0.0
        %2404 = vadd.xlane.f32.xlu0 %v2403
        %v2405 = vpop.xlane.xlu0 %2404
        %v2406 = vsel %vm2104, %v2397, 0.0
        %2407 = vadd.xlane.f32.xlu0 %v2406
        %v2408 = vpop.xlane.xlu0 %2407
        %v2409 = vsel %vm2114, %v2399, 0.0
        %2410 = vadd.xlane.f32.xlu0 %v2409
        %v2411 = vpop.xlane.xlu0 %2410
        %v2412 = vrcp.pop %v2402
        %v2413 = vrcp.pop %v2405
        %v2414 = vrcp.pop %v2408
        %v2415 = vrcp.pop %v2411
        %v2416 = vmul.f32 %v2393, %v2412
        %v2417 = vmul.f32 %v2395, %v2413
        %v2418 = vmul.f32 %v2397, %v2414
        %v2419 = vmul.f32 %v2399, %v2415
        %2423 = vrot.lane.b32.xlu0 %v1964, 120
        %v2424 = vpop.permute.xlu0 %2423
        %2425 = vrot.lane.b32.xlu0 %v1969, 120
        %v2426 = vpop.permute.xlu0 %2425
        %2427 = vrot.lane.b32.xlu0 %v1974, 120
        %v2428 = vpop.permute.xlu0 %2427
        %2429 = vrot.lane.b32.xlu0 %v1979, 120
        %v2430 = vpop.permute.xlu0 %2429
        %v2435 = vsel %vm2104, %v2416, 0
        %v2438 = vsel %vm2104, %v2417, 0
        %v2441 = vsel %vm2104, %v2418, 0
        %v2444 = vsel %vm2104, %v2419, 0
        %v2446 = vsel %vm2162, %v2430, 0
        %2448 = vmatprep.subr.mxu0 0.0
        %2449 = vmatpush1.msra.mxu0 %v2424
        %2450 = vmatprep.subr.mxu0 0.0
        %2451 = vmatpush1.msra.mxu0 %v2426
        %2452 = vmatprep.subr.mxu0 0.0
        %2453 = vmatpush1.msra.mxu0 %v2428
        %2454 = vmatprep.subr.mxu0 0.0
        %2455 = vmatpush1.msra.mxu0 %v2446
        %2456 = vmatprep.subr.mxu0 0.0
        %2457 = vmatpush1.msra.mxu0 0.0
        %2458 = vmatprep.subr.mxu0 0.0
        %2459 = vmatpush1.msra.mxu0 0.0
        %2460 = vmatprep.subr.mxu0 0.0
        %2461 = vmatpush1.msra.mxu0 0.0
        %2462 = vmatprep.subr.mxu0 0.0
        %2463 = vmatpush1.msra.mxu0 0.0
        %2464 = vmatprep.subr.mxu0 0.0
        %2465 = vmatpush1.msra.mxu0 0.0
        %2466 = vmatprep.subr.mxu0 0.0
        %2467 = vmatpush1.msra.mxu0 0.0
        %2468 = vmatprep.subr.mxu0 0.0
        %2469 = vmatpush1.msra.mxu0 0.0
        %2470 = vmatprep.subr.mxu0 0.0
        %2471 = vmatpush1.msra.mxu0 0.0
        %2472 = vmatprep.subr.mxu0 0.0
        %2473 = vmatpush1.msra.mxu0 0.0
        %2474 = vmatprep.subr.mxu0 0.0
        %2475 = vmatpush1.msra.mxu0 0.0
        %2476 = vmatprep.subr.mxu0 0.0
        %2477 = vmatpush1.msra.mxu0 0.0
        %2478 = vmatprep.subr.mxu0 0.0
        %2479 = vmatpush1.msra.mxu0 0.0
        %2480 = vmatprep.subr.mxu0 0.0
        %2481 = vmatpush1.msra.mxu0 0.0
        %2482 = vmatprep.subr.mxu0 0.0
        %2483 = vmatpush1.msra.mxu0 0.0
        %2484 = vmatprep.subr.mxu0 0.0
        %2485 = vmatpush1.msra.mxu0 0.0
        %2486 = vmatprep.subr.mxu0 0.0
        %2487 = vmatpush1.msra.mxu0 0.0
        %2488 = vmatprep.subr.mxu0 0.0
        %2489 = vmatpush1.msra.mxu0 0.0
        %2490 = vmatprep.subr.mxu0 0.0
        %2491 = vmatpush1.msra.mxu0 0.0
        %2492 = vmatprep.subr.mxu0 0.0
        %2493 = vmatpush1.msra.mxu0 0.0
        %2494 = vmatprep.subr.mxu0 0.0
        %2495 = vmatpush1.msra.mxu0 0.0
        %2496 = vmatprep.subr.mxu0 0.0
        %2497 = vmatpush1.msra.mxu0 0.0
        %2498 = vmatprep.subr.mxu0 0.0
        %2499 = vmatpush1.msra.mxu0 0.0
        %2500 = vmatprep.subr.mxu0 0.0
        %2501 = vmatpush1.msra.mxu0 0.0
        %2502 = vmatprep.subr.mxu0 0.0
        %2503 = vmatpush1.msra.mxu0 0.0
        %2504 = vmatprep.subr.mxu0 0.0
        %2505 = vmatpush1.msra.mxu0 0.0
        %2506 = vmatprep.subr.mxu0 0.0
        %2507 = vmatpush1.msra.mxu0 0.0
        %2508 = vmatprep.subr.mxu0 0.0
        %2509 = vmatpush1.msra.mxu0 0.0
        %2510 = vmatprep.subr.mxu0 0.0
        %2511 = vmatpush1.msra.mxu0 0.0
        %2512 = vmatprep.mubr.f32.mxu0 0.0
        %2513 = vmatmul.mubr.f32.gmra.mrb[0].mxu0 %v2435
        %v2514 = vpop.f32.mrb[0].mxu0
        %v2515 = vadd.f32 0.0, %v2514
        %v2516 = vpop.f32.mrb[0].mxu0
        %2517 = vmatprep.mubr.f32.mxu0 0.0
        %2518 = vmatmul.mubr.f32.gmra.mrb[0].mxu0 %v2438
        %v2519 = vpop.f32.mrb[0].mxu0
        %v2520 = vadd.f32 0.0, %v2519
        %v2521 = vpop.f32.mrb[0].mxu0
        %2522 = vmatprep.mubr.f32.mxu0 0.0
        %2523 = vmatmul.mubr.f32.gmra.mrb[0].mxu0 %v2441
        %v2524 = vpop.f32.mrb[0].mxu0
        %v2525 = vadd.f32 0.0, %v2524
        %v2526 = vpop.f32.mrb[0].mxu0
        %2527 = vmatprep.mubr.f32.mxu0 0.0
        %2528 = vmatmul.mubr.f32.gmra.mrb[0].mxu0 %v2444
        %v2529 = vpop.f32.mrb[0].mxu0
        %v2530 = vadd.f32 0.0, %v2529
        %v2531 = vpop.f32.mrb[0].mxu0
        %2532 = vdwg.mxu0
        %v2534 = vsel %vm1986, %v2515, 0
        %v2537 = vsel %vm1986, %v2520, 0
        %v2540 = vsel %vm1986, %v2525, 0
        %v2543 = vsel %vm1986, %v2530, 0
        %2545 = vmatprep.subr.mxu0 0.0
        %2546 = vmatpush1.msra.mxu0 %v1983
        %2547 = vmatprep.subr.mxu0 0.0
        %2548 = vmatpush1.msra.mxu0 0.0
        %2549 = vmatprep.subr.mxu0 0.0
        %2550 = vmatpush1.msra.mxu0 0.0
        %2551 = vmatprep.subr.mxu0 0.0
        %2552 = vmatpush1.msra.mxu0 0.0
        %2553 = vmatprep.subr.mxu0 0.0
        %2554 = vmatpush1.msra.mxu0 0.0
        %2555 = vmatprep.subr.mxu0 0.0
        %2556 = vmatpush1.msra.mxu0 0.0
        %2557 = vmatprep.subr.mxu0 0.0
        %2558 = vmatpush1.msra.mxu0 0.0
        %2559 = vmatprep.subr.mxu0 0.0
        %2560 = vmatpush1.msra.mxu0 0.0
        %2561 = vmatprep.subr.mxu0 0.0
        %2562 = vmatpush1.msra.mxu0 0.0
        %2563 = vmatprep.subr.mxu0 0.0
        %2564 = vmatpush1.msra.mxu0 0.0
        %2565 = vmatprep.subr.mxu0 0.0
        %2566 = vmatpush1.msra.mxu0 0.0
        %2567 = vmatprep.subr.mxu0 0.0
        %2568 = vmatpush1.msra.mxu0 0.0
        %2569 = vmatprep.subr.mxu0 0.0
        %2570 = vmatpush1.msra.mxu0 0.0
        %2571 = vmatprep.subr.mxu0 0.0
        %2572 = vmatpush1.msra.mxu0 0.0
        %2573 = vmatprep.subr.mxu0 0.0
        %2574 = vmatpush1.msra.mxu0 0.0
        %2575 = vmatprep.subr.mxu0 0.0
        %2576 = vmatpush1.msra.mxu0 0.0
        %2577 = vmatprep.subr.mxu0 0.0
        %2578 = vmatpush1.msra.mxu0 0.0
        %2579 = vmatprep.subr.mxu0 0.0
        %2580 = vmatpush1.msra.mxu0 0.0
        %2581 = vmatprep.subr.mxu0 0.0
        %2582 = vmatpush1.msra.mxu0 0.0
        %2583 = vmatprep.subr.mxu0 0.0
        %2584 = vmatpush1.msra.mxu0 0.0
        %2585 = vmatprep.subr.mxu0 0.0
        %2586 = vmatpush1.msra.mxu0 0.0
        %2587 = vmatprep.subr.mxu0 0.0
        %2588 = vmatpush1.msra.mxu0 0.0
        %2589 = vmatprep.subr.mxu0 0.0
        %2590 = vmatpush1.msra.mxu0 0.0
        %2591 = vmatprep.subr.mxu0 0.0
        %2592 = vmatpush1.msra.mxu0 0.0
        %2593 = vmatprep.subr.mxu0 0.0
        %2594 = vmatpush1.msra.mxu0 0.0
        %2595 = vmatprep.subr.mxu0 0.0
        %2596 = vmatpush1.msra.mxu0 0.0
        %2597 = vmatprep.subr.mxu0 0.0
        %2598 = vmatpush1.msra.mxu0 0.0
        %2599 = vmatprep.subr.mxu0 0.0
        %2600 = vmatpush1.msra.mxu0 0.0
        %2601 = vmatprep.subr.mxu0 0.0
        %2602 = vmatpush1.msra.mxu0 0.0
        %2603 = vmatprep.subr.mxu0 0.0
        %2604 = vmatpush1.msra.mxu0 0.0
        %2605 = vmatprep.subr.mxu0 0.0
        %2606 = vmatpush1.msra.mxu0 0.0
        %2607 = vmatprep.subr.mxu0 0.0
        %2608 = vmatpush1.msra.mxu0 0.0
        %2609 = vmatprep.mubr.f32.mxu0 0.0
        %2610 = vmatmul.mubr.f32.gmra.mrb[0].mxu0 %v2534
        %v2611 = vpop.f32.mrb[0].mxu0
        %v2612 = vadd.f32 0.0, %v2611
        %v2613 = vpop.f32.mrb[0].mxu0
        %2614 = vmatprep.mubr.f32.mxu0 0.0
        %2615 = vmatmul.mubr.f32.gmra.mrb[0].mxu0 %v2537
        %v2616 = vpop.f32.mrb[0].mxu0
        %v2617 = vadd.f32 0.0, %v2616
        %v2618 = vpop.f32.mrb[0].mxu0
        %2619 = vmatprep.mubr.f32.mxu0 0.0
        %2620 = vmatmul.mubr.f32.gmra.mrb[0].mxu0 %v2540
        %v2621 = vpop.f32.mrb[0].mxu0
        %v2622 = vadd.f32 0.0, %v2621
        %v2623 = vpop.f32.mrb[0].mxu0
        %2624 = vmatprep.mubr.f32.mxu0 0.0
        %2625 = vmatmul.mubr.f32.gmra.mrb[0].mxu0 %v2543
        %v2626 = vpop.f32.mrb[0].mxu0
        %v2627 = vadd.f32 0.0, %v2626
        %v2628 = vpop.f32.mrb[0].mxu0
        %2629 = vdwg.mxu0
        %v2631 = vsel %vm1986, %v2233, 0
        %v2634 = vsel %vm1986, %v2238, 0
        %v2637 = vsel %vm1986, %v2243, 0
        %v2640 = vsel %vm1986, %v2248, 0
        %2642 = vmatprep.subr.mxu0 0.0
        %2643 = vmatpush1.msra.mxu0 %v1982
        %2644 = vmatprep.subr.mxu0 0.0
        %2645 = vmatpush1.msra.mxu0 0.0
        %2646 = vmatprep.subr.mxu0 0.0
        %2647 = vmatpush1.msra.mxu0 0.0
        %2648 = vmatprep.subr.mxu0 0.0
        %2649 = vmatpush1.msra.mxu0 0.0
        %2650 = vmatprep.subr.mxu0 0.0
        %2651 = vmatpush1.msra.mxu0 0.0
        %2652 = vmatprep.subr.mxu0 0.0
        %2653 = vmatpush1.msra.mxu0 0.0
        %2654 = vmatprep.subr.mxu0 0.0
        %2655 = vmatpush1.msra.mxu0 0.0
        %2656 = vmatprep.subr.mxu0 0.0
        %2657 = vmatpush1.msra.mxu0 0.0
        %2658 = vmatprep.subr.mxu0 0.0
        %2659 = vmatpush1.msra.mxu0 0.0
        %2660 = vmatprep.subr.mxu0 0.0
        %2661 = vmatpush1.msra.mxu0 0.0
        %2662 = vmatprep.subr.mxu0 0.0
        %2663 = vmatpush1.msra.mxu0 0.0
        %2664 = vmatprep.subr.mxu0 0.0
        %2665 = vmatpush1.msra.mxu0 0.0
        %2666 = vmatprep.subr.mxu0 0.0
        %2667 = vmatpush1.msra.mxu0 0.0
        %2668 = vmatprep.subr.mxu0 0.0
        %2669 = vmatpush1.msra.mxu0 0.0
        %2670 = vmatprep.subr.mxu0 0.0
        %2671 = vmatpush1.msra.mxu0 0.0
        %2672 = vmatprep.subr.mxu0 0.0
        %2673 = vmatpush1.msra.mxu0 0.0
        %2674 = vmatprep.subr.mxu0 0.0
        %2675 = vmatpush1.msra.mxu0 0.0
        %2676 = vmatprep.subr.mxu0 0.0
        %2677 = vmatpush1.msra.mxu0 0.0
        %2678 = vmatprep.subr.mxu0 0.0
        %2679 = vmatpush1.msra.mxu0 0.0
        %2680 = vmatprep.subr.mxu0 0.0
        %2681 = vmatpush1.msra.mxu0 0.0
        %2682 = vmatprep.subr.mxu0 0.0
        %2683 = vmatpush1.msra.mxu0 0.0
        %2684 = vmatprep.subr.mxu0 0.0
        %2685 = vmatpush1.msra.mxu0 0.0
        %2686 = vmatprep.subr.mxu0 0.0
        %2687 = vmatpush1.msra.mxu0 0.0
        %2688 = vmatprep.subr.mxu0 0.0
        %2689 = vmatpush1.msra.mxu0 0.0
        %2690 = vmatprep.subr.mxu0 0.0
        %2691 = vmatpush1.msra.mxu0 0.0
        %2692 = vmatprep.subr.mxu0 0.0
        %2693 = vmatpush1.msra.mxu0 0.0
        %2694 = vmatprep.subr.mxu0 0.0
        %2695 = vmatpush1.msra.mxu0 0.0
        %2696 = vmatprep.subr.mxu0 0.0
        %2697 = vmatpush1.msra.mxu0 0.0
        %2698 = vmatprep.subr.mxu0 0.0
        %2699 = vmatpush1.msra.mxu0 0.0
        %2700 = vmatprep.subr.mxu0 0.0
        %2701 = vmatpush1.msra.mxu0 0.0
        %2702 = vmatprep.subr.mxu0 0.0
        %2703 = vmatpush1.msra.mxu0 0.0
        %2704 = vmatprep.subr.mxu0 0.0
        %2705 = vmatpush1.msra.mxu0 0.0
        %2706 = vmatprep.mubr.f32.mxu0 0.0
        %2707 = vmatmul.mubr.f32.gmra.mrb[0].mxu0 %v2631
        %v2708 = vpop.f32.mrb[0].mxu0
        %v2709 = vadd.f32 %v2612, %v2708
        %v2710 = vpop.f32.mrb[0].mxu0
        %2711 = vmatprep.mubr.f32.mxu0 0.0
        %2712 = vmatmul.mubr.f32.gmra.mrb[0].mxu0 %v2634
        %v2713 = vpop.f32.mrb[0].mxu0
        %v2714 = vadd.f32 %v2617, %v2713
        %v2715 = vpop.f32.mrb[0].mxu0
        %2716 = vmatprep.mubr.f32.mxu0 0.0
        %2717 = vmatmul.mubr.f32.gmra.mrb[0].mxu0 %v2637
        %v2718 = vpop.f32.mrb[0].mxu0
        %v2719 = vadd.f32 %v2622, %v2718
        %v2720 = vpop.f32.mrb[0].mxu0
        %2721 = vmatprep.mubr.f32.mxu0 0.0
        %2722 = vmatmul.mubr.f32.gmra.mrb[0].mxu0 %v2640
        %v2723 = vpop.f32.mrb[0].mxu0
        %v2724 = vadd.f32 %v2627, %v2723
        %v2725 = vpop.f32.mrb[0].mxu0
        %2726 = vdwg.mxu0
        %2727 = vrot.lane.b32.xlu0 %v1772, 112
        %v2728 = vpop.permute.xlu0 %2727
        %2729 = vrot.lane.b32.xlu0 %v1777, 112
        %v2730 = vpop.permute.xlu0 %2729
        %2731 = vrot.lane.b32.xlu0 %v1782, 112
        %v2732 = vpop.permute.xlu0 %2731
        %2733 = vrot.lane.b32.xlu0 %v1787, 112
        %v2734 = vpop.permute.xlu0 %2733
        %2735 = vrot.lane.b32.xlu0 %v1868, 112
        %v2736 = vpop.permute.xlu0 %2735
        %2737 = vrot.lane.b32.xlu0 %v1873, 112
        %v2738 = vpop.permute.xlu0 %2737
        %2739 = vrot.lane.b32.xlu0 %v1878, 112
        %v2740 = vpop.permute.xlu0 %2739
        %2741 = vrot.lane.b32.xlu0 %v1883, 112
        %v2742 = vpop.permute.xlu0 %2741
        %v2743 = vsel %vm1986, %v2728, 0
        %v2745 = vsel %vm1986, %v2730, 0
        %v2747 = vsel %vm1986, %v2732, 0
        %v2749 = vsel %vm1986, %v2734, 0
        %v2751 = vsel %vm1986, %v2736, 0
        %v2753 = vsel %vm1986, %v2738, 0
        %v2755 = vsel %vm1986, %v2740, 0
        %v2757 = vsel %vm1986, %v2742, 0
        %2759 = vmatprep.subr.mxu0 0.0
        %2760 = vmatpush1.xpose.msra.mxu0 %v2751
        %2761 = vmatprep.subr.mxu0 0.0
        %2762 = vmatpush1.xpose.msra.mxu0 %v2753
        %2763 = vmatprep.subr.mxu0 0.0
        %2764 = vmatpush1.xpose.msra.mxu0 %v2755
        %2765 = vmatprep.subr.mxu0 0.0
        %2766 = vmatpush1.xpose.msra.mxu0 %v2757
        %2767 = vmatprep.subr.mxu0 0.0
        %2768 = vmatpush1.xpose.msra.mxu0 0.0
        %2769 = vmatprep.subr.mxu0 0.0
        %2770 = vmatpush1.xpose.msra.mxu0 0.0
        %2771 = vmatprep.subr.mxu0 0.0
        %2772 = vmatpush1.xpose.msra.mxu0 0.0
        %2773 = vmatprep.subr.mxu0 0.0
        %2774 = vmatpush1.xpose.msra.mxu0 0.0
        %2775 = vmatprep.subr.mxu0 0.0
        %2776 = vmatpush1.xpose.msra.mxu0 0.0
        %2777 = vmatprep.subr.mxu0 0.0
        %2778 = vmatpush1.xpose.msra.mxu0 0.0
        %2779 = vmatprep.subr.mxu0 0.0
        %2780 = vmatpush1.xpose.msra.mxu0 0.0
        %2781 = vmatprep.subr.mxu0 0.0
        %2782 = vmatpush1.xpose.msra.mxu0 0.0
        %2783 = vmatprep.subr.mxu0 0.0
        %2784 = vmatpush1.xpose.msra.mxu0 0.0
        %2785 = vmatprep.subr.mxu0 0.0
        %2786 = vmatpush1.xpose.msra.mxu0 0.0
        %2787 = vmatprep.subr.mxu0 0.0
        %2788 = vmatpush1.xpose.msra.mxu0 0.0
        %2789 = vmatprep.subr.mxu0 0.0
        %2790 = vmatpush1.xpose.msra.mxu0 0.0
        %2791 = vmatprep.subr.mxu0 0.0
        %2792 = vmatpush1.xpose.msra.mxu0 0.0
        %2793 = vmatprep.subr.mxu0 0.0
        %2794 = vmatpush1.xpose.msra.mxu0 0.0
        %2795 = vmatprep.subr.mxu0 0.0
        %2796 = vmatpush1.xpose.msra.mxu0 0.0
        %2797 = vmatprep.subr.mxu0 0.0
        %2798 = vmatpush1.xpose.msra.mxu0 0.0
        %2799 = vmatprep.subr.mxu0 0.0
        %2800 = vmatpush1.xpose.msra.mxu0 0.0
        %2801 = vmatprep.subr.mxu0 0.0
        %2802 = vmatpush1.xpose.msra.mxu0 0.0
        %2803 = vmatprep.subr.mxu0 0.0
        %2804 = vmatpush1.xpose.msra.mxu0 0.0
        %2805 = vmatprep.subr.mxu0 0.0
        %2806 = vmatpush1.xpose.msra.mxu0 0.0
        %2807 = vmatprep.subr.mxu0 0.0
        %2808 = vmatpush1.xpose.msra.mxu0 0.0
        %2809 = vmatprep.subr.mxu0 0.0
        %2810 = vmatpush1.xpose.msra.mxu0 0.0
        %2811 = vmatprep.subr.mxu0 0.0
        %2812 = vmatpush1.xpose.msra.mxu0 0.0
        %2813 = vmatprep.subr.mxu0 0.0
        %2814 = vmatpush1.xpose.msra.mxu0 0.0
        %2815 = vmatprep.subr.mxu0 0.0
        %2816 = vmatpush1.xpose.msra.mxu0 0.0
        %2817 = vmatprep.subr.mxu0 0.0
        %2818 = vmatpush1.xpose.msra.mxu0 0.0
        %2819 = vmatprep.subr.mxu0 0.0
        %2820 = vmatpush1.xpose.msra.mxu0 0.0
        %2821 = vmatprep.subr.mxu0 0.0
        %2822 = vmatpush1.xpose.msra.mxu0 0.0
        %2823 = vmatprep.mubr.f32.mxu0 0.0
        %2824 = vmatmul.mubr.f32.gmra.mrb[0].mxu0 %v2743
        %v2825 = vpop.f32.mrb[0].mxu0
        %v2826 = vadd.f32 0.0, %v2825
        %v2827 = vpop.f32.mrb[0].mxu0
        %2828 = vmatprep.mubr.f32.mxu0 0.0
        %2829 = vmatmul.mubr.f32.gmra.mrb[0].mxu0 %v2745
        %v2830 = vpop.f32.mrb[0].mxu0
        %v2831 = vadd.f32 0.0, %v2830
        %v2832 = vpop.f32.mrb[0].mxu0
        %2833 = vmatprep.mubr.f32.mxu0 0.0
        %2834 = vmatmul.mubr.f32.gmra.mrb[0].mxu0 %v2747
        %v2835 = vpop.f32.mrb[0].mxu0
        %v2836 = vadd.f32 0.0, %v2835
        %v2837 = vpop.f32.mrb[0].mxu0
        %2838 = vmatprep.mubr.f32.mxu0 0.0
        %2839 = vmatmul.mubr.f32.gmra.mrb[0].mxu0 %v2749
        %v2840 = vpop.f32.mrb[0].mxu0
        %v2841 = vadd.f32 0.0, %v2840
        %v2842 = vpop.f32.mrb[0].mxu0
        %2843 = vdwg.mxu0
        %v2844 = vmul.f32 %v2826, 0.35355338
        %v2845 = vmul.f32 %v2831, 0.35355338
        %v2846 = vmul.f32 %v2836, 0.35355338
        %v2847 = vmul.f32 %v2841, 0.35355338
        %v2848 = vadd.f32 %v2844, %v1677
        %v2849 = vadd.f32 %v2845, %v1678
        %v2850 = vadd.f32 %v2846, %v1679
        %v2851 = vadd.f32 %v2847, %v1680
        %v2852 = vsel %vm2104, %v2848, -inf
        %2853 = vmax.xlane.f32.xlu0 %v2852
        %v2854 = vpop.xlane.xlu0 %2853
        %v2855 = vsel %vm2104, %v2849, -inf
        %2856 = vmax.xlane.f32.xlu0 %v2855
        %v2857 = vpop.xlane.xlu0 %2856
        %v2858 = vsel %vm2104, %v2850, -inf
        %2859 = vmax.xlane.f32.xlu0 %v2858
        %v2860 = vpop.xlane.xlu0 %2859
        %v2861 = vsel %vm2114, %v2851, -inf
        %2862 = vmax.xlane.f32.xlu0 %v2861
        %v2863 = vpop.xlane.xlu0 %2862
        %v2864 = vsub.f32 %v2848, %v2854
        %v2865 = vsub.f32 %v2849, %v2857
        %v2866 = vsub.f32 %v2850, %v2860
        %v2867 = vsub.f32 %v2851, %v2863
        %v2868 = vmul.f32 %v2864, 1.442695
        %v2869 = vpow.pop %v2868
        %v2870 = vmul.f32 %v2865, 1.442695
        %v2871 = vpow.pop %v2870
        %v2872 = vmul.f32 %v2866, 1.442695
        %v2873 = vpow.pop %v2872
        %v2874 = vmul.f32 %v2867, 1.442695
        %v2875 = vpow.pop %v2874
        %v2876 = vsel %vm2104, %v2869, 0.0
        %2877 = vadd.xlane.f32.xlu0 %v2876
        %v2878 = vpop.xlane.xlu0 %2877
        %v2879 = vsel %vm2104, %v2871, 0.0
        %2880 = vadd.xlane.f32.xlu0 %v2879
        %v2881 = vpop.xlane.xlu0 %2880
        %v2882 = vsel %vm2104, %v2873, 0.0
        %2883 = vadd.xlane.f32.xlu0 %v2882
        %v2884 = vpop.xlane.xlu0 %2883
        %v2885 = vsel %vm2114, %v2875, 0.0
        %2886 = vadd.xlane.f32.xlu0 %v2885
        %v2887 = vpop.xlane.xlu0 %2886
        %v2888 = vrcp.pop %v2878
        %v2889 = vrcp.pop %v2881
        %v2890 = vrcp.pop %v2884
        %v2891 = vrcp.pop %v2887
        %v2892 = vmul.f32 %v2869, %v2888
        %v2893 = vmul.f32 %v2871, %v2889
        %v2894 = vmul.f32 %v2873, %v2890
        %v2895 = vmul.f32 %v2875, %v2891
        %2896 = vrot.lane.b32.xlu0 %v1964, 112
        %v2897 = vpop.permute.xlu0 %2896
        %2898 = vrot.lane.b32.xlu0 %v1969, 112
        %v2899 = vpop.permute.xlu0 %2898
        %2900 = vrot.lane.b32.xlu0 %v1974, 112
        %v2901 = vpop.permute.xlu0 %2900
        %2902 = vrot.lane.b32.xlu0 %v1979, 112
        %v2903 = vpop.permute.xlu0 %2902
        %v2908 = vsel %vm2104, %v2892, 0
        %v2911 = vsel %vm2104, %v2893, 0
        %v2914 = vsel %vm2104, %v2894, 0
        %v2917 = vsel %vm2104, %v2895, 0
        %v2919 = vsel %vm2162, %v2903, 0
        %2921 = vmatprep.subr.mxu0 0.0
        %2922 = vmatpush1.msra.mxu0 %v2897
        %2923 = vmatprep.subr.mxu0 0.0
        %2924 = vmatpush1.msra.mxu0 %v2899
        %2925 = vmatprep.subr.mxu0 0.0
        %2926 = vmatpush1.msra.mxu0 %v2901
        %2927 = vmatprep.subr.mxu0 0.0
        %2928 = vmatpush1.msra.mxu0 %v2919
        %2929 = vmatprep.subr.mxu0 0.0
        %2930 = vmatpush1.msra.mxu0 0.0
        %2931 = vmatprep.subr.mxu0 0.0
        %2932 = vmatpush1.msra.mxu0 0.0
        %2933 = vmatprep.subr.mxu0 0.0
        %2934 = vmatpush1.msra.mxu0 0.0
        %2935 = vmatprep.subr.mxu0 0.0
        %2936 = vmatpush1.msra.mxu0 0.0
        %2937 = vmatprep.subr.mxu0 0.0
        %2938 = vmatpush1.msra.mxu0 0.0
        %2939 = vmatprep.subr.mxu0 0.0
        %2940 = vmatpush1.msra.mxu0 0.0
        %2941 = vmatprep.subr.mxu0 0.0
        %2942 = vmatpush1.msra.mxu0 0.0
        %2943 = vmatprep.subr.mxu0 0.0
        %2944 = vmatpush1.msra.mxu0 0.0
        %2945 = vmatprep.subr.mxu0 0.0
        %2946 = vmatpush1.msra.mxu0 0.0
        %2947 = vmatprep.subr.mxu0 0.0
        %2948 = vmatpush1.msra.mxu0 0.0
        %2949 = vmatprep.subr.mxu0 0.0
        %2950 = vmatpush1.msra.mxu0 0.0
        %2951 = vmatprep.subr.mxu0 0.0
        %2952 = vmatpush1.msra.mxu0 0.0
        %2953 = vmatprep.subr.mxu0 0.0
        %2954 = vmatpush1.msra.mxu0 0.0
        %2955 = vmatprep.subr.mxu0 0.0
        %2956 = vmatpush1.msra.mxu0 0.0
        %2957 = vmatprep.subr.mxu0 0.0
        %2958 = vmatpush1.msra.mxu0 0.0
        %2959 = vmatprep.subr.mxu0 0.0
        %2960 = vmatpush1.msra.mxu0 0.0
        %2961 = vmatprep.subr.mxu0 0.0
        %2962 = vmatpush1.msra.mxu0 0.0
        %2963 = vmatprep.subr.mxu0 0.0
        %2964 = vmatpush1.msra.mxu0 0.0
        %2965 = vmatprep.subr.mxu0 0.0
        %2966 = vmatpush1.msra.mxu0 0.0
        %2967 = vmatprep.subr.mxu0 0.0
        %2968 = vmatpush1.msra.mxu0 0.0
        %2969 = vmatprep.subr.mxu0 0.0
        %2970 = vmatpush1.msra.mxu0 0.0
        %2971 = vmatprep.subr.mxu0 0.0
        %2972 = vmatpush1.msra.mxu0 0.0
        %2973 = vmatprep.subr.mxu0 0.0
        %2974 = vmatpush1.msra.mxu0 0.0
        %2975 = vmatprep.subr.mxu0 0.0
        %2976 = vmatpush1.msra.mxu0 0.0
        %2977 = vmatprep.subr.mxu0 0.0
        %2978 = vmatpush1.msra.mxu0 0.0
        %2979 = vmatprep.subr.mxu0 0.0
        %2980 = vmatpush1.msra.mxu0 0.0
        %2981 = vmatprep.subr.mxu0 0.0
        %2982 = vmatpush1.msra.mxu0 0.0
        %2983 = vmatprep.subr.mxu0 0.0
        %2984 = vmatpush1.msra.mxu0 0.0
        %2985 = vmatprep.mubr.f32.mxu0 0.0
        %2986 = vmatmul.mubr.f32.gmra.mrb[0].mxu0 %v2908
        %v2987 = vpop.f32.mrb[0].mxu0
        %v2988 = vadd.f32 0.0, %v2987
        %v2989 = vpop.f32.mrb[0].mxu0
        %2990 = vmatprep.mubr.f32.mxu0 0.0
        %2991 = vmatmul.mubr.f32.gmra.mrb[0].mxu0 %v2911
        %v2992 = vpop.f32.mrb[0].mxu0
        %v2993 = vadd.f32 0.0, %v2992
        %v2994 = vpop.f32.mrb[0].mxu0
        %2995 = vmatprep.mubr.f32.mxu0 0.0
        %2996 = vmatmul.mubr.f32.gmra.mrb[0].mxu0 %v2914
        %v2997 = vpop.f32.mrb[0].mxu0
        %v2998 = vadd.f32 0.0, %v2997
        %v2999 = vpop.f32.mrb[0].mxu0
        %3000 = vmatprep.mubr.f32.mxu0 0.0
        %3001 = vmatmul.mubr.f32.gmra.mrb[0].mxu0 %v2917
        %v3002 = vpop.f32.mrb[0].mxu0
        %v3003 = vadd.f32 0.0, %v3002
        %v3004 = vpop.f32.mrb[0].mxu0
        %3005 = vdwg.mxu0
        %v3007 = vsel %vm1986, %v2988, 0
        %v3010 = vsel %vm1986, %v2993, 0
        %v3013 = vsel %vm1986, %v2998, 0
        %v3016 = vsel %vm1986, %v3003, 0
        %3018 = vmatprep.subr.mxu0 0.0
        %3019 = vmatpush1.msra.mxu0 %v1984
        %3020 = vmatprep.subr.mxu0 0.0
        %3021 = vmatpush1.msra.mxu0 0.0
        %3022 = vmatprep.subr.mxu0 0.0
        %3023 = vmatpush1.msra.mxu0 0.0
        %3024 = vmatprep.subr.mxu0 0.0
        %3025 = vmatpush1.msra.mxu0 0.0
        %3026 = vmatprep.subr.mxu0 0.0
        %3027 = vmatpush1.msra.mxu0 0.0
        %3028 = vmatprep.subr.mxu0 0.0
        %3029 = vmatpush1.msra.mxu0 0.0
        %3030 = vmatprep.subr.mxu0 0.0
        %3031 = vmatpush1.msra.mxu0 0.0
        %3032 = vmatprep.subr.mxu0 0.0
        %3033 = vmatpush1.msra.mxu0 0.0
        %3034 = vmatprep.subr.mxu0 0.0
        %3035 = vmatpush1.msra.mxu0 0.0
        %3036 = vmatprep.subr.mxu0 0.0
        %3037 = vmatpush1.msra.mxu0 0.0
        %3038 = vmatprep.subr.mxu0 0.0
        %3039 = vmatpush1.msra.mxu0 0.0
        %3040 = vmatprep.subr.mxu0 0.0
        %3041 = vmatpush1.msra.mxu0 0.0
        %3042 = vmatprep.subr.mxu0 0.0
        %3043 = vmatpush1.msra.mxu0 0.0
        %3044 = vmatprep.subr.mxu0 0.0
        %3045 = vmatpush1.msra.mxu0 0.0
        %3046 = vmatprep.subr.mxu0 0.0
        %3047 = vmatpush1.msra.mxu0 0.0
        %3048 = vmatprep.subr.mxu0 0.0
        %3049 = vmatpush1.msra.mxu0 0.0
        %3050 = vmatprep.subr.mxu0 0.0
        %3051 = vmatpush1.msra.mxu0 0.0
        %3052 = vmatprep.subr.mxu0 0.0
        %3053 = vmatpush1.msra.mxu0 0.0
        %3054 = vmatprep.subr.mxu0 0.0
        %3055 = vmatpush1.msra.mxu0 0.0
        %3056 = vmatprep.subr.mxu0 0.0
        %3057 = vmatpush1.msra.mxu0 0.0
        %3058 = vmatprep.subr.mxu0 0.0
        %3059 = vmatpush1.msra.mxu0 0.0
        %3060 = vmatprep.subr.mxu0 0.0
        %3061 = vmatpush1.msra.mxu0 0.0
        %3062 = vmatprep.subr.mxu0 0.0
        %3063 = vmatpush1.msra.mxu0 0.0
        %3064 = vmatprep.subr.mxu0 0.0
        %3065 = vmatpush1.msra.mxu0 0.0
        %3066 = vmatprep.subr.mxu0 0.0
        %3067 = vmatpush1.msra.mxu0 0.0
        %3068 = vmatprep.subr.mxu0 0.0
        %3069 = vmatpush1.msra.mxu0 0.0
        %3070 = vmatprep.subr.mxu0 0.0
        %3071 = vmatpush1.msra.mxu0 0.0
        %3072 = vmatprep.subr.mxu0 0.0
        %3073 = vmatpush1.msra.mxu0 0.0
        %3074 = vmatprep.subr.mxu0 0.0
        %3075 = vmatpush1.msra.mxu0 0.0
        %3076 = vmatprep.subr.mxu0 0.0
        %3077 = vmatpush1.msra.mxu0 0.0
        %3078 = vmatprep.subr.mxu0 0.0
        %3079 = vmatpush1.msra.mxu0 0.0
        %3080 = vmatprep.subr.mxu0 0.0
        %3081 = vmatpush1.msra.mxu0 0.0
        %3082 = vmatprep.mubr.f32.mxu0 0.0
        %3083 = vmatmul.mubr.f32.gmra.mrb[0].mxu0 %v3007
        %v3084 = vpop.f32.mrb[0].mxu0
        %v3085 = vadd.f32 0.0, %v3084
        %v3086 = vpop.f32.mrb[0].mxu0
        %3087 = vmatprep.mubr.f32.mxu0 0.0
        %3088 = vmatmul.mubr.f32.gmra.mrb[0].mxu0 %v3010
        %v3089 = vpop.f32.mrb[0].mxu0
        %v3090 = vadd.f32 0.0, %v3089
        %v3091 = vpop.f32.mrb[0].mxu0
        %3092 = vmatprep.mubr.f32.mxu0 0.0
        %3093 = vmatmul.mubr.f32.gmra.mrb[0].mxu0 %v3013
        %v3094 = vpop.f32.mrb[0].mxu0
        %v3095 = vadd.f32 0.0, %v3094
        %v3096 = vpop.f32.mrb[0].mxu0
        %3097 = vmatprep.mubr.f32.mxu0 0.0
        %3098 = vmatmul.mubr.f32.gmra.mrb[0].mxu0 %v3016
        %v3099 = vpop.f32.mrb[0].mxu0
        %v3100 = vadd.f32 0.0, %v3099
        %v3101 = vpop.f32.mrb[0].mxu0
        %3102 = vdwg.mxu0
        %v3103 = vadd.f32 %v2709, %v3085
        %v3104 = vadd.f32 %v2714, %v3090
        %v3105 = vadd.f32 %v2719, %v3095
        %v3106 = vadd.f32 %v2724, %v3100
        %3107 = vrot.lane.b32.xlu0 %v1772, 104
        %v3108 = vpop.permute.xlu0 %3107
        %3109 = vrot.lane.b32.xlu0 %v1777, 104
        %v3110 = vpop.permute.xlu0 %3109
        %3111 = vrot.lane.b32.xlu0 %v1782, 104
        %v3112 = vpop.permute.xlu0 %3111
        %3113 = vrot.lane.b32.xlu0 %v1787, 104
        %v3114 = vpop.permute.xlu0 %3113
        %3115 = vrot.lane.b32.xlu0 %v1868, 104
        %v3116 = vpop.permute.xlu0 %3115
        %3117 = vrot.lane.b32.xlu0 %v1873, 104
        %v3118 = vpop.permute.xlu0 %3117
        %3119 = vrot.lane.b32.xlu0 %v1878, 104
        %v3120 = vpop.permute.xlu0 %3119
        %3121 = vrot.lane.b32.xlu0 %v1883, 104
        %v3122 = vpop.permute.xlu0 %3121
        %v3123 = vsel %vm1986, %v3108, 0
        %v3125 = vsel %vm1986, %v3110, 0
        %v3127 = vsel %vm1986, %v3112, 0
        %v3129 = vsel %vm1986, %v3114, 0
        %v3131 = vsel %vm1986, %v3116, 0
        %v3133 = vsel %vm1986, %v3118, 0
        %v3135 = vsel %vm1986, %v3120, 0
        %v3137 = vsel %vm1986, %v3122, 0
        %3139 = vmatprep.subr.mxu0 0.0
        %3140 = vmatpush1.xpose.msra.mxu0 %v3131
        %3141 = vmatprep.subr.mxu0 0.0
        %3142 = vmatpush1.xpose.msra.mxu0 %v3133
        %3143 = vmatprep.subr.mxu0 0.0
        %3144 = vmatpush1.xpose.msra.mxu0 %v3135
        %3145 = vmatprep.subr.mxu0 0.0
        %3146 = vmatpush1.xpose.msra.mxu0 %v3137
        %3147 = vmatprep.subr.mxu0 0.0
        %3148 = vmatpush1.xpose.msra.mxu0 0.0
        %3149 = vmatprep.subr.mxu0 0.0
        %3150 = vmatpush1.xpose.msra.mxu0 0.0
        %3151 = vmatprep.subr.mxu0 0.0
        %3152 = vmatpush1.xpose.msra.mxu0 0.0
        %3153 = vmatprep.subr.mxu0 0.0
        %3154 = vmatpush1.xpose.msra.mxu0 0.0
        %3155 = vmatprep.subr.mxu0 0.0
        %3156 = vmatpush1.xpose.msra.mxu0 0.0
        %3157 = vmatprep.subr.mxu0 0.0
        %3158 = vmatpush1.xpose.msra.mxu0 0.0
        %3159 = vmatprep.subr.mxu0 0.0
        %3160 = vmatpush1.xpose.msra.mxu0 0.0
        %3161 = vmatprep.subr.mxu0 0.0
        %3162 = vmatpush1.xpose.msra.mxu0 0.0
        %3163 = vmatprep.subr.mxu0 0.0
        %3164 = vmatpush1.xpose.msra.mxu0 0.0
        %3165 = vmatprep.subr.mxu0 0.0
        %3166 = vmatpush1.xpose.msra.mxu0 0.0
        %3167 = vmatprep.subr.mxu0 0.0
        %3168 = vmatpush1.xpose.msra.mxu0 0.0
        %3169 = vmatprep.subr.mxu0 0.0
        %3170 = vmatpush1.xpose.msra.mxu0 0.0
        %3171 = vmatprep.subr.mxu0 0.0
        %3172 = vmatpush1.xpose.msra.mxu0 0.0
        %3173 = vmatprep.subr.mxu0 0.0
        %3174 = vmatpush1.xpose.msra.mxu0 0.0
        %3175 = vmatprep.subr.mxu0 0.0
        %3176 = vmatpush1.xpose.msra.mxu0 0.0
        %3177 = vmatprep.subr.mxu0 0.0
        %3178 = vmatpush1.xpose.msra.mxu0 0.0
        %3179 = vmatprep.subr.mxu0 0.0
        %3180 = vmatpush1.xpose.msra.mxu0 0.0
        %3181 = vmatprep.subr.mxu0 0.0
        %3182 = vmatpush1.xpose.msra.mxu0 0.0
        %3183 = vmatprep.subr.mxu0 0.0
        %3184 = vmatpush1.xpose.msra.mxu0 0.0
        %3185 = vmatprep.subr.mxu0 0.0
        %3186 = vmatpush1.xpose.msra.mxu0 0.0
        %3187 = vmatprep.subr.mxu0 0.0
        %3188 = vmatpush1.xpose.msra.mxu0 0.0
        %3189 = vmatprep.subr.mxu0 0.0
        %3190 = vmatpush1.xpose.msra.mxu0 0.0
        %3191 = vmatprep.subr.mxu0 0.0
        %3192 = vmatpush1.xpose.msra.mxu0 0.0
        %3193 = vmatprep.subr.mxu0 0.0
        %3194 = vmatpush1.xpose.msra.mxu0 0.0
        %3195 = vmatprep.subr.mxu0 0.0
        %3196 = vmatpush1.xpose.msra.mxu0 0.0
        %3197 = vmatprep.subr.mxu0 0.0
        %3198 = vmatpush1.xpose.msra.mxu0 0.0
        %3199 = vmatprep.subr.mxu0 0.0
        %3200 = vmatpush1.xpose.msra.mxu0 0.0
        %3201 = vmatprep.subr.mxu0 0.0
        %3202 = vmatpush1.xpose.msra.mxu0 0.0
        %3203 = vmatprep.mubr.f32.mxu0 0.0
        %3204 = vmatmul.mubr.f32.gmra.mrb[0].mxu0 %v3123
        %v3205 = vpop.f32.mrb[0].mxu0
        %v3206 = vadd.f32 0.0, %v3205
        %v3207 = vpop.f32.mrb[0].mxu0
        %3208 = vmatprep.mubr.f32.mxu0 0.0
        %3209 = vmatmul.mubr.f32.gmra.mrb[0].mxu0 %v3125
        %v3210 = vpop.f32.mrb[0].mxu0
        %v3211 = vadd.f32 0.0, %v3210
        %v3212 = vpop.f32.mrb[0].mxu0
        %3213 = vmatprep.mubr.f32.mxu0 0.0
        %3214 = vmatmul.mubr.f32.gmra.mrb[0].mxu0 %v3127
        %v3215 = vpop.f32.mrb[0].mxu0
        %v3216 = vadd.f32 0.0, %v3215
        %v3217 = vpop.f32.mrb[0].mxu0
        %3218 = vmatprep.mubr.f32.mxu0 0.0
        %3219 = vmatmul.mubr.f32.gmra.mrb[0].mxu0 %v3129
        %v3220 = vpop.f32.mrb[0].mxu0
        %v3221 = vadd.f32 0.0, %v3220
        %v3222 = vpop.f32.mrb[0].mxu0
        %3223 = vdwg.mxu0
        %v3224 = vmul.f32 %v3206, 0.35355338
        %v3225 = vmul.f32 %v3211, 0.35355338
        %v3226 = vmul.f32 %v3216, 0.35355338
        %v3227 = vmul.f32 %v3221, 0.35355338
        %v3228 = vadd.f32 %v3224, %v1677
        %v3229 = vadd.f32 %v3225, %v1678
        %v3230 = vadd.f32 %v3226, %v1679
        %v3231 = vadd.f32 %v3227, %v1680
        %v3232 = vsel %vm2104, %v3228, -inf
        %3233 = vmax.xlane.f32.xlu0 %v3232
        %v3234 = vpop.xlane.xlu0 %3233
        %v3235 = vsel %vm2104, %v3229, -inf
        %3236 = vmax.xlane.f32.xlu0 %v3235
        %v3237 = vpop.xlane.xlu0 %3236
        %v3238 = vsel %vm2104, %v3230, -inf
        %3239 = vmax.xlane.f32.xlu0 %v3238
        %v3240 = vpop.xlane.xlu0 %3239
        %v3241 = vsel %vm2114, %v3231, -inf
        %3242 = vmax.xlane.f32.xlu0 %v3241
        %v3243 = vpop.xlane.xlu0 %3242
        %v3244 = vsub.f32 %v3228, %v3234
        %v3245 = vsub.f32 %v3229, %v3237
        %v3246 = vsub.f32 %v3230, %v3240
        %v3247 = vsub.f32 %v3231, %v3243
        %v3248 = vmul.f32 %v3244, 1.442695
        %v3249 = vpow.pop %v3248
        %v3250 = vmul.f32 %v3245, 1.442695
        %v3251 = vpow.pop %v3250
        %v3252 = vmul.f32 %v3246, 1.442695
        %v3253 = vpow.pop %v3252
        %v3254 = vmul.f32 %v3247, 1.442695
        %v3255 = vpow.pop %v3254
        %v3256 = vsel %vm2104, %v3249, 0.0
        %3257 = vadd.xlane.f32.xlu0 %v3256
        %v3258 = vpop.xlane.xlu0 %3257
        %v3259 = vsel %vm2104, %v3251, 0.0
        %3260 = vadd.xlane.f32.xlu0 %v3259
        %v3261 = vpop.xlane.xlu0 %3260
        %v3262 = vsel %vm2104, %v3253, 0.0
        %3263 = vadd.xlane.f32.xlu0 %v3262
        %v3264 = vpop.xlane.xlu0 %3263
        %v3265 = vsel %vm2114, %v3255, 0.0
        %3266 = vadd.xlane.f32.xlu0 %v3265
        %v3267 = vpop.xlane.xlu0 %3266
        %v3268 = vrcp.pop %v3258
        %v3269 = vrcp.pop %v3261
        %v3270 = vrcp.pop %v3264
        %v3271 = vrcp.pop %v3267
        %v3272 = vmul.f32 %v3249, %v3268
        %v3273 = vmul.f32 %v3251, %v3269
        %v3274 = vmul.f32 %v3253, %v3270
        %v3275 = vmul.f32 %v3255, %v3271
        %3276 = vrot.lane.b32.xlu0 %v1964, 104
        %v3277 = vpop.permute.xlu0 %3276
        %3278 = vrot.lane.b32.xlu0 %v1969, 104
        %v3279 = vpop.permute.xlu0 %3278
        %3280 = vrot.lane.b32.xlu0 %v1974, 104
        %v3281 = vpop.permute.xlu0 %3280
        %3282 = vrot.lane.b32.xlu0 %v1979, 104
        %v3283 = vpop.permute.xlu0 %3282
        %v3288 = vsel %vm2104, %v3272, 0
        %v3291 = vsel %vm2104, %v3273, 0
        %v3294 = vsel %vm2104, %v3274, 0
        %v3297 = vsel %vm2104, %v3275, 0
        %v3299 = vsel %vm2162, %v3283, 0
        %3301 = vmatprep.subr.mxu0 0.0
        %3302 = vmatpush1.msra.mxu0 %v3277
        %3303 = vmatprep.subr.mxu0 0.0
        %3304 = vmatpush1.msra.mxu0 %v3279
        %3305 = vmatprep.subr.mxu0 0.0
        %3306 = vmatpush1.msra.mxu0 %v3281
        %3307 = vmatprep.subr.mxu0 0.0
        %3308 = vmatpush1.msra.mxu0 %v3299
        %3309 = vmatprep.subr.mxu0 0.0
        %3310 = vmatpush1.msra.mxu0 0.0
        %3311 = vmatprep.subr.mxu0 0.0
        %3312 = vmatpush1.msra.mxu0 0.0
        %3313 = vmatprep.subr.mxu0 0.0
        %3314 = vmatpush1.msra.mxu0 0.0
        %3315 = vmatprep.subr.mxu0 0.0
        %3316 = vmatpush1.msra.mxu0 0.0
        %3317 = vmatprep.subr.mxu0 0.0
        %3318 = vmatpush1.msra.mxu0 0.0
        %3319 = vmatprep.subr.mxu0 0.0
        %3320 = vmatpush1.msra.mxu0 0.0
        %3321 = vmatprep.subr.mxu0 0.0
        %3322 = vmatpush1.msra.mxu0 0.0
        %3323 = vmatprep.subr.mxu0 0.0
        %3324 = vmatpush1.msra.mxu0 0.0
        %3325 = vmatprep.subr.mxu0 0.0
        %3326 = vmatpush1.msra.mxu0 0.0
        %3327 = vmatprep.subr.mxu0 0.0
        %3328 = vmatpush1.msra.mxu0 0.0
        %3329 = vmatprep.subr.mxu0 0.0
        %3330 = vmatpush1.msra.mxu0 0.0
        %3331 = vmatprep.subr.mxu0 0.0
        %3332 = vmatpush1.msra.mxu0 0.0
        %3333 = vmatprep.subr.mxu0 0.0
        %3334 = vmatpush1.msra.mxu0 0.0
        %3335 = vmatprep.subr.mxu0 0.0
        %3336 = vmatpush1.msra.mxu0 0.0
        %3337 = vmatprep.subr.mxu0 0.0
        %3338 = vmatpush1.msra.mxu0 0.0
        %3339 = vmatprep.subr.mxu0 0.0
        %3340 = vmatpush1.msra.mxu0 0.0
        %3341 = vmatprep.subr.mxu0 0.0
        %3342 = vmatpush1.msra.mxu0 0.0
        %3343 = vmatprep.subr.mxu0 0.0
        %3344 = vmatpush1.msra.mxu0 0.0
        %3345 = vmatprep.subr.mxu0 0.0
        %3346 = vmatpush1.msra.mxu0 0.0
        %3347 = vmatprep.subr.mxu0 0.0
        %3348 = vmatpush1.msra.mxu0 0.0
        %3349 = vmatprep.subr.mxu0 0.0
        %3350 = vmatpush1.msra.mxu0 0.0
        %3351 = vmatprep.subr.mxu0 0.0
        %3352 = vmatpush1.msra.mxu0 0.0
        %3353 = vmatprep.subr.mxu0 0.0
        %3354 = vmatpush1.msra.mxu0 0.0
        %3355 = vmatprep.subr.mxu0 0.0
        %3356 = vmatpush1.msra.mxu0 0.0
        %3357 = vmatprep.subr.mxu0 0.0
        %3358 = vmatpush1.msra.mxu0 0.0
        %3359 = vmatprep.subr.mxu0 0.0
        %3360 = vmatpush1.msra.mxu0 0.0
        %3361 = vmatprep.subr.mxu0 0.0
        %3362 = vmatpush1.msra.mxu0 0.0
        %3363 = vmatprep.subr.mxu0 0.0
        %3364 = vmatpush1.msra.mxu0 0.0
        %3365 = vmatprep.mubr.f32.mxu0 0.0
        %3366 = vmatmul.mubr.f32.gmra.mrb[0].mxu0 %v3288
        %v3367 = vpop.f32.mrb[0].mxu0
        %v3368 = vadd.f32 0.0, %v3367
        %v3369 = vpop.f32.mrb[0].mxu0
        %3370 = vmatprep.mubr.f32.mxu0 0.0
        %3371 = vmatmul.mubr.f32.gmra.mrb[0].mxu0 %v3291
        %v3372 = vpop.f32.mrb[0].mxu0
        %v3373 = vadd.f32 0.0, %v3372
        %v3374 = vpop.f32.mrb[0].mxu0
        %3375 = vmatprep.mubr.f32.mxu0 0.0
        %3376 = vmatmul.mubr.f32.gmra.mrb[0].mxu0 %v3294
        %v3377 = vpop.f32.mrb[0].mxu0
        %v3378 = vadd.f32 0.0, %v3377
        %v3379 = vpop.f32.mrb[0].mxu0
        %3380 = vmatprep.mubr.f32.mxu0 0.0
        %3381 = vmatmul.mubr.f32.gmra.mrb[0].mxu0 %v3297
        %v3382 = vpop.f32.mrb[0].mxu0
        %v3383 = vadd.f32 0.0, %v3382
        %v3384 = vpop.f32.mrb[0].mxu0
        %3385 = vdwg.mxu0
        %v3387 = vsel %vm1986, %v3368, 0
        %v3390 = vsel %vm1986, %v3373, 0
        %v3393 = vsel %vm1986, %v3378, 0
        %v3396 = vsel %vm1986, %v3383, 0
        %3398 = vmatprep.subr.mxu0 0.0
        %3399 = vmatpush1.msra.mxu0 %v1985
        %3400 = vmatprep.subr.mxu0 0.0
        %3401 = vmatpush1.msra.mxu0 0.0
        %3402 = vmatprep.subr.mxu0 0.0
        %3403 = vmatpush1.msra.mxu0 0.0
        %3404 = vmatprep.subr.mxu0 0.0
        %3405 = vmatpush1.msra.mxu0 0.0
        %3406 = vmatprep.subr.mxu0 0.0
        %3407 = vmatpush1.msra.mxu0 0.0
        %3408 = vmatprep.subr.mxu0 0.0
        %3409 = vmatpush1.msra.mxu0 0.0
        %3410 = vmatprep.subr.mxu0 0.0
        %3411 = vmatpush1.msra.mxu0 0.0
        %3412 = vmatprep.subr.mxu0 0.0
        %3413 = vmatpush1.msra.mxu0 0.0
        %3414 = vmatprep.subr.mxu0 0.0
        %3415 = vmatpush1.msra.mxu0 0.0
        %3416 = vmatprep.subr.mxu0 0.0
        %3417 = vmatpush1.msra.mxu0 0.0
        %3418 = vmatprep.subr.mxu0 0.0
        %3419 = vmatpush1.msra.mxu0 0.0
        %3420 = vmatprep.subr.mxu0 0.0
        %3421 = vmatpush1.msra.mxu0 0.0
        %3422 = vmatprep.subr.mxu0 0.0
        %3423 = vmatpush1.msra.mxu0 0.0
        %3424 = vmatprep.subr.mxu0 0.0
        %3425 = vmatpush1.msra.mxu0 0.0
        %3426 = vmatprep.subr.mxu0 0.0
        %3427 = vmatpush1.msra.mxu0 0.0
        %3428 = vmatprep.subr.mxu0 0.0
        %3429 = vmatpush1.msra.mxu0 0.0
        %3430 = vmatprep.subr.mxu0 0.0
        %3431 = vmatpush1.msra.mxu0 0.0
        %3432 = vmatprep.subr.mxu0 0.0
        %3433 = vmatpush1.msra.mxu0 0.0
        %3434 = vmatprep.subr.mxu0 0.0
        %3435 = vmatpush1.msra.mxu0 0.0
        %3436 = vmatprep.subr.mxu0 0.0
        %3437 = vmatpush1.msra.mxu0 0.0
        %3438 = vmatprep.subr.mxu0 0.0
        %3439 = vmatpush1.msra.mxu0 0.0
        %3440 = vmatprep.subr.mxu0 0.0
        %3441 = vmatpush1.msra.mxu0 0.0
        %3442 = vmatprep.subr.mxu0 0.0
        %3443 = vmatpush1.msra.mxu0 0.0
        %3444 = vmatprep.subr.mxu0 0.0
        %3445 = vmatpush1.msra.mxu0 0.0
        %3446 = vmatprep.subr.mxu0 0.0
        %3447 = vmatpush1.msra.mxu0 0.0
        %3448 = vmatprep.subr.mxu0 0.0
        %3449 = vmatpush1.msra.mxu0 0.0
        %3450 = vmatprep.subr.mxu0 0.0
        %3451 = vmatpush1.msra.mxu0 0.0
        %3452 = vmatprep.subr.mxu0 0.0
        %3453 = vmatpush1.msra.mxu0 0.0
        %3454 = vmatprep.subr.mxu0 0.0
        %3455 = vmatpush1.msra.mxu0 0.0
        %3456 = vmatprep.subr.mxu0 0.0
        %3457 = vmatpush1.msra.mxu0 0.0
        %3458 = vmatprep.subr.mxu0 0.0
        %3459 = vmatpush1.msra.mxu0 0.0
        %3460 = vmatprep.subr.mxu0 0.0
        %3461 = vmatpush1.msra.mxu0 0.0
        %3462 = vmatprep.mubr.f32.mxu0 0.0
        %3463 = vmatmul.mubr.f32.gmra.mrb[0].mxu0 %v3387
        %v3464 = vpop.f32.mrb[0].mxu0
        %v3465 = vadd.f32 0.0, %v3464
        %v3466 = vpop.f32.mrb[0].mxu0
        %3467 = vmatprep.mubr.f32.mxu0 0.0
        %3468 = vmatmul.mubr.f32.gmra.mrb[0].mxu0 %v3390
        %v3469 = vpop.f32.mrb[0].mxu0
        %v3470 = vadd.f32 0.0, %v3469
        %v3471 = vpop.f32.mrb[0].mxu0
        %3472 = vmatprep.mubr.f32.mxu0 0.0
        %3473 = vmatmul.mubr.f32.gmra.mrb[0].mxu0 %v3393
        %v3474 = vpop.f32.mrb[0].mxu0
        %v3475 = vadd.f32 0.0, %v3474
        %v3476 = vpop.f32.mrb[0].mxu0
        %3477 = vmatprep.mubr.f32.mxu0 0.0
        %3478 = vmatmul.mubr.f32.gmra.mrb[0].mxu0 %v3396
        %v3479 = vpop.f32.mrb[0].mxu0
        %v3480 = vadd.f32 0.0, %v3479
        %v3481 = vpop.f32.mrb[0].mxu0
        %3482 = vdwg.mxu0
        %v3483 = vadd.f32 %v3103, %v3465
        %v3484 = vadd.f32 %v3104, %v3470
        %v3485 = vadd.f32 %v3105, %v3475
        %v3486 = vadd.f32 %v3106, %v3480
        %v3487 = vld [vmem:[%s25] sm:$0x1]
        %v3489 = vlaneseq
        %v3490 = vshrl.u32 %v3489, 7
        %v3491 = vsub.s32 0, %v3490
        %v3492 = vrot.slane %v3487, %v3491
        %v3494 = vadd.f32 %v3483, %v3492
        %v3495 = vadd.f32 %v3484, %v3492
        %v3496 = vadd.f32 %v3485, %v3492
        %v3497 = vadd.f32 %v3486, %v3492
        %v3498 = vadd.f32 %v1660, %v3494
        %v3499 = vadd.f32 %v1661, %v3495
        %v3500 = vadd.f32 %v1662, %v3496
        %v3501 = vadd.f32 %v1663, %v3497
        %v3502 = vld [vmem:[#allocation18] sm:$0x1]
        %v3503 = vld [vmem:[#allocation19] sm:$0x1]
        %v3504 = vsel %vm1692, %v3498, 0.0
        %3505 = vadd.xlane.f32.xlu0 %v3504
        %v3506 = vpop.xlane.xlu0 %3505
        %v3507 = vsel %vm1692, %v3499, 0.0
        %3508 = vadd.xlane.f32.xlu0 %v3507
        %v3509 = vpop.xlane.xlu0 %3508
        %v3510 = vsel %vm1692, %v3500, 0.0
        %3511 = vadd.xlane.f32.xlu0 %v3510
        %v3512 = vpop.xlane.xlu0 %3511
        %vm3513 = vcmask 259072
        %v3514 = vsel %vm3513, %v3501, 0.0
        %3515 = vadd.xlane.f32.xlu0 %v3514
        %v3516 = vpop.xlane.xlu0 %3515
        %v3517 = vrcp.pop 32.0
        %v3518 = vmul.f32 %v3506, %v3517
        %v3519 = vmul.f32 %v3509, %v3517
        %v3520 = vmul.f32 %v3512, %v3517
        %v3521 = vmul.f32 %v3516, %v3517
        %v3522 = vsub.f32 %v3498, %v3518
        %v3523 = vsub.f32 %v3499, %v3519
        %v3524 = vsub.f32 %v3500, %v3520
        %v3525 = vsub.f32 %v3501, %v3521
        %v3526 = vmul.f32 %v3522, %v3522
        %v3527 = vmul.f32 %v3523, %v3523
        %v3528 = vmul.f32 %v3524, %v3524
        %v3529 = vmul.f32 %v3525, %v3525
        %v3530 = vsel %vm1692, %v3526, 0.0
        %3531 = vadd.xlane.f32.xlu0 %v3530
        %v3532 = vpop.xlane.xlu0 %3531
        %v3533 = vsel %vm1692, %v3527, 0.0
        %3534 = vadd.xlane.f32.xlu0 %v3533
        %v3535 = vpop.xlane.xlu0 %3534
        %v3536 = vsel %vm1692, %v3528, 0.0
        %3537 = vadd.xlane.f32.xlu0 %v3536
        %v3538 = vpop.xlane.xlu0 %3537
        %v3539 = vsel %vm3513, %v3529, 0.0
        %3540 = vadd.xlane.f32.xlu0 %v3539
        %v3541 = vpop.xlane.xlu0 %3540
        %v3542 = vmul.f32 %v3532, %v3517
        %v3543 = vmul.f32 %v3535, %v3517
        %v3544 = vmul.f32 %v3538, %v3517
        %v3545 = vmul.f32 %v3541, %v3517
        %v3546 = vadd.f32 %v3542, 1e-05
        %v3547 = vadd.f32 %v3543, 1e-05
        %v3548 = vadd.f32 %v3544, 1e-05
        %v3549 = vadd.f32 %v3545, 1e-05
        %v3550 = vrsqrt.pop %v3546
        %v3551 = vrsqrt.pop %v3547
        %v3552 = vrsqrt.pop %v3548
        %v3553 = vrsqrt.pop %v3549
        %v3554 = vmul.f32 %v3522, %v3550
        %v3555 = vmul.f32 %v3523, %v3551
        %v3556 = vmul.f32 %v3524, %v3552
        %v3557 = vmul.f32 %v3525, %v3553
        %v3559 = vlaneseq
        %v3560 = vshrl.u32 %v3559, 7
        %v3561 = vsub.s32 0, %v3560
        %v3562 = vrot.slane %v3502, %v3561
        %v3564 = vmul.f32 %v3554, %v3562
        %v3565 = vmul.f32 %v3555, %v3562
        %v3566 = vmul.f32 %v3556, %v3562
        %v3567 = vmul.f32 %v3557, %v3562
        %v3569 = vlaneseq
        %v3570 = vshrl.u32 %v3569, 7
        %v3571 = vsub.s32 0, %v3570
        %v3572 = vrot.slane %v3503, %v3571
        %v3574 = vadd.f32 %v3564, %v3572
        %v3575 = vadd.f32 %v3565, %v3572
        %v3576 = vadd.f32 %v3566, %v3572
        %v3577 = vadd.f32 %v3567, %v3572
        %v3578 = vld [vmem:[#allocation21] sm:$0xff]
        %v3579 = vld [vmem:[#allocation21 + $0x8] sm:$0xff]
        %v3580 = vld [vmem:[#allocation21 + $0x10] sm:$0xff]
        %v3581 = vld [vmem:[#allocation21 + $0x18] sm:$0xff]
        %v3582 = vld [vmem:[#allocation22] sm:$0x1]
        %v3584 = vlaneseq
        %v3585 = vshrl.u32 %v3584, 7
        %v3586 = vsub.s32 0, %v3585
        %v3587 = vrot.slane %v3582, %v3586
        %v3590 = vsel %vm1692, %v3574, 0
        %v3593 = vsel %vm1692, %v3575, 0
        %v3596 = vsel %vm1692, %v3576, 0
        %v3599 = vsel %vm1692, %v3577, 0
        %3601 = vmatprep.subr.mxu0 0.0
        %3602 = vmatpush1.msra.mxu0 %v3578
        %3603 = vmatprep.subr.mxu0 0.0
        %3604 = vmatpush1.msra.mxu0 %v3579
        %3605 = vmatprep.subr.mxu0 0.0
        %3606 = vmatpush1.msra.mxu0 %v3580
        %3607 = vmatprep.subr.mxu0 0.0
        %3608 = vmatpush1.msra.mxu0 %v3581
        %3609 = vmatprep.subr.mxu0 0.0
        %3610 = vmatpush1.msra.mxu0 0.0
        %3611 = vmatprep.subr.mxu0 0.0
        %3612 = vmatpush1.msra.mxu0 0.0
        %3613 = vmatprep.subr.mxu0 0.0
        %3614 = vmatpush1.msra.mxu0 0.0
        %3615 = vmatprep.subr.mxu0 0.0
        %3616 = vmatpush1.msra.mxu0 0.0
        %3617 = vmatprep.subr.mxu0 0.0
        %3618 = vmatpush1.msra.mxu0 0.0
        %3619 = vmatprep.subr.mxu0 0.0
        %3620 = vmatpush1.msra.mxu0 0.0
        %3621 = vmatprep.subr.mxu0 0.0
        %3622 = vmatpush1.msra.mxu0 0.0
        %3623 = vmatprep.subr.mxu0 0.0
        %3624 = vmatpush1.msra.mxu0 0.0
        %3625 = vmatprep.subr.mxu0 0.0
        %3626 = vmatpush1.msra.mxu0 0.0
        %3627 = vmatprep.subr.mxu0 0.0
        %3628 = vmatpush1.msra.mxu0 0.0
        %3629 = vmatprep.subr.mxu0 0.0
        %3630 = vmatpush1.msra.mxu0 0.0
        %3631 = vmatprep.subr.mxu0 0.0
        %3632 = vmatpush1.msra.mxu0 0.0
        %3633 = vmatprep.subr.mxu0 0.0
        %3634 = vmatpush1.msra.mxu0 0.0
        %3635 = vmatprep.subr.mxu0 0.0
        %3636 = vmatpush1.msra.mxu0 0.0
        %3637 = vmatprep.subr.mxu0 0.0
        %3638 = vmatpush1.msra.mxu0 0.0
        %3639 = vmatprep.subr.mxu0 0.0
        %3640 = vmatpush1.msra.mxu0 0.0
        %3641 = vmatprep.subr.mxu0 0.0
        %3642 = vmatpush1.msra.mxu0 0.0
        %3643 = vmatprep.subr.mxu0 0.0
        %3644 = vmatpush1.msra.mxu0 0.0
        %3645 = vmatprep.subr.mxu0 0.0
        %3646 = vmatpush1.msra.mxu0 0.0
        %3647 = vmatprep.subr.mxu0 0.0
        %3648 = vmatpush1.msra.mxu0 0.0
        %3649 = vmatprep.subr.mxu0 0.0
        %3650 = vmatpush1.msra.mxu0 0.0
        %3651 = vmatprep.subr.mxu0 0.0
        %3652 = vmatpush1.msra.mxu0 0.0
        %3653 = vmatprep.subr.mxu0 0.0
        %3654 = vmatpush1.msra.mxu0 0.0
        %3655 = vmatprep.subr.mxu0 0.0
        %3656 = vmatpush1.msra.mxu0 0.0
        %3657 = vmatprep.subr.mxu0 0.0
        %3658 = vmatpush1.msra.mxu0 0.0
        %3659 = vmatprep.subr.mxu0 0.0
        %3660 = vmatpush1.msra.mxu0 0.0
        %3661 = vmatprep.subr.mxu0 0.0
        %3662 = vmatpush1.msra.mxu0 0.0
        %3663 = vmatprep.subr.mxu0 0.0
        %3664 = vmatpush1.msra.mxu0 0.0
        %3665 = vmatprep.mubr.f32.mxu0 0.0
        %3666 = vmatmul.mubr.f32.gmra.mrb[0].mxu0 %v3590
        %v3667 = vpop.f32.mrb[0].mxu0
        %v3668 = vadd.f32 %v3587, %v3667
        %v3669 = vpop.f32.mrb[0].mxu0
        %3670 = vmatprep.mubr.f32.mxu0 0.0
        %3671 = vmatmul.mubr.f32.gmra.mrb[0].mxu0 %v3593
        %v3672 = vpop.f32.mrb[0].mxu0
        %v3673 = vadd.f32 %v3587, %v3672
        %v3674 = vpop.f32.mrb[0].mxu0
        %3675 = vmatprep.mubr.f32.mxu0 0.0
        %3676 = vmatmul.mubr.f32.gmra.mrb[0].mxu0 %v3596
        %v3677 = vpop.f32.mrb[0].mxu0
        %v3678 = vadd.f32 %v3587, %v3677
        %v3679 = vpop.f32.mrb[0].mxu0
        %3680 = vmatprep.mubr.f32.mxu0 0.0
        %3681 = vmatmul.mubr.f32.gmra.mrb[0].mxu0 %v3599
        %v3682 = vpop.f32.mrb[0].mxu0
        %v3683 = vadd.f32 %v3587, %v3682
        %v3684 = vpop.f32.mrb[0].mxu0
        %3685 = vdwg.mxu0
        %v3686 = vmul.f32 %v3668, 0.5
        %v3687 = vmul.f32 %v3673, 0.5
        %v3688 = vmul.f32 %v3678, 0.5
        %v3689 = vmul.f32 %v3683, 0.5
        %v3690 = vmul.f32 %v3668, 0.70710677
        %v3691 = vmul.f32 %v3673, 0.70710677
        %v3692 = vmul.f32 %v3678, 0.70710677
        %v3693 = vmul.f32 %v3683, 0.70710677
        %v3694 = verf.f32.pop %v3690
        %v3695 = verf.f32.pop %v3691
        %v3696 = verf.f32.pop %v3692
        %v3697 = verf.f32.pop %v3693
        %v3698 = vadd.f32 %v3694, 1.0
        %v3699 = vadd.f32 %v3695, 1.0
        %v3700 = vadd.f32 %v3696, 1.0
        %v3701 = vadd.f32 %v3697, 1.0
        %v3702 = vmul.f32 %v3686, %v3698
        %v3703 = vmul.f32 %v3687, %v3699
        %v3704 = vmul.f32 %v3688, %v3700
        %v3705 = vmul.f32 %v3689, %v3701
        %v3706 = vld [vmem:[%s67] sm:$0xff]
        %v3707 = vld [vmem:[%s67 + $0x8] sm:$0xff]
        %v3708 = vld [vmem:[%s67 + $0x10] sm:$0xff]
        %v3709 = vld [vmem:[%s67 + $0x18] sm:$0xff]
        %v3710 = vld [vmem:[%s67 + $0x20] sm:$0xff]
        %v3711 = vld [vmem:[%s67 + $0x28] sm:$0xff]
        %v3712 = vld [vmem:[%s67 + $0x30] sm:$0xff]
        %v3713 = vld [vmem:[%s67 + $0x38] sm:$0xff]
        %v3714 = vld [vmem:[#allocation24] sm:$0x1]
        %v3716 = vlaneseq
        %v3717 = vshrl.u32 %v3716, 7
        %v3718 = vsub.s32 0, %v3717
        %v3719 = vrot.slane %v3714, %v3718
        %vm3721 = vcmask 523264
        %v3723 = vsel %vm3721, %v3702, 0
        %v3726 = vsel %vm3721, %v3703, 0
        %v3729 = vsel %vm3721, %v3704, 0
        %v3732 = vsel %vm3721, %v3705, 0
        %3734 = vmatprep.subr.mxu0 0.0
        %3735 = vmatpush1.msra.mxu0 %v3706
        %3736 = vmatprep.subr.mxu0 0.0
        %3737 = vmatpush1.msra.mxu0 %v3707
        %3738 = vmatprep.subr.mxu0 0.0
        %3739 = vmatpush1.msra.mxu0 %v3708
        %3740 = vmatprep.subr.mxu0 0.0
        %3741 = vmatpush1.msra.mxu0 %v3709
        %3742 = vmatprep.subr.mxu0 0.0
        %3743 = vmatpush1.msra.mxu0 %v3710
        %3744 = vmatprep.subr.mxu0 0.0
        %3745 = vmatpush1.msra.mxu0 %v3711
        %3746 = vmatprep.subr.mxu0 0.0
        %3747 = vmatpush1.msra.mxu0 %v3712
        %3748 = vmatprep.subr.mxu0 0.0
        %3749 = vmatpush1.msra.mxu0 %v3713
        %3750 = vmatprep.subr.mxu0 0.0
        %3751 = vmatpush1.msra.mxu0 0.0
        %3752 = vmatprep.subr.mxu0 0.0
        %3753 = vmatpush1.msra.mxu0 0.0
        %3754 = vmatprep.subr.mxu0 0.0
        %3755 = vmatpush1.msra.mxu0 0.0
        %3756 = vmatprep.subr.mxu0 0.0
        %3757 = vmatpush1.msra.mxu0 0.0
        %3758 = vmatprep.subr.mxu0 0.0
        %3759 = vmatpush1.msra.mxu0 0.0
        %3760 = vmatprep.subr.mxu0 0.0
        %3761 = vmatpush1.msra.mxu0 0.0
        %3762 = vmatprep.subr.mxu0 0.0
        %3763 = vmatpush1.msra.mxu0 0.0
        %3764 = vmatprep.subr.mxu0 0.0
        %3765 = vmatpush1.msra.mxu0 0.0
        %3766 = vmatprep.subr.mxu0 0.0
        %3767 = vmatpush1.msra.mxu0 0.0
        %3768 = vmatprep.subr.mxu0 0.0
        %3769 = vmatpush1.msra.mxu0 0.0
        %3770 = vmatprep.subr.mxu0 0.0
        %3771 = vmatpush1.msra.mxu0 0.0
        %3772 = vmatprep.subr.mxu0 0.0
        %3773 = vmatpush1.msra.mxu0 0.0
        %3774 = vmatprep.subr.mxu0 0.0
        %3775 = vmatpush1.msra.mxu0 0.0
        %3776 = vmatprep.subr.mxu0 0.0
        %3777 = vmatpush1.msra.mxu0 0.0
        %3778 = vmatprep.subr.mxu0 0.0
        %3779 = vmatpush1.msra.mxu0 0.0
        %3780 = vmatprep.subr.mxu0 0.0
        %3781 = vmatpush1.msra.mxu0 0.0
        %3782 = vmatprep.subr.mxu0 0.0
        %3783 = vmatpush1.msra.mxu0 0.0
        %3784 = vmatprep.subr.mxu0 0.0
        %3785 = vmatpush1.msra.mxu0 0.0
        %3786 = vmatprep.subr.mxu0 0.0
        %3787 = vmatpush1.msra.mxu0 0.0
        %3788 = vmatprep.subr.mxu0 0.0
        %3789 = vmatpush1.msra.mxu0 0.0
        %3790 = vmatprep.subr.mxu0 0.0
        %3791 = vmatpush1.msra.mxu0 0.0
        %3792 = vmatprep.subr.mxu0 0.0
        %3793 = vmatpush1.msra.mxu0 0.0
        %3794 = vmatprep.subr.mxu0 0.0
        %3795 = vmatpush1.msra.mxu0 0.0
        %3796 = vmatprep.subr.mxu0 0.0
        %3797 = vmatpush1.msra.mxu0 0.0
        %3798 = vmatprep.mubr.f32.mxu0 0.0
        %3799 = vmatmul.mubr.f32.gmra.mrb[0].mxu0 %v3723
        %v3800 = vpop.f32.mrb[0].mxu0
        %v3801 = vadd.f32 %v3719, %v3800
        %v3802 = vpop.f32.mrb[0].mxu0
        %3803 = vmatprep.mubr.f32.mxu0 0.0
        %3804 = vmatmul.mubr.f32.gmra.mrb[0].mxu0 %v3726
        %v3805 = vpop.f32.mrb[0].mxu0
        %v3806 = vadd.f32 %v3719, %v3805
        %v3807 = vpop.f32.mrb[0].mxu0
        %3808 = vmatprep.mubr.f32.mxu0 0.0
        %3809 = vmatmul.mubr.f32.gmra.mrb[0].mxu0 %v3729
        %v3810 = vpop.f32.mrb[0].mxu0
        %v3811 = vadd.f32 %v3719, %v3810
        %v3812 = vpop.f32.mrb[0].mxu0
        %3813 = vmatprep.mubr.f32.mxu0 0.0
        %3814 = vmatmul.mubr.f32.gmra.mrb[0].mxu0 %v3732
        %v3815 = vpop.f32.mrb[0].mxu0
        %v3816 = vadd.f32 %v3719, %v3815
        %v3817 = vpop.f32.mrb[0].mxu0
        %3818 = vdwg.mxu0
        %v3819 = vadd.f32 %v3574, %v3801
        %v3820 = vadd.f32 %v3575, %v3806
        %v3821 = vadd.f32 %v3576, %v3811
        %v3822 = vadd.f32 %v3577, %v3816
        %v3823 = vld [vmem:[#allocation25] sm:$0x1]
        %v3824 = vld [vmem:[#allocation27] sm:$0x1]
        %v3825 = vsel %vm1692, %v3819, 0.0
        %3826 = vadd.xlane.f32.xlu0 %v3825
        %v3827 = vpop.xlane.xlu0 %3826
        %v3828 = vsel %vm1692, %v3820, 0.0
        %3829 = vadd.xlane.f32.xlu0 %v3828
        %v3830 = vpop.xlane.xlu0 %3829
        %v3831 = vsel %vm1692, %v3821, 0.0
        %3832 = vadd.xlane.f32.xlu0 %v3831
        %v3833 = vpop.xlane.xlu0 %3832
        %v3834 = vsel %vm3513, %v3822, 0.0
        %3835 = vadd.xlane.f32.xlu0 %v3834
        %v3836 = vpop.xlane.xlu0 %3835
        %v3837 = vmul.f32 %v3827, %v3517
        %v3838 = vmul.f32 %v3830, %v3517
        %v3839 = vmul.f32 %v3833, %v3517
        %v3840 = vmul.f32 %v3836, %v3517
        %v3841 = vsub.f32 %v3819, %v3837
        %v3842 = vsub.f32 %v3820, %v3838
        %v3843 = vsub.f32 %v3821, %v3839
        %v3844 = vsub.f32 %v3822, %v3840
        %v3845 = vmul.f32 %v3841, %v3841
        %v3846 = vmul.f32 %v3842, %v3842
        %v3847 = vmul.f32 %v3843, %v3843
        %v3848 = vmul.f32 %v3844, %v3844
        %v3849 = vsel %vm1692, %v3845, 0.0
        %3850 = vadd.xlane.f32.xlu0 %v3849
        %v3851 = vpop.xlane.xlu0 %3850
        %v3852 = vsel %vm1692, %v3846, 0.0
        %3853 = vadd.xlane.f32.xlu0 %v3852
        %v3854 = vpop.xlane.xlu0 %3853
        %v3855 = vsel %vm1692, %v3847, 0.0
        %3856 = vadd.xlane.f32.xlu0 %v3855
        %v3857 = vpop.xlane.xlu0 %3856
        %v3858 = vsel %vm3513, %v3848, 0.0
        %3859 = vadd.xlane.f32.xlu0 %v3858
        %v3860 = vpop.xlane.xlu0 %3859
        %v3861 = vmul.f32 %v3851, %v3517
        %v3862 = vmul.f32 %v3854, %v3517
        %v3863 = vmul.f32 %v3857, %v3517
        %v3864 = vmul.f32 %v3860, %v3517
        %v3865 = vadd.f32 %v3861, 1e-05
        %v3866 = vadd.f32 %v3862, 1e-05
        %v3867 = vadd.f32 %v3863, 1e-05
        %v3868 = vadd.f32 %v3864, 1e-05
        %v3869 = vrsqrt.pop %v3865
        %v3870 = vrsqrt.pop %v3866
        %v3871 = vrsqrt.pop %v3867
        %v3872 = vrsqrt.pop %v3868
        %v3873 = vmul.f32 %v3841, %v3869
        %v3874 = vmul.f32 %v3842, %v3870
        %v3875 = vmul.f32 %v3843, %v3871
        %v3876 = vmul.f32 %v3844, %v3872
        %v3878 = vlaneseq
        %v3879 = vshrl.u32 %v3878, 7
        %v3880 = vsub.s32 0, %v3879
        %v3881 = vrot.slane %v3823, %v3880
        %v3883 = vmul.f32 %v3873, %v3881
        %v3884 = vmul.f32 %v3874, %v3881
        %v3885 = vmul.f32 %v3875, %v3881
        %v3886 = vmul.f32 %v3876, %v3881
        %v3888 = vlaneseq
        %v3889 = vshrl.u32 %v3888, 7
        %v3890 = vsub.s32 0, %v3889
        %v3891 = vrot.slane %v3824, %v3890
        %v3893 = vadd.f32 %v3883, %v3891
        %v3894 = vadd.f32 %v3884, %v3891
        %v3895 = vadd.f32 %v3885, %v3891
        %v3896 = vadd.f32 %v3886, %v3891
        %v3897 = vld [vmem:[%s7] sm:$0xff]
        %v3898 = vld [vmem:[%s7 + $0x8] sm:$0xff]
        %v3899 = vld [vmem:[%s7 + $0x10] sm:$0xff]
        %v3900 = vld [vmem:[%s7 + $0x18] sm:$0xff]
        %v3901 = vld [vmem:[%s7 + $0x20] sm:$0xff]
        %v3902 = vld [vmem:[%s7 + $0x28] sm:$0xff]
        %v3903 = vld [vmem:[%s7 + $0x30] sm:$0xff]
        %v3904 = vld [vmem:[%s7 + $0x38] sm:$0xff]
        %v3905 = vld [vmem:[%s7 + $0x40] sm:$0xff]
        %v3906 = vld [vmem:[%s7 + $0x48] sm:$0xff]
        %v3907 = vld [vmem:[%s7 + $0x50] sm:$0xff]
        %v3908 = vld [vmem:[%s7 + $0x58] sm:$0xff]
        %v3909 = vld [vmem:[%s7 + $0x60] sm:$0xf]
        %v3910 = vld [vmem:[%s27] sm:$0xff]
        %v3911 = vld [vmem:[%s27 + $0x8] sm:$0xff]
        %v3912 = vld [vmem:[%s27 + $0x10] sm:$0xff]
        %v3913 = vld [vmem:[%s27 + $0x18] sm:$0xff]
        %v3914 = vld [vmem:[#allocation2] sm:$0x1]
        %v3916 = vlaneseq
        %v3917 = vshrl.u32 %v3916, 7
        %v3918 = vsub.s32 0, %v3917
        %v3919 = vrot.slane %v3914, %v3918
        %v3922 = vsel %vm1692, %v1664, 0
        %v3925 = vsel %vm1692, %v1665, 0
        %v3928 = vsel %vm1692, %v1666, 0
        %v3931 = vsel %vm1692, %v1667, 0
        %v3934 = vsel %vm1692, %v1668, 0
        %v3937 = vsel %vm1692, %v1669, 0
        %v3940 = vsel %vm1692, %v1670, 0
        %v3943 = vsel %vm1692, %v1671, 0
        %v3946 = vsel %vm1692, %v1672, 0
        %v3949 = vsel %vm1692, %v1673, 0
        %v3952 = vsel %vm1692, %v1674, 0
        %v3955 = vsel %vm1692, %v1675, 0
        %v3958 = vsel %vm1692, %v1676, 0
        %3960 = vmatprep.subr.mxu0 0.0
        %3961 = vmatpush1.msra.mxu0 %v3910
        %3962 = vmatprep.subr.mxu0 0.0
        %3963 = vmatpush1.msra.mxu0 %v3911
        %3964 = vmatprep.subr.mxu0 0.0
        %3965 = vmatpush1.msra.mxu0 %v3912
        %3966 = vmatprep.subr.mxu0 0.0
        %3967 = vmatpush1.msra.mxu0 %v3913
        %3968 = vmatprep.subr.mxu0 0.0
        %3969 = vmatpush1.msra.mxu0 0.0
        %3970 = vmatprep.subr.mxu0 0.0
        %3971 = vmatpush1.msra.mxu0 0.0
        %3972 = vmatprep.subr.mxu0 0.0
        %3973 = vmatpush1.msra.mxu0 0.0
        %3974 = vmatprep.subr.mxu0 0.0
        %3975 = vmatpush1.msra.mxu0 0.0
        %3976 = vmatprep.subr.mxu0 0.0
        %3977 = vmatpush1.msra.mxu0 0.0
        %3978 = vmatprep.subr.mxu0 0.0
        %3979 = vmatpush1.msra.mxu0 0.0
        %3980 = vmatprep.subr.mxu0 0.0
        %3981 = vmatpush1.msra.mxu0 0.0
        %3982 = vmatprep.subr.mxu0 0.0
        %3983 = vmatpush1.msra.mxu0 0.0
        %3984 = vmatprep.subr.mxu0 0.0
        %3985 = vmatpush1.msra.mxu0 0.0
        %3986 = vmatprep.subr.mxu0 0.0
        %3987 = vmatpush1.msra.mxu0 0.0
        %3988 = vmatprep.subr.mxu0 0.0
        %3989 = vmatpush1.msra.mxu0 0.0
        %3990 = vmatprep.subr.mxu0 0.0
        %3991 = vmatpush1.msra.mxu0 0.0
        %3992 = vmatprep.subr.mxu0 0.0
        %3993 = vmatpush1.msra.mxu0 0.0
        %3994 = vmatprep.subr.mxu0 0.0
        %3995 = vmatpush1.msra.mxu0 0.0
        %3996 = vmatprep.subr.mxu0 0.0
        %3997 = vmatpush1.msra.mxu0 0.0
        %3998 = vmatprep.subr.mxu0 0.0
        %3999 = vmatpush1.msra.mxu0 0.0
        %4000 = vmatprep.subr.mxu0 0.0
        %4001 = vmatpush1.msra.mxu0 0.0
        %4002 = vmatprep.subr.mxu0 0.0
        %4003 = vmatpush1.msra.mxu0 0.0
        %4004 = vmatprep.subr.mxu0 0.0
        %4005 = vmatpush1.msra.mxu0 0.0
        %4006 = vmatprep.subr.mxu0 0.0
        %4007 = vmatpush1.msra.mxu0 0.0
        %4008 = vmatprep.subr.mxu0 0.0
        %4009 = vmatpush1.msra.mxu0 0.0
        %4010 = vmatprep.subr.mxu0 0.0
        %4011 = vmatpush1.msra.mxu0 0.0
        %4012 = vmatprep.subr.mxu0 0.0
        %4013 = vmatpush1.msra.mxu0 0.0
        %4014 = vmatprep.subr.mxu0 0.0
        %4015 = vmatpush1.msra.mxu0 0.0
        %4016 = vmatprep.subr.mxu0 0.0
        %4017 = vmatpush1.msra.mxu0 0.0
        %4018 = vmatprep.subr.mxu0 0.0
        %4019 = vmatpush1.msra.mxu0 0.0
        %4020 = vmatprep.subr.mxu0 0.0
        %4021 = vmatpush1.msra.mxu0 0.0
        %4022 = vmatprep.subr.mxu0 0.0
        %4023 = vmatpush1.msra.mxu0 0.0
        %4024 = vmatprep.mubr.f32.mxu0 0.0
        %4025 = vmatmul.mubr.f32.gmra.mrb[0].mxu0 %v3922
        %v4026 = vpop.f32.mrb[0].mxu0
        %v4027 = vadd.f32 %v3919, %v4026
        %v4028 = vpop.f32.mrb[0].mxu0
        %4029 = vmatprep.mubr.f32.mxu0 0.0
        %4030 = vmatmul.mubr.f32.gmra.mrb[0].mxu0 %v3925
        %v4031 = vpop.f32.mrb[0].mxu0
        %v4032 = vadd.f32 %v3919, %v4031
        %v4033 = vpop.f32.mrb[0].mxu0
        %4034 = vmatprep.mubr.f32.mxu0 0.0
        %4035 = vmatmul.mubr.f32.gmra.mrb[0].mxu0 %v3928
        %v4036 = vpop.f32.mrb[0].mxu0
        %v4037 = vadd.f32 %v3919, %v4036
        %v4038 = vpop.f32.mrb[0].mxu0
        %4039 = vmatprep.mubr.f32.mxu0 0.0
        %4040 = vmatmul.mubr.f32.gmra.mrb[0].mxu0 %v3931
        %v4041 = vpop.f32.mrb[0].mxu0
        %v4042 = vadd.f32 %v3919, %v4041
        %v4043 = vpop.f32.mrb[0].mxu0
        %4044 = vmatprep.mubr.f32.mxu0 0.0
        %4045 = vmatmul.mubr.f32.gmra.mrb[0].mxu0 %v3934
        %v4046 = vpop.f32.mrb[0].mxu0
        %v4047 = vadd.f32 %v3919, %v4046
        %v4048 = vpop.f32.mrb[0].mxu0
        %4049 = vmatprep.mubr.f32.mxu0 0.0
        %4050 = vmatmul.mubr.f32.gmra.mrb[0].mxu0 %v3937
        %v4051 = vpop.f32.mrb[0].mxu0
        %v4052 = vadd.f32 %v3919, %v4051
        %v4053 = vpop.f32.mrb[0].mxu0
        %4054 = vmatprep.mubr.f32.mxu0 0.0
        %4055 = vmatmul.mubr.f32.gmra.mrb[0].mxu0 %v3940
        %v4056 = vpop.f32.mrb[0].mxu0
        %v4057 = vadd.f32 %v3919, %v4056
        %v4058 = vpop.f32.mrb[0].mxu0
        %4059 = vmatprep.mubr.f32.mxu0 0.0
        %4060 = vmatmul.mubr.f32.gmra.mrb[0].mxu0 %v3943
        %v4061 = vpop.f32.mrb[0].mxu0
        %v4062 = vadd.f32 %v3919, %v4061
        %v4063 = vpop.f32.mrb[0].mxu0
        %4064 = vmatprep.mubr.f32.mxu0 0.0
        %4065 = vmatmul.mubr.f32.gmra.mrb[0].mxu0 %v3946
        %v4066 = vpop.f32.mrb[0].mxu0
        %v4067 = vadd.f32 %v3919, %v4066
        %v4068 = vpop.f32.mrb[0].mxu0
        %4069 = vmatprep.mubr.f32.mxu0 0.0
        %4070 = vmatmul.mubr.f32.gmra.mrb[0].mxu0 %v3949
        %v4071 = vpop.f32.mrb[0].mxu0
        %v4072 = vadd.f32 %v3919, %v4071
        %v4073 = vpop.f32.mrb[0].mxu0
        %4074 = vmatprep.mubr.f32.mxu0 0.0
        %4075 = vmatmul.mubr.f32.gmra.mrb[0].mxu0 %v3952
        %v4076 = vpop.f32.mrb[0].mxu0
        %v4077 = vadd.f32 %v3919, %v4076
        %v4078 = vpop.f32.mrb[0].mxu0
        %4079 = vmatprep.mubr.f32.mxu0 0.0
        %4080 = vmatmul.mubr.f32.gmra.mrb[0].mxu0 %v3955
        %v4081 = vpop.f32.mrb[0].mxu0
        %v4082 = vadd.f32 %v3919, %v4081
        %v4083 = vpop.f32.mrb[0].mxu0
        %4084 = vmatprep.mubr.f32.mxu0 0.0
        %4085 = vmatmul.mubr.f32.gmra.mrb[0].mxu0 %v3958
        %v4086 = vpop.f32.mrb[0].mxu0
        %v4087 = vadd.f32 %v3919, %v4086
        %v4088 = vpop.f32.mrb[0].mxu0
        %4089 = vdwg.mxu0
        %v4090 = vld [vmem:[%s31] sm:$0xff]
        %v4091 = vld [vmem:[%s31 + $0x8] sm:$0xff]
        %v4092 = vld [vmem:[%s31 + $0x10] sm:$0xff]
        %v4093 = vld [vmem:[%s31 + $0x18] sm:$0xff]
        %v4094 = vld [vmem:[#allocation4] sm:$0x1]
        %v4096 = vlaneseq
        %v4097 = vshrl.u32 %v4096, 7
        %v4098 = vsub.s32 0, %v4097
        %v4099 = vrot.slane %v4094, %v4098
        %v4102 = vsel %vm1692, %v3893, 0
        %v4105 = vsel %vm1692, %v3894, 0
        %v4108 = vsel %vm1692, %v3895, 0
        %v4111 = vsel %vm1692, %v3896, 0
        %4113 = vmatprep.subr.mxu0 0.0
        %4114 = vmatpush1.msra.mxu0 %v4090
        %4115 = vmatprep.subr.mxu0 0.0
        %4116 = vmatpush1.msra.mxu0 %v4091
        %4117 = vmatprep.subr.mxu0 0.0
        %4118 = vmatpush1.msra.mxu0 %v4092
        %4119 = vmatprep.subr.mxu0 0.0
        %4120 = vmatpush1.msra.mxu0 %v4093
        %4121 = vmatprep.subr.mxu0 0.0
        %4122 = vmatpush1.msra.mxu0 0.0
        %4123 = vmatprep.subr.mxu0 0.0
        %4124 = vmatpush1.msra.mxu0 0.0
        %4125 = vmatprep.subr.mxu0 0.0
        %4126 = vmatpush1.msra.mxu0 0.0
        %4127 = vmatprep.subr.mxu0 0.0
        %4128 = vmatpush1.msra.mxu0 0.0
        %4129 = vmatprep.subr.mxu0 0.0
        %4130 = vmatpush1.msra.mxu0 0.0
        %4131 = vmatprep.subr.mxu0 0.0
        %4132 = vmatpush1.msra.mxu0 0.0
        %4133 = vmatprep.subr.mxu0 0.0
        %4134 = vmatpush1.msra.mxu0 0.0
        %4135 = vmatprep.subr.mxu0 0.0
        %4136 = vmatpush1.msra.mxu0 0.0
        %4137 = vmatprep.subr.mxu0 0.0
        %4138 = vmatpush1.msra.mxu0 0.0
        %4139 = vmatprep.subr.mxu0 0.0
        %4140 = vmatpush1.msra.mxu0 0.0
        %4141 = vmatprep.subr.mxu0 0.0
        %4142 = vmatpush1.msra.mxu0 0.0
        %4143 = vmatprep.subr.mxu0 0.0
        %4144 = vmatpush1.msra.mxu0 0.0
        %4145 = vmatprep.subr.mxu0 0.0
        %4146 = vmatpush1.msra.mxu0 0.0
        %4147 = vmatprep.subr.mxu0 0.0
        %4148 = vmatpush1.msra.mxu0 0.0
        %4149 = vmatprep.subr.mxu0 0.0
        %4150 = vmatpush1.msra.mxu0 0.0
        %4151 = vmatprep.subr.mxu0 0.0
        %4152 = vmatpush1.msra.mxu0 0.0
        %4153 = vmatprep.subr.mxu0 0.0
        %4154 = vmatpush1.msra.mxu0 0.0
        %4155 = vmatprep.subr.mxu0 0.0
        %4156 = vmatpush1.msra.mxu0 0.0
        %4157 = vmatprep.subr.mxu0 0.0
        %4158 = vmatpush1.msra.mxu0 0.0
        %4159 = vmatprep.subr.mxu0 0.0
        %4160 = vmatpush1.msra.mxu0 0.0
        %4161 = vmatprep.subr.mxu0 0.0
        %4162 = vmatpush1.msra.mxu0 0.0
        %4163 = vmatprep.subr.mxu0 0.0
        %4164 = vmatpush1.msra.mxu0 0.0
        %4165 = vmatprep.subr.mxu0 0.0
        %4166 = vmatpush1.msra.mxu0 0.0
        %4167 = vmatprep.subr.mxu0 0.0
        %4168 = vmatpush1.msra.mxu0 0.0
        %4169 = vmatprep.subr.mxu0 0.0
        %4170 = vmatpush1.msra.mxu0 0.0
        %4171 = vmatprep.subr.mxu0 0.0
        %4172 = vmatpush1.msra.mxu0 0.0
        %4173 = vmatprep.subr.mxu0 0.0
        %4174 = vmatpush1.msra.mxu0 0.0
        %4175 = vmatprep.subr.mxu0 0.0
        %4176 = vmatpush1.msra.mxu0 0.0
        %4177 = vmatprep.mubr.f32.mxu0 0.0
        %4178 = vmatmul.mubr.f32.gmra.mrb[0].mxu0 %v4102
        %v4179 = vpop.f32.mrb[0].mxu0
        %v4180 = vadd.f32 %v4099, %v4179
        %v4181 = vpop.f32.mrb[0].mxu0
        %4182 = vmatprep.mubr.f32.mxu0 0.0
        %4183 = vmatmul.mubr.f32.gmra.mrb[0].mxu0 %v4105
        %v4184 = vpop.f32.mrb[0].mxu0
        %v4185 = vadd.f32 %v4099, %v4184
        %v4186 = vpop.f32.mrb[0].mxu0
        %4187 = vmatprep.mubr.f32.mxu0 0.0
        %4188 = vmatmul.mubr.f32.gmra.mrb[0].mxu0 %v4108
        %v4189 = vpop.f32.mrb[0].mxu0
        %v4190 = vadd.f32 %v4099, %v4189
        %v4191 = vpop.f32.mrb[0].mxu0
        %4192 = vmatprep.mubr.f32.mxu0 0.0
        %4193 = vmatmul.mubr.f32.gmra.mrb[0].mxu0 %v4111
        %v4194 = vpop.f32.mrb[0].mxu0
        %v4195 = vadd.f32 %v4099, %v4194
        %v4196 = vpop.f32.mrb[0].mxu0
        %4197 = vdwg.mxu0
        %v4198 = vld [vmem:[%s35] sm:$0xff]
        %v4199 = vld [vmem:[%s35 + $0x8] sm:$0xff]
        %v4200 = vld [vmem:[%s35 + $0x10] sm:$0xff]
        %v4201 = vld [vmem:[%s35 + $0x18] sm:$0xff]
        %v4202 = vld [vmem:[#allocation6] sm:$0x1]
        %v4204 = vlaneseq
        %v4205 = vshrl.u32 %v4204, 7
        %v4206 = vsub.s32 0, %v4205
        %v4207 = vrot.slane %v4202, %v4206
        %4209 = vmatprep.subr.mxu0 0.0
        %4210 = vmatpush1.msra.mxu0 %v4198
        %4211 = vmatprep.subr.mxu0 0.0
        %4212 = vmatpush1.msra.mxu0 %v4199
        %4213 = vmatprep.subr.mxu0 0.0
        %4214 = vmatpush1.msra.mxu0 %v4200
        %4215 = vmatprep.subr.mxu0 0.0
        %4216 = vmatpush1.msra.mxu0 %v4201
        %4217 = vmatprep.subr.mxu0 0.0
        %4218 = vmatpush1.msra.mxu0 0.0
        %4219 = vmatprep.subr.mxu0 0.0
        %4220 = vmatpush1.msra.mxu0 0.0
        %4221 = vmatprep.subr.mxu0 0.0
        %4222 = vmatpush1.msra.mxu0 0.0
        %4223 = vmatprep.subr.mxu0 0.0
        %4224 = vmatpush1.msra.mxu0 0.0
        %4225 = vmatprep.subr.mxu0 0.0
        %4226 = vmatpush1.msra.mxu0 0.0
        %4227 = vmatprep.subr.mxu0 0.0
        %4228 = vmatpush1.msra.mxu0 0.0
        %4229 = vmatprep.subr.mxu0 0.0
        %4230 = vmatpush1.msra.mxu0 0.0
        %4231 = vmatprep.subr.mxu0 0.0
        %4232 = vmatpush1.msra.mxu0 0.0
        %4233 = vmatprep.subr.mxu0 0.0
        %4234 = vmatpush1.msra.mxu0 0.0
        %4235 = vmatprep.subr.mxu0 0.0
        %4236 = vmatpush1.msra.mxu0 0.0
        %4237 = vmatprep.subr.mxu0 0.0
        %4238 = vmatpush1.msra.mxu0 0.0
        %4239 = vmatprep.subr.mxu0 0.0
        %4240 = vmatpush1.msra.mxu0 0.0
        %4241 = vmatprep.subr.mxu0 0.0
        %4242 = vmatpush1.msra.mxu0 0.0
        %4243 = vmatprep.subr.mxu0 0.0
        %4244 = vmatpush1.msra.mxu0 0.0
        %4245 = vmatprep.subr.mxu0 0.0
        %4246 = vmatpush1.msra.mxu0 0.0
        %4247 = vmatprep.subr.mxu0 0.0
        %4248 = vmatpush1.msra.mxu0 0.0
        %4249 = vmatprep.subr.mxu0 0.0
        %4250 = vmatpush1.msra.mxu0 0.0
        %4251 = vmatprep.subr.mxu0 0.0
        %4252 = vmatpush1.msra.mxu0 0.0
        %4253 = vmatprep.subr.mxu0 0.0
        %4254 = vmatpush1.msra.mxu0 0.0
        %4255 = vmatprep.subr.mxu0 0.0
        %4256 = vmatpush1.msra.mxu0 0.0
        %4257 = vmatprep.subr.mxu0 0.0
        %4258 = vmatpush1.msra.mxu0 0.0
        %4259 = vmatprep.subr.mxu0 0.0
        %4260 = vmatpush1.msra.mxu0 0.0
        %4261 = vmatprep.subr.mxu0 0.0
        %4262 = vmatpush1.msra.mxu0 0.0
        %4263 = vmatprep.subr.mxu0 0.0
        %4264 = vmatpush1.msra.mxu0 0.0
        %4265 = vmatprep.subr.mxu0 0.0
        %4266 = vmatpush1.msra.mxu0 0.0
        %4267 = vmatprep.subr.mxu0 0.0
        %4268 = vmatpush1.msra.mxu0 0.0
        %4269 = vmatprep.subr.mxu0 0.0
        %4270 = vmatpush1.msra.mxu0 0.0
        %4271 = vmatprep.subr.mxu0 0.0
        %4272 = vmatpush1.msra.mxu0 0.0
        %4273 = vmatprep.mubr.f32.mxu0 0.0
        %4274 = vmatmul.mubr.f32.gmra.mrb[0].mxu0 %v4102
        %v4275 = vpop.f32.mrb[0].mxu0
        %v4276 = vadd.f32 %v4207, %v4275
        %v4277 = vpop.f32.mrb[0].mxu0
        %4278 = vmatprep.mubr.f32.mxu0 0.0
        %4279 = vmatmul.mubr.f32.gmra.mrb[0].mxu0 %v4105
        %v4280 = vpop.f32.mrb[0].mxu0
        %v4281 = vadd.f32 %v4207, %v4280
        %v4282 = vpop.f32.mrb[0].mxu0
        %4283 = vmatprep.mubr.f32.mxu0 0.0
        %4284 = vmatmul.mubr.f32.gmra.mrb[0].mxu0 %v4108
        %v4285 = vpop.f32.mrb[0].mxu0
        %v4286 = vadd.f32 %v4207, %v4285
        %v4287 = vpop.f32.mrb[0].mxu0
        %4288 = vmatprep.mubr.f32.mxu0 0.0
        %4289 = vmatmul.mubr.f32.gmra.mrb[0].mxu0 %v4111
        %v4290 = vpop.f32.mrb[0].mxu0
        %v4291 = vadd.f32 %v4207, %v4290
        %v4292 = vpop.f32.mrb[0].mxu0
        %4293 = vdwg.mxu0
        %v4294 = vld [vmem:[%s39] sm:$0xff]
        %v4295 = vld [vmem:[%s39 + $0x8] sm:$0xff]
        %v4296 = vld [vmem:[%s39 + $0x10] sm:$0xff]
        %v4297 = vld [vmem:[%s39 + $0x18] sm:$0xff]
        %v4299 = vsel %vm1986, %v4027, 0
        %v4302 = vsel %vm1986, %v4032, 0
        %v4305 = vsel %vm1986, %v4037, 0
        %v4308 = vsel %vm1986, %v4042, 0
        %v4311 = vsel %vm1986, %v4047, 0
        %v4314 = vsel %vm1986, %v4052, 0
        %v4317 = vsel %vm1986, %v4057, 0
        %v4320 = vsel %vm1986, %v4062, 0
        %v4323 = vsel %vm1986, %v4067, 0
        %v4326 = vsel %vm1986, %v4072, 0
        %v4329 = vsel %vm1986, %v4077, 0
        %v4332 = vsel %vm1986, %v4082, 0
        %v4335 = vsel %vm1986, %v4087, 0
        %v4338 = vsel %vm1986, %v4180, 0
        %v4341 = vsel %vm1986, %v4185, 0
        %v4344 = vsel %vm1986, %v4190, 0
        %v4347 = vsel %vm1986, %v4195, 0
        %4349 = vmatprep.subr.mxu0 0.0
        %4350 = vmatpush1.xpose.msra.mxu0 %v4338
        %4351 = vmatprep.subr.mxu0 0.0
        %4352 = vmatpush1.xpose.msra.mxu0 %v4341
        %4353 = vmatprep.subr.mxu0 0.0
        %4354 = vmatpush1.xpose.msra.mxu0 %v4344
        %4355 = vmatprep.subr.mxu0 0.0
        %4356 = vmatpush1.xpose.msra.mxu0 %v4347
        %4357 = vmatprep.subr.mxu0 0.0
        %4358 = vmatpush1.xpose.msra.mxu0 0.0
        %4359 = vmatprep.subr.mxu0 0.0
        %4360 = vmatpush1.xpose.msra.mxu0 0.0
        %4361 = vmatprep.subr.mxu0 0.0
        %4362 = vmatpush1.xpose.msra.mxu0 0.0
        %4363 = vmatprep.subr.mxu0 0.0
        %4364 = vmatpush1.xpose.msra.mxu0 0.0
        %4365 = vmatprep.subr.mxu0 0.0
        %4366 = vmatpush1.xpose.msra.mxu0 0.0
        %4367 = vmatprep.subr.mxu0 0.0
        %4368 = vmatpush1.xpose.msra.mxu0 0.0
        %4369 = vmatprep.subr.mxu0 0.0
        %4370 = vmatpush1.xpose.msra.mxu0 0.0
        %4371 = vmatprep.subr.mxu0 0.0
        %4372 = vmatpush1.xpose.msra.mxu0 0.0
        %4373 = vmatprep.subr.mxu0 0.0
        %4374 = vmatpush1.xpose.msra.mxu0 0.0
        %4375 = vmatprep.subr.mxu0 0.0
        %4376 = vmatpush1.xpose.msra.mxu0 0.0
        %4377 = vmatprep.subr.mxu0 0.0
        %4378 = vmatpush1.xpose.msra.mxu0 0.0
        %4379 = vmatprep.subr.mxu0 0.0
        %4380 = vmatpush1.xpose.msra.mxu0 0.0
        %4381 = vmatprep.subr.mxu0 0.0
        %4382 = vmatpush1.xpose.msra.mxu0 0.0
        %4383 = vmatprep.subr.mxu0 0.0
        %4384 = vmatpush1.xpose.msra.mxu0 0.0
        %4385 = vmatprep.subr.mxu0 0.0
        %4386 = vmatpush1.xpose.msra.mxu0 0.0
        %4387 = vmatprep.subr.mxu0 0.0
        %4388 = vmatpush1.xpose.msra.mxu0 0.0
        %4389 = vmatprep.subr.mxu0 0.0
        %4390 = vmatpush1.xpose.msra.mxu0 0.0
        %4391 = vmatprep.subr.mxu0 0.0
        %4392 = vmatpush1.xpose.msra.mxu0 0.0
        %4393 = vmatprep.subr.mxu0 0.0
        %4394 = vmatpush1.xpose.msra.mxu0 0.0
        %4395 = vmatprep.subr.mxu0 0.0
        %4396 = vmatpush1.xpose.msra.mxu0 0.0
        %4397 = vmatprep.subr.mxu0 0.0
        %4398 = vmatpush1.xpose.msra.mxu0 0.0
        %4399 = vmatprep.subr.mxu0 0.0
        %4400 = vmatpush1.xpose.msra.mxu0 0.0
        %4401 = vmatprep.subr.mxu0 0.0
        %4402 = vmatpush1.xpose.msra.mxu0 0.0
        %4403 = vmatprep.subr.mxu0 0.0
        %4404 = vmatpush1.xpose.msra.mxu0 0.0
        %4405 = vmatprep.subr.mxu0 0.0
        %4406 = vmatpush1.xpose.msra.mxu0 0.0
        %4407 = vmatprep.subr.mxu0 0.0
        %4408 = vmatpush1.xpose.msra.mxu0 0.0
        %4409 = vmatprep.subr.mxu0 0.0
        %4410 = vmatpush1.xpose.msra.mxu0 0.0
        %4411 = vmatprep.subr.mxu0 0.0
        %4412 = vmatpush1.xpose.msra.mxu0 0.0
        %4413 = vmatprep.mubr.f32.mxu0 0.0
        %4414 = vmatmul.mubr.f32.gmra.mrb[0].mxu0 %v4299
        %v4415 = vpop.f32.mrb[0].mxu0
        %v4416 = vadd.f32 0.0, %v4415
        %v4417 = vpop.f32.mrb[0].mxu0
        %4418 = vmatprep.mubr.f32.mxu0 0.0
        %4419 = vmatmul.mubr.f32.gmra.mrb[0].mxu0 %v4302
        %v4420 = vpop.f32.mrb[0].mxu0
        %v4421 = vadd.f32 0.0, %v4420
        %v4422 = vpop.f32.mrb[0].mxu0
        %4423 = vmatprep.mubr.f32.mxu0 0.0
        %4424 = vmatmul.mubr.f32.gmra.mrb[0].mxu0 %v4305
        %v4425 = vpop.f32.mrb[0].mxu0
        %v4426 = vadd.f32 0.0, %v4425
        %v4427 = vpop.f32.mrb[0].mxu0
        %4428 = vmatprep.mubr.f32.mxu0 0.0
        %4429 = vmatmul.mubr.f32.gmra.mrb[0].mxu0 %v4308
        %v4430 = vpop.f32.mrb[0].mxu0
        %v4431 = vadd.f32 0.0, %v4430
        %v4432 = vpop.f32.mrb[0].mxu0
        %4433 = vmatprep.mubr.f32.mxu0 0.0
        %4434 = vmatmul.mubr.f32.gmra.mrb[0].mxu0 %v4311
        %v4435 = vpop.f32.mrb[0].mxu0
        %v4436 = vadd.f32 0.0, %v4435
        %v4437 = vpop.f32.mrb[0].mxu0
        %4438 = vmatprep.mubr.f32.mxu0 0.0
        %4439 = vmatmul.mubr.f32.gmra.mrb[0].mxu0 %v4314
        %v4440 = vpop.f32.mrb[0].mxu0
        %v4441 = vadd.f32 0.0, %v4440
        %v4442 = vpop.f32.mrb[0].mxu0
        %4443 = vmatprep.mubr.f32.mxu0 0.0
        %4444 = vmatmul.mubr.f32.gmra.mrb[0].mxu0 %v4317
        %v4445 = vpop.f32.mrb[0].mxu0
        %v4446 = vadd.f32 0.0, %v4445
        %v4447 = vpop.f32.mrb[0].mxu0
        %4448 = vmatprep.mubr.f32.mxu0 0.0
        %4449 = vmatmul.mubr.f32.gmra.mrb[0].mxu0 %v4320
        %v4450 = vpop.f32.mrb[0].mxu0
        %v4451 = vadd.f32 0.0, %v4450
        %v4452 = vpop.f32.mrb[0].mxu0
        %4453 = vmatprep.mubr.f32.mxu0 0.0
        %4454 = vmatmul.mubr.f32.gmra.mrb[0].mxu0 %v4323
        %v4455 = vpop.f32.mrb[0].mxu0
        %v4456 = vadd.f32 0.0, %v4455
        %v4457 = vpop.f32.mrb[0].mxu0
        %4458 = vmatprep.mubr.f32.mxu0 0.0
        %4459 = vmatmul.mubr.f32.gmra.mrb[0].mxu0 %v4326
        %v4460 = vpop.f32.mrb[0].mxu0
        %v4461 = vadd.f32 0.0, %v4460
        %v4462 = vpop.f32.mrb[0].mxu0
        %4463 = vmatprep.mubr.f32.mxu0 0.0
        %4464 = vmatmul.mubr.f32.gmra.mrb[0].mxu0 %v4329
        %v4465 = vpop.f32.mrb[0].mxu0
        %v4466 = vadd.f32 0.0, %v4465
        %v4467 = vpop.f32.mrb[0].mxu0
        %4468 = vmatprep.mubr.f32.mxu0 0.0
        %4469 = vmatmul.mubr.f32.gmra.mrb[0].mxu0 %v4332
        %v4470 = vpop.f32.mrb[0].mxu0
        %v4471 = vadd.f32 0.0, %v4470
        %v4472 = vpop.f32.mrb[0].mxu0
        %4473 = vmatprep.mubr.f32.mxu0 0.0
        %4474 = vmatmul.mubr.f32.gmra.mrb[0].mxu0 %v4335
        %v4475 = vpop.f32.mrb[0].mxu0
        %v4476 = vadd.f32 0.0, %v4475
        %v4477 = vpop.f32.mrb[0].mxu0
        %4478 = vdwg.mxu0
        %v4479 = vmul.f32 %v4416, 0.35355338
        %v4480 = vmul.f32 %v4421, 0.35355338
        %v4481 = vmul.f32 %v4426, 0.35355338
        %v4482 = vmul.f32 %v4431, 0.35355338
        %v4483 = vmul.f32 %v4436, 0.35355338
        %v4484 = vmul.f32 %v4441, 0.35355338
        %v4485 = vmul.f32 %v4446, 0.35355338
        %v4486 = vmul.f32 %v4451, 0.35355338
        %v4487 = vmul.f32 %v4456, 0.35355338
        %v4488 = vmul.f32 %v4461, 0.35355338
        %v4489 = vmul.f32 %v4466, 0.35355338
        %v4490 = vmul.f32 %v4471, 0.35355338
        %v4491 = vmul.f32 %v4476, 0.35355338
        %v4492 = vadd.f32 %v4479, %v3897
        %v4493 = vadd.f32 %v4480, %v3898
        %v4494 = vadd.f32 %v4481, %v3899
        %v4495 = vadd.f32 %v4482, %v3900
        %v4496 = vadd.f32 %v4483, %v3901
        %v4497 = vadd.f32 %v4484, %v3902
        %v4498 = vadd.f32 %v4485, %v3903
        %v4499 = vadd.f32 %v4486, %v3904
        %v4500 = vadd.f32 %v4487, %v3905
        %v4501 = vadd.f32 %v4488, %v3906
        %v4502 = vadd.f32 %v4489, %v3907
        %v4503 = vadd.f32 %v4490, %v3908
        %v4504 = vadd.f32 %v4491, %v3909
        %v4505 = vsel %vm2104, %v4492, -inf
        %4506 = vmax.xlane.f32.xlu0 %v4505
        %v4507 = vpop.xlane.xlu0 %4506
        %v4508 = vsel %vm2104, %v4493, -inf
        %4509 = vmax.xlane.f32.xlu0 %v4508
        %v4510 = vpop.xlane.xlu0 %4509
        %v4511 = vsel %vm2104, %v4494, -inf
        %4512 = vmax.xlane.f32.xlu0 %v4511
        %v4513 = vpop.xlane.xlu0 %4512
        %v4514 = vsel %vm2104, %v4495, -inf
        %4515 = vmax.xlane.f32.xlu0 %v4514
        %v4516 = vpop.xlane.xlu0 %4515
        %v4517 = vsel %vm2104, %v4496, -inf
        %4518 = vmax.xlane.f32.xlu0 %v4517
        %v4519 = vpop.xlane.xlu0 %4518
        %v4520 = vsel %vm2104, %v4497, -inf
        %4521 = vmax.xlane.f32.xlu0 %v4520
        %v4522 = vpop.xlane.xlu0 %4521
        %v4523 = vsel %vm2104, %v4498, -inf
        %4524 = vmax.xlane.f32.xlu0 %v4523
        %v4525 = vpop.xlane.xlu0 %4524
        %v4526 = vsel %vm2104, %v4499, -inf
        %4527 = vmax.xlane.f32.xlu0 %v4526
        %v4528 = vpop.xlane.xlu0 %4527
        %v4529 = vsel %vm2104, %v4500, -inf
        %4530 = vmax.xlane.f32.xlu0 %v4529
        %v4531 = vpop.xlane.xlu0 %4530
        %v4532 = vsel %vm2104, %v4501, -inf
        %4533 = vmax.xlane.f32.xlu0 %v4532
        %v4534 = vpop.xlane.xlu0 %4533
        %v4535 = vsel %vm2104, %v4502, -inf
        %4536 = vmax.xlane.f32.xlu0 %v4535
        %v4537 = vpop.xlane.xlu0 %4536
        %v4538 = vsel %vm2104, %v4503, -inf
        %4539 = vmax.xlane.f32.xlu0 %v4538
        %v4540 = vpop.xlane.xlu0 %4539
        %vm4541 = vcmask 240640
        %v4542 = vsel %vm4541, %v4504, -inf
        %4543 = vmax.xlane.f32.xlu0 %v4542
        %v4544 = vpop.xlane.xlu0 %4543
        %v4545 = vsub.f32 %v4492, %v4507
        %v4546 = vsub.f32 %v4493, %v4510
        %v4547 = vsub.f32 %v4494, %v4513
        %v4548 = vsub.f32 %v4495, %v4516
        %v4549 = vsub.f32 %v4496, %v4519
        %v4550 = vsub.f32 %v4497, %v4522
        %v4551 = vsub.f32 %v4498, %v4525
        %v4552 = vsub.f32 %v4499, %v4528
        %v4553 = vsub.f32 %v4500, %v4531
        %v4554 = vsub.f32 %v4501, %v4534
        %v4555 = vsub.f32 %v4502, %v4537
        %v4556 = vsub.f32 %v4503, %v4540
        %v4557 = vsub.f32 %v4504, %v4544
        %v4558 = vmul.f32 %v4545, 1.442695
        %v4559 = vpow.pop %v4558
        %v4560 = vmul.f32 %v4546, 1.442695
        %v4561 = vpow.pop %v4560
        %v4562 = vmul.f32 %v4547, 1.442695
        %v4563 = vpow.pop %v4562
        %v4564 = vmul.f32 %v4548, 1.442695
        %v4565 = vpow.pop %v4564
        %v4566 = vmul.f32 %v4549, 1.442695
        %v4567 = vpow.pop %v4566
        %v4568 = vmul.f32 %v4550, 1.442695
        %v4569 = vpow.pop %v4568
        %v4570 = vmul.f32 %v4551, 1.442695
        %v4571 = vpow.pop %v4570
        %v4572 = vmul.f32 %v4552, 1.442695
        %v4573 = vpow.pop %v4572
        %v4574 = vmul.f32 %v4553, 1.442695
        %v4575 = vpow.pop %v4574
        %v4576 = vmul.f32 %v4554, 1.442695
        %v4577 = vpow.pop %v4576
        %v4578 = vmul.f32 %v4555, 1.442695
        %v4579 = vpow.pop %v4578
        %v4580 = vmul.f32 %v4556, 1.442695
        %v4581 = vpow.pop %v4580
        %v4582 = vmul.f32 %v4557, 1.442695
        %v4583 = vpow.pop %v4582
        %v4584 = vsel %vm2104, %v4559, 0.0
        %4585 = vadd.xlane.f32.xlu0 %v4584
        %v4586 = vpop.xlane.xlu0 %4585
        %v4587 = vsel %vm2104, %v4561, 0.0
        %4588 = vadd.xlane.f32.xlu0 %v4587
        %v4589 = vpop.xlane.xlu0 %4588
        %v4590 = vsel %vm2104, %v4563, 0.0
        %4591 = vadd.xlane.f32.xlu0 %v4590
        %v4592 = vpop.xlane.xlu0 %4591
        %v4593 = vsel %vm2104, %v4565, 0.0
        %4594 = vadd.xlane.f32.xlu0 %v4593
        %v4595 = vpop.xlane.xlu0 %4594
        %v4596 = vsel %vm2104, %v4567, 0.0
        %4597 = vadd.xlane.f32.xlu0 %v4596
        %v4598 = vpop.xlane.xlu0 %4597
        %v4599 = vsel %vm2104, %v4569, 0.0
        %4600 = vadd.xlane.f32.xlu0 %v4599
        %v4601 = vpop.xlane.xlu0 %4600
        %v4602 = vsel %vm2104, %v4571, 0.0
        %4603 = vadd.xlane.f32.xlu0 %v4602
        %v4604 = vpop.xlane.xlu0 %4603
        %v4605 = vsel %vm2104, %v4573, 0.0
        %4606 = vadd.xlane.f32.xlu0 %v4605
        %v4607 = vpop.xlane.xlu0 %4606
        %v4608 = vsel %vm2104, %v4575, 0.0
        %4609 = vadd.xlane.f32.xlu0 %v4608
        %v4610 = vpop.xlane.xlu0 %4609
        %v4611 = vsel %vm2104, %v4577, 0.0
        %4612 = vadd.xlane.f32.xlu0 %v4611
        %v4613 = vpop.xlane.xlu0 %4612
        %v4614 = vsel %vm2104, %v4579, 0.0
        %4615 = vadd.xlane.f32.xlu0 %v4614
        %v4616 = vpop.xlane.xlu0 %4615
        %v4617 = vsel %vm2104, %v4581, 0.0
        %4618 = vadd.xlane.f32.xlu0 %v4617
        %v4619 = vpop.xlane.xlu0 %4618
        %v4620 = vsel %vm4541, %v4583, 0.0
        %4621 = vadd.xlane.f32.xlu0 %v4620
        %v4622 = vpop.xlane.xlu0 %4621
        %v4623 = vrcp.pop %v4586
        %v4624 = vrcp.pop %v4589
        %v4625 = vrcp.pop %v4592
        %v4626 = vrcp.pop %v4595
        %v4627 = vrcp.pop %v4598
        %v4628 = vrcp.pop %v4601
        %v4629 = vrcp.pop %v4604
        %v4630 = vrcp.pop %v4607
        %v4631 = vrcp.pop %v4610
        %v4632 = vrcp.pop %v4613
        %v4633 = vrcp.pop %v4616
        %v4634 = vrcp.pop %v4619
        %v4635 = vrcp.pop %v4622
        %v4636 = vmul.f32 %v4559, %v4623
        %v4637 = vmul.f32 %v4561, %v4624
        %v4638 = vmul.f32 %v4563, %v4625
        %v4639 = vmul.f32 %v4565, %v4626
        %v4640 = vmul.f32 %v4567, %v4627
        %v4641 = vmul.f32 %v4569, %v4628
        %v4642 = vmul.f32 %v4571, %v4629
        %v4643 = vmul.f32 %v4573, %v4630
        %v4644 = vmul.f32 %v4575, %v4631
        %v4645 = vmul.f32 %v4577, %v4632
        %v4646 = vmul.f32 %v4579, %v4633
        %v4647 = vmul.f32 %v4581, %v4634
        %v4648 = vmul.f32 %v4583, %v4635
        %v4650 = vsel %vm2104, %v4636, 0
        %v4653 = vsel %vm2104, %v4637, 0
        %v4656 = vsel %vm2104, %v4638, 0
        %v4659 = vsel %vm2104, %v4639, 0
        %v4662 = vsel %vm2104, %v4640, 0
        %v4665 = vsel %vm2104, %v4641, 0
        %v4668 = vsel %vm2104, %v4642, 0
        %v4671 = vsel %vm2104, %v4643, 0
        %v4674 = vsel %vm2104, %v4644, 0
        %v4677 = vsel %vm2104, %v4645, 0
        %v4680 = vsel %vm2104, %v4646, 0
        %v4683 = vsel %vm2104, %v4647, 0
        %v4686 = vsel %vm2104, %v4648, 0
        %v4689 = vsel %vm2162, %v4291, 0
        %4691 = vmatprep.subr.mxu0 0.0
        %4692 = vmatpush1.msra.mxu0 %v4276
        %4693 = vmatprep.subr.mxu0 0.0
        %4694 = vmatpush1.msra.mxu0 %v4281
        %4695 = vmatprep.subr.mxu0 0.0
        %4696 = vmatpush1.msra.mxu0 %v4286
        %4697 = vmatprep.subr.mxu0 0.0
        %4698 = vmatpush1.msra.mxu0 %v4689
        %4699 = vmatprep.subr.mxu0 0.0
        %4700 = vmatpush1.msra.mxu0 0.0
        %4701 = vmatprep.subr.mxu0 0.0
        %4702 = vmatpush1.msra.mxu0 0.0
        %4703 = vmatprep.subr.mxu0 0.0
        %4704 = vmatpush1.msra.mxu0 0.0
        %4705 = vmatprep.subr.mxu0 0.0
        %4706 = vmatpush1.msra.mxu0 0.0
        %4707 = vmatprep.subr.mxu0 0.0
        %4708 = vmatpush1.msra.mxu0 0.0
        %4709 = vmatprep.subr.mxu0 0.0
        %4710 = vmatpush1.msra.mxu0 0.0
        %4711 = vmatprep.subr.mxu0 0.0
        %4712 = vmatpush1.msra.mxu0 0.0
        %4713 = vmatprep.subr.mxu0 0.0
        %4714 = vmatpush1.msra.mxu0 0.0
        %4715 = vmatprep.subr.mxu0 0.0
        %4716 = vmatpush1.msra.mxu0 0.0
        %4717 = vmatprep.subr.mxu0 0.0
        %4718 = vmatpush1.msra.mxu0 0.0
        %4719 = vmatprep.subr.mxu0 0.0
        %4720 = vmatpush1.msra.mxu0 0.0
        %4721 = vmatprep.subr.mxu0 0.0
        %4722 = vmatpush1.msra.mxu0 0.0
        %4723 = vmatprep.subr.mxu0 0.0
        %4724 = vmatpush1.msra.mxu0 0.0
        %4725 = vmatprep.subr.mxu0 0.0
        %4726 = vmatpush1.msra.mxu0 0.0
        %4727 = vmatprep.subr.mxu0 0.0
        %4728 = vmatpush1.msra.mxu0 0.0
        %4729 = vmatprep.subr.mxu0 0.0
        %4730 = vmatpush1.msra.mxu0 0.0
        %4731 = vmatprep.subr.mxu0 0.0
        %4732 = vmatpush1.msra.mxu0 0.0
        %4733 = vmatprep.subr.mxu0 0.0
        %4734 = vmatpush1.msra.mxu0 0.0
        %4735 = vmatprep.subr.mxu0 0.0
        %4736 = vmatpush1.msra.mxu0 0.0
        %4737 = vmatprep.subr.mxu0 0.0
        %4738 = vmatpush1.msra.mxu0 0.0
        %4739 = vmatprep.subr.mxu0 0.0
        %4740 = vmatpush1.msra.mxu0 0.0
        %4741 = vmatprep.subr.mxu0 0.0
        %4742 = vmatpush1.msra.mxu0 0.0
        %4743 = vmatprep.subr.mxu0 0.0
        %4744 = vmatpush1.msra.mxu0 0.0
        %4745 = vmatprep.subr.mxu0 0.0
        %4746 = vmatpush1.msra.mxu0 0.0
        %4747 = vmatprep.subr.mxu0 0.0
        %4748 = vmatpush1.msra.mxu0 0.0
        %4749 = vmatprep.subr.mxu0 0.0
        %4750 = vmatpush1.msra.mxu0 0.0
        %4751 = vmatprep.subr.mxu0 0.0
        %4752 = vmatpush1.msra.mxu0 0.0
        %4753 = vmatprep.subr.mxu0 0.0
        %4754 = vmatpush1.msra.mxu0 0.0
        %4755 = vmatprep.mubr.f32.mxu0 0.0
        %4756 = vmatmul.mubr.f32.gmra.mrb[0].mxu0 %v4650
        %v4757 = vpop.f32.mrb[0].mxu0
        %v4758 = vadd.f32 0.0, %v4757
        %v4759 = vpop.f32.mrb[0].mxu0
        %4760 = vmatprep.mubr.f32.mxu0 0.0
        %4761 = vmatmul.mubr.f32.gmra.mrb[0].mxu0 %v4653
        %v4762 = vpop.f32.mrb[0].mxu0
        %v4763 = vadd.f32 0.0, %v4762
        %v4764 = vpop.f32.mrb[0].mxu0
        %4765 = vmatprep.mubr.f32.mxu0 0.0
        %4766 = vmatmul.mubr.f32.gmra.mrb[0].mxu0 %v4656
        %v4767 = vpop.f32.mrb[0].mxu0
        %v4768 = vadd.f32 0.0, %v4767
        %v4769 = vpop.f32.mrb[0].mxu0
        %4770 = vmatprep.mubr.f32.mxu0 0.0
        %4771 = vmatmul.mubr.f32.gmra.mrb[0].mxu0 %v4659
        %v4772 = vpop.f32.mrb[0].mxu0
        %v4773 = vadd.f32 0.0, %v4772
        %v4774 = vpop.f32.mrb[0].mxu0
        %4775 = vmatprep.mubr.f32.mxu0 0.0
        %4776 = vmatmul.mubr.f32.gmra.mrb[0].mxu0 %v4662
        %v4777 = vpop.f32.mrb[0].mxu0
        %v4778 = vadd.f32 0.0, %v4777
        %v4779 = vpop.f32.mrb[0].mxu0
        %4780 = vmatprep.mubr.f32.mxu0 0.0
        %4781 = vmatmul.mubr.f32.gmra.mrb[0].mxu0 %v4665
        %v4782 = vpop.f32.mrb[0].mxu0
        %v4783 = vadd.f32 0.0, %v4782
        %v4784 = vpop.f32.mrb[0].mxu0
        %4785 = vmatprep.mubr.f32.mxu0 0.0
        %4786 = vmatmul.mubr.f32.gmra.mrb[0].mxu0 %v4668
        %v4787 = vpop.f32.mrb[0].mxu0
        %v4788 = vadd.f32 0.0, %v4787
        %v4789 = vpop.f32.mrb[0].mxu0
        %4790 = vmatprep.mubr.f32.mxu0 0.0
        %4791 = vmatmul.mubr.f32.gmra.mrb[0].mxu0 %v4671
        %v4792 = vpop.f32.mrb[0].mxu0
        %v4793 = vadd.f32 0.0, %v4792
        %v4794 = vpop.f32.mrb[0].mxu0
        %4795 = vmatprep.mubr.f32.mxu0 0.0
        %4796 = vmatmul.mubr.f32.gmra.mrb[0].mxu0 %v4674
        %v4797 = vpop.f32.mrb[0].mxu0
        %v4798 = vadd.f32 0.0, %v4797
        %v4799 = vpop.f32.mrb[0].mxu0
        %4800 = vmatprep.mubr.f32.mxu0 0.0
        %4801 = vmatmul.mubr.f32.gmra.mrb[0].mxu0 %v4677
        %v4802 = vpop.f32.mrb[0].mxu0
        %v4803 = vadd.f32 0.0, %v4802
        %v4804 = vpop.f32.mrb[0].mxu0
        %4805 = vmatprep.mubr.f32.mxu0 0.0
        %4806 = vmatmul.mubr.f32.gmra.mrb[0].mxu0 %v4680
        %v4807 = vpop.f32.mrb[0].mxu0
        %v4808 = vadd.f32 0.0, %v4807
        %v4809 = vpop.f32.mrb[0].mxu0
        %4810 = vmatprep.mubr.f32.mxu0 0.0
        %4811 = vmatmul.mubr.f32.gmra.mrb[0].mxu0 %v4683
        %v4812 = vpop.f32.mrb[0].mxu0
        %v4813 = vadd.f32 0.0, %v4812
        %v4814 = vpop.f32.mrb[0].mxu0
        %4815 = vmatprep.mubr.f32.mxu0 0.0
        %4816 = vmatmul.mubr.f32.gmra.mrb[0].mxu0 %v4686
        %v4817 = vpop.f32.mrb[0].mxu0
        %v4818 = vadd.f32 0.0, %v4817
        %v4819 = vpop.f32.mrb[0].mxu0
        %4820 = vdwg.mxu0
        %4821 = vrot.lane.b32.xlu0 %v4027, 120
        %v4822 = vpop.permute.xlu0 %4821
        %4823 = vrot.lane.b32.xlu0 %v4032, 120
        %v4824 = vpop.permute.xlu0 %4823
        %4825 = vrot.lane.b32.xlu0 %v4037, 120
        %v4826 = vpop.permute.xlu0 %4825
        %4827 = vrot.lane.b32.xlu0 %v4042, 120
        %v4828 = vpop.permute.xlu0 %4827
        %4829 = vrot.lane.b32.xlu0 %v4047, 120
        %v4830 = vpop.permute.xlu0 %4829
        %4831 = vrot.lane.b32.xlu0 %v4052, 120
        %v4832 = vpop.permute.xlu0 %4831
        %4833 = vrot.lane.b32.xlu0 %v4057, 120
        %v4834 = vpop.permute.xlu0 %4833
        %4835 = vrot.lane.b32.xlu0 %v4062, 120
        %v4836 = vpop.permute.xlu0 %4835
        %4837 = vrot.lane.b32.xlu0 %v4067, 120
        %v4838 = vpop.permute.xlu0 %4837
        %4839 = vrot.lane.b32.xlu0 %v4072, 120
        %v4840 = vpop.permute.xlu0 %4839
        %4841 = vrot.lane.b32.xlu0 %v4077, 120
        %v4842 = vpop.permute.xlu0 %4841
        %4843 = vrot.lane.b32.xlu0 %v4082, 120
        %v4844 = vpop.permute.xlu0 %4843
        %4845 = vrot.lane.b32.xlu0 %v4087, 120
        %v4846 = vpop.permute.xlu0 %4845
        %4847 = vrot.lane.b32.xlu0 %v4180, 120
        %v4848 = vpop.permute.xlu0 %4847
        %4849 = vrot.lane.b32.xlu0 %v4185, 120
        %v4850 = vpop.permute.xlu0 %4849
        %4851 = vrot.lane.b32.xlu0 %v4190, 120
        %v4852 = vpop.permute.xlu0 %4851
        %4853 = vrot.lane.b32.xlu0 %v4195, 120
        %v4854 = vpop.permute.xlu0 %4853
        %v4855 = vsel %vm1986, %v4822, 0
        %v4857 = vsel %vm1986, %v4824, 0
        %v4859 = vsel %vm1986, %v4826, 0
        %v4861 = vsel %vm1986, %v4828, 0
        %v4863 = vsel %vm1986, %v4830, 0
        %v4865 = vsel %vm1986, %v4832, 0
        %v4867 = vsel %vm1986, %v4834, 0
        %v4869 = vsel %vm1986, %v4836, 0
        %v4871 = vsel %vm1986, %v4838, 0
        %v4873 = vsel %vm1986, %v4840, 0
        %v4875 = vsel %vm1986, %v4842, 0
        %v4877 = vsel %vm1986, %v4844, 0
        %v4879 = vsel %vm1986, %v4846, 0
        %v4881 = vsel %vm1986, %v4848, 0
        %v4883 = vsel %vm1986, %v4850, 0
        %v4885 = vsel %vm1986, %v4852, 0
        %v4887 = vsel %vm1986, %v4854, 0
        %4889 = vmatprep.subr.mxu0 0.0
        %4890 = vmatpush1.xpose.msra.mxu0 %v4881
        %4891 = vmatprep.subr.mxu0 0.0
        %4892 = vmatpush1.xpose.msra.mxu0 %v4883
        %4893 = vmatprep.subr.mxu0 0.0
        %4894 = vmatpush1.xpose.msra.mxu0 %v4885
        %4895 = vmatprep.subr.mxu0 0.0
        %4896 = vmatpush1.xpose.msra.mxu0 %v4887
        %4897 = vmatprep.subr.mxu0 0.0
        %4898 = vmatpush1.xpose.msra.mxu0 0.0
        %4899 = vmatprep.subr.mxu0 0.0
        %4900 = vmatpush1.xpose.msra.mxu0 0.0
        %4901 = vmatprep.subr.mxu0 0.0
        %4902 = vmatpush1.xpose.msra.mxu0 0.0
        %4903 = vmatprep.subr.mxu0 0.0
        %4904 = vmatpush1.xpose.msra.mxu0 0.0
        %4905 = vmatprep.subr.mxu0 0.0
        %4906 = vmatpush1.xpose.msra.mxu0 0.0
        %4907 = vmatprep.subr.mxu0 0.0
        %4908 = vmatpush1.xpose.msra.mxu0 0.0
        %4909 = vmatprep.subr.mxu0 0.0
        %4910 = vmatpush1.xpose.msra.mxu0 0.0
        %4911 = vmatprep.subr.mxu0 0.0
        %4912 = vmatpush1.xpose.msra.mxu0 0.0
        %4913 = vmatprep.subr.mxu0 0.0
        %4914 = vmatpush1.xpose.msra.mxu0 0.0
        %4915 = vmatprep.subr.mxu0 0.0
        %4916 = vmatpush1.xpose.msra.mxu0 0.0
        %4917 = vmatprep.subr.mxu0 0.0
        %4918 = vmatpush1.xpose.msra.mxu0 0.0
        %4919 = vmatprep.subr.mxu0 0.0
        %4920 = vmatpush1.xpose.msra.mxu0 0.0
        %4921 = vmatprep.subr.mxu0 0.0
        %4922 = vmatpush1.xpose.msra.mxu0 0.0
        %4923 = vmatprep.subr.mxu0 0.0
        %4924 = vmatpush1.xpose.msra.mxu0 0.0
        %4925 = vmatprep.subr.mxu0 0.0
        %4926 = vmatpush1.xpose.msra.mxu0 0.0
        %4927 = vmatprep.subr.mxu0 0.0
        %4928 = vmatpush1.xpose.msra.mxu0 0.0
        %4929 = vmatprep.subr.mxu0 0.0
        %4930 = vmatpush1.xpose.msra.mxu0 0.0
        %4931 = vmatprep.subr.mxu0 0.0
        %4932 = vmatpush1.xpose.msra.mxu0 0.0
        %4933 = vmatprep.subr.mxu0 0.0
        %4934 = vmatpush1.xpose.msra.mxu0 0.0
        %4935 = vmatprep.subr.mxu0 0.0
        %4936 = vmatpush1.xpose.msra.mxu0 0.0
        %4937 = vmatprep.subr.mxu0 0.0
        %4938 = vmatpush1.xpose.msra.mxu0 0.0
        %4939 = vmatprep.subr.mxu0 0.0
        %4940 = vmatpush1.xpose.msra.mxu0 0.0
        %4941 = vmatprep.subr.mxu0 0.0
        %4942 = vmatpush1.xpose.msra.mxu0 0.0
        %4943 = vmatprep.subr.mxu0 0.0
        %4944 = vmatpush1.xpose.msra.mxu0 0.0
        %4945 = vmatprep.subr.mxu0 0.0
        %4946 = vmatpush1.xpose.msra.mxu0 0.0
        %4947 = vmatprep.subr.mxu0 0.0
        %4948 = vmatpush1.xpose.msra.mxu0 0.0
        %4949 = vmatprep.subr.mxu0 0.0
        %4950 = vmatpush1.xpose.msra.mxu0 0.0
        %4951 = vmatprep.subr.mxu0 0.0
        %4952 = vmatpush1.xpose.msra.mxu0 0.0
        %4953 = vmatprep.mubr.f32.mxu0 0.0
        %4954 = vmatmul.mubr.f32.gmra.mrb[0].mxu0 %v4855
        %v4955 = vpop.f32.mrb[0].mxu0
        %v4956 = vadd.f32 0.0, %v4955
        %v4957 = vpop.f32.mrb[0].mxu0
        %4958 = vmatprep.mubr.f32.mxu0 0.0
        %4959 = vmatmul.mubr.f32.gmra.mrb[0].mxu0 %v4857
        %v4960 = vpop.f32.mrb[0].mxu0
        %v4961 = vadd.f32 0.0, %v4960
        %v4962 = vpop.f32.mrb[0].mxu0
        %4963 = vmatprep.mubr.f32.mxu0 0.0
        %4964 = vmatmul.mubr.f32.gmra.mrb[0].mxu0 %v4859
        %v4965 = vpop.f32.mrb[0].mxu0
        %v4966 = vadd.f32 0.0, %v4965
        %v4967 = vpop.f32.mrb[0].mxu0
        %4968 = vmatprep.mubr.f32.mxu0 0.0
        %4969 = vmatmul.mubr.f32.gmra.mrb[0].mxu0 %v4861
        %v4970 = vpop.f32.mrb[0].mxu0
        %v4971 = vadd.f32 0.0, %v4970
        %v4972 = vpop.f32.mrb[0].mxu0
        %4973 = vmatprep.mubr.f32.mxu0 0.0
        %4974 = vmatmul.mubr.f32.gmra.mrb[0].mxu0 %v4863
        %v4975 = vpop.f32.mrb[0].mxu0
        %v4976 = vadd.f32 0.0, %v4975
        %v4977 = vpop.f32.mrb[0].mxu0
        %4978 = vmatprep.mubr.f32.mxu0 0.0
        %4979 = vmatmul.mubr.f32.gmra.mrb[0].mxu0 %v4865
        %v4980 = vpop.f32.mrb[0].mxu0
        %v4981 = vadd.f32 0.0, %v4980
        %v4982 = vpop.f32.mrb[0].mxu0
        %4983 = vmatprep.mubr.f32.mxu0 0.0
        %4984 = vmatmul.mubr.f32.gmra.mrb[0].mxu0 %v4867
        %v4985 = vpop.f32.mrb[0].mxu0
        %v4986 = vadd.f32 0.0, %v4985
        %v4987 = vpop.f32.mrb[0].mxu0
        %4988 = vmatprep.mubr.f32.mxu0 0.0
        %4989 = vmatmul.mubr.f32.gmra.mrb[0].mxu0 %v4869
        %v4990 = vpop.f32.mrb[0].mxu0
        %v4991 = vadd.f32 0.0, %v4990
        %v4992 = vpop.f32.mrb[0].mxu0
        %4993 = vmatprep.mubr.f32.mxu0 0.0
        %4994 = vmatmul.mubr.f32.gmra.mrb[0].mxu0 %v4871
        %v4995 = vpop.f32.mrb[0].mxu0
        %v4996 = vadd.f32 0.0, %v4995
        %v4997 = vpop.f32.mrb[0].mxu0
        %4998 = vmatprep.mubr.f32.mxu0 0.0
        %4999 = vmatmul.mubr.f32.gmra.mrb[0].mxu0 %v4873
        %v5000 = vpop.f32.mrb[0].mxu0
        %v5001 = vadd.f32 0.0, %v5000
        %v5002 = vpop.f32.mrb[0].mxu0
        %5003 = vmatprep.mubr.f32.mxu0 0.0
        %5004 = vmatmul.mubr.f32.gmra.mrb[0].mxu0 %v4875
        %v5005 = vpop.f32.mrb[0].mxu0
        %v5006 = vadd.f32 0.0, %v5005
        %v5007 = vpop.f32.mrb[0].mxu0
        %5008 = vmatprep.mubr.f32.mxu0 0.0
        %5009 = vmatmul.mubr.f32.gmra.mrb[0].mxu0 %v4877
        %v5010 = vpop.f32.mrb[0].mxu0
        %v5011 = vadd.f32 0.0, %v5010
        %v5012 = vpop.f32.mrb[0].mxu0
        %5013 = vmatprep.mubr.f32.mxu0 0.0
        %5014 = vmatmul.mubr.f32.gmra.mrb[0].mxu0 %v4879
        %v5015 = vpop.f32.mrb[0].mxu0
        %v5016 = vadd.f32 0.0, %v5015
        %v5017 = vpop.f32.mrb[0].mxu0
        %5018 = vdwg.mxu0
        %v5019 = vmul.f32 %v4956, 0.35355338
        %v5020 = vmul.f32 %v4961, 0.35355338
        %v5021 = vmul.f32 %v4966, 0.35355338
        %v5022 = vmul.f32 %v4971, 0.35355338
        %v5023 = vmul.f32 %v4976, 0.35355338
        %v5024 = vmul.f32 %v4981, 0.35355338
        %v5025 = vmul.f32 %v4986, 0.35355338
        %v5026 = vmul.f32 %v4991, 0.35355338
        %v5027 = vmul.f32 %v4996, 0.35355338
        %v5028 = vmul.f32 %v5001, 0.35355338
        %v5029 = vmul.f32 %v5006, 0.35355338
        %v5030 = vmul.f32 %v5011, 0.35355338
        %v5031 = vmul.f32 %v5016, 0.35355338
        %v5032 = vadd.f32 %v5019, %v3897
        %v5033 = vadd.f32 %v5020, %v3898
        %v5034 = vadd.f32 %v5021, %v3899
        %v5035 = vadd.f32 %v5022, %v3900
        %v5036 = vadd.f32 %v5023, %v3901
        %v5037 = vadd.f32 %v5024, %v3902
        %v5038 = vadd.f32 %v5025, %v3903
        %v5039 = vadd.f32 %v5026, %v3904
        %v5040 = vadd.f32 %v5027, %v3905
        %v5041 = vadd.f32 %v5028, %v3906
        %v5042 = vadd.f32 %v5029, %v3907
        %v5043 = vadd.f32 %v5030, %v3908
        %v5044 = vadd.f32 %v5031, %v3909
        %v5045 = vsel %vm2104, %v5032, -inf
        %5046 = vmax.xlane.f32.xlu0 %v5045
        %v5047 = vpop.xlane.xlu0 %5046
        %v5048 = vsel %vm2104, %v5033, -inf
        %5049 = vmax.xlane.f32.xlu0 %v5048
        %v5050 = vpop.xlane.xlu0 %5049
        %v5051 = vsel %vm2104, %v5034, -inf
        %5052 = vmax.xlane.f32.xlu0 %v5051
        %v5053 = vpop.xlane.xlu0 %5052
        %v5054 = vsel %vm2104, %v5035, -inf
        %5055 = vmax.xlane.f32.xlu0 %v5054
        %v5056 = vpop.xlane.xlu0 %5055
        %v5057 = vsel %vm2104, %v5036, -inf
        %5058 = vmax.xlane.f32.xlu0 %v5057
        %v5059 = vpop.xlane.xlu0 %5058
        %v5060 = vsel %vm2104, %v5037, -inf
        %5061 = vmax.xlane.f32.xlu0 %v5060
        %v5062 = vpop.xlane.xlu0 %5061
        %v5063 = vsel %vm2104, %v5038, -inf
        %5064 = vmax.xlane.f32.xlu0 %v5063
        %v5065 = vpop.xlane.xlu0 %5064
        %v5066 = vsel %vm2104, %v5039, -inf
        %5067 = vmax.xlane.f32.xlu0 %v5066
        %v5068 = vpop.xlane.xlu0 %5067
        %v5069 = vsel %vm2104, %v5040, -inf
        %5070 = vmax.xlane.f32.xlu0 %v5069
        %v5071 = vpop.xlane.xlu0 %5070
        %v5072 = vsel %vm2104, %v5041, -inf
        %5073 = vmax.xlane.f32.xlu0 %v5072
        %v5074 = vpop.xlane.xlu0 %5073
        %v5075 = vsel %vm2104, %v5042, -inf
        %5076 = vmax.xlane.f32.xlu0 %v5075
        %v5077 = vpop.xlane.xlu0 %5076
        %v5078 = vsel %vm2104, %v5043, -inf
        %5079 = vmax.xlane.f32.xlu0 %v5078
        %v5080 = vpop.xlane.xlu0 %5079
        %v5081 = vsel %vm4541, %v5044, -inf
        %5082 = vmax.xlane.f32.xlu0 %v5081
        %v5083 = vpop.xlane.xlu0 %5082
        %v5084 = vsub.f32 %v5032, %v5047
        %v5085 = vsub.f32 %v5033, %v5050
        %v5086 = vsub.f32 %v5034, %v5053
        %v5087 = vsub.f32 %v5035, %v5056
        %v5088 = vsub.f32 %v5036, %v5059
        %v5089 = vsub.f32 %v5037, %v5062
        %v5090 = vsub.f32 %v5038, %v5065
        %v5091 = vsub.f32 %v5039, %v5068
        %v5092 = vsub.f32 %v5040, %v5071
        %v5093 = vsub.f32 %v5041, %v5074
        %v5094 = vsub.f32 %v5042, %v5077
        %v5095 = vsub.f32 %v5043, %v5080
        %v5096 = vsub.f32 %v5044, %v5083
        %v5097 = vmul.f32 %v5084, 1.442695
        %v5098 = vpow.pop %v5097
        %v5099 = vmul.f32 %v5085, 1.442695
        %v5100 = vpow.pop %v5099
        %v5101 = vmul.f32 %v5086, 1.442695
        %v5102 = vpow.pop %v5101
        %v5103 = vmul.f32 %v5087, 1.442695
        %v5104 = vpow.pop %v5103
        %v5105 = vmul.f32 %v5088, 1.442695
        %v5106 = vpow.pop %v5105
        %v5107 = vmul.f32 %v5089, 1.442695
        %v5108 = vpow.pop %v5107
        %v5109 = vmul.f32 %v5090, 1.442695
        %v5110 = vpow.pop %v5109
        %v5111 = vmul.f32 %v5091, 1.442695
        %v5112 = vpow.pop %v5111
        %v5113 = vmul.f32 %v5092, 1.442695
        %v5114 = vpow.pop %v5113
        %v5115 = vmul.f32 %v5093, 1.442695
        %v5116 = vpow.pop %v5115
        %v5117 = vmul.f32 %v5094, 1.442695
        %v5118 = vpow.pop %v5117
        %v5119 = vmul.f32 %v5095, 1.442695
        %v5120 = vpow.pop %v5119
        %v5121 = vmul.f32 %v5096, 1.442695
        %v5122 = vpow.pop %v5121
        %v5123 = vsel %vm2104, %v5098, 0.0
        %5124 = vadd.xlane.f32.xlu0 %v5123
        %v5125 = vpop.xlane.xlu0 %5124
        %v5126 = vsel %vm2104, %v5100, 0.0
        %5127 = vadd.xlane.f32.xlu0 %v5126
        %v5128 = vpop.xlane.xlu0 %5127
        %v5129 = vsel %vm2104, %v5102, 0.0
        %5130 = vadd.xlane.f32.xlu0 %v5129
        %v5131 = vpop.xlane.xlu0 %5130
        %v5132 = vsel %vm2104, %v5104, 0.0
        %5133 = vadd.xlane.f32.xlu0 %v5132
        %v5134 = vpop.xlane.xlu0 %5133
        %v5135 = vsel %vm2104, %v5106, 0.0
        %5136 = vadd.xlane.f32.xlu0 %v5135
        %v5137 = vpop.xlane.xlu0 %5136
        %v5138 = vsel %vm2104, %v5108, 0.0
        %5139 = vadd.xlane.f32.xlu0 %v5138
        %v5140 = vpop.xlane.xlu0 %5139
        %v5141 = vsel %vm2104, %v5110, 0.0
        %5142 = vadd.xlane.f32.xlu0 %v5141
        %v5143 = vpop.xlane.xlu0 %5142
        %v5144 = vsel %vm2104, %v5112, 0.0
        %5145 = vadd.xlane.f32.xlu0 %v5144
        %v5146 = vpop.xlane.xlu0 %5145
        %v5147 = vsel %vm2104, %v5114, 0.0
        %5148 = vadd.xlane.f32.xlu0 %v5147
        %v5149 = vpop.xlane.xlu0 %5148
        %v5150 = vsel %vm2104, %v5116, 0.0
        %5151 = vadd.xlane.f32.xlu0 %v5150
        %v5152 = vpop.xlane.xlu0 %5151
        %v5153 = vsel %vm2104, %v5118, 0.0
        %5154 = vadd.xlane.f32.xlu0 %v5153
        %v5155 = vpop.xlane.xlu0 %5154
        %v5156 = vsel %vm2104, %v5120, 0.0
        %5157 = vadd.xlane.f32.xlu0 %v5156
        %v5158 = vpop.xlane.xlu0 %5157
        %v5159 = vsel %vm4541, %v5122, 0.0
        %5160 = vadd.xlane.f32.xlu0 %v5159
        %v5161 = vpop.xlane.xlu0 %5160
        %v5162 = vrcp.pop %v5125
        %v5163 = vrcp.pop %v5128
        %v5164 = vrcp.pop %v5131
        %v5165 = vrcp.pop %v5134
        %v5166 = vrcp.pop %v5137
        %v5167 = vrcp.pop %v5140
        %v5168 = vrcp.pop %v5143
        %v5169 = vrcp.pop %v5146
        %v5170 = vrcp.pop %v5149
        %v5171 = vrcp.pop %v5152
        %v5172 = vrcp.pop %v5155
        %v5173 = vrcp.pop %v5158
        %v5174 = vrcp.pop %v5161
        %v5175 = vmul.f32 %v5098, %v5162
        %v5176 = vmul.f32 %v5100, %v5163
        %v5177 = vmul.f32 %v5102, %v5164
        %v5178 = vmul.f32 %v5104, %v5165
        %v5179 = vmul.f32 %v5106, %v5166
        %v5180 = vmul.f32 %v5108, %v5167
        %v5181 = vmul.f32 %v5110, %v5168
        %v5182 = vmul.f32 %v5112, %v5169
        %v5183 = vmul.f32 %v5114, %v5170
        %v5184 = vmul.f32 %v5116, %v5171
        %v5185 = vmul.f32 %v5118, %v5172
        %v5186 = vmul.f32 %v5120, %v5173
        %v5187 = vmul.f32 %v5122, %v5174
        %5191 = vrot.lane.b32.xlu0 %v4276, 120
        %v5192 = vpop.permute.xlu0 %5191
        %5193 = vrot.lane.b32.xlu0 %v4281, 120
        %v5194 = vpop.permute.xlu0 %5193
        %5195 = vrot.lane.b32.xlu0 %v4286, 120
        %v5196 = vpop.permute.xlu0 %5195
        %5197 = vrot.lane.b32.xlu0 %v4291, 120
        %v5198 = vpop.permute.xlu0 %5197
        %v5203 = vsel %vm2104, %v5175, 0
        %v5206 = vsel %vm2104, %v5176, 0
        %v5209 = vsel %vm2104, %v5177, 0
        %v5212 = vsel %vm2104, %v5178, 0
        %v5215 = vsel %vm2104, %v5179, 0
        %v5218 = vsel %vm2104, %v5180, 0
        %v5221 = vsel %vm2104, %v5181, 0
        %v5224 = vsel %vm2104, %v5182, 0
        %v5227 = vsel %vm2104, %v5183, 0
        %v5230 = vsel %vm2104, %v5184, 0
        %v5233 = vsel %vm2104, %v5185, 0
        %v5236 = vsel %vm2104, %v5186, 0
        %v5239 = vsel %vm2104, %v5187, 0
        %v5241 = vsel %vm2162, %v5198, 0
        %5243 = vmatprep.subr.mxu0 0.0
        %5244 = vmatpush1.msra.mxu0 %v5192
        %5245 = vmatprep.subr.mxu0 0.0
        %5246 = vmatpush1.msra.mxu0 %v5194
        %5247 = vmatprep.subr.mxu0 0.0
        %5248 = vmatpush1.msra.mxu0 %v5196
        %5249 = vmatprep.subr.mxu0 0.0
        %5250 = vmatpush1.msra.mxu0 %v5241
        %5251 = vmatprep.subr.mxu0 0.0
        %5252 = vmatpush1.msra.mxu0 0.0
        %5253 = vmatprep.subr.mxu0 0.0
        %5254 = vmatpush1.msra.mxu0 0.0
        %5255 = vmatprep.subr.mxu0 0.0
        %5256 = vmatpush1.msra.mxu0 0.0
        %5257 = vmatprep.subr.mxu0 0.0
        %5258 = vmatpush1.msra.mxu0 0.0
        %5259 = vmatprep.subr.mxu0 0.0
        %5260 = vmatpush1.msra.mxu0 0.0
        %5261 = vmatprep.subr.mxu0 0.0
        %5262 = vmatpush1.msra.mxu0 0.0
        %5263 = vmatprep.subr.mxu0 0.0
        %5264 = vmatpush1.msra.mxu0 0.0
        %5265 = vmatprep.subr.mxu0 0.0
        %5266 = vmatpush1.msra.mxu0 0.0
        %5267 = vmatprep.subr.mxu0 0.0
        %5268 = vmatpush1.msra.mxu0 0.0
        %5269 = vmatprep.subr.mxu0 0.0
        %5270 = vmatpush1.msra.mxu0 0.0
        %5271 = vmatprep.subr.mxu0 0.0
        %5272 = vmatpush1.msra.mxu0 0.0
        %5273 = vmatprep.subr.mxu0 0.0
        %5274 = vmatpush1.msra.mxu0 0.0
        %5275 = vmatprep.subr.mxu0 0.0
        %5276 = vmatpush1.msra.mxu0 0.0
        %5277 = vmatprep.subr.mxu0 0.0
        %5278 = vmatpush1.msra.mxu0 0.0
        %5279 = vmatprep.subr.mxu0 0.0
        %5280 = vmatpush1.msra.mxu0 0.0
        %5281 = vmatprep.subr.mxu0 0.0
        %5282 = vmatpush1.msra.mxu0 0.0
        %5283 = vmatprep.subr.mxu0 0.0
        %5284 = vmatpush1.msra.mxu0 0.0
        %5285 = vmatprep.subr.mxu0 0.0
        %5286 = vmatpush1.msra.mxu0 0.0
        %5287 = vmatprep.subr.mxu0 0.0
        %5288 = vmatpush1.msra.mxu0 0.0
        %5289 = vmatprep.subr.mxu0 0.0
        %5290 = vmatpush1.msra.mxu0 0.0
        %5291 = vmatprep.subr.mxu0 0.0
        %5292 = vmatpush1.msra.mxu0 0.0
        %5293 = vmatprep.subr.mxu0 0.0
        %5294 = vmatpush1.msra.mxu0 0.0
        %5295 = vmatprep.subr.mxu0 0.0
        %5296 = vmatpush1.msra.mxu0 0.0
        %5297 = vmatprep.subr.mxu0 0.0
        %5298 = vmatpush1.msra.mxu0 0.0
        %5299 = vmatprep.subr.mxu0 0.0
        %5300 = vmatpush1.msra.mxu0 0.0
        %5301 = vmatprep.subr.mxu0 0.0
        %5302 = vmatpush1.msra.mxu0 0.0
        %5303 = vmatprep.subr.mxu0 0.0
        %5304 = vmatpush1.msra.mxu0 0.0
        %5305 = vmatprep.subr.mxu0 0.0
        %5306 = vmatpush1.msra.mxu0 0.0
        %5307 = vmatprep.mubr.f32.mxu0 0.0
        %5308 = vmatmul.mubr.f32.gmra.mrb[0].mxu0 %v5203
        %v5309 = vpop.f32.mrb[0].mxu0
        %v5310 = vadd.f32 0.0, %v5309
        %v5311 = vpop.f32.mrb[0].mxu0
        %5312 = vmatprep.mubr.f32.mxu0 0.0
        %5313 = vmatmul.mubr.f32.gmra.mrb[0].mxu0 %v5206
        %v5314 = vpop.f32.mrb[0].mxu0
        %v5315 = vadd.f32 0.0, %v5314
        %v5316 = vpop.f32.mrb[0].mxu0
        %5317 = vmatprep.mubr.f32.mxu0 0.0
        %5318 = vmatmul.mubr.f32.gmra.mrb[0].mxu0 %v5209
        %v5319 = vpop.f32.mrb[0].mxu0
        %v5320 = vadd.f32 0.0, %v5319
        %v5321 = vpop.f32.mrb[0].mxu0
        %5322 = vmatprep.mubr.f32.mxu0 0.0
        %5323 = vmatmul.mubr.f32.gmra.mrb[0].mxu0 %v5212
        %v5324 = vpop.f32.mrb[0].mxu0
        %v5325 = vadd.f32 0.0, %v5324
        %v5326 = vpop.f32.mrb[0].mxu0
        %5327 = vmatprep.mubr.f32.mxu0 0.0
        %5328 = vmatmul.mubr.f32.gmra.mrb[0].mxu0 %v5215
        %v5329 = vpop.f32.mrb[0].mxu0
        %v5330 = vadd.f32 0.0, %v5329
        %v5331 = vpop.f32.mrb[0].mxu0
        %5332 = vmatprep.mubr.f32.mxu0 0.0
        %5333 = vmatmul.mubr.f32.gmra.mrb[0].mxu0 %v5218
        %v5334 = vpop.f32.mrb[0].mxu0
        %v5335 = vadd.f32 0.0, %v5334
        %v5336 = vpop.f32.mrb[0].mxu0
        %5337 = vmatprep.mubr.f32.mxu0 0.0
        %5338 = vmatmul.mubr.f32.gmra.mrb[0].mxu0 %v5221
        %v5339 = vpop.f32.mrb[0].mxu0
        %v5340 = vadd.f32 0.0, %v5339
        %v5341 = vpop.f32.mrb[0].mxu0
        %5342 = vmatprep.mubr.f32.mxu0 0.0
        %5343 = vmatmul.mubr.f32.gmra.mrb[0].mxu0 %v5224
        %v5344 = vpop.f32.mrb[0].mxu0
        %v5345 = vadd.f32 0.0, %v5344
        %v5346 = vpop.f32.mrb[0].mxu0
        %5347 = vmatprep.mubr.f32.mxu0 0.0
        %5348 = vmatmul.mubr.f32.gmra.mrb[0].mxu0 %v5227
        %v5349 = vpop.f32.mrb[0].mxu0
        %v5350 = vadd.f32 0.0, %v5349
        %v5351 = vpop.f32.mrb[0].mxu0
        %5352 = vmatprep.mubr.f32.mxu0 0.0
        %5353 = vmatmul.mubr.f32.gmra.mrb[0].mxu0 %v5230
        %v5354 = vpop.f32.mrb[0].mxu0
        %v5355 = vadd.f32 0.0, %v5354
        %v5356 = vpop.f32.mrb[0].mxu0
        %5357 = vmatprep.mubr.f32.mxu0 0.0
        %5358 = vmatmul.mubr.f32.gmra.mrb[0].mxu0 %v5233
        %v5359 = vpop.f32.mrb[0].mxu0
        %v5360 = vadd.f32 0.0, %v5359
        %v5361 = vpop.f32.mrb[0].mxu0
        %5362 = vmatprep.mubr.f32.mxu0 0.0
        %5363 = vmatmul.mubr.f32.gmra.mrb[0].mxu0 %v5236
        %v5364 = vpop.f32.mrb[0].mxu0
        %v5365 = vadd.f32 0.0, %v5364
        %v5366 = vpop.f32.mrb[0].mxu0
        %5367 = vmatprep.mubr.f32.mxu0 0.0
        %5368 = vmatmul.mubr.f32.gmra.mrb[0].mxu0 %v5239
        %v5369 = vpop.f32.mrb[0].mxu0
        %v5370 = vadd.f32 0.0, %v5369
        %v5371 = vpop.f32.mrb[0].mxu0
        %5372 = vdwg.mxu0
        %v5374 = vsel %vm1986, %v5310, 0
        %v5377 = vsel %vm1986, %v5315, 0
        %v5380 = vsel %vm1986, %v5320, 0
        %v5383 = vsel %vm1986, %v5325, 0
        %v5386 = vsel %vm1986, %v5330, 0
        %v5389 = vsel %vm1986, %v5335, 0
        %v5392 = vsel %vm1986, %v5340, 0
        %v5395 = vsel %vm1986, %v5345, 0
        %v5398 = vsel %vm1986, %v5350, 0
        %v5401 = vsel %vm1986, %v5355, 0
        %v5404 = vsel %vm1986, %v5360, 0
        %v5407 = vsel %vm1986, %v5365, 0
        %v5410 = vsel %vm1986, %v5370, 0
        %5412 = vmatprep.subr.mxu0 0.0
        %5413 = vmatpush1.msra.mxu0 %v4295
        %5414 = vmatprep.subr.mxu0 0.0
        %5415 = vmatpush1.msra.mxu0 0.0
        %5416 = vmatprep.subr.mxu0 0.0
        %5417 = vmatpush1.msra.mxu0 0.0
        %5418 = vmatprep.subr.mxu0 0.0
        %5419 = vmatpush1.msra.mxu0 0.0
        %5420 = vmatprep.subr.mxu0 0.0
        %5421 = vmatpush1.msra.mxu0 0.0
        %5422 = vmatprep.subr.mxu0 0.0
        %5423 = vmatpush1.msra.mxu0 0.0
        %5424 = vmatprep.subr.mxu0 0.0
        %5425 = vmatpush1.msra.mxu0 0.0
        %5426 = vmatprep.subr.mxu0 0.0
        %5427 = vmatpush1.msra.mxu0 0.0
        %5428 = vmatprep.subr.mxu0 0.0
        %5429 = vmatpush1.msra.mxu0 0.0
        %5430 = vmatprep.subr.mxu0 0.0
        %5431 = vmatpush1.msra.mxu0 0.0
        %5432 = vmatprep.subr.mxu0 0.0
        %5433 = vmatpush1.msra.mxu0 0.0
        %5434 = vmatprep.subr.mxu0 0.0
        %5435 = vmatpush1.msra.mxu0 0.0
        %5436 = vmatprep.subr.mxu0 0.0
        %5437 = vmatpush1.msra.mxu0 0.0
        %5438 = vmatprep.subr.mxu0 0.0
        %5439 = vmatpush1.msra.mxu0 0.0
        %5440 = vmatprep.subr.mxu0 0.0
        %5441 = vmatpush1.msra.mxu0 0.0
        %5442 = vmatprep.subr.mxu0 0.0
        %5443 = vmatpush1.msra.mxu0 0.0
        %5444 = vmatprep.subr.mxu0 0.0
        %5445 = vmatpush1.msra.mxu0 0.0
        %5446 = vmatprep.subr.mxu0 0.0
        %5447 = vmatpush1.msra.mxu0 0.0
        %5448 = vmatprep.subr.mxu0 0.0
        %5449 = vmatpush1.msra.mxu0 0.0
        %5450 = vmatprep.subr.mxu0 0.0
        %5451 = vmatpush1.msra.mxu0 0.0
        %5452 = vmatprep.subr.mxu0 0.0
        %5453 = vmatpush1.msra.mxu0 0.0
        %5454 = vmatprep.subr.mxu0 0.0
        %5455 = vmatpush1.msra.mxu0 0.0
        %5456 = vmatprep.subr.mxu0 0.0
        %5457 = vmatpush1.msra.mxu0 0.0
        %5458 = vmatprep.subr.mxu0 0.0
        %5459 = vmatpush1.msra.mxu0 0.0
        %5460 = vmatprep.subr.mxu0 0.0
        %5461 = vmatpush1.msra.mxu0 0.0
        %5462 = vmatprep.subr.mxu0 0.0
        %5463 = vmatpush1.msra.mxu0 0.0
        %5464 = vmatprep.subr.mxu0 0.0
        %5465 = vmatpush1.msra.mxu0 0.0
        %5466 = vmatprep.subr.mxu0 0.0
        %5467 = vmatpush1.msra.mxu0 0.0
        %5468 = vmatprep.subr.mxu0 0.0
        %5469 = vmatpush1.msra.mxu0 0.0
        %5470 = vmatprep.subr.mxu0 0.0
        %5471 = vmatpush1.msra.mxu0 0.0
        %5472 = vmatprep.subr.mxu0 0.0
        %5473 = vmatpush1.msra.mxu0 0.0
        %5474 = vmatprep.subr.mxu0 0.0
        %5475 = vmatpush1.msra.mxu0 0.0
        %5476 = vmatprep.mubr.f32.mxu0 0.0
        %5477 = vmatmul.mubr.f32.gmra.mrb[0].mxu0 %v5374
        %v5478 = vpop.f32.mrb[0].mxu0
        %v5479 = vadd.f32 0.0, %v5478
        %v5480 = vpop.f32.mrb[0].mxu0
        %5481 = vmatprep.mubr.f32.mxu0 0.0
        %5482 = vmatmul.mubr.f32.gmra.mrb[0].mxu0 %v5377
        %v5483 = vpop.f32.mrb[0].mxu0
        %v5484 = vadd.f32 0.0, %v5483
        %v5485 = vpop.f32.mrb[0].mxu0
        %5486 = vmatprep.mubr.f32.mxu0 0.0
        %5487 = vmatmul.mubr.f32.gmra.mrb[0].mxu0 %v5380
        %v5488 = vpop.f32.mrb[0].mxu0
        %v5489 = vadd.f32 0.0, %v5488
        %v5490 = vpop.f32.mrb[0].mxu0
        %5491 = vmatprep.mubr.f32.mxu0 0.0
        %5492 = vmatmul.mubr.f32.gmra.mrb[0].mxu0 %v5383
        %v5493 = vpop.f32.mrb[0].mxu0
        %v5494 = vadd.f32 0.0, %v5493
        %v5495 = vpop.f32.mrb[0].mxu0
        %5496 = vmatprep.mubr.f32.mxu0 0.0
        %5497 = vmatmul.mubr.f32.gmra.mrb[0].mxu0 %v5386
        %v5498 = vpop.f32.mrb[0].mxu0
        %v5499 = vadd.f32 0.0, %v5498
        %v5500 = vpop.f32.mrb[0].mxu0
        %5501 = vmatprep.mubr.f32.mxu0 0.0
        %5502 = vmatmul.mubr.f32.gmra.mrb[0].mxu0 %v5389
        %v5503 = vpop.f32.mrb[0].mxu0
        %v5504 = vadd.f32 0.0, %v5503
        %v5505 = vpop.f32.mrb[0].mxu0
        %5506 = vmatprep.mubr.f32.mxu0 0.0
        %5507 = vmatmul.mubr.f32.gmra.mrb[0].mxu0 %v5392
        %v5508 = vpop.f32.mrb[0].mxu0
        %v5509 = vadd.f32 0.0, %v5508
        %v5510 = vpop.f32.mrb[0].mxu0
        %5511 = vmatprep.mubr.f32.mxu0 0.0
        %5512 = vmatmul.mubr.f32.gmra.mrb[0].mxu0 %v5395
        %v5513 = vpop.f32.mrb[0].mxu0
        %v5514 = vadd.f32 0.0, %v5513
        %v5515 = vpop.f32.mrb[0].mxu0
        %5516 = vmatprep.mubr.f32.mxu0 0.0
        %5517 = vmatmul.mubr.f32.gmra.mrb[0].mxu0 %v5398
        %v5518 = vpop.f32.mrb[0].mxu0
        %v5519 = vadd.f32 0.0, %v5518
        %v5520 = vpop.f32.mrb[0].mxu0
        %5521 = vmatprep.mubr.f32.mxu0 0.0
        %5522 = vmatmul.mubr.f32.gmra.mrb[0].mxu0 %v5401
        %v5523 = vpop.f32.mrb[0].mxu0
        %v5524 = vadd.f32 0.0, %v5523
        %v5525 = vpop.f32.mrb[0].mxu0
        %5526 = vmatprep.mubr.f32.mxu0 0.0
        %5527 = vmatmul.mubr.f32.gmra.mrb[0].mxu0 %v5404
        %v5528 = vpop.f32.mrb[0].mxu0
        %v5529 = vadd.f32 0.0, %v5528
        %v5530 = vpop.f32.mrb[0].mxu0
        %5531 = vmatprep.mubr.f32.mxu0 0.0
        %5532 = vmatmul.mubr.f32.gmra.mrb[0].mxu0 %v5407
        %v5533 = vpop.f32.mrb[0].mxu0
        %v5534 = vadd.f32 0.0, %v5533
        %v5535 = vpop.f32.mrb[0].mxu0
        %5536 = vmatprep.mubr.f32.mxu0 0.0
        %5537 = vmatmul.mubr.f32.gmra.mrb[0].mxu0 %v5410
        %v5538 = vpop.f32.mrb[0].mxu0
        %v5539 = vadd.f32 0.0, %v5538
        %v5540 = vpop.f32.mrb[0].mxu0
        %5541 = vdwg.mxu0
        %v5543 = vsel %vm1986, %v4758, 0
        %v5546 = vsel %vm1986, %v4763, 0
        %v5549 = vsel %vm1986, %v4768, 0
        %v5552 = vsel %vm1986, %v4773, 0
        %v5555 = vsel %vm1986, %v4778, 0
        %v5558 = vsel %vm1986, %v4783, 0
        %v5561 = vsel %vm1986, %v4788, 0
        %v5564 = vsel %vm1986, %v4793, 0
        %v5567 = vsel %vm1986, %v4798, 0
        %v5570 = vsel %vm1986, %v4803, 0
        %v5573 = vsel %vm1986, %v4808, 0
        %v5576 = vsel %vm1986, %v4813, 0
        %v5579 = vsel %vm1986, %v4818, 0
        %5581 = vmatprep.subr.mxu0 0.0
        %5582 = vmatpush1.msra.mxu0 %v4294
        %5583 = vmatprep.subr.mxu0 0.0
        %5584 = vmatpush1.msra.mxu0 0.0
        %5585 = vmatprep.subr.mxu0 0.0
        %5586 = vmatpush1.msra.mxu0 0.0
        %5587 = vmatprep.subr.mxu0 0.0
        %5588 = vmatpush1.msra.mxu0 0.0
        %5589 = vmatprep.subr.mxu0 0.0
        %5590 = vmatpush1.msra.mxu0 0.0
        %5591 = vmatprep.subr.mxu0 0.0
        %5592 = vmatpush1.msra.mxu0 0.0
        %5593 = vmatprep.subr.mxu0 0.0
        %5594 = vmatpush1.msra.mxu0 0.0
        %5595 = vmatprep.subr.mxu0 0.0
        %5596 = vmatpush1.msra.mxu0 0.0
        %5597 = vmatprep.subr.mxu0 0.0
        %5598 = vmatpush1.msra.mxu0 0.0
        %5599 = vmatprep.subr.mxu0 0.0
        %5600 = vmatpush1.msra.mxu0 0.0
        %5601 = vmatprep.subr.mxu0 0.0
        %5602 = vmatpush1.msra.mxu0 0.0
        %5603 = vmatprep.subr.mxu0 0.0
        %5604 = vmatpush1.msra.mxu0 0.0
        %5605 = vmatprep.subr.mxu0 0.0
        %5606 = vmatpush1.msra.mxu0 0.0
        %5607 = vmatprep.subr.mxu0 0.0
        %5608 = vmatpush1.msra.mxu0 0.0
        %5609 = vmatprep.subr.mxu0 0.0
        %5610 = vmatpush1.msra.mxu0 0.0
        %5611 = vmatprep.subr.mxu0 0.0
        %5612 = vmatpush1.msra.mxu0 0.0
        %5613 = vmatprep.subr.mxu0 0.0
        %5614 = vmatpush1.msra.mxu0 0.0
        %5615 = vmatprep.subr.mxu0 0.0
        %5616 = vmatpush1.msra.mxu0 0.0
        %5617 = vmatprep.subr.mxu0 0.0
        %5618 = vmatpush1.msra.mxu0 0.0
        %5619 = vmatprep.subr.mxu0 0.0
        %5620 = vmatpush1.msra.mxu0 0.0
        %5621 = vmatprep.subr.mxu0 0.0
        %5622 = vmatpush1.msra.mxu0 0.0
        %5623 = vmatprep.subr.mxu0 0.0
        %5624 = vmatpush1.msra.mxu0 0.0
        %5625 = vmatprep.subr.mxu0 0.0
        %5626 = vmatpush1.msra.mxu0 0.0
        %5627 = vmatprep.subr.mxu0 0.0
        %5628 = vmatpush1.msra.mxu0 0.0
        %5629 = vmatprep.subr.mxu0 0.0
        %5630 = vmatpush1.msra.mxu0 0.0
        %5631 = vmatprep.subr.mxu0 0.0
        %5632 = vmatpush1.msra.mxu0 0.0
        %5633 = vmatprep.subr.mxu0 0.0
        %5634 = vmatpush1.msra.mxu0 0.0
        %5635 = vmatprep.subr.mxu0 0.0
        %5636 = vmatpush1.msra.mxu0 0.0
        %5637 = vmatprep.subr.mxu0 0.0
        %5638 = vmatpush1.msra.mxu0 0.0
        %5639 = vmatprep.subr.mxu0 0.0
        %5640 = vmatpush1.msra.mxu0 0.0
        %5641 = vmatprep.subr.mxu0 0.0
        %5642 = vmatpush1.msra.mxu0 0.0
        %5643 = vmatprep.subr.mxu0 0.0
        %5644 = vmatpush1.msra.mxu0 0.0
        %5645 = vmatprep.mubr.f32.mxu0 0.0
        %5646 = vmatmul.mubr.f32.gmra.mrb[0].mxu0 %v5543
        %v5647 = vpop.f32.mrb[0].mxu0
        %v5648 = vadd.f32 %v5479, %v5647
        %v5649 = vpop.f32.mrb[0].mxu0
        %5650 = vmatprep.mubr.f32.mxu0 0.0
        %5651 = vmatmul.mubr.f32.gmra.mrb[0].mxu0 %v5546
        %v5652 = vpop.f32.mrb[0].mxu0
        %v5653 = vadd.f32 %v5484, %v5652
        %v5654 = vpop.f32.mrb[0].mxu0
        %5655 = vmatprep.mubr.f32.mxu0 0.0
        %5656 = vmatmul.mubr.f32.gmra.mrb[0].mxu0 %v5549
        %v5657 = vpop.f32.mrb[0].mxu0
        %v5658 = vadd.f32 %v5489, %v5657
        %v5659 = vpop.f32.mrb[0].mxu0
        %5660 = vmatprep.mubr.f32.mxu0 0.0
        %5661 = vmatmul.mubr.f32.gmra.mrb[0].mxu0 %v5552
        %v5662 = vpop.f32.mrb[0].mxu0
        %v5663 = vadd.f32 %v5494, %v5662
        %v5664 = vpop.f32.mrb[0].mxu0
        %5665 = vmatprep.mubr.f32.mxu0 0.0
        %5666 = vmatmul.mubr.f32.gmra.mrb[0].mxu0 %v5555
        %v5667 = vpop.f32.mrb[0].mxu0
        %v5668 = vadd.f32 %v5499, %v5667
        %v5669 = vpop.f32.mrb[0].mxu0
        %5670 = vmatprep.mubr.f32.mxu0 0.0
        %5671 = vmatmul.mubr.f32.gmra.mrb[0].mxu0 %v5558
        %v5672 = vpop.f32.mrb[0].mxu0
        %v5673 = vadd.f32 %v5504, %v5672
        %v5674 = vpop.f32.mrb[0].mxu0
        %5675 = vmatprep.mubr.f32.mxu0 0.0
        %5676 = vmatmul.mubr.f32.gmra.mrb[0].mxu0 %v5561
        %v5677 = vpop.f32.mrb[0].mxu0
        %v5678 = vadd.f32 %v5509, %v5677
        %v5679 = vpop.f32.mrb[0].mxu0
        %5680 = vmatprep.mubr.f32.mxu0 0.0
        %5681 = vmatmul.mubr.f32.gmra.mrb[0].mxu0 %v5564
        %v5682 = vpop.f32.mrb[0].mxu0
        %v5683 = vadd.f32 %v5514, %v5682
        %v5684 = vpop.f32.mrb[0].mxu0
        %5685 = vmatprep.mubr.f32.mxu0 0.0
        %5686 = vmatmul.mubr.f32.gmra.mrb[0].mxu0 %v5567
        %v5687 = vpop.f32.mrb[0].mxu0
        %v5688 = vadd.f32 %v5519, %v5687
        %v5689 = vpop.f32.mrb[0].mxu0
        %5690 = vmatprep.mubr.f32.mxu0 0.0
        %5691 = vmatmul.mubr.f32.gmra.mrb[0].mxu0 %v5570
        %v5692 = vpop.f32.mrb[0].mxu0
        %v5693 = vadd.f32 %v5524, %v5692
        %v5694 = vpop.f32.mrb[0].mxu0
        %5695 = vmatprep.mubr.f32.mxu0 0.0
        %5696 = vmatmul.mubr.f32.gmra.mrb[0].mxu0 %v5573
        %v5697 = vpop.f32.mrb[0].mxu0
        %v5698 = vadd.f32 %v5529, %v5697
        %v5699 = vpop.f32.mrb[0].mxu0
        %5700 = vmatprep.mubr.f32.mxu0 0.0
        %5701 = vmatmul.mubr.f32.gmra.mrb[0].mxu0 %v5576
        %v5702 = vpop.f32.mrb[0].mxu0
        %v5703 = vadd.f32 %v5534, %v5702
        %v5704 = vpop.f32.mrb[0].mxu0
        %5705 = vmatprep.mubr.f32.mxu0 0.0
        %5706 = vmatmul.mubr.f32.gmra.mrb[0].mxu0 %v5579
        %v5707 = vpop.f32.mrb[0].mxu0
        %v5708 = vadd.f32 %v5539, %v5707
        %v5709 = vpop.f32.mrb[0].mxu0
        %5710 = vdwg.mxu0
        %5711 = vrot.lane.b32.xlu0 %v4027, 112
        %v5712 = vpop.permute.xlu0 %5711
        %5713 = vrot.lane.b32.xlu0 %v4032, 112
        %v5714 = vpop.permute.xlu0 %5713
        %5715 = vrot.lane.b32.xlu0 %v4037, 112
        %v5716 = vpop.permute.xlu0 %5715
        %5717 = vrot.lane.b32.xlu0 %v4042, 112
        %v5718 = vpop.permute.xlu0 %5717
        %5719 = vrot.lane.b32.xlu0 %v4047, 112
        %v5720 = vpop.permute.xlu0 %5719
        %5721 = vrot.lane.b32.xlu0 %v4052, 112
        %v5722 = vpop.permute.xlu0 %5721
        %5723 = vrot.lane.b32.xlu0 %v4057, 112
        %v5724 = vpop.permute.xlu0 %5723
        %5725 = vrot.lane.b32.xlu0 %v4062, 112
        %v5726 = vpop.permute.xlu0 %5725
        %5727 = vrot.lane.b32.xlu0 %v4067, 112
        %v5728 = vpop.permute.xlu0 %5727
        %5729 = vrot.lane.b32.xlu0 %v4072, 112
        %v5730 = vpop.permute.xlu0 %5729
        %5731 = vrot.lane.b32.xlu0 %v4077, 112
        %v5732 = vpop.permute.xlu0 %5731
        %5733 = vrot.lane.b32.xlu0 %v4082, 112
        %v5734 = vpop.permute.xlu0 %5733
        %5735 = vrot.lane.b32.xlu0 %v4087, 112
        %v5736 = vpop.permute.xlu0 %5735
        %5737 = vrot.lane.b32.xlu0 %v4180, 112
        %v5738 = vpop.permute.xlu0 %5737
        %5739 = vrot.lane.b32.xlu0 %v4185, 112
        %v5740 = vpop.permute.xlu0 %5739
        %5741 = vrot.lane.b32.xlu0 %v4190, 112
        %v5742 = vpop.permute.xlu0 %5741
        %5743 = vrot.lane.b32.xlu0 %v4195, 112
        %v5744 = vpop.permute.xlu0 %5743
        %v5745 = vsel %vm1986, %v5712, 0
        %v5747 = vsel %vm1986, %v5714, 0
        %v5749 = vsel %vm1986, %v5716, 0
        %v5751 = vsel %vm1986, %v5718, 0
        %v5753 = vsel %vm1986, %v5720, 0
        %v5755 = vsel %vm1986, %v5722, 0
        %v5757 = vsel %vm1986, %v5724, 0
        %v5759 = vsel %vm1986, %v5726, 0
        %v5761 = vsel %vm1986, %v5728, 0
        %v5763 = vsel %vm1986, %v5730, 0
        %v5765 = vsel %vm1986, %v5732, 0
        %v5767 = vsel %vm1986, %v5734, 0
        %v5769 = vsel %vm1986, %v5736, 0
        %v5771 = vsel %vm1986, %v5738, 0
        %v5773 = vsel %vm1986, %v5740, 0
        %v5775 = vsel %vm1986, %v5742, 0
        %v5777 = vsel %vm1986, %v5744, 0
        %5779 = vmatprep.subr.mxu0 0.0
        %5780 = vmatpush1.xpose.msra.mxu0 %v5771
        %5781 = vmatprep.subr.mxu0 0.0
        %5782 = vmatpush1.xpose.msra.mxu0 %v5773
        %5783 = vmatprep.subr.mxu0 0.0
        %5784 = vmatpush1.xpose.msra.mxu0 %v5775
        %5785 = vmatprep.subr.mxu0 0.0
        %5786 = vmatpush1.xpose.msra.mxu0 %v5777
        %5787 = vmatprep.subr.mxu0 0.0
        %5788 = vmatpush1.xpose.msra.mxu0 0.0
        %5789 = vmatprep.subr.mxu0 0.0
        %5790 = vmatpush1.xpose.msra.mxu0 0.0
        %5791 = vmatprep.subr.mxu0 0.0
        %5792 = vmatpush1.xpose.msra.mxu0 0.0
        %5793 = vmatprep.subr.mxu0 0.0
        %5794 = vmatpush1.xpose.msra.mxu0 0.0
        %5795 = vmatprep.subr.mxu0 0.0
        %5796 = vmatpush1.xpose.msra.mxu0 0.0
        %5797 = vmatprep.subr.mxu0 0.0
        %5798 = vmatpush1.xpose.msra.mxu0 0.0
        %5799 = vmatprep.subr.mxu0 0.0
        %5800 = vmatpush1.xpose.msra.mxu0 0.0
        %5801 = vmatprep.subr.mxu0 0.0
        %5802 = vmatpush1.xpose.msra.mxu0 0.0
        %5803 = vmatprep.subr.mxu0 0.0
        %5804 = vmatpush1.xpose.msra.mxu0 0.0
        %5805 = vmatprep.subr.mxu0 0.0
        %5806 = vmatpush1.xpose.msra.mxu0 0.0
        %5807 = vmatprep.subr.mxu0 0.0
        %5808 = vmatpush1.xpose.msra.mxu0 0.0
        %5809 = vmatprep.subr.mxu0 0.0
        %5810 = vmatpush1.xpose.msra.mxu0 0.0
        %5811 = vmatprep.subr.mxu0 0.0
        %5812 = vmatpush1.xpose.msra.mxu0 0.0
        %5813 = vmatprep.subr.mxu0 0.0
        %5814 = vmatpush1.xpose.msra.mxu0 0.0
        %5815 = vmatprep.subr.mxu0 0.0
        %5816 = vmatpush1.xpose.msra.mxu0 0.0
        %5817 = vmatprep.subr.mxu0 0.0
        %5818 = vmatpush1.xpose.msra.mxu0 0.0
        %5819 = vmatprep.subr.mxu0 0.0
        %5820 = vmatpush1.xpose.msra.mxu0 0.0
        %5821 = vmatprep.subr.mxu0 0.0
        %5822 = vmatpush1.xpose.msra.mxu0 0.0
        %5823 = vmatprep.subr.mxu0 0.0
        %5824 = vmatpush1.xpose.msra.mxu0 0.0
        %5825 = vmatprep.subr.mxu0 0.0
        %5826 = vmatpush1.xpose.msra.mxu0 0.0
        %5827 = vmatprep.subr.mxu0 0.0
        %5828 = vmatpush1.xpose.msra.mxu0 0.0
        %5829 = vmatprep.subr.mxu0 0.0
        %5830 = vmatpush1.xpose.msra.mxu0 0.0
        %5831 = vmatprep.subr.mxu0 0.0
        %5832 = vmatpush1.xpose.msra.mxu0 0.0
        %5833 = vmatprep.subr.mxu0 0.0
        %5834 = vmatpush1.xpose.msra.mxu0 0.0
        %5835 = vmatprep.subr.mxu0 0.0
        %5836 = vmatpush1.xpose.msra.mxu0 0.0
        %5837 = vmatprep.subr.mxu0 0.0
        %5838 = vmatpush1.xpose.msra.mxu0 0.0
        %5839 = vmatprep.subr.mxu0 0.0
        %5840 = vmatpush1.xpose.msra.mxu0 0.0
        %5841 = vmatprep.subr.mxu0 0.0
        %5842 = vmatpush1.xpose.msra.mxu0 0.0
        %5843 = vmatprep.mubr.f32.mxu0 0.0
        %5844 = vmatmul.mubr.f32.gmra.mrb[0].mxu0 %v5745
        %v5845 = vpop.f32.mrb[0].mxu0
        %v5846 = vadd.f32 0.0, %v5845
        %v5847 = vpop.f32.mrb[0].mxu0
        %5848 = vmatprep.mubr.f32.mxu0 0.0
        %5849 = vmatmul.mubr.f32.gmra.mrb[0].mxu0 %v5747
        %v5850 = vpop.f32.mrb[0].mxu0
        %v5851 = vadd.f32 0.0, %v5850
        %v5852 = vpop.f32.mrb[0].mxu0
        %5853 = vmatprep.mubr.f32.mxu0 0.0
        %5854 = vmatmul.mubr.f32.gmra.mrb[0].mxu0 %v5749
        %v5855 = vpop.f32.mrb[0].mxu0
        %v5856 = vadd.f32 0.0, %v5855
        %v5857 = vpop.f32.mrb[0].mxu0
        %5858 = vmatprep.mubr.f32.mxu0 0.0
        %5859 = vmatmul.mubr.f32.gmra.mrb[0].mxu0 %v5751
        %v5860 = vpop.f32.mrb[0].mxu0
        %v5861 = vadd.f32 0.0, %v5860
        %v5862 = vpop.f32.mrb[0].mxu0
        %5863 = vmatprep.mubr.f32.mxu0 0.0
        %5864 = vmatmul.mubr.f32.gmra.mrb[0].mxu0 %v5753
        %v5865 = vpop.f32.mrb[0].mxu0
        %v5866 = vadd.f32 0.0, %v5865
        %v5867 = vpop.f32.mrb[0].mxu0
        %5868 = vmatprep.mubr.f32.mxu0 0.0
        %5869 = vmatmul.mubr.f32.gmra.mrb[0].mxu0 %v5755
        %v5870 = vpop.f32.mrb[0].mxu0
        %v5871 = vadd.f32 0.0, %v5870
        %v5872 = vpop.f32.mrb[0].mxu0
        %5873 = vmatprep.mubr.f32.mxu0 0.0
        %5874 = vmatmul.mubr.f32.gmra.mrb[0].mxu0 %v5757
        %v5875 = vpop.f32.mrb[0].mxu0
        %v5876 = vadd.f32 0.0, %v5875
        %v5877 = vpop.f32.mrb[0].mxu0
        %5878 = vmatprep.mubr.f32.mxu0 0.0
        %5879 = vmatmul.mubr.f32.gmra.mrb[0].mxu0 %v5759
        %v5880 = vpop.f32.mrb[0].mxu0
        %v5881 = vadd.f32 0.0, %v5880
        %v5882 = vpop.f32.mrb[0].mxu0
        %5883 = vmatprep.mubr.f32.mxu0 0.0
        %5884 = vmatmul.mubr.f32.gmra.mrb[0].mxu0 %v5761
        %v5885 = vpop.f32.mrb[0].mxu0
        %v5886 = vadd.f32 0.0, %v5885
        %v5887 = vpop.f32.mrb[0].mxu0
        %5888 = vmatprep.mubr.f32.mxu0 0.0
        %5889 = vmatmul.mubr.f32.gmra.mrb[0].mxu0 %v5763
        %v5890 = vpop.f32.mrb[0].mxu0
        %v5891 = vadd.f32 0.0, %v5890
        %v5892 = vpop.f32.mrb[0].mxu0
        %5893 = vmatprep.mubr.f32.mxu0 0.0
        %5894 = vmatmul.mubr.f32.gmra.mrb[0].mxu0 %v5765
        %v5895 = vpop.f32.mrb[0].mxu0
        %v5896 = vadd.f32 0.0, %v5895
        %v5897 = vpop.f32.mrb[0].mxu0
        %5898 = vmatprep.mubr.f32.mxu0 0.0
        %5899 = vmatmul.mubr.f32.gmra.mrb[0].mxu0 %v5767
        %v5900 = vpop.f32.mrb[0].mxu0
        %v5901 = vadd.f32 0.0, %v5900
        %v5902 = vpop.f32.mrb[0].mxu0
        %5903 = vmatprep.mubr.f32.mxu0 0.0
        %5904 = vmatmul.mubr.f32.gmra.mrb[0].mxu0 %v5769
        %v5905 = vpop.f32.mrb[0].mxu0
        %v5906 = vadd.f32 0.0, %v5905
        %v5907 = vpop.f32.mrb[0].mxu0
        %5908 = vdwg.mxu0
        %v5909 = vmul.f32 %v5846, 0.35355338
        %v5910 = vmul.f32 %v5851, 0.35355338
        %v5911 = vmul.f32 %v5856, 0.35355338
        %v5912 = vmul.f32 %v5861, 0.35355338
        %v5913 = vmul.f32 %v5866, 0.35355338
        %v5914 = vmul.f32 %v5871, 0.35355338
        %v5915 = vmul.f32 %v5876, 0.35355338
        %v5916 = vmul.f32 %v5881, 0.35355338
        %v5917 = vmul.f32 %v5886, 0.35355338
        %v5918 = vmul.f32 %v5891, 0.35355338
        %v5919 = vmul.f32 %v5896, 0.35355338
        %v5920 = vmul.f32 %v5901, 0.35355338
        %v5921 = vmul.f32 %v5906, 0.35355338
        %v5922 = vadd.f32 %v5909, %v3897
        %v5923 = vadd.f32 %v5910, %v3898
        %v5924 = vadd.f32 %v5911, %v3899
        %v5925 = vadd.f32 %v5912, %v3900
        %v5926 = vadd.f32 %v5913, %v3901
        %v5927 = vadd.f32 %v5914, %v3902
        %v5928 = vadd.f32 %v5915, %v3903
        %v5929 = vadd.f32 %v5916, %v3904
        %v5930 = vadd.f32 %v5917, %v3905
        %v5931 = vadd.f32 %v5918, %v3906
        %v5932 = vadd.f32 %v5919, %v3907
        %v5933 = vadd.f32 %v5920, %v3908
        %v5934 = vadd.f32 %v5921, %v3909
        %v5935 = vsel %vm2104, %v5922, -inf
        %5936 = vmax.xlane.f32.xlu0 %v5935
        %v5937 = vpop.xlane.xlu0 %5936
        %v5938 = vsel %vm2104, %v5923, -inf
        %5939 = vmax.xlane.f32.xlu0 %v5938
        %v5940 = vpop.xlane.xlu0 %5939
        %v5941 = vsel %vm2104, %v5924, -inf
        %5942 = vmax.xlane.f32.xlu0 %v5941
        %v5943 = vpop.xlane.xlu0 %5942
        %v5944 = vsel %vm2104, %v5925, -inf
        %5945 = vmax.xlane.f32.xlu0 %v5944
        %v5946 = vpop.xlane.xlu0 %5945
        %v5947 = vsel %vm2104, %v5926, -inf
        %5948 = vmax.xlane.f32.xlu0 %v5947
        %v5949 = vpop.xlane.xlu0 %5948
        %v5950 = vsel %vm2104, %v5927, -inf
        %5951 = vmax.xlane.f32.xlu0 %v5950
        %v5952 = vpop.xlane.xlu0 %5951
        %v5953 = vsel %vm2104, %v5928, -inf
        %5954 = vmax.xlane.f32.xlu0 %v5953
        %v5955 = vpop.xlane.xlu0 %5954
        %v5956 = vsel %vm2104, %v5929, -inf
        %5957 = vmax.xlane.f32.xlu0 %v5956
        %v5958 = vpop.xlane.xlu0 %5957
        %v5959 = vsel %vm2104, %v5930, -inf
        %5960 = vmax.xlane.f32.xlu0 %v5959
        %v5961 = vpop.xlane.xlu0 %5960
        %v5962 = vsel %vm2104, %v5931, -inf
        %5963 = vmax.xlane.f32.xlu0 %v5962
        %v5964 = vpop.xlane.xlu0 %5963
        %v5965 = vsel %vm2104, %v5932, -inf
        %5966 = vmax.xlane.f32.xlu0 %v5965
        %v5967 = vpop.xlane.xlu0 %5966
        %v5968 = vsel %vm2104, %v5933, -inf
        %5969 = vmax.xlane.f32.xlu0 %v5968
        %v5970 = vpop.xlane.xlu0 %5969
        %v5971 = vsel %vm4541, %v5934, -inf
        %5972 = vmax.xlane.f32.xlu0 %v5971
        %v5973 = vpop.xlane.xlu0 %5972
        %v5974 = vsub.f32 %v5922, %v5937
        %v5975 = vsub.f32 %v5923, %v5940
        %v5976 = vsub.f32 %v5924, %v5943
        %v5977 = vsub.f32 %v5925, %v5946
        %v5978 = vsub.f32 %v5926, %v5949
        %v5979 = vsub.f32 %v5927, %v5952
        %v5980 = vsub.f32 %v5928, %v5955
        %v5981 = vsub.f32 %v5929, %v5958
        %v5982 = vsub.f32 %v5930, %v5961
        %v5983 = vsub.f32 %v5931, %v5964
        %v5984 = vsub.f32 %v5932, %v5967
        %v5985 = vsub.f32 %v5933, %v5970
        %v5986 = vsub.f32 %v5934, %v5973
        %v5987 = vmul.f32 %v5974, 1.442695
        %v5988 = vpow.pop %v5987
        %v5989 = vmul.f32 %v5975, 1.442695
        %v5990 = vpow.pop %v5989
        %v5991 = vmul.f32 %v5976, 1.442695
        %v5992 = vpow.pop %v5991
        %v5993 = vmul.f32 %v5977, 1.442695
        %v5994 = vpow.pop %v5993
        %v5995 = vmul.f32 %v5978, 1.442695
        %v5996 = vpow.pop %v5995
        %v5997 = vmul.f32 %v5979, 1.442695
        %v5998 = vpow.pop %v5997
        %v5999 = vmul.f32 %v5980, 1.442695
        %v6000 = vpow.pop %v5999
        %v6001 = vmul.f32 %v5981, 1.442695
        %v6002 = vpow.pop %v6001
        %v6003 = vmul.f32 %v5982, 1.442695
        %v6004 = vpow.pop %v6003
        %v6005 = vmul.f32 %v5983, 1.442695
        %v6006 = vpow.pop %v6005
        %v6007 = vmul.f32 %v5984, 1.442695
        %v6008 = vpow.pop %v6007
        %v6009 = vmul.f32 %v5985, 1.442695
        %v6010 = vpow.pop %v6009
        %v6011 = vmul.f32 %v5986, 1.442695
        %v6012 = vpow.pop %v6011
        %v6013 = vsel %vm2104, %v5988, 0.0
        %6014 = vadd.xlane.f32.xlu0 %v6013
        %v6015 = vpop.xlane.xlu0 %6014
        %v6016 = vsel %vm2104, %v5990, 0.0
        %6017 = vadd.xlane.f32.xlu0 %v6016
        %v6018 = vpop.xlane.xlu0 %6017
        %v6019 = vsel %vm2104, %v5992, 0.0
        %6020 = vadd.xlane.f32.xlu0 %v6019
        %v6021 = vpop.xlane.xlu0 %6020
        %v6022 = vsel %vm2104, %v5994, 0.0
        %6023 = vadd.xlane.f32.xlu0 %v6022
        %v6024 = vpop.xlane.xlu0 %6023
        %v6025 = vsel %vm2104, %v5996, 0.0
        %6026 = vadd.xlane.f32.xlu0 %v6025
        %v6027 = vpop.xlane.xlu0 %6026
        %v6028 = vsel %vm2104, %v5998, 0.0
        %6029 = vadd.xlane.f32.xlu0 %v6028
        %v6030 = vpop.xlane.xlu0 %6029
        %v6031 = vsel %vm2104, %v6000, 0.0
        %6032 = vadd.xlane.f32.xlu0 %v6031
        %v6033 = vpop.xlane.xlu0 %6032
        %v6034 = vsel %vm2104, %v6002, 0.0
        %6035 = vadd.xlane.f32.xlu0 %v6034
        %v6036 = vpop.xlane.xlu0 %6035
        %v6037 = vsel %vm2104, %v6004, 0.0
        %6038 = vadd.xlane.f32.xlu0 %v6037
        %v6039 = vpop.xlane.xlu0 %6038
        %v6040 = vsel %vm2104, %v6006, 0.0
        %6041 = vadd.xlane.f32.xlu0 %v6040
        %v6042 = vpop.xlane.xlu0 %6041
        %v6043 = vsel %vm2104, %v6008, 0.0
        %6044 = vadd.xlane.f32.xlu0 %v6043
        %v6045 = vpop.xlane.xlu0 %6044
        %v6046 = vsel %vm2104, %v6010, 0.0
        %6047 = vadd.xlane.f32.xlu0 %v6046
        %v6048 = vpop.xlane.xlu0 %6047
        %v6049 = vsel %vm4541, %v6012, 0.0
        %6050 = vadd.xlane.f32.xlu0 %v6049
        %v6051 = vpop.xlane.xlu0 %6050
        %v6052 = vrcp.pop %v6015
        %v6053 = vrcp.pop %v6018
        %v6054 = vrcp.pop %v6021
        %v6055 = vrcp.pop %v6024
        %v6056 = vrcp.pop %v6027
        %v6057 = vrcp.pop %v6030
        %v6058 = vrcp.pop %v6033
        %v6059 = vrcp.pop %v6036
        %v6060 = vrcp.pop %v6039
        %v6061 = vrcp.pop %v6042
        %v6062 = vrcp.pop %v6045
        %v6063 = vrcp.pop %v6048
        %v6064 = vrcp.pop %v6051
        %v6065 = vmul.f32 %v5988, %v6052
        %v6066 = vmul.f32 %v5990, %v6053
        %v6067 = vmul.f32 %v5992, %v6054
        %v6068 = vmul.f32 %v5994, %v6055
        %v6069 = vmul.f32 %v5996, %v6056
        %v6070 = vmul.f32 %v5998, %v6057
        %v6071 = vmul.f32 %v6000, %v6058
        %v6072 = vmul.f32 %v6002, %v6059
        %v6073 = vmul.f32 %v6004, %v6060
        %v6074 = vmul.f32 %v6006, %v6061
        %v6075 = vmul.f32 %v6008, %v6062
        %v6076 = vmul.f32 %v6010, %v6063
        %v6077 = vmul.f32 %v6012, %v6064
        %6078 = vrot.lane.b32.xlu0 %v4276, 112
        %v6079 = vpop.permute.xlu0 %6078
        %6080 = vrot.lane.b32.xlu0 %v4281, 112
        %v6081 = vpop.permute.xlu0 %6080
        %6082 = vrot.lane.b32.xlu0 %v4286, 112
        %v6083 = vpop.permute.xlu0 %6082
        %6084 = vrot.lane.b32.xlu0 %v4291, 112
        %v6085 = vpop.permute.xlu0 %6084
        %v6090 = vsel %vm2104, %v6065, 0
        %v6093 = vsel %vm2104, %v6066, 0
        %v6096 = vsel %vm2104, %v6067, 0
        %v6099 = vsel %vm2104, %v6068, 0
        %v6102 = vsel %vm2104, %v6069, 0
        %v6105 = vsel %vm2104, %v6070, 0
        %v6108 = vsel %vm2104, %v6071, 0
        %v6111 = vsel %vm2104, %v6072, 0
        %v6114 = vsel %vm2104, %v6073, 0
        %v6117 = vsel %vm2104, %v6074, 0
        %v6120 = vsel %vm2104, %v6075, 0
        %v6123 = vsel %vm2104, %v6076, 0
        %v6126 = vsel %vm2104, %v6077, 0
        %v6128 = vsel %vm2162, %v6085, 0
        %6130 = vmatprep.subr.mxu0 0.0
        %6131 = vmatpush1.msra.mxu0 %v6079
        %6132 = vmatprep.subr.mxu0 0.0
        %6133 = vmatpush1.msra.mxu0 %v6081
        %6134 = vmatprep.subr.mxu0 0.0
        %6135 = vmatpush1.msra.mxu0 %v6083
        %6136 = vmatprep.subr.mxu0 0.0
        %6137 = vmatpush1.msra.mxu0 %v6128
        %6138 = vmatprep.subr.mxu0 0.0
        %6139 = vmatpush1.msra.mxu0 0.0
        %6140 = vmatprep.subr.mxu0 0.0
        %6141 = vmatpush1.msra.mxu0 0.0
        %6142 = vmatprep.subr.mxu0 0.0
        %6143 = vmatpush1.msra.mxu0 0.0
        %6144 = vmatprep.subr.mxu0 0.0
        %6145 = vmatpush1.msra.mxu0 0.0
        %6146 = vmatprep.subr.mxu0 0.0
        %6147 = vmatpush1.msra.mxu0 0.0
        %6148 = vmatprep.subr.mxu0 0.0
        %6149 = vmatpush1.msra.mxu0 0.0
        %6150 = vmatprep.subr.mxu0 0.0
        %6151 = vmatpush1.msra.mxu0 0.0
        %6152 = vmatprep.subr.mxu0 0.0
        %6153 = vmatpush1.msra.mxu0 0.0
        %6154 = vmatprep.subr.mxu0 0.0
        %6155 = vmatpush1.msra.mxu0 0.0
        %6156 = vmatprep.subr.mxu0 0.0
        %6157 = vmatpush1.msra.mxu0 0.0
        %6158 = vmatprep.subr.mxu0 0.0
        %6159 = vmatpush1.msra.mxu0 0.0
        %6160 = vmatprep.subr.mxu0 0.0
        %6161 = vmatpush1.msra.mxu0 0.0
        %6162 = vmatprep.subr.mxu0 0.0
        %6163 = vmatpush1.msra.mxu0 0.0
        %6164 = vmatprep.subr.mxu0 0.0
        %6165 = vmatpush1.msra.mxu0 0.0
        %6166 = vmatprep.subr.mxu0 0.0
        %6167 = vmatpush1.msra.mxu0 0.0
        %6168 = vmatprep.subr.mxu0 0.0
        %6169 = vmatpush1.msra.mxu0 0.0
        %6170 = vmatprep.subr.mxu0 0.0
        %6171 = vmatpush1.msra.mxu0 0.0
        %6172 = vmatprep.subr.mxu0 0.0
        %6173 = vmatpush1.msra.mxu0 0.0
        %6174 = vmatprep.subr.mxu0 0.0
        %6175 = vmatpush1.msra.mxu0 0.0
        %6176 = vmatprep.subr.mxu0 0.0
        %6177 = vmatpush1.msra.mxu0 0.0
        %6178 = vmatprep.subr.mxu0 0.0
        %6179 = vmatpush1.msra.mxu0 0.0
        %6180 = vmatprep.subr.mxu0 0.0
        %6181 = vmatpush1.msra.mxu0 0.0
        %6182 = vmatprep.subr.mxu0 0.0
        %6183 = vmatpush1.msra.mxu0 0.0
        %6184 = vmatprep.subr.mxu0 0.0
        %6185 = vmatpush1.msra.mxu0 0.0
        %6186 = vmatprep.subr.mxu0 0.0
        %6187 = vmatpush1.msra.mxu0 0.0
        %6188 = vmatprep.subr.mxu0 0.0
        %6189 = vmatpush1.msra.mxu0 0.0
        %6190 = vmatprep.subr.mxu0 0.0
        %6191 = vmatpush1.msra.mxu0 0.0
        %6192 = vmatprep.subr.mxu0 0.0
        %6193 = vmatpush1.msra.mxu0 0.0
        %6194 = vmatprep.mubr.f32.mxu0 0.0
        %6195 = vmatmul.mubr.f32.gmra.mrb[0].mxu0 %v6090
        %v6196 = vpop.f32.mrb[0].mxu0
        %v6197 = vadd.f32 0.0, %v6196
        %v6198 = vpop.f32.mrb[0].mxu0
        %6199 = vmatprep.mubr.f32.mxu0 0.0
        %6200 = vmatmul.mubr.f32.gmra.mrb[0].mxu0 %v6093
        %v6201 = vpop.f32.mrb[0].mxu0
        %v6202 = vadd.f32 0.0, %v6201
        %v6203 = vpop.f32.mrb[0].mxu0
        %6204 = vmatprep.mubr.f32.mxu0 0.0
        %6205 = vmatmul.mubr.f32.gmra.mrb[0].mxu0 %v6096
        %v6206 = vpop.f32.mrb[0].mxu0
        %v6207 = vadd.f32 0.0, %v6206
        %v6208 = vpop.f32.mrb[0].mxu0
        %6209 = vmatprep.mubr.f32.mxu0 0.0
        %6210 = vmatmul.mubr.f32.gmra.mrb[0].mxu0 %v6099
        %v6211 = vpop.f32.mrb[0].mxu0
        %v6212 = vadd.f32 0.0, %v6211
        %v6213 = vpop.f32.mrb[0].mxu0
        %6214 = vmatprep.mubr.f32.mxu0 0.0
        %6215 = vmatmul.mubr.f32.gmra.mrb[0].mxu0 %v6102
        %v6216 = vpop.f32.mrb[0].mxu0
        %v6217 = vadd.f32 0.0, %v6216
        %v6218 = vpop.f32.mrb[0].mxu0
        %6219 = vmatprep.mubr.f32.mxu0 0.0
        %6220 = vmatmul.mubr.f32.gmra.mrb[0].mxu0 %v6105
        %v6221 = vpop.f32.mrb[0].mxu0
        %v6222 = vadd.f32 0.0, %v6221
        %v6223 = vpop.f32.mrb[0].mxu0
        %6224 = vmatprep.mubr.f32.mxu0 0.0
        %6225 = vmatmul.mubr.f32.gmra.mrb[0].mxu0 %v6108
        %v6226 = vpop.f32.mrb[0].mxu0
        %v6227 = vadd.f32 0.0, %v6226
        %v6228 = vpop.f32.mrb[0].mxu0
        %6229 = vmatprep.mubr.f32.mxu0 0.0
        %6230 = vmatmul.mubr.f32.gmra.mrb[0].mxu0 %v6111
        %v6231 = vpop.f32.mrb[0].mxu0
        %v6232 = vadd.f32 0.0, %v6231
        %v6233 = vpop.f32.mrb[0].mxu0
        %6234 = vmatprep.mubr.f32.mxu0 0.0
        %6235 = vmatmul.mubr.f32.gmra.mrb[0].mxu0 %v6114
        %v6236 = vpop.f32.mrb[0].mxu0
        %v6237 = vadd.f32 0.0, %v6236
        %v6238 = vpop.f32.mrb[0].mxu0
        %6239 = vmatprep.mubr.f32.mxu0 0.0
        %6240 = vmatmul.mubr.f32.gmra.mrb[0].mxu0 %v6117
        %v6241 = vpop.f32.mrb[0].mxu0
        %v6242 = vadd.f32 0.0, %v6241
        %v6243 = vpop.f32.mrb[0].mxu0
        %6244 = vmatprep.mubr.f32.mxu0 0.0
        %6245 = vmatmul.mubr.f32.gmra.mrb[0].mxu0 %v6120
        %v6246 = vpop.f32.mrb[0].mxu0
        %v6247 = vadd.f32 0.0, %v6246
        %v6248 = vpop.f32.mrb[0].mxu0
        %6249 = vmatprep.mubr.f32.mxu0 0.0
        %6250 = vmatmul.mubr.f32.gmra.mrb[0].mxu0 %v6123
        %v6251 = vpop.f32.mrb[0].mxu0
        %v6252 = vadd.f32 0.0, %v6251
        %v6253 = vpop.f32.mrb[0].mxu0
        %6254 = vmatprep.mubr.f32.mxu0 0.0
        %6255 = vmatmul.mubr.f32.gmra.mrb[0].mxu0 %v6126
        %v6256 = vpop.f32.mrb[0].mxu0
        %v6257 = vadd.f32 0.0, %v6256
        %v6258 = vpop.f32.mrb[0].mxu0
        %6259 = vdwg.mxu0
        %v6261 = vsel %vm1986, %v6197, 0
        %v6264 = vsel %vm1986, %v6202, 0
        %v6267 = vsel %vm1986, %v6207, 0
        %v6270 = vsel %vm1986, %v6212, 0
        %v6273 = vsel %vm1986, %v6217, 0
        %v6276 = vsel %vm1986, %v6222, 0
        %v6279 = vsel %vm1986, %v6227, 0
        %v6282 = vsel %vm1986, %v6232, 0
        %v6285 = vsel %vm1986, %v6237, 0
        %v6288 = vsel %vm1986, %v6242, 0
        %v6291 = vsel %vm1986, %v6247, 0
        %v6294 = vsel %vm1986, %v6252, 0
        %v6297 = vsel %vm1986, %v6257, 0
        %6299 = vmatprep.subr.mxu0 0.0
        %6300 = vmatpush1.msra.mxu0 %v4296
        %6301 = vmatprep.subr.mxu0 0.0
        %6302 = vmatpush1.msra.mxu0 0.0
        %6303 = vmatprep.subr.mxu0 0.0
        %6304 = vmatpush1.msra.mxu0 0.0
        %6305 = vmatprep.subr.mxu0 0.0
        %6306 = vmatpush1.msra.mxu0 0.0
        %6307 = vmatprep.subr.mxu0 0.0
        %6308 = vmatpush1.msra.mxu0 0.0
        %6309 = vmatprep.subr.mxu0 0.0
        %6310 = vmatpush1.msra.mxu0 0.0
        %6311 = vmatprep.subr.mxu0 0.0
        %6312 = vmatpush1.msra.mxu0 0.0
        %6313 = vmatprep.subr.mxu0 0.0
        %6314 = vmatpush1.msra.mxu0 0.0
        %6315 = vmatprep.subr.mxu0 0.0
        %6316 = vmatpush1.msra.mxu0 0.0
        %6317 = vmatprep.subr.mxu0 0.0
        %6318 = vmatpush1.msra.mxu0 0.0
        %6319 = vmatprep.subr.mxu0 0.0
        %6320 = vmatpush1.msra.mxu0 0.0
        %6321 = vmatprep.subr.mxu0 0.0
        %6322 = vmatpush1.msra.mxu0 0.0
        %6323 = vmatprep.subr.mxu0 0.0
        %6324 = vmatpush1.msra.mxu0 0.0
        %6325 = vmatprep.subr.mxu0 0.0
        %6326 = vmatpush1.msra.mxu0 0.0
        %6327 = vmatprep.subr.mxu0 0.0
        %6328 = vmatpush1.msra.mxu0 0.0
        %6329 = vmatprep.subr.mxu0 0.0
        %6330 = vmatpush1.msra.mxu0 0.0
        %6331 = vmatprep.subr.mxu0 0.0
        %6332 = vmatpush1.msra.mxu0 0.0
        %6333 = vmatprep.subr.mxu0 0.0
        %6334 = vmatpush1.msra.mxu0 0.0
        %6335 = vmatprep.subr.mxu0 0.0
        %6336 = vmatpush1.msra.mxu0 0.0
        %6337 = vmatprep.subr.mxu0 0.0
        %6338 = vmatpush1.msra.mxu0 0.0
        %6339 = vmatprep.subr.mxu0 0.0
        %6340 = vmatpush1.msra.mxu0 0.0
        %6341 = vmatprep.subr.mxu0 0.0
        %6342 = vmatpush1.msra.mxu0 0.0
        %6343 = vmatprep.subr.mxu0 0.0
        %6344 = vmatpush1.msra.mxu0 0.0
        %6345 = vmatprep.subr.mxu0 0.0
        %6346 = vmatpush1.msra.mxu0 0.0
        %6347 = vmatprep.subr.mxu0 0.0
        %6348 = vmatpush1.msra.mxu0 0.0
        %6349 = vmatprep.subr.mxu0 0.0
        %6350 = vmatpush1.msra.mxu0 0.0
        %6351 = vmatprep.subr.mxu0 0.0
        %6352 = vmatpush1.msra.mxu0 0.0
        %6353 = vmatprep.subr.mxu0 0.0
        %6354 = vmatpush1.msra.mxu0 0.0
        %6355 = vmatprep.subr.mxu0 0.0
        %6356 = vmatpush1.msra.mxu0 0.0
        %6357 = vmatprep.subr.mxu0 0.0
        %6358 = vmatpush1.msra.mxu0 0.0
        %6359 = vmatprep.subr.mxu0 0.0
        %6360 = vmatpush1.msra.mxu0 0.0
        %6361 = vmatprep.subr.mxu0 0.0
        %6362 = vmatpush1.msra.mxu0 0.0
        %6363 = vmatprep.mubr.f32.mxu0 0.0
        %6364 = vmatmul.mubr.f32.gmra.mrb[0].mxu0 %v6261
        %v6365 = vpop.f32.mrb[0].mxu0
        %v6366 = vadd.f32 0.0, %v6365
        %v6367 = vpop.f32.mrb[0].mxu0
        %6368 = vmatprep.mubr.f32.mxu0 0.0
        %6369 = vmatmul.mubr.f32.gmra.mrb[0].mxu0 %v6264
        %v6370 = vpop.f32.mrb[0].mxu0
        %v6371 = vadd.f32 0.0, %v6370
        %v6372 = vpop.f32.mrb[0].mxu0
        %6373 = vmatprep.mubr.f32.mxu0 0.0
        %6374 = vmatmul.mubr.f32.gmra.mrb[0].mxu0 %v6267
        %v6375 = vpop.f32.mrb[0].mxu0
        %v6376 = vadd.f32 0.0, %v6375
        %v6377 = vpop.f32.mrb[0].mxu0
        %6378 = vmatprep.mubr.f32.mxu0 0.0
        %6379 = vmatmul.mubr.f32.gmra.mrb[0].mxu0 %v6270
        %v6380 = vpop.f32.mrb[0].mxu0
        %v6381 = vadd.f32 0.0, %v6380
        %v6382 = vpop.f32.mrb[0].mxu0
        %6383 = vmatprep.mubr.f32.mxu0 0.0
        %6384 = vmatmul.mubr.f32.gmra.mrb[0].mxu0 %v6273
        %v6385 = vpop.f32.mrb[0].mxu0
        %v6386 = vadd.f32 0.0, %v6385
        %v6387 = vpop.f32.mrb[0].mxu0
        %6388 = vmatprep.mubr.f32.mxu0 0.0
        %6389 = vmatmul.mubr.f32.gmra.mrb[0].mxu0 %v6276
        %v6390 = vpop.f32.mrb[0].mxu0
        %v6391 = vadd.f32 0.0, %v6390
        %v6392 = vpop.f32.mrb[0].mxu0
        %6393 = vmatprep.mubr.f32.mxu0 0.0
        %6394 = vmatmul.mubr.f32.gmra.mrb[0].mxu0 %v6279
        %v6395 = vpop.f32.mrb[0].mxu0
        %v6396 = vadd.f32 0.0, %v6395
        %v6397 = vpop.f32.mrb[0].mxu0
        %6398 = vmatprep.mubr.f32.mxu0 0.0
        %6399 = vmatmul.mubr.f32.gmra.mrb[0].mxu0 %v6282
        %v6400 = vpop.f32.mrb[0].mxu0
        %v6401 = vadd.f32 0.0, %v6400
        %v6402 = vpop.f32.mrb[0].mxu0
        %6403 = vmatprep.mubr.f32.mxu0 0.0
        %6404 = vmatmul.mubr.f32.gmra.mrb[0].mxu0 %v6285
        %v6405 = vpop.f32.mrb[0].mxu0
        %v6406 = vadd.f32 0.0, %v6405
        %v6407 = vpop.f32.mrb[0].mxu0
        %6408 = vmatprep.mubr.f32.mxu0 0.0
        %6409 = vmatmul.mubr.f32.gmra.mrb[0].mxu0 %v6288
        %v6410 = vpop.f32.mrb[0].mxu0
        %v6411 = vadd.f32 0.0, %v6410
        %v6412 = vpop.f32.mrb[0].mxu0
        %6413 = vmatprep.mubr.f32.mxu0 0.0
        %6414 = vmatmul.mubr.f32.gmra.mrb[0].mxu0 %v6291
        %v6415 = vpop.f32.mrb[0].mxu0
        %v6416 = vadd.f32 0.0, %v6415
        %v6417 = vpop.f32.mrb[0].mxu0
        %6418 = vmatprep.mubr.f32.mxu0 0.0
        %6419 = vmatmul.mubr.f32.gmra.mrb[0].mxu0 %v6294
        %v6420 = vpop.f32.mrb[0].mxu0
        %v6421 = vadd.f32 0.0, %v6420
        %v6422 = vpop.f32.mrb[0].mxu0
        %6423 = vmatprep.mubr.f32.mxu0 0.0
        %6424 = vmatmul.mubr.f32.gmra.mrb[0].mxu0 %v6297
        %v6425 = vpop.f32.mrb[0].mxu0
        %v6426 = vadd.f32 0.0, %v6425
        %v6427 = vpop.f32.mrb[0].mxu0
        %6428 = vdwg.mxu0
        %v6429 = vadd.f32 %v5648, %v6366
        %v6430 = vadd.f32 %v5653, %v6371
        %v6431 = vadd.f32 %v5658, %v6376
        %v6432 = vadd.f32 %v5663, %v6381
        %v6433 = vadd.f32 %v5668, %v6386
        %v6434 = vadd.f32 %v5673, %v6391
        %v6435 = vadd.f32 %v5678, %v6396
        %v6436 = vadd.f32 %v5683, %v6401
        %v6437 = vadd.f32 %v5688, %v6406
        %v6438 = vadd.f32 %v5693, %v6411
        %v6439 = vadd.f32 %v5698, %v6416
        %v6440 = vadd.f32 %v5703, %v6421
        %v6441 = vadd.f32 %v5708, %v6426
        %6442 = vrot.lane.b32.xlu0 %v4027, 104
        %v6443 = vpop.permute.xlu0 %6442
        %6444 = vrot.lane.b32.xlu0 %v4032, 104
        %v6445 = vpop.permute.xlu0 %6444
        %6446 = vrot.lane.b32.xlu0 %v4037, 104
        %v6447 = vpop.permute.xlu0 %6446
        %6448 = vrot.lane.b32.xlu0 %v4042, 104
        %v6449 = vpop.permute.xlu0 %6448
        %6450 = vrot.lane.b32.xlu0 %v4047, 104
        %v6451 = vpop.permute.xlu0 %6450
        %6452 = vrot.lane.b32.xlu0 %v4052, 104
        %v6453 = vpop.permute.xlu0 %6452
        %6454 = vrot.lane.b32.xlu0 %v4057, 104
        %v6455 = vpop.permute.xlu0 %6454
        %6456 = vrot.lane.b32.xlu0 %v4062, 104
        %v6457 = vpop.permute.xlu0 %6456
        %6458 = vrot.lane.b32.xlu0 %v4067, 104
        %v6459 = vpop.permute.xlu0 %6458
        %6460 = vrot.lane.b32.xlu0 %v4072, 104
        %v6461 = vpop.permute.xlu0 %6460
        %6462 = vrot.lane.b32.xlu0 %v4077, 104
        %v6463 = vpop.permute.xlu0 %6462
        %6464 = vrot.lane.b32.xlu0 %v4082, 104
        %v6465 = vpop.permute.xlu0 %6464
        %6466 = vrot.lane.b32.xlu0 %v4087, 104
        %v6467 = vpop.permute.xlu0 %6466
        %6468 = vrot.lane.b32.xlu0 %v4180, 104
        %v6469 = vpop.permute.xlu0 %6468
        %6470 = vrot.lane.b32.xlu0 %v4185, 104
        %v6471 = vpop.permute.xlu0 %6470
        %6472 = vrot.lane.b32.xlu0 %v4190, 104
        %v6473 = vpop.permute.xlu0 %6472
        %6474 = vrot.lane.b32.xlu0 %v4195, 104
        %v6475 = vpop.permute.xlu0 %6474
        %v6476 = vsel %vm1986, %v6443, 0
        %v6478 = vsel %vm1986, %v6445, 0
        %v6480 = vsel %vm1986, %v6447, 0
        %v6482 = vsel %vm1986, %v6449, 0
        %v6484 = vsel %vm1986, %v6451, 0
        %v6486 = vsel %vm1986, %v6453, 0
        %v6488 = vsel %vm1986, %v6455, 0
        %v6490 = vsel %vm1986, %v6457, 0
        %v6492 = vsel %vm1986, %v6459, 0
        %v6494 = vsel %vm1986, %v6461, 0
        %v6496 = vsel %vm1986, %v6463, 0
        %v6498 = vsel %vm1986, %v6465, 0
        %v6500 = vsel %vm1986, %v6467, 0
        %v6502 = vsel %vm1986, %v6469, 0
        %v6504 = vsel %vm1986, %v6471, 0
        %v6506 = vsel %vm1986, %v6473, 0
        %v6508 = vsel %vm1986, %v6475, 0
        %6510 = vmatprep.subr.mxu0 0.0
        %6511 = vmatpush1.xpose.msra.mxu0 %v6502
        %6512 = vmatprep.subr.mxu0 0.0
        %6513 = vmatpush1.xpose.msra.mxu0 %v6504
        %6514 = vmatprep.subr.mxu0 0.0
        %6515 = vmatpush1.xpose.msra.mxu0 %v6506
        %6516 = vmatprep.subr.mxu0 0.0
        %6517 = vmatpush1.xpose.msra.mxu0 %v6508
        %6518 = vmatprep.subr.mxu0 0.0
        %6519 = vmatpush1.xpose.msra.mxu0 0.0
        %6520 = vmatprep.subr.mxu0 0.0
        %6521 = vmatpush1.xpose.msra.mxu0 0.0
        %6522 = vmatprep.subr.mxu0 0.0
        %6523 = vmatpush1.xpose.msra.mxu0 0.0
        %6524 = vmatprep.subr.mxu0 0.0
        %6525 = vmatpush1.xpose.msra.mxu0 0.0
        %6526 = vmatprep.subr.mxu0 0.0
        %6527 = vmatpush1.xpose.msra.mxu0 0.0
        %6528 = vmatprep.subr.mxu0 0.0
        %6529 = vmatpush1.xpose.msra.mxu0 0.0
        %6530 = vmatprep.subr.mxu0 0.0
        %6531 = vmatpush1.xpose.msra.mxu0 0.0
        %6532 = vmatprep.subr.mxu0 0.0
        %6533 = vmatpush1.xpose.msra.mxu0 0.0
        %6534 = vmatprep.subr.mxu0 0.0
        %6535 = vmatpush1.xpose.msra.mxu0 0.0
        %6536 = vmatprep.subr.mxu0 0.0
        %6537 = vmatpush1.xpose.msra.mxu0 0.0
        %6538 = vmatprep.subr.mxu0 0.0
        %6539 = vmatpush1.xpose.msra.mxu0 0.0
        %6540 = vmatprep.subr.mxu0 0.0
        %6541 = vmatpush1.xpose.msra.mxu0 0.0
        %6542 = vmatprep.subr.mxu0 0.0
        %6543 = vmatpush1.xpose.msra.mxu0 0.0
        %6544 = vmatprep.subr.mxu0 0.0
        %6545 = vmatpush1.xpose.msra.mxu0 0.0
        %6546 = vmatprep.subr.mxu0 0.0
        %6547 = vmatpush1.xpose.msra.mxu0 0.0
        %6548 = vmatprep.subr.mxu0 0.0
        %6549 = vmatpush1.xpose.msra.mxu0 0.0
        %6550 = vmatprep.subr.mxu0 0.0
        %6551 = vmatpush1.xpose.msra.mxu0 0.0
        %6552 = vmatprep.subr.mxu0 0.0
        %6553 = vmatpush1.xpose.msra.mxu0 0.0
        %6554 = vmatprep.subr.mxu0 0.0
        %6555 = vmatpush1.xpose.msra.mxu0 0.0
        %6556 = vmatprep.subr.mxu0 0.0
        %6557 = vmatpush1.xpose.msra.mxu0 0.0
        %6558 = vmatprep.subr.mxu0 0.0
        %6559 = vmatpush1.xpose.msra.mxu0 0.0
        %6560 = vmatprep.subr.mxu0 0.0
        %6561 = vmatpush1.xpose.msra.mxu0 0.0
        %6562 = vmatprep.subr.mxu0 0.0
        %6563 = vmatpush1.xpose.msra.mxu0 0.0
        %6564 = vmatprep.subr.mxu0 0.0
        %6565 = vmatpush1.xpose.msra.mxu0 0.0
        %6566 = vmatprep.subr.mxu0 0.0
        %6567 = vmatpush1.xpose.msra.mxu0 0.0
        %6568 = vmatprep.subr.mxu0 0.0
        %6569 = vmatpush1.xpose.msra.mxu0 0.0
        %6570 = vmatprep.subr.mxu0 0.0
        %6571 = vmatpush1.xpose.msra.mxu0 0.0
        %6572 = vmatprep.subr.mxu0 0.0
        %6573 = vmatpush1.xpose.msra.mxu0 0.0
        %6574 = vmatprep.mubr.f32.mxu0 0.0
        %6575 = vmatmul.mubr.f32.gmra.mrb[0].mxu0 %v6476
        %v6576 = vpop.f32.mrb[0].mxu0
        %v6577 = vadd.f32 0.0, %v6576
        %v6578 = vpop.f32.mrb[0].mxu0
        %6579 = vmatprep.mubr.f32.mxu0 0.0
        %6580 = vmatmul.mubr.f32.gmra.mrb[0].mxu0 %v6478
        %v6581 = vpop.f32.mrb[0].mxu0
        %v6582 = vadd.f32 0.0, %v6581
        %v6583 = vpop.f32.mrb[0].mxu0
        %6584 = vmatprep.mubr.f32.mxu0 0.0
        %6585 = vmatmul.mubr.f32.gmra.mrb[0].mxu0 %v6480
        %v6586 = vpop.f32.mrb[0].mxu0
        %v6587 = vadd.f32 0.0, %v6586
        %v6588 = vpop.f32.mrb[0].mxu0
        %6589 = vmatprep.mubr.f32.mxu0 0.0
        %6590 = vmatmul.mubr.f32.gmra.mrb[0].mxu0 %v6482
        %v6591 = vpop.f32.mrb[0].mxu0
        %v6592 = vadd.f32 0.0, %v6591
        %v6593 = vpop.f32.mrb[0].mxu0
        %6594 = vmatprep.mubr.f32.mxu0 0.0
        %6595 = vmatmul.mubr.f32.gmra.mrb[0].mxu0 %v6484
        %v6596 = vpop.f32.mrb[0].mxu0
        %v6597 = vadd.f32 0.0, %v6596
        %v6598 = vpop.f32.mrb[0].mxu0
        %6599 = vmatprep.mubr.f32.mxu0 0.0
        %6600 = vmatmul.mubr.f32.gmra.mrb[0].mxu0 %v6486
        %v6601 = vpop.f32.mrb[0].mxu0
        %v6602 = vadd.f32 0.0, %v6601
        %v6603 = vpop.f32.mrb[0].mxu0
        %6604 = vmatprep.mubr.f32.mxu0 0.0
        %6605 = vmatmul.mubr.f32.gmra.mrb[0].mxu0 %v6488
        %v6606 = vpop.f32.mrb[0].mxu0
        %v6607 = vadd.f32 0.0, %v6606
        %v6608 = vpop.f32.mrb[0].mxu0
        %6609 = vmatprep.mubr.f32.mxu0 0.0
        %6610 = vmatmul.mubr.f32.gmra.mrb[0].mxu0 %v6490
        %v6611 = vpop.f32.mrb[0].mxu0
        %v6612 = vadd.f32 0.0, %v6611
        %v6613 = vpop.f32.mrb[0].mxu0
        %6614 = vmatprep.mubr.f32.mxu0 0.0
        %6615 = vmatmul.mubr.f32.gmra.mrb[0].mxu0 %v6492
        %v6616 = vpop.f32.mrb[0].mxu0
        %v6617 = vadd.f32 0.0, %v6616
        %v6618 = vpop.f32.mrb[0].mxu0
        %6619 = vmatprep.mubr.f32.mxu0 0.0
        %6620 = vmatmul.mubr.f32.gmra.mrb[0].mxu0 %v6494
        %v6621 = vpop.f32.mrb[0].mxu0
        %v6622 = vadd.f32 0.0, %v6621
        %v6623 = vpop.f32.mrb[0].mxu0
        %6624 = vmatprep.mubr.f32.mxu0 0.0
        %6625 = vmatmul.mubr.f32.gmra.mrb[0].mxu0 %v6496
        %v6626 = vpop.f32.mrb[0].mxu0
        %v6627 = vadd.f32 0.0, %v6626
        %v6628 = vpop.f32.mrb[0].mxu0
        %6629 = vmatprep.mubr.f32.mxu0 0.0
        %6630 = vmatmul.mubr.f32.gmra.mrb[0].mxu0 %v6498
        %v6631 = vpop.f32.mrb[0].mxu0
        %v6632 = vadd.f32 0.0, %v6631
        %v6633 = vpop.f32.mrb[0].mxu0
        %6634 = vmatprep.mubr.f32.mxu0 0.0
        %6635 = vmatmul.mubr.f32.gmra.mrb[0].mxu0 %v6500
        %v6636 = vpop.f32.mrb[0].mxu0
        %v6637 = vadd.f32 0.0, %v6636
        %v6638 = vpop.f32.mrb[0].mxu0
        %6639 = vdwg.mxu0
        %v6640 = vmul.f32 %v6577, 0.35355338
        %v6641 = vmul.f32 %v6582, 0.35355338
        %v6642 = vmul.f32 %v6587, 0.35355338
        %v6643 = vmul.f32 %v6592, 0.35355338
        %v6644 = vmul.f32 %v6597, 0.35355338
        %v6645 = vmul.f32 %v6602, 0.35355338
        %v6646 = vmul.f32 %v6607, 0.35355338
        %v6647 = vmul.f32 %v6612, 0.35355338
        %v6648 = vmul.f32 %v6617, 0.35355338
        %v6649 = vmul.f32 %v6622, 0.35355338
        %v6650 = vmul.f32 %v6627, 0.35355338
        %v6651 = vmul.f32 %v6632, 0.35355338
        %v6652 = vmul.f32 %v6637, 0.35355338
        %v6653 = vadd.f32 %v6640, %v3897
        %v6654 = vadd.f32 %v6641, %v3898
        %v6655 = vadd.f32 %v6642, %v3899
        %v6656 = vadd.f32 %v6643, %v3900
        %v6657 = vadd.f32 %v6644, %v3901
        %v6658 = vadd.f32 %v6645, %v3902
        %v6659 = vadd.f32 %v6646, %v3903
        %v6660 = vadd.f32 %v6647, %v3904
        %v6661 = vadd.f32 %v6648, %v3905
        %v6662 = vadd.f32 %v6649, %v3906
        %v6663 = vadd.f32 %v6650, %v3907
        %v6664 = vadd.f32 %v6651, %v3908
        %v6665 = vadd.f32 %v6652, %v3909
        %v6666 = vsel %vm2104, %v6653, -inf
        %6667 = vmax.xlane.f32.xlu0 %v6666
        %v6668 = vpop.xlane.xlu0 %6667
        %v6669 = vsel %vm2104, %v6654, -inf
        %6670 = vmax.xlane.f32.xlu0 %v6669
        %v6671 = vpop.xlane.xlu0 %6670
        %v6672 = vsel %vm2104, %v6655, -inf
        %6673 = vmax.xlane.f32.xlu0 %v6672
        %v6674 = vpop.xlane.xlu0 %6673
        %v6675 = vsel %vm2104, %v6656, -inf
        %6676 = vmax.xlane.f32.xlu0 %v6675
        %v6677 = vpop.xlane.xlu0 %6676
        %v6678 = vsel %vm2104, %v6657, -inf
        %6679 = vmax.xlane.f32.xlu0 %v6678
        %v6680 = vpop.xlane.xlu0 %6679
        %v6681 = vsel %vm2104, %v6658, -inf
        %6682 = vmax.xlane.f32.xlu0 %v6681
        %v6683 = vpop.xlane.xlu0 %6682
        %v6684 = vsel %vm2104, %v6659, -inf
        %6685 = vmax.xlane.f32.xlu0 %v6684
        %v6686 = vpop.xlane.xlu0 %6685
        %v6687 = vsel %vm2104, %v6660, -inf
        %6688 = vmax.xlane.f32.xlu0 %v6687
        %v6689 = vpop.xlane.xlu0 %6688
        %v6690 = vsel %vm2104, %v6661, -inf
        %6691 = vmax.xlane.f32.xlu0 %v6690
        %v6692 = vpop.xlane.xlu0 %6691
        %v6693 = vsel %vm2104, %v6662, -inf
        %6694 = vmax.xlane.f32.xlu0 %v6693
        %v6695 = vpop.xlane.xlu0 %6694
        %v6696 = vsel %vm2104, %v6663, -inf
        %6697 = vmax.xlane.f32.xlu0 %v6696
        %v6698 = vpop.xlane.xlu0 %6697
        %v6699 = vsel %vm2104, %v6664, -inf
        %6700 = vmax.xlane.f32.xlu0 %v6699
        %v6701 = vpop.xlane.xlu0 %6700
        %v6702 = vsel %vm4541, %v6665, -inf
        %6703 = vmax.xlane.f32.xlu0 %v6702
        %v6704 = vpop.xlane.xlu0 %6703
        %v6705 = vsub.f32 %v6653, %v6668
        %v6706 = vsub.f32 %v6654, %v6671
        %v6707 = vsub.f32 %v6655, %v6674
        %v6708 = vsub.f32 %v6656, %v6677
        %v6709 = vsub.f32 %v6657, %v6680
        %v6710 = vsub.f32 %v6658, %v6683
        %v6711 = vsub.f32 %v6659, %v6686
        %v6712 = vsub.f32 %v6660, %v6689
        %v6713 = vsub.f32 %v6661, %v6692
        %v6714 = vsub.f32 %v6662, %v6695
        %v6715 = vsub.f32 %v6663, %v6698
        %v6716 = vsub.f32 %v6664, %v6701
        %v6717 = vsub.f32 %v6665, %v6704
        %v6718 = vmul.f32 %v6705, 1.442695
        %v6719 = vpow.pop %v6718
        %v6720 = vmul.f32 %v6706, 1.442695
        %v6721 = vpow.pop %v6720
        %v6722 = vmul.f32 %v6707, 1.442695
        %v6723 = vpow.pop %v6722
        %v6724 = vmul.f32 %v6708, 1.442695
        %v6725 = vpow.pop %v6724
        %v6726 = vmul.f32 %v6709, 1.442695
        %v6727 = vpow.pop %v6726
        %v6728 = vmul.f32 %v6710, 1.442695
        %v6729 = vpow.pop %v6728
        %v6730 = vmul.f32 %v6711, 1.442695
        %v6731 = vpow.pop %v6730
        %v6732 = vmul.f32 %v6712, 1.442695
        %v6733 = vpow.pop %v6732
        %v6734 = vmul.f32 %v6713, 1.442695
        %v6735 = vpow.pop %v6734
        %v6736 = vmul.f32 %v6714, 1.442695
        %v6737 = vpow.pop %v6736
        %v6738 = vmul.f32 %v6715, 1.442695
        %v6739 = vpow.pop %v6738
        %v6740 = vmul.f32 %v6716, 1.442695
        %v6741 = vpow.pop %v6740
        %v6742 = vmul.f32 %v6717, 1.442695
        %v6743 = vpow.pop %v6742
        %v6744 = vsel %vm2104, %v6719, 0.0
        %6745 = vadd.xlane.f32.xlu0 %v6744
        %v6746 = vpop.xlane.xlu0 %6745
        %v6747 = vsel %vm2104, %v6721, 0.0
        %6748 = vadd.xlane.f32.xlu0 %v6747
        %v6749 = vpop.xlane.xlu0 %6748
        %v6750 = vsel %vm2104, %v6723, 0.0
        %6751 = vadd.xlane.f32.xlu0 %v6750
        %v6752 = vpop.xlane.xlu0 %6751
        %v6753 = vsel %vm2104, %v6725, 0.0
        %6754 = vadd.xlane.f32.xlu0 %v6753
        %v6755 = vpop.xlane.xlu0 %6754
        %v6756 = vsel %vm2104, %v6727, 0.0
        %6757 = vadd.xlane.f32.xlu0 %v6756
        %v6758 = vpop.xlane.xlu0 %6757
        %v6759 = vsel %vm2104, %v6729, 0.0
        %6760 = vadd.xlane.f32.xlu0 %v6759
        %v6761 = vpop.xlane.xlu0 %6760
        %v6762 = vsel %vm2104, %v6731, 0.0
        %6763 = vadd.xlane.f32.xlu0 %v6762
        %v6764 = vpop.xlane.xlu0 %6763
        %v6765 = vsel %vm2104, %v6733, 0.0
        %6766 = vadd.xlane.f32.xlu0 %v6765
        %v6767 = vpop.xlane.xlu0 %6766
        %v6768 = vsel %vm2104, %v6735, 0.0
        %6769 = vadd.xlane.f32.xlu0 %v6768
        %v6770 = vpop.xlane.xlu0 %6769
        %v6771 = vsel %vm2104, %v6737, 0.0
        %6772 = vadd.xlane.f32.xlu0 %v6771
        %v6773 = vpop.xlane.xlu0 %6772
        %v6774 = vsel %vm2104, %v6739, 0.0
        %6775 = vadd.xlane.f32.xlu0 %v6774
        %v6776 = vpop.xlane.xlu0 %6775
        %v6777 = vsel %vm2104, %v6741, 0.0
        %6778 = vadd.xlane.f32.xlu0 %v6777
        %v6779 = vpop.xlane.xlu0 %6778
        %v6780 = vsel %vm4541, %v6743, 0.0
        %6781 = vadd.xlane.f32.xlu0 %v6780
        %v6782 = vpop.xlane.xlu0 %6781
        %v6783 = vrcp.pop %v6746
        %v6784 = vrcp.pop %v6749
        %v6785 = vrcp.pop %v6752
        %v6786 = vrcp.pop %v6755
        %v6787 = vrcp.pop %v6758
        %v6788 = vrcp.pop %v6761
        %v6789 = vrcp.pop %v6764
        %v6790 = vrcp.pop %v6767
        %v6791 = vrcp.pop %v6770
        %v6792 = vrcp.pop %v6773
        %v6793 = vrcp.pop %v6776
        %v6794 = vrcp.pop %v6779
        %v6795 = vrcp.pop %v6782
        %v6796 = vmul.f32 %v6719, %v6783
        %v6797 = vmul.f32 %v6721, %v6784
        %v6798 = vmul.f32 %v6723, %v6785
        %v6799 = vmul.f32 %v6725, %v6786
        %v6800 = vmul.f32 %v6727, %v6787
        %v6801 = vmul.f32 %v6729, %v6788
        %v6802 = vmul.f32 %v6731, %v6789
        %v6803 = vmul.f32 %v6733, %v6790
        %v6804 = vmul.f32 %v6735, %v6791
        %v6805 = vmul.f32 %v6737, %v6792
        %v6806 = vmul.f32 %v6739, %v6793
        %v6807 = vmul.f32 %v6741, %v6794
        %v6808 = vmul.f32 %v6743, %v6795
        %6809 = vrot.lane.b32.xlu0 %v4276, 104
        %v6810 = vpop.permute.xlu0 %6809
        %6811 = vrot.lane.b32.xlu0 %v4281, 104
        %v6812 = vpop.permute.xlu0 %6811
        %6813 = vrot.lane.b32.xlu0 %v4286, 104
        %v6814 = vpop.permute.xlu0 %6813
        %6815 = vrot.lane.b32.xlu0 %v4291, 104
        %v6816 = vpop.permute.xlu0 %6815
        %v6821 = vsel %vm2104, %v6796, 0
        %v6824 = vsel %vm2104, %v6797, 0
        %v6827 = vsel %vm2104, %v6798, 0
        %v6830 = vsel %vm2104, %v6799, 0
        %v6833 = vsel %vm2104, %v6800, 0
        %v6836 = vsel %vm2104, %v6801, 0
        %v6839 = vsel %vm2104, %v6802, 0
        %v6842 = vsel %vm2104, %v6803, 0
        %v6845 = vsel %vm2104, %v6804, 0
        %v6848 = vsel %vm2104, %v6805, 0
        %v6851 = vsel %vm2104, %v6806, 0
        %v6854 = vsel %vm2104, %v6807, 0
        %v6857 = vsel %vm2104, %v6808, 0
        %v6859 = vsel %vm2162, %v6816, 0
        %6861 = vmatprep.subr.mxu0 0.0
        %6862 = vmatpush1.msra.mxu0 %v6810
        %6863 = vmatprep.subr.mxu0 0.0
        %6864 = vmatpush1.msra.mxu0 %v6812
        %6865 = vmatprep.subr.mxu0 0.0
        %6866 = vmatpush1.msra.mxu0 %v6814
        %6867 = vmatprep.subr.mxu0 0.0
        %6868 = vmatpush1.msra.mxu0 %v6859
        %6869 = vmatprep.subr.mxu0 0.0
        %6870 = vmatpush1.msra.mxu0 0.0
        %6871 = vmatprep.subr.mxu0 0.0
        %6872 = vmatpush1.msra.mxu0 0.0
        %6873 = vmatprep.subr.mxu0 0.0
        %6874 = vmatpush1.msra.mxu0 0.0
        %6875 = vmatprep.subr.mxu0 0.0
        %6876 = vmatpush1.msra.mxu0 0.0
        %6877 = vmatprep.subr.mxu0 0.0
        %6878 = vmatpush1.msra.mxu0 0.0
        %6879 = vmatprep.subr.mxu0 0.0
        %6880 = vmatpush1.msra.mxu0 0.0
        %6881 = vmatprep.subr.mxu0 0.0
        %6882 = vmatpush1.msra.mxu0 0.0
        %6883 = vmatprep.subr.mxu0 0.0
        %6884 = vmatpush1.msra.mxu0 0.0
        %6885 = vmatprep.subr.mxu0 0.0
        %6886 = vmatpush1.msra.mxu0 0.0
        %6887 = vmatprep.subr.mxu0 0.0
        %6888 = vmatpush1.msra.mxu0 0.0
        %6889 = vmatprep.subr.mxu0 0.0
        %6890 = vmatpush1.msra.mxu0 0.0
        %6891 = vmatprep.subr.mxu0 0.0
        %6892 = vmatpush1.msra.mxu0 0.0
        %6893 = vmatprep.subr.mxu0 0.0
        %6894 = vmatpush1.msra.mxu0 0.0
        %6895 = vmatprep.subr.mxu0 0.0
        %6896 = vmatpush1.msra.mxu0 0.0
        %6897 = vmatprep.subr.mxu0 0.0
        %6898 = vmatpush1.msra.mxu0 0.0
        %6899 = vmatprep.subr.mxu0 0.0
        %6900 = vmatpush1.msra.mxu0 0.0
        %6901 = vmatprep.subr.mxu0 0.0
        %6902 = vmatpush1.msra.mxu0 0.0
        %6903 = vmatprep.subr.mxu0 0.0
        %6904 = vmatpush1.msra.mxu0 0.0
        %6905 = vmatprep.subr.mxu0 0.0
        %6906 = vmatpush1.msra.mxu0 0.0
        %6907 = vmatprep.subr.mxu0 0.0
        %6908 = vmatpush1.msra.mxu0 0.0
        %6909 = vmatprep.subr.mxu0 0.0
        %6910 = vmatpush1.msra.mxu0 0.0
        %6911 = vmatprep.subr.mxu0 0.0
        %6912 = vmatpush1.msra.mxu0 0.0
        %6913 = vmatprep.subr.mxu0 0.0
        %6914 = vmatpush1.msra.mxu0 0.0
        %6915 = vmatprep.subr.mxu0 0.0
        %6916 = vmatpush1.msra.mxu0 0.0
        %6917 = vmatprep.subr.mxu0 0.0
        %6918 = vmatpush1.msra.mxu0 0.0
        %6919 = vmatprep.subr.mxu0 0.0
        %6920 = vmatpush1.msra.mxu0 0.0
        %6921 = vmatprep.subr.mxu0 0.0
        %6922 = vmatpush1.msra.mxu0 0.0
        %6923 = vmatprep.subr.mxu0 0.0
        %6924 = vmatpush1.msra.mxu0 0.0
        %6925 = vmatprep.mubr.f32.mxu0 0.0
        %6926 = vmatmul.mubr.f32.gmra.mrb[0].mxu0 %v6821
        %v6927 = vpop.f32.mrb[0].mxu0
        %v6928 = vadd.f32 0.0, %v6927
        %v6929 = vpop.f32.mrb[0].mxu0
        %6930 = vmatprep.mubr.f32.mxu0 0.0
        %6931 = vmatmul.mubr.f32.gmra.mrb[0].mxu0 %v6824
        %v6932 = vpop.f32.mrb[0].mxu0
        %v6933 = vadd.f32 0.0, %v6932
        %v6934 = vpop.f32.mrb[0].mxu0
        %6935 = vmatprep.mubr.f32.mxu0 0.0
        %6936 = vmatmul.mubr.f32.gmra.mrb[0].mxu0 %v6827
        %v6937 = vpop.f32.mrb[0].mxu0
        %v6938 = vadd.f32 0.0, %v6937
        %v6939 = vpop.f32.mrb[0].mxu0
        %6940 = vmatprep.mubr.f32.mxu0 0.0
        %6941 = vmatmul.mubr.f32.gmra.mrb[0].mxu0 %v6830
        %v6942 = vpop.f32.mrb[0].mxu0
        %v6943 = vadd.f32 0.0, %v6942
        %v6944 = vpop.f32.mrb[0].mxu0
        %6945 = vmatprep.mubr.f32.mxu0 0.0
        %6946 = vmatmul.mubr.f32.gmra.mrb[0].mxu0 %v6833
        %v6947 = vpop.f32.mrb[0].mxu0
        %v6948 = vadd.f32 0.0, %v6947
        %v6949 = vpop.f32.mrb[0].mxu0
        %6950 = vmatprep.mubr.f32.mxu0 0.0
        %6951 = vmatmul.mubr.f32.gmra.mrb[0].mxu0 %v6836
        %v6952 = vpop.f32.mrb[0].mxu0
        %v6953 = vadd.f32 0.0, %v6952
        %v6954 = vpop.f32.mrb[0].mxu0
        %6955 = vmatprep.mubr.f32.mxu0 0.0
        %6956 = vmatmul.mubr.f32.gmra.mrb[0].mxu0 %v6839
        %v6957 = vpop.f32.mrb[0].mxu0
        %v6958 = vadd.f32 0.0, %v6957
        %v6959 = vpop.f32.mrb[0].mxu0
        %6960 = vmatprep.mubr.f32.mxu0 0.0
        %6961 = vmatmul.mubr.f32.gmra.mrb[0].mxu0 %v6842
        %v6962 = vpop.f32.mrb[0].mxu0
        %v6963 = vadd.f32 0.0, %v6962
        %v6964 = vpop.f32.mrb[0].mxu0
        %6965 = vmatprep.mubr.f32.mxu0 0.0
        %6966 = vmatmul.mubr.f32.gmra.mrb[0].mxu0 %v6845
        %v6967 = vpop.f32.mrb[0].mxu0
        %v6968 = vadd.f32 0.0, %v6967
        %v6969 = vpop.f32.mrb[0].mxu0
        %6970 = vmatprep.mubr.f32.mxu0 0.0
        %6971 = vmatmul.mubr.f32.gmra.mrb[0].mxu0 %v6848
        %v6972 = vpop.f32.mrb[0].mxu0
        %v6973 = vadd.f32 0.0, %v6972
        %v6974 = vpop.f32.mrb[0].mxu0
        %6975 = vmatprep.mubr.f32.mxu0 0.0
        %6976 = vmatmul.mubr.f32.gmra.mrb[0].mxu0 %v6851
        %v6977 = vpop.f32.mrb[0].mxu0
        %v6978 = vadd.f32 0.0, %v6977
        %v6979 = vpop.f32.mrb[0].mxu0
        %6980 = vmatprep.mubr.f32.mxu0 0.0
        %6981 = vmatmul.mubr.f32.gmra.mrb[0].mxu0 %v6854
        %v6982 = vpop.f32.mrb[0].mxu0
        %v6983 = vadd.f32 0.0, %v6982
        %v6984 = vpop.f32.mrb[0].mxu0
        %6985 = vmatprep.mubr.f32.mxu0 0.0
        %6986 = vmatmul.mubr.f32.gmra.mrb[0].mxu0 %v6857
        %v6987 = vpop.f32.mrb[0].mxu0
        %v6988 = vadd.f32 0.0, %v6987
        %v6989 = vpop.f32.mrb[0].mxu0
        %6990 = vdwg.mxu0
        %v6992 = vsel %vm1986, %v6928, 0
        %v6995 = vsel %vm1986, %v6933, 0
        %v6998 = vsel %vm1986, %v6938, 0
        %v7001 = vsel %vm1986, %v6943, 0
        %v7004 = vsel %vm1986, %v6948, 0
        %v7007 = vsel %vm1986, %v6953, 0
        %v7010 = vsel %vm1986, %v6958, 0
        %v7013 = vsel %vm1986, %v6963, 0
        %v7016 = vsel %vm1986, %v6968, 0
        %v7019 = vsel %vm1986, %v6973, 0
        %v7022 = vsel %vm1986, %v6978, 0
        %v7025 = vsel %vm1986, %v6983, 0
        %v7028 = vsel %vm1986, %v6988, 0
        %7030 = vmatprep.subr.mxu0 0.0
        %7031 = vmatpush1.msra.mxu0 %v4297
        %7032 = vmatprep.subr.mxu0 0.0
        %7033 = vmatpush1.msra.mxu0 0.0
        %7034 = vmatprep.subr.mxu0 0.0
        %7035 = vmatpush1.msra.mxu0 0.0
        %7036 = vmatprep.subr.mxu0 0.0
        %7037 = vmatpush1.msra.mxu0 0.0
        %7038 = vmatprep.subr.mxu0 0.0
        %7039 = vmatpush1.msra.mxu0 0.0
        %7040 = vmatprep.subr.mxu0 0.0
        %7041 = vmatpush1.msra.mxu0 0.0
        %7042 = vmatprep.subr.mxu0 0.0
        %7043 = vmatpush1.msra.mxu0 0.0
        %7044 = vmatprep.subr.mxu0 0.0
        %7045 = vmatpush1.msra.mxu0 0.0
        %7046 = vmatprep.subr.mxu0 0.0
        %7047 = vmatpush1.msra.mxu0 0.0
        %7048 = vmatprep.subr.mxu0 0.0
        %7049 = vmatpush1.msra.mxu0 0.0
        %7050 = vmatprep.subr.mxu0 0.0
        %7051 = vmatpush1.msra.mxu0 0.0
        %7052 = vmatprep.subr.mxu0 0.0
        %7053 = vmatpush1.msra.mxu0 0.0
        %7054 = vmatprep.subr.mxu0 0.0
        %7055 = vmatpush1.msra.mxu0 0.0
        %7056 = vmatprep.subr.mxu0 0.0
        %7057 = vmatpush1.msra.mxu0 0.0
        %7058 = vmatprep.subr.mxu0 0.0
        %7059 = vmatpush1.msra.mxu0 0.0
        %7060 = vmatprep.subr.mxu0 0.0
        %7061 = vmatpush1.msra.mxu0 0.0
        %7062 = vmatprep.subr.mxu0 0.0
        %7063 = vmatpush1.msra.mxu0 0.0
        %7064 = vmatprep.subr.mxu0 0.0
        %7065 = vmatpush1.msra.mxu0 0.0
        %7066 = vmatprep.subr.mxu0 0.0
        %7067 = vmatpush1.msra.mxu0 0.0
        %7068 = vmatprep.subr.mxu0 0.0
        %7069 = vmatpush1.msra.mxu0 0.0
        %7070 = vmatprep.subr.mxu0 0.0
        %7071 = vmatpush1.msra.mxu0 0.0
        %7072 = vmatprep.subr.mxu0 0.0
        %7073 = vmatpush1.msra.mxu0 0.0
        %7074 = vmatprep.subr.mxu0 0.0
        %7075 = vmatpush1.msra.mxu0 0.0
        %7076 = vmatprep.subr.mxu0 0.0
        %7077 = vmatpush1.msra.mxu0 0.0
        %7078 = vmatprep.subr.mxu0 0.0
        %7079 = vmatpush1.msra.mxu0 0.0
        %7080 = vmatprep.subr.mxu0 0.0
        %7081 = vmatpush1.msra.mxu0 0.0
        %7082 = vmatprep.subr.mxu0 0.0
        %7083 = vmatpush1.msra.mxu0 0.0
        %7084 = vmatprep.subr.mxu0 0.0
        %7085 = vmatpush1.msra.mxu0 0.0
        %7086 = vmatprep.subr.mxu0 0.0
        %7087 = vmatpush1.msra.mxu0 0.0
        %7088 = vmatprep.subr.mxu0 0.0
        %7089 = vmatpush1.msra.mxu0 0.0
        %7090 = vmatprep.subr.mxu0 0.0
        %7091 = vmatpush1.msra.mxu0 0.0
        %7092 = vmatprep.subr.mxu0 0.0
        %7093 = vmatpush1.msra.mxu0 0.0
        %7094 = vmatprep.mubr.f32.mxu0 0.0
        %7095 = vmatmul.mubr.f32.gmra.mrb[0].mxu0 %v6992
        %v7096 = vpop.f32.mrb[0].mxu0
        %v7097 = vadd.f32 0.0, %v7096
        %v7098 = vpop.f32.mrb[0].mxu0
        %7099 = vmatprep.mubr.f32.mxu0 0.0
        %7100 = vmatmul.mubr.f32.gmra.mrb[0].mxu0 %v6995
        %v7101 = vpop.f32.mrb[0].mxu0
        %v7102 = vadd.f32 0.0, %v7101
        %v7103 = vpop.f32.mrb[0].mxu0
        %7104 = vmatprep.mubr.f32.mxu0 0.0
        %7105 = vmatmul.mubr.f32.gmra.mrb[0].mxu0 %v6998
        %v7106 = vpop.f32.mrb[0].mxu0
        %v7107 = vadd.f32 0.0, %v7106
        %v7108 = vpop.f32.mrb[0].mxu0
        %7109 = vmatprep.mubr.f32.mxu0 0.0
        %7110 = vmatmul.mubr.f32.gmra.mrb[0].mxu0 %v7001
        %v7111 = vpop.f32.mrb[0].mxu0
        %v7112 = vadd.f32 0.0, %v7111
        %v7113 = vpop.f32.mrb[0].mxu0
        %7114 = vmatprep.mubr.f32.mxu0 0.0
        %7115 = vmatmul.mubr.f32.gmra.mrb[0].mxu0 %v7004
        %v7116 = vpop.f32.mrb[0].mxu0
        %v7117 = vadd.f32 0.0, %v7116
        %v7118 = vpop.f32.mrb[0].mxu0
        %7119 = vmatprep.mubr.f32.mxu0 0.0
        %7120 = vmatmul.mubr.f32.gmra.mrb[0].mxu0 %v7007
        %v7121 = vpop.f32.mrb[0].mxu0
        %v7122 = vadd.f32 0.0, %v7121
        %v7123 = vpop.f32.mrb[0].mxu0
        %7124 = vmatprep.mubr.f32.mxu0 0.0
        %7125 = vmatmul.mubr.f32.gmra.mrb[0].mxu0 %v7010
        %v7126 = vpop.f32.mrb[0].mxu0
        %v7127 = vadd.f32 0.0, %v7126
        %v7128 = vpop.f32.mrb[0].mxu0
        %7129 = vmatprep.mubr.f32.mxu0 0.0
        %7130 = vmatmul.mubr.f32.gmra.mrb[0].mxu0 %v7013
        %v7131 = vpop.f32.mrb[0].mxu0
        %v7132 = vadd.f32 0.0, %v7131
        %v7133 = vpop.f32.mrb[0].mxu0
        %7134 = vmatprep.mubr.f32.mxu0 0.0
        %7135 = vmatmul.mubr.f32.gmra.mrb[0].mxu0 %v7016
        %v7136 = vpop.f32.mrb[0].mxu0
        %v7137 = vadd.f32 0.0, %v7136
        %v7138 = vpop.f32.mrb[0].mxu0
        %7139 = vmatprep.mubr.f32.mxu0 0.0
        %7140 = vmatmul.mubr.f32.gmra.mrb[0].mxu0 %v7019
        %v7141 = vpop.f32.mrb[0].mxu0
        %v7142 = vadd.f32 0.0, %v7141
        %v7143 = vpop.f32.mrb[0].mxu0
        %7144 = vmatprep.mubr.f32.mxu0 0.0
        %7145 = vmatmul.mubr.f32.gmra.mrb[0].mxu0 %v7022
        %v7146 = vpop.f32.mrb[0].mxu0
        %v7147 = vadd.f32 0.0, %v7146
        %v7148 = vpop.f32.mrb[0].mxu0
        %7149 = vmatprep.mubr.f32.mxu0 0.0
        %7150 = vmatmul.mubr.f32.gmra.mrb[0].mxu0 %v7025
        %v7151 = vpop.f32.mrb[0].mxu0
        %v7152 = vadd.f32 0.0, %v7151
        %v7153 = vpop.f32.mrb[0].mxu0
        %7154 = vmatprep.mubr.f32.mxu0 0.0
        %7155 = vmatmul.mubr.f32.gmra.mrb[0].mxu0 %v7028
        %v7156 = vpop.f32.mrb[0].mxu0
        %v7157 = vadd.f32 0.0, %v7156
        %v7158 = vpop.f32.mrb[0].mxu0
        %7159 = vdwg.mxu0
        %v7160 = vadd.f32 %v6429, %v7097
        %v7161 = vadd.f32 %v6430, %v7102
        %v7162 = vadd.f32 %v6431, %v7107
        %v7163 = vadd.f32 %v6432, %v7112
        %v7164 = vadd.f32 %v6433, %v7117
        %v7165 = vadd.f32 %v6434, %v7122
        %v7166 = vadd.f32 %v6435, %v7127
        %v7167 = vadd.f32 %v6436, %v7132
        %v7168 = vadd.f32 %v6437, %v7137
        %v7169 = vadd.f32 %v6438, %v7142
        %v7170 = vadd.f32 %v6439, %v7147
        %v7171 = vadd.f32 %v6440, %v7152
        %v7172 = vadd.f32 %v6441, %v7157
        %v7173 = vld [vmem:[#allocation7] sm:$0x1]
        %v7175 = vlaneseq
        %v7176 = vshrl.u32 %v7175, 7
        %v7177 = vsub.s32 0, %v7176
        %v7178 = vrot.slane %v7173, %v7177
        %v7180 = vadd.f32 %v7160, %v7178
        %v7181 = vadd.f32 %v7161, %v7178
        %v7182 = vadd.f32 %v7162, %v7178
        %v7183 = vadd.f32 %v7163, %v7178
        %v7184 = vadd.f32 %v7164, %v7178
        %v7185 = vadd.f32 %v7165, %v7178
        %v7186 = vadd.f32 %v7166, %v7178
        %v7187 = vadd.f32 %v7167, %v7178
        %v7188 = vadd.f32 %v7168, %v7178
        %v7189 = vadd.f32 %v7169, %v7178
        %v7190 = vadd.f32 %v7170, %v7178
        %v7191 = vadd.f32 %v7171, %v7178
        %v7192 = vadd.f32 %v7172, %v7178
        %v7193 = vld [vmem:[%s9] sm:$0xff]
        %v7194 = vld [vmem:[%s9 + $0x8] sm:$0xff]
        %v7195 = vld [vmem:[%s9 + $0x10] sm:$0xff]
        %v7196 = vld [vmem:[%s9 + $0x18] sm:$0x3f]
        %v7197 = vld [vmem:[%s43] sm:$0xff]
        %v7198 = vld [vmem:[%s43 + $0x8] sm:$0xff]
        %v7199 = vld [vmem:[%s43 + $0x10] sm:$0xff]
        %v7200 = vld [vmem:[%s43 + $0x18] sm:$0xff]
        %v7201 = vld [vmem:[#allocation9] sm:$0x1]
        %v7203 = vlaneseq
        %v7204 = vshrl.u32 %v7203, 7
        %v7205 = vsub.s32 0, %v7204
        %v7206 = vrot.slane %v7201, %v7205
        %7208 = vmatprep.subr.mxu0 0.0
        %7209 = vmatpush1.msra.mxu0 %v7197
        %7210 = vmatprep.subr.mxu0 0.0
        %7211 = vmatpush1.msra.mxu0 %v7198
        %7212 = vmatprep.subr.mxu0 0.0
        %7213 = vmatpush1.msra.mxu0 %v7199
        %7214 = vmatprep.subr.mxu0 0.0
        %7215 = vmatpush1.msra.mxu0 %v7200
        %7216 = vmatprep.subr.mxu0 0.0
        %7217 = vmatpush1.msra.mxu0 0.0
        %7218 = vmatprep.subr.mxu0 0.0
        %7219 = vmatpush1.msra.mxu0 0.0
        %7220 = vmatprep.subr.mxu0 0.0
        %7221 = vmatpush1.msra.mxu0 0.0
        %7222 = vmatprep.subr.mxu0 0.0
        %7223 = vmatpush1.msra.mxu0 0.0
        %7224 = vmatprep.subr.mxu0 0.0
        %7225 = vmatpush1.msra.mxu0 0.0
        %7226 = vmatprep.subr.mxu0 0.0
        %7227 = vmatpush1.msra.mxu0 0.0
        %7228 = vmatprep.subr.mxu0 0.0
        %7229 = vmatpush1.msra.mxu0 0.0
        %7230 = vmatprep.subr.mxu0 0.0
        %7231 = vmatpush1.msra.mxu0 0.0
        %7232 = vmatprep.subr.mxu0 0.0
        %7233 = vmatpush1.msra.mxu0 0.0
        %7234 = vmatprep.subr.mxu0 0.0
        %7235 = vmatpush1.msra.mxu0 0.0
        %7236 = vmatprep.subr.mxu0 0.0
        %7237 = vmatpush1.msra.mxu0 0.0
        %7238 = vmatprep.subr.mxu0 0.0
        %7239 = vmatpush1.msra.mxu0 0.0
        %7240 = vmatprep.subr.mxu0 0.0
        %7241 = vmatpush1.msra.mxu0 0.0
        %7242 = vmatprep.subr.mxu0 0.0
        %7243 = vmatpush1.msra.mxu0 0.0
        %7244 = vmatprep.subr.mxu0 0.0
        %7245 = vmatpush1.msra.mxu0 0.0
        %7246 = vmatprep.subr.mxu0 0.0
        %7247 = vmatpush1.msra.mxu0 0.0
        %7248 = vmatprep.subr.mxu0 0.0
        %7249 = vmatpush1.msra.mxu0 0.0
        %7250 = vmatprep.subr.mxu0 0.0
        %7251 = vmatpush1.msra.mxu0 0.0
        %7252 = vmatprep.subr.mxu0 0.0
        %7253 = vmatpush1.msra.mxu0 0.0
        %7254 = vmatprep.subr.mxu0 0.0
        %7255 = vmatpush1.msra.mxu0 0.0
        %7256 = vmatprep.subr.mxu0 0.0
        %7257 = vmatpush1.msra.mxu0 0.0
        %7258 = vmatprep.subr.mxu0 0.0
        %7259 = vmatpush1.msra.mxu0 0.0
        %7260 = vmatprep.subr.mxu0 0.0
        %7261 = vmatpush1.msra.mxu0 0.0
        %7262 = vmatprep.subr.mxu0 0.0
        %7263 = vmatpush1.msra.mxu0 0.0
        %7264 = vmatprep.subr.mxu0 0.0
        %7265 = vmatpush1.msra.mxu0 0.0
        %7266 = vmatprep.subr.mxu0 0.0
        %7267 = vmatpush1.msra.mxu0 0.0
        %7268 = vmatprep.subr.mxu0 0.0
        %7269 = vmatpush1.msra.mxu0 0.0
        %7270 = vmatprep.subr.mxu0 0.0
        %7271 = vmatpush1.msra.mxu0 0.0
        %7272 = vmatprep.mubr.f32.mxu0 0.0
        %7273 = vmatmul.mubr.f32.gmra.mrb[0].mxu0 %v4102
        %v7274 = vpop.f32.mrb[0].mxu0
        %v7275 = vadd.f32 %v7206, %v7274
        %v7276 = vpop.f32.mrb[0].mxu0
        %7277 = vmatprep.mubr.f32.mxu0 0.0
        %7278 = vmatmul.mubr.f32.gmra.mrb[0].mxu0 %v4105
        %v7279 = vpop.f32.mrb[0].mxu0
        %v7280 = vadd.f32 %v7206, %v7279
        %v7281 = vpop.f32.mrb[0].mxu0
        %7282 = vmatprep.mubr.f32.mxu0 0.0
        %7283 = vmatmul.mubr.f32.gmra.mrb[0].mxu0 %v4108
        %v7284 = vpop.f32.mrb[0].mxu0
        %v7285 = vadd.f32 %v7206, %v7284
        %v7286 = vpop.f32.mrb[0].mxu0
        %7287 = vmatprep.mubr.f32.mxu0 0.0
        %7288 = vmatmul.mubr.f32.gmra.mrb[0].mxu0 %v4111
        %v7289 = vpop.f32.mrb[0].mxu0
        %v7290 = vadd.f32 %v7206, %v7289
        %v7291 = vpop.f32.mrb[0].mxu0
        %7292 = vdwg.mxu0
        %v7293 = vld [vmem:[%s47] sm:$0xff]
        %v7294 = vld [vmem:[%s47 + $0x8] sm:$0xff]
        %v7295 = vld [vmem:[%s47 + $0x10] sm:$0xff]
        %v7296 = vld [vmem:[%s47 + $0x18] sm:$0xff]
        %v7297 = vld [vmem:[#allocation10] sm:$0x1]
        %v7299 = vlaneseq
        %v7300 = vshrl.u32 %v7299, 7
        %v7301 = vsub.s32 0, %v7300
        %v7302 = vrot.slane %v7297, %v7301
        %v7305 = vsel %vm1692, %v7180, 0
        %v7308 = vsel %vm1692, %v7181, 0
        %v7311 = vsel %vm1692, %v7182, 0
        %v7314 = vsel %vm1692, %v7183, 0
        %v7317 = vsel %vm1692, %v7184, 0
        %v7320 = vsel %vm1692, %v7185, 0
        %v7323 = vsel %vm1692, %v7186, 0
        %v7326 = vsel %vm1692, %v7187, 0
        %v7329 = vsel %vm1692, %v7188, 0
        %v7332 = vsel %vm1692, %v7189, 0
        %v7335 = vsel %vm1692, %v7190, 0
        %v7338 = vsel %vm1692, %v7191, 0
        %v7341 = vsel %vm1692, %v7192, 0
        %7343 = vmatprep.subr.mxu0 0.0
        %7344 = vmatpush1.msra.mxu0 %v7293
        %7345 = vmatprep.subr.mxu0 0.0
        %7346 = vmatpush1.msra.mxu0 %v7294
        %7347 = vmatprep.subr.mxu0 0.0
        %7348 = vmatpush1.msra.mxu0 %v7295
        %7349 = vmatprep.subr.mxu0 0.0
        %7350 = vmatpush1.msra.mxu0 %v7296
        %7351 = vmatprep.subr.mxu0 0.0
        %7352 = vmatpush1.msra.mxu0 0.0
        %7353 = vmatprep.subr.mxu0 0.0
        %7354 = vmatpush1.msra.mxu0 0.0
        %7355 = vmatprep.subr.mxu0 0.0
        %7356 = vmatpush1.msra.mxu0 0.0
        %7357 = vmatprep.subr.mxu0 0.0
        %7358 = vmatpush1.msra.mxu0 0.0
        %7359 = vmatprep.subr.mxu0 0.0
        %7360 = vmatpush1.msra.mxu0 0.0
        %7361 = vmatprep.subr.mxu0 0.0
        %7362 = vmatpush1.msra.mxu0 0.0
        %7363 = vmatprep.subr.mxu0 0.0
        %7364 = vmatpush1.msra.mxu0 0.0
        %7365 = vmatprep.subr.mxu0 0.0
        %7366 = vmatpush1.msra.mxu0 0.0
        %7367 = vmatprep.subr.mxu0 0.0
        %7368 = vmatpush1.msra.mxu0 0.0
        %7369 = vmatprep.subr.mxu0 0.0
        %7370 = vmatpush1.msra.mxu0 0.0
        %7371 = vmatprep.subr.mxu0 0.0
        %7372 = vmatpush1.msra.mxu0 0.0
        %7373 = vmatprep.subr.mxu0 0.0
        %7374 = vmatpush1.msra.mxu0 0.0
        %7375 = vmatprep.subr.mxu0 0.0
        %7376 = vmatpush1.msra.mxu0 0.0
        %7377 = vmatprep.subr.mxu0 0.0
        %7378 = vmatpush1.msra.mxu0 0.0
        %7379 = vmatprep.subr.mxu0 0.0
        %7380 = vmatpush1.msra.mxu0 0.0
        %7381 = vmatprep.subr.mxu0 0.0
        %7382 = vmatpush1.msra.mxu0 0.0
        %7383 = vmatprep.subr.mxu0 0.0
        %7384 = vmatpush1.msra.mxu0 0.0
        %7385 = vmatprep.subr.mxu0 0.0
        %7386 = vmatpush1.msra.mxu0 0.0
        %7387 = vmatprep.subr.mxu0 0.0
        %7388 = vmatpush1.msra.mxu0 0.0
        %7389 = vmatprep.subr.mxu0 0.0
        %7390 = vmatpush1.msra.mxu0 0.0
        %7391 = vmatprep.subr.mxu0 0.0
        %7392 = vmatpush1.msra.mxu0 0.0
        %7393 = vmatprep.subr.mxu0 0.0
        %7394 = vmatpush1.msra.mxu0 0.0
        %7395 = vmatprep.subr.mxu0 0.0
        %7396 = vmatpush1.msra.mxu0 0.0
        %7397 = vmatprep.subr.mxu0 0.0
        %7398 = vmatpush1.msra.mxu0 0.0
        %7399 = vmatprep.subr.mxu0 0.0
        %7400 = vmatpush1.msra.mxu0 0.0
        %7401 = vmatprep.subr.mxu0 0.0
        %7402 = vmatpush1.msra.mxu0 0.0
        %7403 = vmatprep.subr.mxu0 0.0
        %7404 = vmatpush1.msra.mxu0 0.0
        %7405 = vmatprep.subr.mxu0 0.0
        %7406 = vmatpush1.msra.mxu0 0.0
        %7407 = vmatprep.mubr.f32.mxu0 0.0
        %7408 = vmatmul.mubr.f32.gmra.mrb[0].mxu0 %v7305
        %v7409 = vpop.f32.mrb[0].mxu0
        %v7410 = vadd.f32 %v7302, %v7409
        %v7411 = vpop.f32.mrb[0].mxu0
        %7412 = vmatprep.mubr.f32.mxu0 0.0
        %7413 = vmatmul.mubr.f32.gmra.mrb[0].mxu0 %v7308
        %v7414 = vpop.f32.mrb[0].mxu0
        %v7415 = vadd.f32 %v7302, %v7414
        %v7416 = vpop.f32.mrb[0].mxu0
        %7417 = vmatprep.mubr.f32.mxu0 0.0
        %7418 = vmatmul.mubr.f32.gmra.mrb[0].mxu0 %v7311
        %v7419 = vpop.f32.mrb[0].mxu0
        %v7420 = vadd.f32 %v7302, %v7419
        %v7421 = vpop.f32.mrb[0].mxu0
        %7422 = vmatprep.mubr.f32.mxu0 0.0
        %7423 = vmatmul.mubr.f32.gmra.mrb[0].mxu0 %v7314
        %v7424 = vpop.f32.mrb[0].mxu0
        %v7425 = vadd.f32 %v7302, %v7424
        %v7426 = vpop.f32.mrb[0].mxu0
        %7427 = vmatprep.mubr.f32.mxu0 0.0
        %7428 = vmatmul.mubr.f32.gmra.mrb[0].mxu0 %v7317
        %v7429 = vpop.f32.mrb[0].mxu0
        %v7430 = vadd.f32 %v7302, %v7429
        %v7431 = vpop.f32.mrb[0].mxu0
        %7432 = vmatprep.mubr.f32.mxu0 0.0
        %7433 = vmatmul.mubr.f32.gmra.mrb[0].mxu0 %v7320
        %v7434 = vpop.f32.mrb[0].mxu0
        %v7435 = vadd.f32 %v7302, %v7434
        %v7436 = vpop.f32.mrb[0].mxu0
        %7437 = vmatprep.mubr.f32.mxu0 0.0
        %7438 = vmatmul.mubr.f32.gmra.mrb[0].mxu0 %v7323
        %v7439 = vpop.f32.mrb[0].mxu0
        %v7440 = vadd.f32 %v7302, %v7439
        %v7441 = vpop.f32.mrb[0].mxu0
        %7442 = vmatprep.mubr.f32.mxu0 0.0
        %7443 = vmatmul.mubr.f32.gmra.mrb[0].mxu0 %v7326
        %v7444 = vpop.f32.mrb[0].mxu0
        %v7445 = vadd.f32 %v7302, %v7444
        %v7446 = vpop.f32.mrb[0].mxu0
        %7447 = vmatprep.mubr.f32.mxu0 0.0
        %7448 = vmatmul.mubr.f32.gmra.mrb[0].mxu0 %v7329
        %v7449 = vpop.f32.mrb[0].mxu0
        %v7450 = vadd.f32 %v7302, %v7449
        %v7451 = vpop.f32.mrb[0].mxu0
        %7452 = vmatprep.mubr.f32.mxu0 0.0
        %7453 = vmatmul.mubr.f32.gmra.mrb[0].mxu0 %v7332
        %v7454 = vpop.f32.mrb[0].mxu0
        %v7455 = vadd.f32 %v7302, %v7454
        %v7456 = vpop.f32.mrb[0].mxu0
        %7457 = vmatprep.mubr.f32.mxu0 0.0
        %7458 = vmatmul.mubr.f32.gmra.mrb[0].mxu0 %v7335
        %v7459 = vpop.f32.mrb[0].mxu0
        %v7460 = vadd.f32 %v7302, %v7459
        %v7461 = vpop.f32.mrb[0].mxu0
        %7462 = vmatprep.mubr.f32.mxu0 0.0
        %7463 = vmatmul.mubr.f32.gmra.mrb[0].mxu0 %v7338
        %v7464 = vpop.f32.mrb[0].mxu0
        %v7465 = vadd.f32 %v7302, %v7464
        %v7466 = vpop.f32.mrb[0].mxu0
        %7467 = vmatprep.mubr.f32.mxu0 0.0
        %7468 = vmatmul.mubr.f32.gmra.mrb[0].mxu0 %v7341
        %v7469 = vpop.f32.mrb[0].mxu0
        %v7470 = vadd.f32 %v7302, %v7469
        %v7471 = vpop.f32.mrb[0].mxu0
        %7472 = vdwg.mxu0
        %v7473 = vld [vmem:[#allocation12] sm:$0xff]
        %v7474 = vld [vmem:[#allocation12 + $0x8] sm:$0xff]
        %v7475 = vld [vmem:[#allocation12 + $0x10] sm:$0xff]
        %v7476 = vld [vmem:[#allocation12 + $0x18] sm:$0xff]
        %v7477 = vld [vmem:[#allocation13] sm:$0x1]
        %v7479 = vlaneseq
        %v7480 = vshrl.u32 %v7479, 7
        %v7481 = vsub.s32 0, %v7480
        %v7482 = vrot.slane %v7477, %v7481
        %7484 = vmatprep.subr.mxu0 0.0
        %7485 = vmatpush1.msra.mxu0 %v7473
        %7486 = vmatprep.subr.mxu0 0.0
        %7487 = vmatpush1.msra.mxu0 %v7474
        %7488 = vmatprep.subr.mxu0 0.0
        %7489 = vmatpush1.msra.mxu0 %v7475
        %7490 = vmatprep.subr.mxu0 0.0
        %7491 = vmatpush1.msra.mxu0 %v7476
        %7492 = vmatprep.subr.mxu0 0.0
        %7493 = vmatpush1.msra.mxu0 0.0
        %7494 = vmatprep.subr.mxu0 0.0
        %7495 = vmatpush1.msra.mxu0 0.0
        %7496 = vmatprep.subr.mxu0 0.0
        %7497 = vmatpush1.msra.mxu0 0.0
        %7498 = vmatprep.subr.mxu0 0.0
        %7499 = vmatpush1.msra.mxu0 0.0
        %7500 = vmatprep.subr.mxu0 0.0
        %7501 = vmatpush1.msra.mxu0 0.0
        %7502 = vmatprep.subr.mxu0 0.0
        %7503 = vmatpush1.msra.mxu0 0.0
        %7504 = vmatprep.subr.mxu0 0.0
        %7505 = vmatpush1.msra.mxu0 0.0
        %7506 = vmatprep.subr.mxu0 0.0
        %7507 = vmatpush1.msra.mxu0 0.0
        %7508 = vmatprep.subr.mxu0 0.0
        %7509 = vmatpush1.msra.mxu0 0.0
        %7510 = vmatprep.subr.mxu0 0.0
        %7511 = vmatpush1.msra.mxu0 0.0
        %7512 = vmatprep.subr.mxu0 0.0
        %7513 = vmatpush1.msra.mxu0 0.0
        %7514 = vmatprep.subr.mxu0 0.0
        %7515 = vmatpush1.msra.mxu0 0.0
        %7516 = vmatprep.subr.mxu0 0.0
        %7517 = vmatpush1.msra.mxu0 0.0
        %7518 = vmatprep.subr.mxu0 0.0
        %7519 = vmatpush1.msra.mxu0 0.0
        %7520 = vmatprep.subr.mxu0 0.0
        %7521 = vmatpush1.msra.mxu0 0.0
        %7522 = vmatprep.subr.mxu0 0.0
        %7523 = vmatpush1.msra.mxu0 0.0
        %7524 = vmatprep.subr.mxu0 0.0
        %7525 = vmatpush1.msra.mxu0 0.0
        %7526 = vmatprep.subr.mxu0 0.0
        %7527 = vmatpush1.msra.mxu0 0.0
        %7528 = vmatprep.subr.mxu0 0.0
        %7529 = vmatpush1.msra.mxu0 0.0
        %7530 = vmatprep.subr.mxu0 0.0
        %7531 = vmatpush1.msra.mxu0 0.0
        %7532 = vmatprep.subr.mxu0 0.0
        %7533 = vmatpush1.msra.mxu0 0.0
        %7534 = vmatprep.subr.mxu0 0.0
        %7535 = vmatpush1.msra.mxu0 0.0
        %7536 = vmatprep.subr.mxu0 0.0
        %7537 = vmatpush1.msra.mxu0 0.0
        %7538 = vmatprep.subr.mxu0 0.0
        %7539 = vmatpush1.msra.mxu0 0.0
        %7540 = vmatprep.subr.mxu0 0.0
        %7541 = vmatpush1.msra.mxu0 0.0
        %7542 = vmatprep.subr.mxu0 0.0
        %7543 = vmatpush1.msra.mxu0 0.0
        %7544 = vmatprep.subr.mxu0 0.0
        %7545 = vmatpush1.msra.mxu0 0.0
        %7546 = vmatprep.subr.mxu0 0.0
        %7547 = vmatpush1.msra.mxu0 0.0
        %7548 = vmatprep.mubr.f32.mxu0 0.0
        %7549 = vmatmul.mubr.f32.gmra.mrb[0].mxu0 %v7305
        %v7550 = vpop.f32.mrb[0].mxu0
        %v7551 = vadd.f32 %v7482, %v7550
        %v7552 = vpop.f32.mrb[0].mxu0
        %7553 = vmatprep.mubr.f32.mxu0 0.0
        %7554 = vmatmul.mubr.f32.gmra.mrb[0].mxu0 %v7308
        %v7555 = vpop.f32.mrb[0].mxu0
        %v7556 = vadd.f32 %v7482, %v7555
        %v7557 = vpop.f32.mrb[0].mxu0
        %7558 = vmatprep.mubr.f32.mxu0 0.0
        %7559 = vmatmul.mubr.f32.gmra.mrb[0].mxu0 %v7311
        %v7560 = vpop.f32.mrb[0].mxu0
        %v7561 = vadd.f32 %v7482, %v7560
        %v7562 = vpop.f32.mrb[0].mxu0
        %7563 = vmatprep.mubr.f32.mxu0 0.0
        %7564 = vmatmul.mubr.f32.gmra.mrb[0].mxu0 %v7314
        %v7565 = vpop.f32.mrb[0].mxu0
        %v7566 = vadd.f32 %v7482, %v7565
        %v7567 = vpop.f32.mrb[0].mxu0
        %7568 = vmatprep.mubr.f32.mxu0 0.0
        %7569 = vmatmul.mubr.f32.gmra.mrb[0].mxu0 %v7317
        %v7570 = vpop.f32.mrb[0].mxu0
        %v7571 = vadd.f32 %v7482, %v7570
        %v7572 = vpop.f32.mrb[0].mxu0
        %7573 = vmatprep.mubr.f32.mxu0 0.0
        %7574 = vmatmul.mubr.f32.gmra.mrb[0].mxu0 %v7320
        %v7575 = vpop.f32.mrb[0].mxu0
        %v7576 = vadd.f32 %v7482, %v7575
        %v7577 = vpop.f32.mrb[0].mxu0
        %7578 = vmatprep.mubr.f32.mxu0 0.0
        %7579 = vmatmul.mubr.f32.gmra.mrb[0].mxu0 %v7323
        %v7580 = vpop.f32.mrb[0].mxu0
        %v7581 = vadd.f32 %v7482, %v7580
        %v7582 = vpop.f32.mrb[0].mxu0
        %7583 = vmatprep.mubr.f32.mxu0 0.0
        %7584 = vmatmul.mubr.f32.gmra.mrb[0].mxu0 %v7326
        %v7585 = vpop.f32.mrb[0].mxu0
        %v7586 = vadd.f32 %v7482, %v7585
        %v7587 = vpop.f32.mrb[0].mxu0
        %7588 = vmatprep.mubr.f32.mxu0 0.0
        %7589 = vmatmul.mubr.f32.gmra.mrb[0].mxu0 %v7329
        %v7590 = vpop.f32.mrb[0].mxu0
        %v7591 = vadd.f32 %v7482, %v7590
        %v7592 = vpop.f32.mrb[0].mxu0
        %7593 = vmatprep.mubr.f32.mxu0 0.0
        %7594 = vmatmul.mubr.f32.gmra.mrb[0].mxu0 %v7332
        %v7595 = vpop.f32.mrb[0].mxu0
        %v7596 = vadd.f32 %v7482, %v7595
        %v7597 = vpop.f32.mrb[0].mxu0
        %7598 = vmatprep.mubr.f32.mxu0 0.0
        %7599 = vmatmul.mubr.f32.gmra.mrb[0].mxu0 %v7335
        %v7600 = vpop.f32.mrb[0].mxu0
        %v7601 = vadd.f32 %v7482, %v7600
        %v7602 = vpop.f32.mrb[0].mxu0
        %7603 = vmatprep.mubr.f32.mxu0 0.0
        %7604 = vmatmul.mubr.f32.gmra.mrb[0].mxu0 %v7338
        %v7605 = vpop.f32.mrb[0].mxu0
        %v7606 = vadd.f32 %v7482, %v7605
        %v7607 = vpop.f32.mrb[0].mxu0
        %7608 = vmatprep.mubr.f32.mxu0 0.0
        %7609 = vmatmul.mubr.f32.gmra.mrb[0].mxu0 %v7341
        %v7610 = vpop.f32.mrb[0].mxu0
        %v7611 = vadd.f32 %v7482, %v7610
        %v7612 = vpop.f32.mrb[0].mxu0
        %7613 = vdwg.mxu0
        %v7614 = vld [vmem:[#allocation15] sm:$0xff]
        %v7615 = vld [vmem:[#allocation15 + $0x8] sm:$0xff]
        %v7616 = vld [vmem:[#allocation15 + $0x10] sm:$0xff]
        %v7617 = vld [vmem:[#allocation15 + $0x18] sm:$0xff]
        %v7619 = vsel %vm1986, %v7275, 0
        %v7622 = vsel %vm1986, %v7280, 0
        %v7625 = vsel %vm1986, %v7285, 0
        %v7628 = vsel %vm1986, %v7290, 0
        %v7631 = vsel %vm1986, %v7410, 0
        %v7634 = vsel %vm1986, %v7415, 0
        %v7637 = vsel %vm1986, %v7420, 0
        %v7640 = vsel %vm1986, %v7425, 0
        %v7643 = vsel %vm1986, %v7430, 0
        %v7646 = vsel %vm1986, %v7435, 0
        %v7649 = vsel %vm1986, %v7440, 0
        %v7652 = vsel %vm1986, %v7445, 0
        %v7655 = vsel %vm1986, %v7450, 0
        %v7658 = vsel %vm1986, %v7455, 0
        %v7661 = vsel %vm1986, %v7460, 0
        %v7664 = vsel %vm1986, %v7465, 0
        %v7667 = vsel %vm1986, %v7470, 0
        %7669 = vmatprep.subr.mxu0 0.0
        %7670 = vmatpush1.xpose.msra.mxu0 %v7631
        %7671 = vmatprep.subr.mxu0 0.0
        %7672 = vmatpush1.xpose.msra.mxu0 %v7634
        %7673 = vmatprep.subr.mxu0 0.0
        %7674 = vmatpush1.xpose.msra.mxu0 %v7637
        %7675 = vmatprep.subr.mxu0 0.0
        %7676 = vmatpush1.xpose.msra.mxu0 %v7640
        %7677 = vmatprep.subr.mxu0 0.0
        %7678 = vmatpush1.xpose.msra.mxu0 %v7643
        %7679 = vmatprep.subr.mxu0 0.0
        %7680 = vmatpush1.xpose.msra.mxu0 %v7646
        %7681 = vmatprep.subr.mxu0 0.0
        %7682 = vmatpush1.xpose.msra.mxu0 %v7649
        %7683 = vmatprep.subr.mxu0 0.0
        %7684 = vmatpush1.xpose.msra.mxu0 %v7652
        %7685 = vmatprep.subr.mxu0 0.0
        %7686 = vmatpush1.xpose.msra.mxu0 %v7655
        %7687 = vmatprep.subr.mxu0 0.0
        %7688 = vmatpush1.xpose.msra.mxu0 %v7658
        %7689 = vmatprep.subr.mxu0 0.0
        %7690 = vmatpush1.xpose.msra.mxu0 %v7661
        %7691 = vmatprep.subr.mxu0 0.0
        %7692 = vmatpush1.xpose.msra.mxu0 %v7664
        %7693 = vmatprep.subr.mxu0 0.0
        %7694 = vmatpush1.xpose.msra.mxu0 %v7667
        %7695 = vmatprep.subr.mxu0 0.0
        %7696 = vmatpush1.xpose.msra.mxu0 0.0
        %7697 = vmatprep.subr.mxu0 0.0
        %7698 = vmatpush1.xpose.msra.mxu0 0.0
        %7699 = vmatprep.subr.mxu0 0.0
        %7700 = vmatpush1.xpose.msra.mxu0 0.0
        %7701 = vmatprep.subr.mxu0 0.0
        %7702 = vmatpush1.xpose.msra.mxu0 0.0
        %7703 = vmatprep.subr.mxu0 0.0
        %7704 = vmatpush1.xpose.msra.mxu0 0.0
        %7705 = vmatprep.subr.mxu0 0.0
        %7706 = vmatpush1.xpose.msra.mxu0 0.0
        %7707 = vmatprep.subr.mxu0 0.0
        %7708 = vmatpush1.xpose.msra.mxu0 0.0
        %7709 = vmatprep.subr.mxu0 0.0
        %7710 = vmatpush1.xpose.msra.mxu0 0.0
        %7711 = vmatprep.subr.mxu0 0.0
        %7712 = vmatpush1.xpose.msra.mxu0 0.0
        %7713 = vmatprep.subr.mxu0 0.0
        %7714 = vmatpush1.xpose.msra.mxu0 0.0
        %7715 = vmatprep.subr.mxu0 0.0
        %7716 = vmatpush1.xpose.msra.mxu0 0.0
        %7717 = vmatprep.subr.mxu0 0.0
        %7718 = vmatpush1.xpose.msra.mxu0 0.0
        %7719 = vmatprep.subr.mxu0 0.0
        %7720 = vmatpush1.xpose.msra.mxu0 0.0
        %7721 = vmatprep.subr.mxu0 0.0
        %7722 = vmatpush1.xpose.msra.mxu0 0.0
        %7723 = vmatprep.subr.mxu0 0.0
        %7724 = vmatpush1.xpose.msra.mxu0 0.0
        %7725 = vmatprep.subr.mxu0 0.0
        %7726 = vmatpush1.xpose.msra.mxu0 0.0
        %7727 = vmatprep.subr.mxu0 0.0
        %7728 = vmatpush1.xpose.msra.mxu0 0.0
        %7729 = vmatprep.subr.mxu0 0.0
        %7730 = vmatpush1.xpose.msra.mxu0 0.0
        %7731 = vmatprep.subr.mxu0 0.0
        %7732 = vmatpush1.xpose.msra.mxu0 0.0
        %7733 = vmatprep.mubr.f32.mxu0 0.0
        %7734 = vmatmul.mubr.f32.gmra.mrb[0].mxu0 %v7619
        %v7735 = vpop.f32.mrb[0].mxu0
        %v7736 = vadd.f32 0.0, %v7735
        %v7737 = vpop.f32.mrb[0].mxu0
        %7738 = vmatprep.mubr.f32.mxu0 0.0
        %7739 = vmatmul.mubr.f32.gmra.mrb[0].mxu0 %v7622
        %v7740 = vpop.f32.mrb[0].mxu0
        %v7741 = vadd.f32 0.0, %v7740
        %v7742 = vpop.f32.mrb[0].mxu0
        %7743 = vmatprep.mubr.f32.mxu0 0.0
        %7744 = vmatmul.mubr.f32.gmra.mrb[0].mxu0 %v7625
        %v7745 = vpop.f32.mrb[0].mxu0
        %v7746 = vadd.f32 0.0, %v7745
        %v7747 = vpop.f32.mrb[0].mxu0
        %7748 = vmatprep.mubr.f32.mxu0 0.0
        %7749 = vmatmul.mubr.f32.gmra.mrb[0].mxu0 %v7628
        %v7750 = vpop.f32.mrb[0].mxu0
        %v7751 = vadd.f32 0.0, %v7750
        %v7752 = vpop.f32.mrb[0].mxu0
        %7753 = vdwg.mxu0
        %v7754 = vmul.f32 %v7736, 0.35355338
        %v7755 = vmul.f32 %v7741, 0.35355338
        %v7756 = vmul.f32 %v7746, 0.35355338
        %v7757 = vmul.f32 %v7751, 0.35355338
        %v7758 = vadd.f32 %v7754, %v7193
        %v7759 = vadd.f32 %v7755, %v7194
        %v7760 = vadd.f32 %v7756, %v7195
        %v7761 = vadd.f32 %v7757, %v7196
        %vm7762 = vcmask 818176
        %v7763 = vsel %vm7762, %v7758, -inf
        %7764 = vmax.xlane.f32.xlu0 %v7763
        %v7765 = vpop.xlane.xlu0 %7764
        %v7766 = vsel %vm7762, %v7759, -inf
        %7767 = vmax.xlane.f32.xlu0 %v7766
        %v7768 = vpop.xlane.xlu0 %7767
        %v7769 = vsel %vm7762, %v7760, -inf
        %7770 = vmax.xlane.f32.xlu0 %v7769
        %v7771 = vpop.xlane.xlu0 %7770
        %vm7772 = vcmask 816128
        %v7773 = vsel %vm7772, %v7761, -inf
        %7774 = vmax.xlane.f32.xlu0 %v7773
        %v7775 = vpop.xlane.xlu0 %7774
        %v7776 = vsub.f32 %v7758, %v7765
        %v7777 = vsub.f32 %v7759, %v7768
        %v7778 = vsub.f32 %v7760, %v7771
        %v7779 = vsub.f32 %v7761, %v7775
        %v7780 = vmul.f32 %v7776, 1.442695
        %v7781 = vpow.pop %v7780
        %v7782 = vmul.f32 %v7777, 1.442695
        %v7783 = vpow.pop %v7782
        %v7784 = vmul.f32 %v7778, 1.442695
        %v7785 = vpow.pop %v7784
        %v7786 = vmul.f32 %v7779, 1.442695
        %v7787 = vpow.pop %v7786
        %v7788 = vsel %vm7762, %v7781, 0.0
        %7789 = vadd.xlane.f32.xlu0 %v7788
        %v7790 = vpop.xlane.xlu0 %7789
        %v7791 = vsel %vm7762, %v7783, 0.0
        %7792 = vadd.xlane.f32.xlu0 %v7791
        %v7793 = vpop.xlane.xlu0 %7792
        %v7794 = vsel %vm7762, %v7785, 0.0
        %7795 = vadd.xlane.f32.xlu0 %v7794
        %v7796 = vpop.xlane.xlu0 %7795
        %v7797 = vsel %vm7772, %v7787, 0.0
        %7798 = vadd.xlane.f32.xlu0 %v7797
        %v7799 = vpop.xlane.xlu0 %7798
        %v7800 = vrcp.pop %v7790
        %v7801 = vrcp.pop %v7793
        %v7802 = vrcp.pop %v7796
        %v7803 = vrcp.pop %v7799
        %v7804 = vmul.f32 %v7781, %v7800
        %v7805 = vmul.f32 %v7783, %v7801
        %v7806 = vmul.f32 %v7785, %v7802
        %v7807 = vmul.f32 %v7787, %v7803
        %v7809 = vsel %vm7762, %v7804, 0
        %v7812 = vsel %vm7762, %v7805, 0
        %v7815 = vsel %vm7762, %v7806, 0
        %v7818 = vsel %vm7762, %v7807, 0
        %vm7820 = vcmask 1043456
        %v7822 = vsel %vm7820, %v7611, 0
        %7824 = vmatprep.subr.mxu0 0.0
        %7825 = vmatpush1.msra.mxu0 %v7551
        %7826 = vmatprep.subr.mxu0 0.0
        %7827 = vmatpush1.msra.mxu0 %v7556
        %7828 = vmatprep.subr.mxu0 0.0
        %7829 = vmatpush1.msra.mxu0 %v7561
        %7830 = vmatprep.subr.mxu0 0.0
        %7831 = vmatpush1.msra.mxu0 %v7566
        %7832 = vmatprep.subr.mxu0 0.0
        %7833 = vmatpush1.msra.mxu0 %v7571
        %7834 = vmatprep.subr.mxu0 0.0
        %7835 = vmatpush1.msra.mxu0 %v7576
        %7836 = vmatprep.subr.mxu0 0.0
        %7837 = vmatpush1.msra.mxu0 %v7581
        %7838 = vmatprep.subr.mxu0 0.0
        %7839 = vmatpush1.msra.mxu0 %v7586
        %7840 = vmatprep.subr.mxu0 0.0
        %7841 = vmatpush1.msra.mxu0 %v7591
        %7842 = vmatprep.subr.mxu0 0.0
        %7843 = vmatpush1.msra.mxu0 %v7596
        %7844 = vmatprep.subr.mxu0 0.0
        %7845 = vmatpush1.msra.mxu0 %v7601
        %7846 = vmatprep.subr.mxu0 0.0
        %7847 = vmatpush1.msra.mxu0 %v7606
        %7848 = vmatprep.subr.mxu0 0.0
        %7849 = vmatpush1.msra.mxu0 %v7822
        %7850 = vmatprep.subr.mxu0 0.0
        %7851 = vmatpush1.msra.mxu0 0.0
        %7852 = vmatprep.subr.mxu0 0.0
        %7853 = vmatpush1.msra.mxu0 0.0
        %7854 = vmatprep.subr.mxu0 0.0
        %7855 = vmatpush1.msra.mxu0 0.0
        %7856 = vmatprep.subr.mxu0 0.0
        %7857 = vmatpush1.msra.mxu0 0.0
        %7858 = vmatprep.subr.mxu0 0.0
        %7859 = vmatpush1.msra.mxu0 0.0
        %7860 = vmatprep.subr.mxu0 0.0
        %7861 = vmatpush1.msra.mxu0 0.0
        %7862 = vmatprep.subr.mxu0 0.0
        %7863 = vmatpush1.msra.mxu0 0.0
        %7864 = vmatprep.subr.mxu0 0.0
        %7865 = vmatpush1.msra.mxu0 0.0
        %7866 = vmatprep.subr.mxu0 0.0
        %7867 = vmatpush1.msra.mxu0 0.0
        %7868 = vmatprep.subr.mxu0 0.0
        %7869 = vmatpush1.msra.mxu0 0.0
        %7870 = vmatprep.subr.mxu0 0.0
        %7871 = vmatpush1.msra.mxu0 0.0
        %7872 = vmatprep.subr.mxu0 0.0
        %7873 = vmatpush1.msra.mxu0 0.0
        %7874 = vmatprep.subr.mxu0 0.0
        %7875 = vmatpush1.msra.mxu0 0.0
        %7876 = vmatprep.subr.mxu0 0.0
        %7877 = vmatpush1.msra.mxu0 0.0
        %7878 = vmatprep.subr.mxu0 0.0
        %7879 = vmatpush1.msra.mxu0 0.0
        %7880 = vmatprep.subr.mxu0 0.0
        %7881 = vmatpush1.msra.mxu0 0.0
        %7882 = vmatprep.subr.mxu0 0.0
        %7883 = vmatpush1.msra.mxu0 0.0
        %7884 = vmatprep.subr.mxu0 0.0
        %7885 = vmatpush1.msra.mxu0 0.0
        %7886 = vmatprep.subr.mxu0 0.0
        %7887 = vmatpush1.msra.mxu0 0.0
        %7888 = vmatprep.mubr.f32.mxu0 0.0
        %7889 = vmatmul.mubr.f32.gmra.mrb[0].mxu0 %v7809
        %v7890 = vpop.f32.mrb[0].mxu0
        %v7891 = vadd.f32 0.0, %v7890
        %v7892 = vpop.f32.mrb[0].mxu0
        %7893 = vmatprep.mubr.f32.mxu0 0.0
        %7894 = vmatmul.mubr.f32.gmra.mrb[0].mxu0 %v7812
        %v7895 = vpop.f32.mrb[0].mxu0
        %v7896 = vadd.f32 0.0, %v7895
        %v7897 = vpop.f32.mrb[0].mxu0
        %7898 = vmatprep.mubr.f32.mxu0 0.0
        %7899 = vmatmul.mubr.f32.gmra.mrb[0].mxu0 %v7815
        %v7900 = vpop.f32.mrb[0].mxu0
        %v7901 = vadd.f32 0.0, %v7900
        %v7902 = vpop.f32.mrb[0].mxu0
        %7903 = vmatprep.mubr.f32.mxu0 0.0
        %7904 = vmatmul.mubr.f32.gmra.mrb[0].mxu0 %v7818
        %v7905 = vpop.f32.mrb[0].mxu0
        %v7906 = vadd.f32 0.0, %v7905
        %v7907 = vpop.f32.mrb[0].mxu0
        %7908 = vdwg.mxu0
        %7909 = vrot.lane.b32.xlu0 %v7275, 120
        %v7910 = vpop.permute.xlu0 %7909
        %7911 = vrot.lane.b32.xlu0 %v7280, 120
        %v7912 = vpop.permute.xlu0 %7911
        %7913 = vrot.lane.b32.xlu0 %v7285, 120
        %v7914 = vpop.permute.xlu0 %7913
        %7915 = vrot.lane.b32.xlu0 %v7290, 120
        %v7916 = vpop.permute.xlu0 %7915
        %7917 = vrot.lane.b32.xlu0 %v7410, 120
        %v7918 = vpop.permute.xlu0 %7917
        %7919 = vrot.lane.b32.xlu0 %v7415, 120
        %v7920 = vpop.permute.xlu0 %7919
        %7921 = vrot.lane.b32.xlu0 %v7420, 120
        %v7922 = vpop.permute.xlu0 %7921
        %7923 = vrot.lane.b32.xlu0 %v7425, 120
        %v7924 = vpop.permute.xlu0 %7923
        %7925 = vrot.lane.b32.xlu0 %v7430, 120
        %v7926 = vpop.permute.xlu0 %7925
        %7927 = vrot.lane.b32.xlu0 %v7435, 120
        %v7928 = vpop.permute.xlu0 %7927
        %7929 = vrot.lane.b32.xlu0 %v7440, 120
        %v7930 = vpop.permute.xlu0 %7929
        %7931 = vrot.lane.b32.xlu0 %v7445, 120
        %v7932 = vpop.permute.xlu0 %7931
        %7933 = vrot.lane.b32.xlu0 %v7450, 120
        %v7934 = vpop.permute.xlu0 %7933
        %7935 = vrot.lane.b32.xlu0 %v7455, 120
        %v7936 = vpop.permute.xlu0 %7935
        %7937 = vrot.lane.b32.xlu0 %v7460, 120
        %v7938 = vpop.permute.xlu0 %7937
        %7939 = vrot.lane.b32.xlu0 %v7465, 120
        %v7940 = vpop.permute.xlu0 %7939
        %7941 = vrot.lane.b32.xlu0 %v7470, 120
        %v7942 = vpop.permute.xlu0 %7941
        %v7943 = vsel %vm1986, %v7910, 0
        %v7945 = vsel %vm1986, %v7912, 0
        %v7947 = vsel %vm1986, %v7914, 0
        %v7949 = vsel %vm1986, %v7916, 0
        %v7951 = vsel %vm1986, %v7918, 0
        %v7953 = vsel %vm1986, %v7920, 0
        %v7955 = vsel %vm1986, %v7922, 0
        %v7957 = vsel %vm1986, %v7924, 0
        %v7959 = vsel %vm1986, %v7926, 0
        %v7961 = vsel %vm1986, %v7928, 0
        %v7963 = vsel %vm1986, %v7930, 0
        %v7965 = vsel %vm1986, %v7932, 0
        %v7967 = vsel %vm1986, %v7934, 0
        %v7969 = vsel %vm1986, %v7936, 0
        %v7971 = vsel %vm1986, %v7938, 0
        %v7973 = vsel %vm1986, %v7940, 0
        %v7975 = vsel %vm1986, %v7942, 0
        %7977 = vmatprep.subr.mxu0 0.0
        %7978 = vmatpush1.xpose.msra.mxu0 %v7951
        %7979 = vmatprep.subr.mxu0 0.0
        %7980 = vmatpush1.xpose.msra.mxu0 %v7953
        %7981 = vmatprep.subr.mxu0 0.0
        %7982 = vmatpush1.xpose.msra.mxu0 %v7955
        %7983 = vmatprep.subr.mxu0 0.0
        %7984 = vmatpush1.xpose.msra.mxu0 %v7957
        %7985 = vmatprep.subr.mxu0 0.0
        %7986 = vmatpush1.xpose.msra.mxu0 %v7959
        %7987 = vmatprep.subr.mxu0 0.0
        %7988 = vmatpush1.xpose.msra.mxu0 %v7961
        %7989 = vmatprep.subr.mxu0 0.0
        %7990 = vmatpush1.xpose.msra.mxu0 %v7963
        %7991 = vmatprep.subr.mxu0 0.0
        %7992 = vmatpush1.xpose.msra.mxu0 %v7965
        %7993 = vmatprep.subr.mxu0 0.0
        %7994 = vmatpush1.xpose.msra.mxu0 %v7967
        %7995 = vmatprep.subr.mxu0 0.0
        %7996 = vmatpush1.xpose.msra.mxu0 %v7969
        %7997 = vmatprep.subr.mxu0 0.0
        %7998 = vmatpush1.xpose.msra.mxu0 %v7971
        %7999 = vmatprep.subr.mxu0 0.0
        %8000 = vmatpush1.xpose.msra.mxu0 %v7973
        %8001 = vmatprep.subr.mxu0 0.0
        %8002 = vmatpush1.xpose.msra.mxu0 %v7975
        %8003 = vmatprep.subr.mxu0 0.0
        %8004 = vmatpush1.xpose.msra.mxu0 0.0
        %8005 = vmatprep.subr.mxu0 0.0
        %8006 = vmatpush1.xpose.msra.mxu0 0.0
        %8007 = vmatprep.subr.mxu0 0.0
        %8008 = vmatpush1.xpose.msra.mxu0 0.0
        %8009 = vmatprep.subr.mxu0 0.0
        %8010 = vmatpush1.xpose.msra.mxu0 0.0
        %8011 = vmatprep.subr.mxu0 0.0
        %8012 = vmatpush1.xpose.msra.mxu0 0.0
        %8013 = vmatprep.subr.mxu0 0.0
        %8014 = vmatpush1.xpose.msra.mxu0 0.0
        %8015 = vmatprep.subr.mxu0 0.0
        %8016 = vmatpush1.xpose.msra.mxu0 0.0
        %8017 = vmatprep.subr.mxu0 0.0
        %8018 = vmatpush1.xpose.msra.mxu0 0.0
        %8019 = vmatprep.subr.mxu0 0.0
        %8020 = vmatpush1.xpose.msra.mxu0 0.0
        %8021 = vmatprep.subr.mxu0 0.0
        %8022 = vmatpush1.xpose.msra.mxu0 0.0
        %8023 = vmatprep.subr.mxu0 0.0
        %8024 = vmatpush1.xpose.msra.mxu0 0.0
        %8025 = vmatprep.subr.mxu0 0.0
        %8026 = vmatpush1.xpose.msra.mxu0 0.0
        %8027 = vmatprep.subr.mxu0 0.0
        %8028 = vmatpush1.xpose.msra.mxu0 0.0
        %8029 = vmatprep.subr.mxu0 0.0
        %8030 = vmatpush1.xpose.msra.mxu0 0.0
        %8031 = vmatprep.subr.mxu0 0.0
        %8032 = vmatpush1.xpose.msra.mxu0 0.0
        %8033 = vmatprep.subr.mxu0 0.0
        %8034 = vmatpush1.xpose.msra.mxu0 0.0
        %8035 = vmatprep.subr.mxu0 0.0
        %8036 = vmatpush1.xpose.msra.mxu0 0.0
        %8037 = vmatprep.subr.mxu0 0.0
        %8038 = vmatpush1.xpose.msra.mxu0 0.0
        %8039 = vmatprep.subr.mxu0 0.0
        %8040 = vmatpush1.xpose.msra.mxu0 0.0
        %8041 = vmatprep.mubr.f32.mxu0 0.0
        %8042 = vmatmul.mubr.f32.gmra.mrb[0].mxu0 %v7943
        %v8043 = vpop.f32.mrb[0].mxu0
        %v8044 = vadd.f32 0.0, %v8043
        %v8045 = vpop.f32.mrb[0].mxu0
        %8046 = vmatprep.mubr.f32.mxu0 0.0
        %8047 = vmatmul.mubr.f32.gmra.mrb[0].mxu0 %v7945
        %v8048 = vpop.f32.mrb[0].mxu0
        %v8049 = vadd.f32 0.0, %v8048
        %v8050 = vpop.f32.mrb[0].mxu0
        %8051 = vmatprep.mubr.f32.mxu0 0.0
        %8052 = vmatmul.mubr.f32.gmra.mrb[0].mxu0 %v7947
        %v8053 = vpop.f32.mrb[0].mxu0
        %v8054 = vadd.f32 0.0, %v8053
        %v8055 = vpop.f32.mrb[0].mxu0
        %8056 = vmatprep.mubr.f32.mxu0 0.0
        %8057 = vmatmul.mubr.f32.gmra.mrb[0].mxu0 %v7949
        %v8058 = vpop.f32.mrb[0].mxu0
        %v8059 = vadd.f32 0.0, %v8058
        %v8060 = vpop.f32.mrb[0].mxu0
        %8061 = vdwg.mxu0
        %v8062 = vmul.f32 %v8044, 0.35355338
        %v8063 = vmul.f32 %v8049, 0.35355338
        %v8064 = vmul.f32 %v8054, 0.35355338
        %v8065 = vmul.f32 %v8059, 0.35355338
        %v8066 = vadd.f32 %v8062, %v7193
        %v8067 = vadd.f32 %v8063, %v7194
        %v8068 = vadd.f32 %v8064, %v7195
        %v8069 = vadd.f32 %v8065, %v7196
        %v8070 = vsel %vm7762, %v8066, -inf
        %8071 = vmax.xlane.f32.xlu0 %v8070
        %v8072 = vpop.xlane.xlu0 %8071
        %v8073 = vsel %vm7762, %v8067, -inf
        %8074 = vmax.xlane.f32.xlu0 %v8073
        %v8075 = vpop.xlane.xlu0 %8074
        %v8076 = vsel %vm7762, %v8068, -inf
        %8077 = vmax.xlane.f32.xlu0 %v8076
        %v8078 = vpop.xlane.xlu0 %8077
        %v8079 = vsel %vm7772, %v8069, -inf
        %8080 = vmax.xlane.f32.xlu0 %v8079
        %v8081 = vpop.xlane.xlu0 %8080
        %v8082 = vsub.f32 %v8066, %v8072
        %v8083 = vsub.f32 %v8067, %v8075
        %v8084 = vsub.f32 %v8068, %v8078
        %v8085 = vsub.f32 %v8069, %v8081
        %v8086 = vmul.f32 %v8082, 1.442695
        %v8087 = vpow.pop %v8086
        %v8088 = vmul.f32 %v8083, 1.442695
        %v8089 = vpow.pop %v8088
        %v8090 = vmul.f32 %v8084, 1.442695
        %v8091 = vpow.pop %v8090
        %v8092 = vmul.f32 %v8085, 1.442695
        %v8093 = vpow.pop %v8092
        %v8094 = vsel %vm7762, %v8087, 0.0
        %8095 = vadd.xlane.f32.xlu0 %v8094
        %v8096 = vpop.xlane.xlu0 %8095
        %v8097 = vsel %vm7762, %v8089, 0.0
        %8098 = vadd.xlane.f32.xlu0 %v8097
        %v8099 = vpop.xlane.xlu0 %8098
        %v8100 = vsel %vm7762, %v8091, 0.0
        %8101 = vadd.xlane.f32.xlu0 %v8100
        %v8102 = vpop.xlane.xlu0 %8101
        %v8103 = vsel %vm7772, %v8093, 0.0
        %8104 = vadd.xlane.f32.xlu0 %v8103
        %v8105 = vpop.xlane.xlu0 %8104
        %v8106 = vrcp.pop %v8096
        %v8107 = vrcp.pop %v8099
        %v8108 = vrcp.pop %v8102
        %v8109 = vrcp.pop %v8105
        %v8110 = vmul.f32 %v8087, %v8106
        %v8111 = vmul.f32 %v8089, %v8107
        %v8112 = vmul.f32 %v8091, %v8108
        %v8113 = vmul.f32 %v8093, %v8109
        %8126 = vrot.lane.b32.xlu0 %v7551, 120
        %v8127 = vpop.permute.xlu0 %8126
        %8128 = vrot.lane.b32.xlu0 %v7556, 120
        %v8129 = vpop.permute.xlu0 %8128
        %8130 = vrot.lane.b32.xlu0 %v7561, 120
        %v8131 = vpop.permute.xlu0 %8130
        %8132 = vrot.lane.b32.xlu0 %v7566, 120
        %v8133 = vpop.permute.xlu0 %8132
        %8134 = vrot.lane.b32.xlu0 %v7571, 120
        %v8135 = vpop.permute.xlu0 %8134
        %8136 = vrot.lane.b32.xlu0 %v7576, 120
        %v8137 = vpop.permute.xlu0 %8136
        %8138 = vrot.lane.b32.xlu0 %v7581, 120
        %v8139 = vpop.permute.xlu0 %8138
        %8140 = vrot.lane.b32.xlu0 %v7586, 120
        %v8141 = vpop.permute.xlu0 %8140
        %8142 = vrot.lane.b32.xlu0 %v7591, 120
        %v8143 = vpop.permute.xlu0 %8142
        %8144 = vrot.lane.b32.xlu0 %v7596, 120
        %v8145 = vpop.permute.xlu0 %8144
        %8146 = vrot.lane.b32.xlu0 %v7601, 120
        %v8147 = vpop.permute.xlu0 %8146
        %8148 = vrot.lane.b32.xlu0 %v7606, 120
        %v8149 = vpop.permute.xlu0 %8148
        %8150 = vrot.lane.b32.xlu0 %v7611, 120
        %v8151 = vpop.permute.xlu0 %8150
        %v8165 = vsel %vm7762, %v8110, 0
        %v8168 = vsel %vm7762, %v8111, 0
        %v8171 = vsel %vm7762, %v8112, 0
        %v8174 = vsel %vm7762, %v8113, 0
        %v8176 = vsel %vm7820, %v8151, 0
        %8178 = vmatprep.subr.mxu0 0.0
        %8179 = vmatpush1.msra.mxu0 %v8127
        %8180 = vmatprep.subr.mxu0 0.0
        %8181 = vmatpush1.msra.mxu0 %v8129
        %8182 = vmatprep.subr.mxu0 0.0
        %8183 = vmatpush1.msra.mxu0 %v8131
        %8184 = vmatprep.subr.mxu0 0.0
        %8185 = vmatpush1.msra.mxu0 %v8133
        %8186 = vmatprep.subr.mxu0 0.0
        %8187 = vmatpush1.msra.mxu0 %v8135
        %8188 = vmatprep.subr.mxu0 0.0
        %8189 = vmatpush1.msra.mxu0 %v8137
        %8190 = vmatprep.subr.mxu0 0.0
        %8191 = vmatpush1.msra.mxu0 %v8139
        %8192 = vmatprep.subr.mxu0 0.0
        %8193 = vmatpush1.msra.mxu0 %v8141
        %8194 = vmatprep.subr.mxu0 0.0
        %8195 = vmatpush1.msra.mxu0 %v8143
        %8196 = vmatprep.subr.mxu0 0.0
        %8197 = vmatpush1.msra.mxu0 %v8145
        %8198 = vmatprep.subr.mxu0 0.0
        %8199 = vmatpush1.msra.mxu0 %v8147
        %8200 = vmatprep.subr.mxu0 0.0
        %8201 = vmatpush1.msra.mxu0 %v8149
        %8202 = vmatprep.subr.mxu0 0.0
        %8203 = vmatpush1.msra.mxu0 %v8176
        %8204 = vmatprep.subr.mxu0 0.0
        %8205 = vmatpush1.msra.mxu0 0.0
        %8206 = vmatprep.subr.mxu0 0.0
        %8207 = vmatpush1.msra.mxu0 0.0
        %8208 = vmatprep.subr.mxu0 0.0
        %8209 = vmatpush1.msra.mxu0 0.0
        %8210 = vmatprep.subr.mxu0 0.0
        %8211 = vmatpush1.msra.mxu0 0.0
        %8212 = vmatprep.subr.mxu0 0.0
        %8213 = vmatpush1.msra.mxu0 0.0
        %8214 = vmatprep.subr.mxu0 0.0
        %8215 = vmatpush1.msra.mxu0 0.0
        %8216 = vmatprep.subr.mxu0 0.0
        %8217 = vmatpush1.msra.mxu0 0.0
        %8218 = vmatprep.subr.mxu0 0.0
        %8219 = vmatpush1.msra.mxu0 0.0
        %8220 = vmatprep.subr.mxu0 0.0
        %8221 = vmatpush1.msra.mxu0 0.0
        %8222 = vmatprep.subr.mxu0 0.0
        %8223 = vmatpush1.msra.mxu0 0.0
        %8224 = vmatprep.subr.mxu0 0.0
        %8225 = vmatpush1.msra.mxu0 0.0
        %8226 = vmatprep.subr.mxu0 0.0
        %8227 = vmatpush1.msra.mxu0 0.0
        %8228 = vmatprep.subr.mxu0 0.0
        %8229 = vmatpush1.msra.mxu0 0.0
        %8230 = vmatprep.subr.mxu0 0.0
        %8231 = vmatpush1.msra.mxu0 0.0
        %8232 = vmatprep.subr.mxu0 0.0
        %8233 = vmatpush1.msra.mxu0 0.0
        %8234 = vmatprep.subr.mxu0 0.0
        %8235 = vmatpush1.msra.mxu0 0.0
        %8236 = vmatprep.subr.mxu0 0.0
        %8237 = vmatpush1.msra.mxu0 0.0
        %8238 = vmatprep.subr.mxu0 0.0
        %8239 = vmatpush1.msra.mxu0 0.0
        %8240 = vmatprep.subr.mxu0 0.0
        %8241 = vmatpush1.msra.mxu0 0.0
        %8242 = vmatprep.mubr.f32.mxu0 0.0
        %8243 = vmatmul.mubr.f32.gmra.mrb[0].mxu0 %v8165
        %v8244 = vpop.f32.mrb[0].mxu0
        %v8245 = vadd.f32 0.0, %v8244
        %v8246 = vpop.f32.mrb[0].mxu0
        %8247 = vmatprep.mubr.f32.mxu0 0.0
        %8248 = vmatmul.mubr.f32.gmra.mrb[0].mxu0 %v8168
        %v8249 = vpop.f32.mrb[0].mxu0
        %v8250 = vadd.f32 0.0, %v8249
        %v8251 = vpop.f32.mrb[0].mxu0
        %8252 = vmatprep.mubr.f32.mxu0 0.0
        %8253 = vmatmul.mubr.f32.gmra.mrb[0].mxu0 %v8171
        %v8254 = vpop.f32.mrb[0].mxu0
        %v8255 = vadd.f32 0.0, %v8254
        %v8256 = vpop.f32.mrb[0].mxu0
        %8257 = vmatprep.mubr.f32.mxu0 0.0
        %8258 = vmatmul.mubr.f32.gmra.mrb[0].mxu0 %v8174
        %v8259 = vpop.f32.mrb[0].mxu0
        %v8260 = vadd.f32 0.0, %v8259
        %v8261 = vpop.f32.mrb[0].mxu0
        %8262 = vdwg.mxu0
        %v8264 = vsel %vm1986, %v8245, 0
        %v8267 = vsel %vm1986, %v8250, 0
        %v8270 = vsel %vm1986, %v8255, 0
        %v8273 = vsel %vm1986, %v8260, 0
        %8275 = vmatprep.subr.mxu0 0.0
        %8276 = vmatpush1.msra.mxu0 %v7615
        %8277 = vmatprep.subr.mxu0 0.0
        %8278 = vmatpush1.msra.mxu0 0.0
        %8279 = vmatprep.subr.mxu0 0.0
        %8280 = vmatpush1.msra.mxu0 0.0
        %8281 = vmatprep.subr.mxu0 0.0
        %8282 = vmatpush1.msra.mxu0 0.0
        %8283 = vmatprep.subr.mxu0 0.0
        %8284 = vmatpush1.msra.mxu0 0.0
        %8285 = vmatprep.subr.mxu0 0.0
        %8286 = vmatpush1.msra.mxu0 0.0
        %8287 = vmatprep.subr.mxu0 0.0
        %8288 = vmatpush1.msra.mxu0 0.0
        %8289 = vmatprep.subr.mxu0 0.0
        %8290 = vmatpush1.msra.mxu0 0.0
        %8291 = vmatprep.subr.mxu0 0.0
        %8292 = vmatpush1.msra.mxu0 0.0
        %8293 = vmatprep.subr.mxu0 0.0
        %8294 = vmatpush1.msra.mxu0 0.0
        %8295 = vmatprep.subr.mxu0 0.0
        %8296 = vmatpush1.msra.mxu0 0.0
        %8297 = vmatprep.subr.mxu0 0.0
        %8298 = vmatpush1.msra.mxu0 0.0
        %8299 = vmatprep.subr.mxu0 0.0
        %8300 = vmatpush1.msra.mxu0 0.0
        %8301 = vmatprep.subr.mxu0 0.0
        %8302 = vmatpush1.msra.mxu0 0.0
        %8303 = vmatprep.subr.mxu0 0.0
        %8304 = vmatpush1.msra.mxu0 0.0
        %8305 = vmatprep.subr.mxu0 0.0
        %8306 = vmatpush1.msra.mxu0 0.0
        %8307 = vmatprep.subr.mxu0 0.0
        %8308 = vmatpush1.msra.mxu0 0.0
        %8309 = vmatprep.subr.mxu0 0.0
        %8310 = vmatpush1.msra.mxu0 0.0
        %8311 = vmatprep.subr.mxu0 0.0
        %8312 = vmatpush1.msra.mxu0 0.0
        %8313 = vmatprep.subr.mxu0 0.0
        %8314 = vmatpush1.msra.mxu0 0.0
        %8315 = vmatprep.subr.mxu0 0.0
        %8316 = vmatpush1.msra.mxu0 0.0
        %8317 = vmatprep.subr.mxu0 0.0
        %8318 = vmatpush1.msra.mxu0 0.0
        %8319 = vmatprep.subr.mxu0 0.0
        %8320 = vmatpush1.msra.mxu0 0.0
        %8321 = vmatprep.subr.mxu0 0.0
        %8322 = vmatpush1.msra.mxu0 0.0
        %8323 = vmatprep.subr.mxu0 0.0
        %8324 = vmatpush1.msra.mxu0 0.0
        %8325 = vmatprep.subr.mxu0 0.0
        %8326 = vmatpush1.msra.mxu0 0.0
        %8327 = vmatprep.subr.mxu0 0.0
        %8328 = vmatpush1.msra.mxu0 0.0
        %8329 = vmatprep.subr.mxu0 0.0
        %8330 = vmatpush1.msra.mxu0 0.0
        %8331 = vmatprep.subr.mxu0 0.0
        %8332 = vmatpush1.msra.mxu0 0.0
        %8333 = vmatprep.subr.mxu0 0.0
        %8334 = vmatpush1.msra.mxu0 0.0
        %8335 = vmatprep.subr.mxu0 0.0
        %8336 = vmatpush1.msra.mxu0 0.0
        %8337 = vmatprep.subr.mxu0 0.0
        %8338 = vmatpush1.msra.mxu0 0.0
        %8339 = vmatprep.mubr.f32.mxu0 0.0
        %8340 = vmatmul.mubr.f32.gmra.mrb[0].mxu0 %v8264
        %v8341 = vpop.f32.mrb[0].mxu0
        %v8342 = vadd.f32 0.0, %v8341
        %v8343 = vpop.f32.mrb[0].mxu0
        %8344 = vmatprep.mubr.f32.mxu0 0.0
        %8345 = vmatmul.mubr.f32.gmra.mrb[0].mxu0 %v8267
        %v8346 = vpop.f32.mrb[0].mxu0
        %v8347 = vadd.f32 0.0, %v8346
        %v8348 = vpop.f32.mrb[0].mxu0
        %8349 = vmatprep.mubr.f32.mxu0 0.0
        %8350 = vmatmul.mubr.f32.gmra.mrb[0].mxu0 %v8270
        %v8351 = vpop.f32.mrb[0].mxu0
        %v8352 = vadd.f32 0.0, %v8351
        %v8353 = vpop.f32.mrb[0].mxu0
        %8354 = vmatprep.mubr.f32.mxu0 0.0
        %8355 = vmatmul.mubr.f32.gmra.mrb[0].mxu0 %v8273
        %v8356 = vpop.f32.mrb[0].mxu0
        %v8357 = vadd.f32 0.0, %v8356
        %v8358 = vpop.f32.mrb[0].mxu0
        %8359 = vdwg.mxu0
        %v8361 = vsel %vm1986, %v7891, 0
        %v8364 = vsel %vm1986, %v7896, 0
        %v8367 = vsel %vm1986, %v7901, 0
        %v8370 = vsel %vm1986, %v7906, 0
        %8372 = vmatprep.subr.mxu0 0.0
        %8373 = vmatpush1.msra.mxu0 %v7614
        %8374 = vmatprep.subr.mxu0 0.0
        %8375 = vmatpush1.msra.mxu0 0.0
        %8376 = vmatprep.subr.mxu0 0.0
        %8377 = vmatpush1.msra.mxu0 0.0
        %8378 = vmatprep.subr.mxu0 0.0
        %8379 = vmatpush1.msra.mxu0 0.0
        %8380 = vmatprep.subr.mxu0 0.0
        %8381 = vmatpush1.msra.mxu0 0.0
        %8382 = vmatprep.subr.mxu0 0.0
        %8383 = vmatpush1.msra.mxu0 0.0
        %8384 = vmatprep.subr.mxu0 0.0
        %8385 = vmatpush1.msra.mxu0 0.0
        %8386 = vmatprep.subr.mxu0 0.0
        %8387 = vmatpush1.msra.mxu0 0.0
        %8388 = vmatprep.subr.mxu0 0.0
        %8389 = vmatpush1.msra.mxu0 0.0
        %8390 = vmatprep.subr.mxu0 0.0
        %8391 = vmatpush1.msra.mxu0 0.0
        %8392 = vmatprep.subr.mxu0 0.0
        %8393 = vmatpush1.msra.mxu0 0.0
        %8394 = vmatprep.subr.mxu0 0.0
        %8395 = vmatpush1.msra.mxu0 0.0
        %8396 = vmatprep.subr.mxu0 0.0
        %8397 = vmatpush1.msra.mxu0 0.0
        %8398 = vmatprep.subr.mxu0 0.0
        %8399 = vmatpush1.msra.mxu0 0.0
        %8400 = vmatprep.subr.mxu0 0.0
        %8401 = vmatpush1.msra.mxu0 0.0
        %8402 = vmatprep.subr.mxu0 0.0
        %8403 = vmatpush1.msra.mxu0 0.0
        %8404 = vmatprep.subr.mxu0 0.0
        %8405 = vmatpush1.msra.mxu0 0.0
        %8406 = vmatprep.subr.mxu0 0.0
        %8407 = vmatpush1.msra.mxu0 0.0
        %8408 = vmatprep.subr.mxu0 0.0
        %8409 = vmatpush1.msra.mxu0 0.0
        %8410 = vmatprep.subr.mxu0 0.0
        %8411 = vmatpush1.msra.mxu0 0.0
        %8412 = vmatprep.subr.mxu0 0.0
        %8413 = vmatpush1.msra.mxu0 0.0
        %8414 = vmatprep.subr.mxu0 0.0
        %8415 = vmatpush1.msra.mxu0 0.0
        %8416 = vmatprep.subr.mxu0 0.0
        %8417 = vmatpush1.msra.mxu0 0.0
        %8418 = vmatprep.subr.mxu0 0.0
        %8419 = vmatpush1.msra.mxu0 0.0
        %8420 = vmatprep.subr.mxu0 0.0
        %8421 = vmatpush1.msra.mxu0 0.0
        %8422 = vmatprep.subr.mxu0 0.0
        %8423 = vmatpush1.msra.mxu0 0.0
        %8424 = vmatprep.subr.mxu0 0.0
        %8425 = vmatpush1.msra.mxu0 0.0
        %8426 = vmatprep.subr.mxu0 0.0
        %8427 = vmatpush1.msra.mxu0 0.0
        %8428 = vmatprep.subr.mxu0 0.0
        %8429 = vmatpush1.msra.mxu0 0.0
        %8430 = vmatprep.subr.mxu0 0.0
        %8431 = vmatpush1.msra.mxu0 0.0
        %8432 = vmatprep.subr.mxu0 0.0
        %8433 = vmatpush1.msra.mxu0 0.0
        %8434 = vmatprep.subr.mxu0 0.0
        %8435 = vmatpush1.msra.mxu0 0.0
        %8436 = vmatprep.mubr.f32.mxu0 0.0
        %8437 = vmatmul.mubr.f32.gmra.mrb[0].mxu0 %v8361
        %v8438 = vpop.f32.mrb[0].mxu0
        %v8439 = vadd.f32 %v8342, %v8438
        %v8440 = vpop.f32.mrb[0].mxu0
        %8441 = vmatprep.mubr.f32.mxu0 0.0
        %8442 = vmatmul.mubr.f32.gmra.mrb[0].mxu0 %v8364
        %v8443 = vpop.f32.mrb[0].mxu0
        %v8444 = vadd.f32 %v8347, %v8443
        %v8445 = vpop.f32.mrb[0].mxu0
        %8446 = vmatprep.mubr.f32.mxu0 0.0
        %8447 = vmatmul.mubr.f32.gmra.mrb[0].mxu0 %v8367
        %v8448 = vpop.f32.mrb[0].mxu0
        %v8449 = vadd.f32 %v8352, %v8448
        %v8450 = vpop.f32.mrb[0].mxu0
        %8451 = vmatprep.mubr.f32.mxu0 0.0
        %8452 = vmatmul.mubr.f32.gmra.mrb[0].mxu0 %v8370
        %v8453 = vpop.f32.mrb[0].mxu0
        %v8454 = vadd.f32 %v8357, %v8453
        %v8455 = vpop.f32.mrb[0].mxu0
        %8456 = vdwg.mxu0
        %8457 = vrot.lane.b32.xlu0 %v7275, 112
        %v8458 = vpop.permute.xlu0 %8457
        %8459 = vrot.lane.b32.xlu0 %v7280, 112
        %v8460 = vpop.permute.xlu0 %8459
        %8461 = vrot.lane.b32.xlu0 %v7285, 112
        %v8462 = vpop.permute.xlu0 %8461
        %8463 = vrot.lane.b32.xlu0 %v7290, 112
        %v8464 = vpop.permute.xlu0 %8463
        %8465 = vrot.lane.b32.xlu0 %v7410, 112
        %v8466 = vpop.permute.xlu0 %8465
        %8467 = vrot.lane.b32.xlu0 %v7415, 112
        %v8468 = vpop.permute.xlu0 %8467
        %8469 = vrot.lane.b32.xlu0 %v7420, 112
        %v8470 = vpop.permute.xlu0 %8469
        %8471 = vrot.lane.b32.xlu0 %v7425, 112
        %v8472 = vpop.permute.xlu0 %8471
        %8473 = vrot.lane.b32.xlu0 %v7430, 112
        %v8474 = vpop.permute.xlu0 %8473
        %8475 = vrot.lane.b32.xlu0 %v7435, 112
        %v8476 = vpop.permute.xlu0 %8475
        %8477 = vrot.lane.b32.xlu0 %v7440, 112
        %v8478 = vpop.permute.xlu0 %8477
        %8479 = vrot.lane.b32.xlu0 %v7445, 112
        %v8480 = vpop.permute.xlu0 %8479
        %8481 = vrot.lane.b32.xlu0 %v7450, 112
        %v8482 = vpop.permute.xlu0 %8481
        %8483 = vrot.lane.b32.xlu0 %v7455, 112
        %v8484 = vpop.permute.xlu0 %8483
        %8485 = vrot.lane.b32.xlu0 %v7460, 112
        %v8486 = vpop.permute.xlu0 %8485
        %8487 = vrot.lane.b32.xlu0 %v7465, 112
        %v8488 = vpop.permute.xlu0 %8487
        %8489 = vrot.lane.b32.xlu0 %v7470, 112
        %v8490 = vpop.permute.xlu0 %8489
        %v8491 = vsel %vm1986, %v8458, 0
        %v8493 = vsel %vm1986, %v8460, 0
        %v8495 = vsel %vm1986, %v8462, 0
        %v8497 = vsel %vm1986, %v8464, 0
        %v8499 = vsel %vm1986, %v8466, 0
        %v8501 = vsel %vm1986, %v8468, 0
        %v8503 = vsel %vm1986, %v8470, 0
        %v8505 = vsel %vm1986, %v8472, 0
        %v8507 = vsel %vm1986, %v8474, 0
        %v8509 = vsel %vm1986, %v8476, 0
        %v8511 = vsel %vm1986, %v8478, 0
        %v8513 = vsel %vm1986, %v8480, 0
        %v8515 = vsel %vm1986, %v8482, 0
        %v8517 = vsel %vm1986, %v8484, 0
        %v8519 = vsel %vm1986, %v8486, 0
        %v8521 = vsel %vm1986, %v8488, 0
        %v8523 = vsel %vm1986, %v8490, 0
        %8525 = vmatprep.subr.mxu0 0.0
        %8526 = vmatpush1.xpose.msra.mxu0 %v8499
        %8527 = vmatprep.subr.mxu0 0.0
        %8528 = vmatpush1.xpose.msra.mxu0 %v8501
        %8529 = vmatprep.subr.mxu0 0.0
        %8530 = vmatpush1.xpose.msra.mxu0 %v8503
        %8531 = vmatprep.subr.mxu0 0.0
        %8532 = vmatpush1.xpose.msra.mxu0 %v8505
        %8533 = vmatprep.subr.mxu0 0.0
        %8534 = vmatpush1.xpose.msra.mxu0 %v8507
        %8535 = vmatprep.subr.mxu0 0.0
        %8536 = vmatpush1.xpose.msra.mxu0 %v8509
        %8537 = vmatprep.subr.mxu0 0.0
        %8538 = vmatpush1.xpose.msra.mxu0 %v8511
        %8539 = vmatprep.subr.mxu0 0.0
        %8540 = vmatpush1.xpose.msra.mxu0 %v8513
        %8541 = vmatprep.subr.mxu0 0.0
        %8542 = vmatpush1.xpose.msra.mxu0 %v8515
        %8543 = vmatprep.subr.mxu0 0.0
        %8544 = vmatpush1.xpose.msra.mxu0 %v8517
        %8545 = vmatprep.subr.mxu0 0.0
        %8546 = vmatpush1.xpose.msra.mxu0 %v8519
        %8547 = vmatprep.subr.mxu0 0.0
        %8548 = vmatpush1.xpose.msra.mxu0 %v8521
        %8549 = vmatprep.subr.mxu0 0.0
        %8550 = vmatpush1.xpose.msra.mxu0 %v8523
        %8551 = vmatprep.subr.mxu0 0.0
        %8552 = vmatpush1.xpose.msra.mxu0 0.0
        %8553 = vmatprep.subr.mxu0 0.0
        %8554 = vmatpush1.xpose.msra.mxu0 0.0
        %8555 = vmatprep.subr.mxu0 0.0
        %8556 = vmatpush1.xpose.msra.mxu0 0.0
        %8557 = vmatprep.subr.mxu0 0.0
        %8558 = vmatpush1.xpose.msra.mxu0 0.0
        %8559 = vmatprep.subr.mxu0 0.0
        %8560 = vmatpush1.xpose.msra.mxu0 0.0
        %8561 = vmatprep.subr.mxu0 0.0
        %8562 = vmatpush1.xpose.msra.mxu0 0.0
        %8563 = vmatprep.subr.mxu0 0.0
        %8564 = vmatpush1.xpose.msra.mxu0 0.0
        %8565 = vmatprep.subr.mxu0 0.0
        %8566 = vmatpush1.xpose.msra.mxu0 0.0
        %8567 = vmatprep.subr.mxu0 0.0
        %8568 = vmatpush1.xpose.msra.mxu0 0.0
        %8569 = vmatprep.subr.mxu0 0.0
        %8570 = vmatpush1.xpose.msra.mxu0 0.0
        %8571 = vmatprep.subr.mxu0 0.0
        %8572 = vmatpush1.xpose.msra.mxu0 0.0
        %8573 = vmatprep.subr.mxu0 0.0
        %8574 = vmatpush1.xpose.msra.mxu0 0.0
        %8575 = vmatprep.subr.mxu0 0.0
        %8576 = vmatpush1.xpose.msra.mxu0 0.0
        %8577 = vmatprep.subr.mxu0 0.0
        %8578 = vmatpush1.xpose.msra.mxu0 0.0
        %8579 = vmatprep.subr.mxu0 0.0
        %8580 = vmatpush1.xpose.msra.mxu0 0.0
        %8581 = vmatprep.subr.mxu0 0.0
        %8582 = vmatpush1.xpose.msra.mxu0 0.0
        %8583 = vmatprep.subr.mxu0 0.0
        %8584 = vmatpush1.xpose.msra.mxu0 0.0
        %8585 = vmatprep.subr.mxu0 0.0
        %8586 = vmatpush1.xpose.msra.mxu0 0.0
        %8587 = vmatprep.subr.mxu0 0.0
        %8588 = vmatpush1.xpose.msra.mxu0 0.0
        %8589 = vmatprep.mubr.f32.mxu0 0.0
        %8590 = vmatmul.mubr.f32.gmra.mrb[0].mxu0 %v8491
        %v8591 = vpop.f32.mrb[0].mxu0
        %v8592 = vadd.f32 0.0, %v8591
        %v8593 = vpop.f32.mrb[0].mxu0
        %8594 = vmatprep.mubr.f32.mxu0 0.0
        %8595 = vmatmul.mubr.f32.gmra.mrb[0].mxu0 %v8493
        %v8596 = vpop.f32.mrb[0].mxu0
        %v8597 = vadd.f32 0.0, %v8596
        %v8598 = vpop.f32.mrb[0].mxu0
        %8599 = vmatprep.mubr.f32.mxu0 0.0
        %8600 = vmatmul.mubr.f32.gmra.mrb[0].mxu0 %v8495
        %v8601 = vpop.f32.mrb[0].mxu0
        %v8602 = vadd.f32 0.0, %v8601
        %v8603 = vpop.f32.mrb[0].mxu0
        %8604 = vmatprep.mubr.f32.mxu0 0.0
        %8605 = vmatmul.mubr.f32.gmra.mrb[0].mxu0 %v8497
        %v8606 = vpop.f32.mrb[0].mxu0
        %v8607 = vadd.f32 0.0, %v8606
        %v8608 = vpop.f32.mrb[0].mxu0
        %8609 = vdwg.mxu0
        %v8610 = vmul.f32 %v8592, 0.35355338
        %v8611 = vmul.f32 %v8597, 0.35355338
        %v8612 = vmul.f32 %v8602, 0.35355338
        %v8613 = vmul.f32 %v8607, 0.35355338
        %v8614 = vadd.f32 %v8610, %v7193
        %v8615 = vadd.f32 %v8611, %v7194
        %v8616 = vadd.f32 %v8612, %v7195
        %v8617 = vadd.f32 %v8613, %v7196
        %v8618 = vsel %vm7762, %v8614, -inf
        %8619 = vmax.xlane.f32.xlu0 %v8618
        %v8620 = vpop.xlane.xlu0 %8619
        %v8621 = vsel %vm7762, %v8615, -inf
        %8622 = vmax.xlane.f32.xlu0 %v8621
        %v8623 = vpop.xlane.xlu0 %8622
        %v8624 = vsel %vm7762, %v8616, -inf
        %8625 = vmax.xlane.f32.xlu0 %v8624
        %v8626 = vpop.xlane.xlu0 %8625
        %v8627 = vsel %vm7772, %v8617, -inf
        %8628 = vmax.xlane.f32.xlu0 %v8627
        %v8629 = vpop.xlane.xlu0 %8628
        %v8630 = vsub.f32 %v8614, %v8620
        %v8631 = vsub.f32 %v8615, %v8623
        %v8632 = vsub.f32 %v8616, %v8626
        %v8633 = vsub.f32 %v8617, %v8629
        %v8634 = vmul.f32 %v8630, 1.442695
        %v8635 = vpow.pop %v8634
        %v8636 = vmul.f32 %v8631, 1.442695
        %v8637 = vpow.pop %v8636
        %v8638 = vmul.f32 %v8632, 1.442695
        %v8639 = vpow.pop %v8638
        %v8640 = vmul.f32 %v8633, 1.442695
        %v8641 = vpow.pop %v8640
        %v8642 = vsel %vm7762, %v8635, 0.0
        %8643 = vadd.xlane.f32.xlu0 %v8642
        %v8644 = vpop.xlane.xlu0 %8643
        %v8645 = vsel %vm7762, %v8637, 0.0
        %8646 = vadd.xlane.f32.xlu0 %v8645
        %v8647 = vpop.xlane.xlu0 %8646
        %v8648 = vsel %vm7762, %v8639, 0.0
        %8649 = vadd.xlane.f32.xlu0 %v8648
        %v8650 = vpop.xlane.xlu0 %8649
        %v8651 = vsel %vm7772, %v8641, 0.0
        %8652 = vadd.xlane.f32.xlu0 %v8651
        %v8653 = vpop.xlane.xlu0 %8652
        %v8654 = vrcp.pop %v8644
        %v8655 = vrcp.pop %v8647
        %v8656 = vrcp.pop %v8650
        %v8657 = vrcp.pop %v8653
        %v8658 = vmul.f32 %v8635, %v8654
        %v8659 = vmul.f32 %v8637, %v8655
        %v8660 = vmul.f32 %v8639, %v8656
        %v8661 = vmul.f32 %v8641, %v8657
        %8662 = vrot.lane.b32.xlu0 %v7551, 112
        %v8663 = vpop.permute.xlu0 %8662
        %8664 = vrot.lane.b32.xlu0 %v7556, 112
        %v8665 = vpop.permute.xlu0 %8664
        %8666 = vrot.lane.b32.xlu0 %v7561, 112
        %v8667 = vpop.permute.xlu0 %8666
        %8668 = vrot.lane.b32.xlu0 %v7566, 112
        %v8669 = vpop.permute.xlu0 %8668
        %8670 = vrot.lane.b32.xlu0 %v7571, 112
        %v8671 = vpop.permute.xlu0 %8670
        %8672 = vrot.lane.b32.xlu0 %v7576, 112
        %v8673 = vpop.permute.xlu0 %8672
        %8674 = vrot.lane.b32.xlu0 %v7581, 112
        %v8675 = vpop.permute.xlu0 %8674
        %8676 = vrot.lane.b32.xlu0 %v7586, 112
        %v8677 = vpop.permute.xlu0 %8676
        %8678 = vrot.lane.b32.xlu0 %v7591, 112
        %v8679 = vpop.permute.xlu0 %8678
        %8680 = vrot.lane.b32.xlu0 %v7596, 112
        %v8681 = vpop.permute.xlu0 %8680
        %8682 = vrot.lane.b32.xlu0 %v7601, 112
        %v8683 = vpop.permute.xlu0 %8682
        %8684 = vrot.lane.b32.xlu0 %v7606, 112
        %v8685 = vpop.permute.xlu0 %8684
        %8686 = vrot.lane.b32.xlu0 %v7611, 112
        %v8687 = vpop.permute.xlu0 %8686
        %v8701 = vsel %vm7762, %v8658, 0
        %v8704 = vsel %vm7762, %v8659, 0
        %v8707 = vsel %vm7762, %v8660, 0
        %v8710 = vsel %vm7762, %v8661, 0
        %v8712 = vsel %vm7820, %v8687, 0
        %8714 = vmatprep.subr.mxu0 0.0
        %8715 = vmatpush1.msra.mxu0 %v8663
        %8716 = vmatprep.subr.mxu0 0.0
        %8717 = vmatpush1.msra.mxu0 %v8665
        %8718 = vmatprep.subr.mxu0 0.0
        %8719 = vmatpush1.msra.mxu0 %v8667
        %8720 = vmatprep.subr.mxu0 0.0
        %8721 = vmatpush1.msra.mxu0 %v8669
        %8722 = vmatprep.subr.mxu0 0.0
        %8723 = vmatpush1.msra.mxu0 %v8671
        %8724 = vmatprep.subr.mxu0 0.0
        %8725 = vmatpush1.msra.mxu0 %v8673
        %8726 = vmatprep.subr.mxu0 0.0
        %8727 = vmatpush1.msra.mxu0 %v8675
        %8728 = vmatprep.subr.mxu0 0.0
        %8729 = vmatpush1.msra.mxu0 %v8677
        %8730 = vmatprep.subr.mxu0 0.0
        %8731 = vmatpush1.msra.mxu0 %v8679
        %8732 = vmatprep.subr.mxu0 0.0
        %8733 = vmatpush1.msra.mxu0 %v8681
        %8734 = vmatprep.subr.mxu0 0.0
        %8735 = vmatpush1.msra.mxu0 %v8683
        %8736 = vmatprep.subr.mxu0 0.0
        %8737 = vmatpush1.msra.mxu0 %v8685
        %8738 = vmatprep.subr.mxu0 0.0
        %8739 = vmatpush1.msra.mxu0 %v8712
        %8740 = vmatprep.subr.mxu0 0.0
        %8741 = vmatpush1.msra.mxu0 0.0
        %8742 = vmatprep.subr.mxu0 0.0
        %8743 = vmatpush1.msra.mxu0 0.0
        %8744 = vmatprep.subr.mxu0 0.0
        %8745 = vmatpush1.msra.mxu0 0.0
        %8746 = vmatprep.subr.mxu0 0.0
        %8747 = vmatpush1.msra.mxu0 0.0
        %8748 = vmatprep.subr.mxu0 0.0
        %8749 = vmatpush1.msra.mxu0 0.0
        %8750 = vmatprep.subr.mxu0 0.0
        %8751 = vmatpush1.msra.mxu0 0.0
        %8752 = vmatprep.subr.mxu0 0.0
        %8753 = vmatpush1.msra.mxu0 0.0
        %8754 = vmatprep.subr.mxu0 0.0
        %8755 = vmatpush1.msra.mxu0 0.0
        %8756 = vmatprep.subr.mxu0 0.0
        %8757 = vmatpush1.msra.mxu0 0.0
        %8758 = vmatprep.subr.mxu0 0.0
        %8759 = vmatpush1.msra.mxu0 0.0
        %8760 = vmatprep.subr.mxu0 0.0
        %8761 = vmatpush1.msra.mxu0 0.0
        %8762 = vmatprep.subr.mxu0 0.0
        %8763 = vmatpush1.msra.mxu0 0.0
        %8764 = vmatprep.subr.mxu0 0.0
        %8765 = vmatpush1.msra.mxu0 0.0
        %8766 = vmatprep.subr.mxu0 0.0
        %8767 = vmatpush1.msra.mxu0 0.0
        %8768 = vmatprep.subr.mxu0 0.0
        %8769 = vmatpush1.msra.mxu0 0.0
        %8770 = vmatprep.subr.mxu0 0.0
        %8771 = vmatpush1.msra.mxu0 0.0
        %8772 = vmatprep.subr.mxu0 0.0
        %8773 = vmatpush1.msra.mxu0 0.0
        %8774 = vmatprep.subr.mxu0 0.0
        %8775 = vmatpush1.msra.mxu0 0.0
        %8776 = vmatprep.subr.mxu0 0.0
        %8777 = vmatpush1.msra.mxu0 0.0
        %8778 = vmatprep.mubr.f32.mxu0 0.0
        %8779 = vmatmul.mubr.f32.gmra.mrb[0].mxu0 %v8701
        %v8780 = vpop.f32.mrb[0].mxu0
        %v8781 = vadd.f32 0.0, %v8780
        %v8782 = vpop.f32.mrb[0].mxu0
        %8783 = vmatprep.mubr.f32.mxu0 0.0
        %8784 = vmatmul.mubr.f32.gmra.mrb[0].mxu0 %v8704
        %v8785 = vpop.f32.mrb[0].mxu0
        %v8786 = vadd.f32 0.0, %v8785
        %v8787 = vpop.f32.mrb[0].mxu0
        %8788 = vmatprep.mubr.f32.mxu0 0.0
        %8789 = vmatmul.mubr.f32.gmra.mrb[0].mxu0 %v8707
        %v8790 = vpop.f32.mrb[0].mxu0
        %v8791 = vadd.f32 0.0, %v8790
        %v8792 = vpop.f32.mrb[0].mxu0
        %8793 = vmatprep.mubr.f32.mxu0 0.0
        %8794 = vmatmul.mubr.f32.gmra.mrb[0].mxu0 %v8710
        %v8795 = vpop.f32.mrb[0].mxu0
        %v8796 = vadd.f32 0.0, %v8795
        %v8797 = vpop.f32.mrb[0].mxu0
        %8798 = vdwg.mxu0
        %v8800 = vsel %vm1986, %v8781, 0
        %v8803 = vsel %vm1986, %v8786, 0
        %v8806 = vsel %vm1986, %v8791, 0
        %v8809 = vsel %vm1986, %v8796, 0
        %8811 = vmatprep.subr.mxu0 0.0
        %8812 = vmatpush1.msra.mxu0 %v7616
        %8813 = vmatprep.subr.mxu0 0.0
        %8814 = vmatpush1.msra.mxu0 0.0
        %8815 = vmatprep.subr.mxu0 0.0
        %8816 = vmatpush1.msra.mxu0 0.0
        %8817 = vmatprep.subr.mxu0 0.0
        %8818 = vmatpush1.msra.mxu0 0.0
        %8819 = vmatprep.subr.mxu0 0.0
        %8820 = vmatpush1.msra.mxu0 0.0
        %8821 = vmatprep.subr.mxu0 0.0
        %8822 = vmatpush1.msra.mxu0 0.0
        %8823 = vmatprep.subr.mxu0 0.0
        %8824 = vmatpush1.msra.mxu0 0.0
        %8825 = vmatprep.subr.mxu0 0.0
        %8826 = vmatpush1.msra.mxu0 0.0
        %8827 = vmatprep.subr.mxu0 0.0
        %8828 = vmatpush1.msra.mxu0 0.0
        %8829 = vmatprep.subr.mxu0 0.0
        %8830 = vmatpush1.msra.mxu0 0.0
        %8831 = vmatprep.subr.mxu0 0.0
        %8832 = vmatpush1.msra.mxu0 0.0
        %8833 = vmatprep.subr.mxu0 0.0
        %8834 = vmatpush1.msra.mxu0 0.0
        %8835 = vmatprep.subr.mxu0 0.0
        %8836 = vmatpush1.msra.mxu0 0.0
        %8837 = vmatprep.subr.mxu0 0.0
        %8838 = vmatpush1.msra.mxu0 0.0
        %8839 = vmatprep.subr.mxu0 0.0
        %8840 = vmatpush1.msra.mxu0 0.0
        %8841 = vmatprep.subr.mxu0 0.0
        %8842 = vmatpush1.msra.mxu0 0.0
        %8843 = vmatprep.subr.mxu0 0.0
        %8844 = vmatpush1.msra.mxu0 0.0
        %8845 = vmatprep.subr.mxu0 0.0
        %8846 = vmatpush1.msra.mxu0 0.0
        %8847 = vmatprep.subr.mxu0 0.0
        %8848 = vmatpush1.msra.mxu0 0.0
        %8849 = vmatprep.subr.mxu0 0.0
        %8850 = vmatpush1.msra.mxu0 0.0
        %8851 = vmatprep.subr.mxu0 0.0
        %8852 = vmatpush1.msra.mxu0 0.0
        %8853 = vmatprep.subr.mxu0 0.0
        %8854 = vmatpush1.msra.mxu0 0.0
        %8855 = vmatprep.subr.mxu0 0.0
        %8856 = vmatpush1.msra.mxu0 0.0
        %8857 = vmatprep.subr.mxu0 0.0
        %8858 = vmatpush1.msra.mxu0 0.0
        %8859 = vmatprep.subr.mxu0 0.0
        %8860 = vmatpush1.msra.mxu0 0.0
        %8861 = vmatprep.subr.mxu0 0.0
        %8862 = vmatpush1.msra.mxu0 0.0
        %8863 = vmatprep.subr.mxu0 0.0
        %8864 = vmatpush1.msra.mxu0 0.0
        %8865 = vmatprep.subr.mxu0 0.0
        %8866 = vmatpush1.msra.mxu0 0.0
        %8867 = vmatprep.subr.mxu0 0.0
        %8868 = vmatpush1.msra.mxu0 0.0
        %8869 = vmatprep.subr.mxu0 0.0
        %8870 = vmatpush1.msra.mxu0 0.0
        %8871 = vmatprep.subr.mxu0 0.0
        %8872 = vmatpush1.msra.mxu0 0.0
        %8873 = vmatprep.subr.mxu0 0.0
        %8874 = vmatpush1.msra.mxu0 0.0
        %8875 = vmatprep.mubr.f32.mxu0 0.0
        %8876 = vmatmul.mubr.f32.gmra.mrb[0].mxu0 %v8800
        %v8877 = vpop.f32.mrb[0].mxu0
        %v8878 = vadd.f32 0.0, %v8877
        %v8879 = vpop.f32.mrb[0].mxu0
        %8880 = vmatprep.mubr.f32.mxu0 0.0
        %8881 = vmatmul.mubr.f32.gmra.mrb[0].mxu0 %v8803
        %v8882 = vpop.f32.mrb[0].mxu0
        %v8883 = vadd.f32 0.0, %v8882
        %v8884 = vpop.f32.mrb[0].mxu0
        %8885 = vmatprep.mubr.f32.mxu0 0.0
        %8886 = vmatmul.mubr.f32.gmra.mrb[0].mxu0 %v8806
        %v8887 = vpop.f32.mrb[0].mxu0
        %v8888 = vadd.f32 0.0, %v8887
        %v8889 = vpop.f32.mrb[0].mxu0
        %8890 = vmatprep.mubr.f32.mxu0 0.0
        %8891 = vmatmul.mubr.f32.gmra.mrb[0].mxu0 %v8809
        %v8892 = vpop.f32.mrb[0].mxu0
        %v8893 = vadd.f32 0.0, %v8892
        %v8894 = vpop.f32.mrb[0].mxu0
        %8895 = vdwg.mxu0
        %v8896 = vadd.f32 %v8439, %v8878
        %v8897 = vadd.f32 %v8444, %v8883
        %v8898 = vadd.f32 %v8449, %v8888
        %v8899 = vadd.f32 %v8454, %v8893
        %8900 = vrot.lane.b32.xlu0 %v7275, 104
        %v8901 = vpop.permute.xlu0 %8900
        %8902 = vrot.lane.b32.xlu0 %v7280, 104
        %v8903 = vpop.permute.xlu0 %8902
        %8904 = vrot.lane.b32.xlu0 %v7285, 104
        %v8905 = vpop.permute.xlu0 %8904
        %8906 = vrot.lane.b32.xlu0 %v7290, 104
        %v8907 = vpop.permute.xlu0 %8906
        %8908 = vrot.lane.b32.xlu0 %v7410, 104
        %v8909 = vpop.permute.xlu0 %8908
        %8910 = vrot.lane.b32.xlu0 %v7415, 104
        %v8911 = vpop.permute.xlu0 %8910
        %8912 = vrot.lane.b32.xlu0 %v7420, 104
        %v8913 = vpop.permute.xlu0 %8912
        %8914 = vrot.lane.b32.xlu0 %v7425, 104
        %v8915 = vpop.permute.xlu0 %8914
        %8916 = vrot.lane.b32.xlu0 %v7430, 104
        %v8917 = vpop.permute.xlu0 %8916
        %8918 = vrot.lane.b32.xlu0 %v7435, 104
        %v8919 = vpop.permute.xlu0 %8918
        %8920 = vrot.lane.b32.xlu0 %v7440, 104
        %v8921 = vpop.permute.xlu0 %8920
        %8922 = vrot.lane.b32.xlu0 %v7445, 104
        %v8923 = vpop.permute.xlu0 %8922
        %8924 = vrot.lane.b32.xlu0 %v7450, 104
        %v8925 = vpop.permute.xlu0 %8924
        %8926 = vrot.lane.b32.xlu0 %v7455, 104
        %v8927 = vpop.permute.xlu0 %8926
        %8928 = vrot.lane.b32.xlu0 %v7460, 104
        %v8929 = vpop.permute.xlu0 %8928
        %8930 = vrot.lane.b32.xlu0 %v7465, 104
        %v8931 = vpop.permute.xlu0 %8930
        %8932 = vrot.lane.b32.xlu0 %v7470, 104
        %v8933 = vpop.permute.xlu0 %8932
        %v8934 = vsel %vm1986, %v8901, 0
        %v8936 = vsel %vm1986, %v8903, 0
        %v8938 = vsel %vm1986, %v8905, 0
        %v8940 = vsel %vm1986, %v8907, 0
        %v8942 = vsel %vm1986, %v8909, 0
        %v8944 = vsel %vm1986, %v8911, 0
        %v8946 = vsel %vm1986, %v8913, 0
        %v8948 = vsel %vm1986, %v8915, 0
        %v8950 = vsel %vm1986, %v8917, 0
        %v8952 = vsel %vm1986, %v8919, 0
        %v8954 = vsel %vm1986, %v8921, 0
        %v8956 = vsel %vm1986, %v8923, 0
        %v8958 = vsel %vm1986, %v8925, 0
        %v8960 = vsel %vm1986, %v8927, 0
        %v8962 = vsel %vm1986, %v8929, 0
        %v8964 = vsel %vm1986, %v8931, 0
        %v8966 = vsel %vm1986, %v8933, 0
        %8968 = vmatprep.subr.mxu0 0.0
        %8969 = vmatpush1.xpose.msra.mxu0 %v8942
        %8970 = vmatprep.subr.mxu0 0.0
        %8971 = vmatpush1.xpose.msra.mxu0 %v8944
        %8972 = vmatprep.subr.mxu0 0.0
        %8973 = vmatpush1.xpose.msra.mxu0 %v8946
        %8974 = vmatprep.subr.mxu0 0.0
        %8975 = vmatpush1.xpose.msra.mxu0 %v8948
        %8976 = vmatprep.subr.mxu0 0.0
        %8977 = vmatpush1.xpose.msra.mxu0 %v8950
        %8978 = vmatprep.subr.mxu0 0.0
        %8979 = vmatpush1.xpose.msra.mxu0 %v8952
        %8980 = vmatprep.subr.mxu0 0.0
        %8981 = vmatpush1.xpose.msra.mxu0 %v8954
        %8982 = vmatprep.subr.mxu0 0.0
        %8983 = vmatpush1.xpose.msra.mxu0 %v8956
        %8984 = vmatprep.subr.mxu0 0.0
        %8985 = vmatpush1.xpose.msra.mxu0 %v8958
        %8986 = vmatprep.subr.mxu0 0.0
        %8987 = vmatpush1.xpose.msra.mxu0 %v8960
        %8988 = vmatprep.subr.mxu0 0.0
        %8989 = vmatpush1.xpose.msra.mxu0 %v8962
        %8990 = vmatprep.subr.mxu0 0.0
        %8991 = vmatpush1.xpose.msra.mxu0 %v8964
        %8992 = vmatprep.subr.mxu0 0.0
        %8993 = vmatpush1.xpose.msra.mxu0 %v8966
        %8994 = vmatprep.subr.mxu0 0.0
        %8995 = vmatpush1.xpose.msra.mxu0 0.0
        %8996 = vmatprep.subr.mxu0 0.0
        %8997 = vmatpush1.xpose.msra.mxu0 0.0
        %8998 = vmatprep.subr.mxu0 0.0
        %8999 = vmatpush1.xpose.msra.mxu0 0.0
        %9000 = vmatprep.subr.mxu0 0.0
        %9001 = vmatpush1.xpose.msra.mxu0 0.0
        %9002 = vmatprep.subr.mxu0 0.0
        %9003 = vmatpush1.xpose.msra.mxu0 0.0
        %9004 = vmatprep.subr.mxu0 0.0
        %9005 = vmatpush1.xpose.msra.mxu0 0.0
        %9006 = vmatprep.subr.mxu0 0.0
        %9007 = vmatpush1.xpose.msra.mxu0 0.0
        %9008 = vmatprep.subr.mxu0 0.0
        %9009 = vmatpush1.xpose.msra.mxu0 0.0
        %9010 = vmatprep.subr.mxu0 0.0
        %9011 = vmatpush1.xpose.msra.mxu0 0.0
        %9012 = vmatprep.subr.mxu0 0.0
        %9013 = vmatpush1.xpose.msra.mxu0 0.0
        %9014 = vmatprep.subr.mxu0 0.0
        %9015 = vmatpush1.xpose.msra.mxu0 0.0
        %9016 = vmatprep.subr.mxu0 0.0
        %9017 = vmatpush1.xpose.msra.mxu0 0.0
        %9018 = vmatprep.subr.mxu0 0.0
        %9019 = vmatpush1.xpose.msra.mxu0 0.0
        %9020 = vmatprep.subr.mxu0 0.0
        %9021 = vmatpush1.xpose.msra.mxu0 0.0
        %9022 = vmatprep.subr.mxu0 0.0
        %9023 = vmatpush1.xpose.msra.mxu0 0.0
        %9024 = vmatprep.subr.mxu0 0.0
        %9025 = vmatpush1.xpose.msra.mxu0 0.0
        %9026 = vmatprep.subr.mxu0 0.0
        %9027 = vmatpush1.xpose.msra.mxu0 0.0
        %9028 = vmatprep.subr.mxu0 0.0
        %9029 = vmatpush1.xpose.msra.mxu0 0.0
        %9030 = vmatprep.subr.mxu0 0.0
        %9031 = vmatpush1.xpose.msra.mxu0 0.0
        %9032 = vmatprep.mubr.f32.mxu0 0.0
        %9033 = vmatmul.mubr.f32.gmra.mrb[0].mxu0 %v8934
        %v9034 = vpop.f32.mrb[0].mxu0
        %v9035 = vadd.f32 0.0, %v9034
        %v9036 = vpop.f32.mrb[0].mxu0
        %9037 = vmatprep.mubr.f32.mxu0 0.0
        %9038 = vmatmul.mubr.f32.gmra.mrb[0].mxu0 %v8936
        %v9039 = vpop.f32.mrb[0].mxu0
        %v9040 = vadd.f32 0.0, %v9039
        %v9041 = vpop.f32.mrb[0].mxu0
        %9042 = vmatprep.mubr.f32.mxu0 0.0
        %9043 = vmatmul.mubr.f32.gmra.mrb[0].mxu0 %v8938
        %v9044 = vpop.f32.mrb[0].mxu0
        %v9045 = vadd.f32 0.0, %v9044
        %v9046 = vpop.f32.mrb[0].mxu0
        %9047 = vmatprep.mubr.f32.mxu0 0.0
        %9048 = vmatmul.mubr.f32.gmra.mrb[0].mxu0 %v8940
        %v9049 = vpop.f32.mrb[0].mxu0
        %v9050 = vadd.f32 0.0, %v9049
        %v9051 = vpop.f32.mrb[0].mxu0
        %9052 = vdwg.mxu0
        %v9053 = vmul.f32 %v9035, 0.35355338
        %v9054 = vmul.f32 %v9040, 0.35355338
        %v9055 = vmul.f32 %v9045, 0.35355338
        %v9056 = vmul.f32 %v9050, 0.35355338
        %v9057 = vadd.f32 %v9053, %v7193
        %v9058 = vadd.f32 %v9054, %v7194
        %v9059 = vadd.f32 %v9055, %v7195
        %v9060 = vadd.f32 %v9056, %v7196
        %v9061 = vsel %vm7762, %v9057, -inf
        %9062 = vmax.xlane.f32.xlu0 %v9061
        %v9063 = vpop.xlane.xlu0 %9062
        %v9064 = vsel %vm7762, %v9058, -inf
        %9065 = vmax.xlane.f32.xlu0 %v9064
        %v9066 = vpop.xlane.xlu0 %9065
        %v9067 = vsel %vm7762, %v9059, -inf
        %9068 = vmax.xlane.f32.xlu0 %v9067
        %v9069 = vpop.xlane.xlu0 %9068
        %v9070 = vsel %vm7772, %v9060, -inf
        %9071 = vmax.xlane.f32.xlu0 %v9070
        %v9072 = vpop.xlane.xlu0 %9071
        %v9073 = vsub.f32 %v9057, %v9063
        %v9074 = vsub.f32 %v9058, %v9066
        %v9075 = vsub.f32 %v9059, %v9069
        %v9076 = vsub.f32 %v9060, %v9072
        %v9077 = vmul.f32 %v9073, 1.442695
        %v9078 = vpow.pop %v9077
        %v9079 = vmul.f32 %v9074, 1.442695
        %v9080 = vpow.pop %v9079
        %v9081 = vmul.f32 %v9075, 1.442695
        %v9082 = vpow.pop %v9081
        %v9083 = vmul.f32 %v9076, 1.442695
        %v9084 = vpow.pop %v9083
        %v9085 = vsel %vm7762, %v9078, 0.0
        %9086 = vadd.xlane.f32.xlu0 %v9085
        %v9087 = vpop.xlane.xlu0 %9086
        %v9088 = vsel %vm7762, %v9080, 0.0
        %9089 = vadd.xlane.f32.xlu0 %v9088
        %v9090 = vpop.xlane.xlu0 %9089
        %v9091 = vsel %vm7762, %v9082, 0.0
        %9092 = vadd.xlane.f32.xlu0 %v9091
        %v9093 = vpop.xlane.xlu0 %9092
        %v9094 = vsel %vm7772, %v9084, 0.0
        %9095 = vadd.xlane.f32.xlu0 %v9094
        %v9096 = vpop.xlane.xlu0 %9095
        %v9097 = vrcp.pop %v9087
        %v9098 = vrcp.pop %v9090
        %v9099 = vrcp.pop %v9093
        %v9100 = vrcp.pop %v9096
        %v9101 = vmul.f32 %v9078, %v9097
        %v9102 = vmul.f32 %v9080, %v9098
        %v9103 = vmul.f32 %v9082, %v9099
        %v9104 = vmul.f32 %v9084, %v9100
        %9105 = vrot.lane.b32.xlu0 %v7551, 104
        %v9106 = vpop.permute.xlu0 %9105
        %9107 = vrot.lane.b32.xlu0 %v7556, 104
        %v9108 = vpop.permute.xlu0 %9107
        %9109 = vrot.lane.b32.xlu0 %v7561, 104
        %v9110 = vpop.permute.xlu0 %9109
        %9111 = vrot.lane.b32.xlu0 %v7566, 104
        %v9112 = vpop.permute.xlu0 %9111
        %9113 = vrot.lane.b32.xlu0 %v7571, 104
        %v9114 = vpop.permute.xlu0 %9113
        %9115 = vrot.lane.b32.xlu0 %v7576, 104
        %v9116 = vpop.permute.xlu0 %9115
        %9117 = vrot.lane.b32.xlu0 %v7581, 104
        %v9118 = vpop.permute.xlu0 %9117
        %9119 = vrot.lane.b32.xlu0 %v7586, 104
        %v9120 = vpop.permute.xlu0 %9119
        %9121 = vrot.lane.b32.xlu0 %v7591, 104
        %v9122 = vpop.permute.xlu0 %9121
        %9123 = vrot.lane.b32.xlu0 %v7596, 104
        %v9124 = vpop.permute.xlu0 %9123
        %9125 = vrot.lane.b32.xlu0 %v7601, 104
        %v9126 = vpop.permute.xlu0 %9125
        %9127 = vrot.lane.b32.xlu0 %v7606, 104
        %v9128 = vpop.permute.xlu0 %9127
        %9129 = vrot.lane.b32.xlu0 %v7611, 104
        %v9130 = vpop.permute.xlu0 %9129
        %v9144 = vsel %vm7762, %v9101, 0
        %v9147 = vsel %vm7762, %v9102, 0
        %v9150 = vsel %vm7762, %v9103, 0
        %v9153 = vsel %vm7762, %v9104, 0
        %v9155 = vsel %vm7820, %v9130, 0
        %9157 = vmatprep.subr.mxu0 0.0
        %9158 = vmatpush1.msra.mxu0 %v9106
        %9159 = vmatprep.subr.mxu0 0.0
        %9160 = vmatpush1.msra.mxu0 %v9108
        %9161 = vmatprep.subr.mxu0 0.0
        %9162 = vmatpush1.msra.mxu0 %v9110
        %9163 = vmatprep.subr.mxu0 0.0
        %9164 = vmatpush1.msra.mxu0 %v9112
        %9165 = vmatprep.subr.mxu0 0.0
        %9166 = vmatpush1.msra.mxu0 %v9114
        %9167 = vmatprep.subr.mxu0 0.0
        %9168 = vmatpush1.msra.mxu0 %v9116
        %9169 = vmatprep.subr.mxu0 0.0
        %9170 = vmatpush1.msra.mxu0 %v9118
        %9171 = vmatprep.subr.mxu0 0.0
        %9172 = vmatpush1.msra.mxu0 %v9120
        %9173 = vmatprep.subr.mxu0 0.0
        %9174 = vmatpush1.msra.mxu0 %v9122
        %9175 = vmatprep.subr.mxu0 0.0
        %9176 = vmatpush1.msra.mxu0 %v9124
        %9177 = vmatprep.subr.mxu0 0.0
        %9178 = vmatpush1.msra.mxu0 %v9126
        %9179 = vmatprep.subr.mxu0 0.0
        %9180 = vmatpush1.msra.mxu0 %v9128
        %9181 = vmatprep.subr.mxu0 0.0
        %9182 = vmatpush1.msra.mxu0 %v9155
        %9183 = vmatprep.subr.mxu0 0.0
        %9184 = vmatpush1.msra.mxu0 0.0
        %9185 = vmatprep.subr.mxu0 0.0
        %9186 = vmatpush1.msra.mxu0 0.0
        %9187 = vmatprep.subr.mxu0 0.0
        %9188 = vmatpush1.msra.mxu0 0.0
        %9189 = vmatprep.subr.mxu0 0.0
        %9190 = vmatpush1.msra.mxu0 0.0
        %9191 = vmatprep.subr.mxu0 0.0
        %9192 = vmatpush1.msra.mxu0 0.0
        %9193 = vmatprep.subr.mxu0 0.0
        %9194 = vmatpush1.msra.mxu0 0.0
        %9195 = vmatprep.subr.mxu0 0.0
        %9196 = vmatpush1.msra.mxu0 0.0
        %9197 = vmatprep.subr.mxu0 0.0
        %9198 = vmatpush1.msra.mxu0 0.0
        %9199 = vmatprep.subr.mxu0 0.0
        %9200 = vmatpush1.msra.mxu0 0.0
        %9201 = vmatprep.subr.mxu0 0.0
        %9202 = vmatpush1.msra.mxu0 0.0
        %9203 = vmatprep.subr.mxu0 0.0
        %9204 = vmatpush1.msra.mxu0 0.0
        %9205 = vmatprep.subr.mxu0 0.0
        %9206 = vmatpush1.msra.mxu0 0.0
        %9207 = vmatprep.subr.mxu0 0.0
        %9208 = vmatpush1.msra.mxu0 0.0
        %9209 = vmatprep.subr.mxu0 0.0
        %9210 = vmatpush1.msra.mxu0 0.0
        %9211 = vmatprep.subr.mxu0 0.0
        %9212 = vmatpush1.msra.mxu0 0.0
        %9213 = vmatprep.subr.mxu0 0.0
        %9214 = vmatpush1.msra.mxu0 0.0
        %9215 = vmatprep.subr.mxu0 0.0
        %9216 = vmatpush1.msra.mxu0 0.0
        %9217 = vmatprep.subr.mxu0 0.0
        %9218 = vmatpush1.msra.mxu0 0.0
        %9219 = vmatprep.subr.mxu0 0.0
        %9220 = vmatpush1.msra.mxu0 0.0
        %9221 = vmatprep.mubr.f32.mxu0 0.0
        %9222 = vmatmul.mubr.f32.gmra.mrb[0].mxu0 %v9144
        %v9223 = vpop.f32.mrb[0].mxu0
        %v9224 = vadd.f32 0.0, %v9223
        %v9225 = vpop.f32.mrb[0].mxu0
        %9226 = vmatprep.mubr.f32.mxu0 0.0
        %9227 = vmatmul.mubr.f32.gmra.mrb[0].mxu0 %v9147
        %v9228 = vpop.f32.mrb[0].mxu0
        %v9229 = vadd.f32 0.0, %v9228
        %v9230 = vpop.f32.mrb[0].mxu0
        %9231 = vmatprep.mubr.f32.mxu0 0.0
        %9232 = vmatmul.mubr.f32.gmra.mrb[0].mxu0 %v9150
        %v9233 = vpop.f32.mrb[0].mxu0
        %v9234 = vadd.f32 0.0, %v9233
        %v9235 = vpop.f32.mrb[0].mxu0
        %9236 = vmatprep.mubr.f32.mxu0 0.0
        %9237 = vmatmul.mubr.f32.gmra.mrb[0].mxu0 %v9153
        %v9238 = vpop.f32.mrb[0].mxu0
        %v9239 = vadd.f32 0.0, %v9238
        %v9240 = vpop.f32.mrb[0].mxu0
        %9241 = vdwg.mxu0
        %v9243 = vsel %vm1986, %v9224, 0
        %v9246 = vsel %vm1986, %v9229, 0
        %v9249 = vsel %vm1986, %v9234, 0
        %v9252 = vsel %vm1986, %v9239, 0
        %9254 = vmatprep.subr.mxu0 0.0
        %9255 = vmatpush1.msra.mxu0 %v7617
        %9256 = vmatprep.subr.mxu0 0.0
        %9257 = vmatpush1.msra.mxu0 0.0
        %9258 = vmatprep.subr.mxu0 0.0
        %9259 = vmatpush1.msra.mxu0 0.0
        %9260 = vmatprep.subr.mxu0 0.0
        %9261 = vmatpush1.msra.mxu0 0.0
        %9262 = vmatprep.subr.mxu0 0.0
        %9263 = vmatpush1.msra.mxu0 0.0
        %9264 = vmatprep.subr.mxu0 0.0
        %9265 = vmatpush1.msra.mxu0 0.0
        %9266 = vmatprep.subr.mxu0 0.0
        %9267 = vmatpush1.msra.mxu0 0.0
        %9268 = vmatprep.subr.mxu0 0.0
        %9269 = vmatpush1.msra.mxu0 0.0
        %9270 = vmatprep.subr.mxu0 0.0
        %9271 = vmatpush1.msra.mxu0 0.0
        %9272 = vmatprep.subr.mxu0 0.0
        %9273 = vmatpush1.msra.mxu0 0.0
        %9274 = vmatprep.subr.mxu0 0.0
        %9275 = vmatpush1.msra.mxu0 0.0
        %9276 = vmatprep.subr.mxu0 0.0
        %9277 = vmatpush1.msra.mxu0 0.0
        %9278 = vmatprep.subr.mxu0 0.0
        %9279 = vmatpush1.msra.mxu0 0.0
        %9280 = vmatprep.subr.mxu0 0.0
        %9281 = vmatpush1.msra.mxu0 0.0
        %9282 = vmatprep.subr.mxu0 0.0
        %9283 = vmatpush1.msra.mxu0 0.0
        %9284 = vmatprep.subr.mxu0 0.0
        %9285 = vmatpush1.msra.mxu0 0.0
        %9286 = vmatprep.subr.mxu0 0.0
        %9287 = vmatpush1.msra.mxu0 0.0
        %9288 = vmatprep.subr.mxu0 0.0
        %9289 = vmatpush1.msra.mxu0 0.0
        %9290 = vmatprep.subr.mxu0 0.0
        %9291 = vmatpush1.msra.mxu0 0.0
        %9292 = vmatprep.subr.mxu0 0.0
        %9293 = vmatpush1.msra.mxu0 0.0
        %9294 = vmatprep.subr.mxu0 0.0
        %9295 = vmatpush1.msra.mxu0 0.0
        %9296 = vmatprep.subr.mxu0 0.0
        %9297 = vmatpush1.msra.mxu0 0.0
        %9298 = vmatprep.subr.mxu0 0.0
        %9299 = vmatpush1.msra.mxu0 0.0
        %9300 = vmatprep.subr.mxu0 0.0
        %9301 = vmatpush1.msra.mxu0 0.0
        %9302 = vmatprep.subr.mxu0 0.0
        %9303 = vmatpush1.msra.mxu0 0.0
        %9304 = vmatprep.subr.mxu0 0.0
        %9305 = vmatpush1.msra.mxu0 0.0
        %9306 = vmatprep.subr.mxu0 0.0
        %9307 = vmatpush1.msra.mxu0 0.0
        %9308 = vmatprep.subr.mxu0 0.0
        %9309 = vmatpush1.msra.mxu0 0.0
        %9310 = vmatprep.subr.mxu0 0.0
        %9311 = vmatpush1.msra.mxu0 0.0
        %9312 = vmatprep.subr.mxu0 0.0
        %9313 = vmatpush1.msra.mxu0 0.0
        %9314 = vmatprep.subr.mxu0 0.0
        %9315 = vmatpush1.msra.mxu0 0.0
        %9316 = vmatprep.subr.mxu0 0.0
        %9317 = vmatpush1.msra.mxu0 0.0
        %9318 = vmatprep.mubr.f32.mxu0 0.0
        %9319 = vmatmul.mubr.f32.gmra.mrb[0].mxu0 %v9243
        %v9320 = vpop.f32.mrb[0].mxu0
        %v9321 = vadd.f32 0.0, %v9320
        %v9322 = vpop.f32.mrb[0].mxu0
        %9323 = vmatprep.mubr.f32.mxu0 0.0
        %9324 = vmatmul.mubr.f32.gmra.mrb[0].mxu0 %v9246
        %v9325 = vpop.f32.mrb[0].mxu0
        %v9326 = vadd.f32 0.0, %v9325
        %v9327 = vpop.f32.mrb[0].mxu0
        %9328 = vmatprep.mubr.f32.mxu0 0.0
        %9329 = vmatmul.mubr.f32.gmra.mrb[0].mxu0 %v9249
        %v9330 = vpop.f32.mrb[0].mxu0
        %v9331 = vadd.f32 0.0, %v9330
        %v9332 = vpop.f32.mrb[0].mxu0
        %9333 = vmatprep.mubr.f32.mxu0 0.0
        %9334 = vmatmul.mubr.f32.gmra.mrb[0].mxu0 %v9252
        %v9335 = vpop.f32.mrb[0].mxu0
        %v9336 = vadd.f32 0.0, %v9335
        %v9337 = vpop.f32.mrb[0].mxu0
        %9338 = vdwg.mxu0
        %v9339 = vadd.f32 %v8896, %v9321
        %v9340 = vadd.f32 %v8897, %v9326
        %v9341 = vadd.f32 %v8898, %v9331
        %v9342 = vadd.f32 %v8899, %v9336
        %v9343 = vld [vmem:[#allocation16] sm:$0x1]
        %v9345 = vlaneseq
        %v9346 = vshrl.u32 %v9345, 7
        %v9347 = vsub.s32 0, %v9346
        %v9348 = vrot.slane %v9343, %v9347
        %v9350 = vadd.f32 %v9339, %v9348
        %v9351 = vadd.f32 %v9340, %v9348
        %v9352 = vadd.f32 %v9341, %v9348
        %v9353 = vadd.f32 %v9342, %v9348
        %v9354 = vadd.f32 %v3893, %v9350
        %v9355 = vadd.f32 %v3894, %v9351
        %v9356 = vadd.f32 %v3895, %v9352
        %v9357 = vadd.f32 %v3896, %v9353
        %v9358 = vld [vmem:[#allocation28] sm:$0x1]
        %v9359 = vld [vmem:[#allocation30] sm:$0x1]
        %v9360 = vsel %vm1692, %v9354, 0.0
        %9361 = vadd.xlane.f32.xlu0 %v9360
        %v9362 = vpop.xlane.xlu0 %9361
        %v9363 = vsel %vm1692, %v9355, 0.0
        %9364 = vadd.xlane.f32.xlu0 %v9363
        %v9365 = vpop.xlane.xlu0 %9364
        %v9366 = vsel %vm1692, %v9356, 0.0
        %9367 = vadd.xlane.f32.xlu0 %v9366
        %v9368 = vpop.xlane.xlu0 %9367
        %v9369 = vsel %vm3513, %v9357, 0.0
        %9370 = vadd.xlane.f32.xlu0 %v9369
        %v9371 = vpop.xlane.xlu0 %9370
        %v9372 = vmul.f32 %v9362, %v3517
        %v9373 = vmul.f32 %v9365, %v3517
        %v9374 = vmul.f32 %v9368, %v3517
        %v9375 = vmul.f32 %v9371, %v3517
        %v9376 = vsub.f32 %v9354, %v9372
        %v9377 = vsub.f32 %v9355, %v9373
        %v9378 = vsub.f32 %v9356, %v9374
        %v9379 = vsub.f32 %v9357, %v9375
        %v9380 = vmul.f32 %v9376, %v9376
        %v9381 = vmul.f32 %v9377, %v9377
        %v9382 = vmul.f32 %v9378, %v9378
        %v9383 = vmul.f32 %v9379, %v9379
        %v9384 = vsel %vm1692, %v9380, 0.0
        %9385 = vadd.xlane.f32.xlu0 %v9384
        %v9386 = vpop.xlane.xlu0 %9385
        %v9387 = vsel %vm1692, %v9381, 0.0
        %9388 = vadd.xlane.f32.xlu0 %v9387
        %v9389 = vpop.xlane.xlu0 %9388
        %v9390 = vsel %vm1692, %v9382, 0.0
        %9391 = vadd.xlane.f32.xlu0 %v9390
        %v9392 = vpop.xlane.xlu0 %9391
        %v9393 = vsel %vm3513, %v9383, 0.0
        %9394 = vadd.xlane.f32.xlu0 %v9393
        %v9395 = vpop.xlane.xlu0 %9394
        %v9396 = vmul.f32 %v9386, %v3517
        %v9397 = vmul.f32 %v9389, %v3517
        %v9398 = vmul.f32 %v9392, %v3517
        %v9399 = vmul.f32 %v9395, %v3517
        %v9400 = vadd.f32 %v9396, 1e-05
        %v9401 = vadd.f32 %v9397, 1e-05
        %v9402 = vadd.f32 %v9398, 1e-05
        %v9403 = vadd.f32 %v9399, 1e-05
        %v9404 = vrsqrt.pop %v9400
        %v9405 = vrsqrt.pop %v9401
        %v9406 = vrsqrt.pop %v9402
        %v9407 = vrsqrt.pop %v9403
        %v9408 = vmul.f32 %v9376, %v9404
        %v9409 = vmul.f32 %v9377, %v9405
        %v9410 = vmul.f32 %v9378, %v9406
        %v9411 = vmul.f32 %v9379, %v9407
        %v9413 = vlaneseq
        %v9414 = vshrl.u32 %v9413, 7
        %v9415 = vsub.s32 0, %v9414
        %v9416 = vrot.slane %v9358, %v9415
        %v9418 = vmul.f32 %v9408, %v9416
        %v9419 = vmul.f32 %v9409, %v9416
        %v9420 = vmul.f32 %v9410, %v9416
        %v9421 = vmul.f32 %v9411, %v9416
        %v9423 = vlaneseq
        %v9424 = vshrl.u32 %v9423, 7
        %v9425 = vsub.s32 0, %v9424
        %v9426 = vrot.slane %v9359, %v9425
        %v9428 = vadd.f32 %v9418, %v9426
        %v9429 = vadd.f32 %v9419, %v9426
        %v9430 = vadd.f32 %v9420, %v9426
        %v9431 = vadd.f32 %v9421, %v9426
        %v9432 = vld [vmem:[#allocation31] sm:$0xff]
        %v9433 = vld [vmem:[#allocation31 + $0x8] sm:$0xff]
        %v9434 = vld [vmem:[#allocation31 + $0x10] sm:$0xff]
        %v9435 = vld [vmem:[#allocation31 + $0x18] sm:$0xff]
        %v9436 = vld [vmem:[#allocation33] sm:$0x1]
        %v9438 = vlaneseq
        %v9439 = vshrl.u32 %v9438, 7
        %v9440 = vsub.s32 0, %v9439
        %v9441 = vrot.slane %v9436, %v9440
        %v9444 = vsel %vm1692, %v9428, 0
        %v9447 = vsel %vm1692, %v9429, 0
        %v9450 = vsel %vm1692, %v9430, 0
        %v9453 = vsel %vm1692, %v9431, 0
        %9455 = vmatprep.subr.mxu0 0.0
        %9456 = vmatpush1.msra.mxu0 %v9432
        %9457 = vmatprep.subr.mxu0 0.0
        %9458 = vmatpush1.msra.mxu0 %v9433
        %9459 = vmatprep.subr.mxu0 0.0
        %9460 = vmatpush1.msra.mxu0 %v9434
        %9461 = vmatprep.subr.mxu0 0.0
        %9462 = vmatpush1.msra.mxu0 %v9435
        %9463 = vmatprep.subr.mxu0 0.0
        %9464 = vmatpush1.msra.mxu0 0.0
        %9465 = vmatprep.subr.mxu0 0.0
        %9466 = vmatpush1.msra.mxu0 0.0
        %9467 = vmatprep.subr.mxu0 0.0
        %9468 = vmatpush1.msra.mxu0 0.0
        %9469 = vmatprep.subr.mxu0 0.0
        %9470 = vmatpush1.msra.mxu0 0.0
        %9471 = vmatprep.subr.mxu0 0.0
        %9472 = vmatpush1.msra.mxu0 0.0
        %9473 = vmatprep.subr.mxu0 0.0
        %9474 = vmatpush1.msra.mxu0 0.0
        %9475 = vmatprep.subr.mxu0 0.0
        %9476 = vmatpush1.msra.mxu0 0.0
        %9477 = vmatprep.subr.mxu0 0.0
        %9478 = vmatpush1.msra.mxu0 0.0
        %9479 = vmatprep.subr.mxu0 0.0
        %9480 = vmatpush1.msra.mxu0 0.0
        %9481 = vmatprep.subr.mxu0 0.0
        %9482 = vmatpush1.msra.mxu0 0.0
        %9483 = vmatprep.subr.mxu0 0.0
        %9484 = vmatpush1.msra.mxu0 0.0
        %9485 = vmatprep.subr.mxu0 0.0
        %9486 = vmatpush1.msra.mxu0 0.0
        %9487 = vmatprep.subr.mxu0 0.0
        %9488 = vmatpush1.msra.mxu0 0.0
        %9489 = vmatprep.subr.mxu0 0.0
        %9490 = vmatpush1.msra.mxu0 0.0
        %9491 = vmatprep.subr.mxu0 0.0
        %9492 = vmatpush1.msra.mxu0 0.0
        %9493 = vmatprep.subr.mxu0 0.0
        %9494 = vmatpush1.msra.mxu0 0.0
        %9495 = vmatprep.subr.mxu0 0.0
        %9496 = vmatpush1.msra.mxu0 0.0
        %9497 = vmatprep.subr.mxu0 0.0
        %9498 = vmatpush1.msra.mxu0 0.0
        %9499 = vmatprep.subr.mxu0 0.0
        %9500 = vmatpush1.msra.mxu0 0.0
        %9501 = vmatprep.subr.mxu0 0.0
        %9502 = vmatpush1.msra.mxu0 0.0
        %9503 = vmatprep.subr.mxu0 0.0
        %9504 = vmatpush1.msra.mxu0 0.0
        %9505 = vmatprep.subr.mxu0 0.0
        %9506 = vmatpush1.msra.mxu0 0.0
        %9507 = vmatprep.subr.mxu0 0.0
        %9508 = vmatpush1.msra.mxu0 0.0
        %9509 = vmatprep.subr.mxu0 0.0
        %9510 = vmatpush1.msra.mxu0 0.0
        %9511 = vmatprep.subr.mxu0 0.0
        %9512 = vmatpush1.msra.mxu0 0.0
        %9513 = vmatprep.subr.mxu0 0.0
        %9514 = vmatpush1.msra.mxu0 0.0
        %9515 = vmatprep.subr.mxu0 0.0
        %9516 = vmatpush1.msra.mxu0 0.0
        %9517 = vmatprep.subr.mxu0 0.0
        %9518 = vmatpush1.msra.mxu0 0.0
        %9519 = vmatprep.mubr.f32.mxu0 0.0
        %9520 = vmatmul.mubr.f32.gmra.mrb[0].mxu0 %v9444
        %v9521 = vpop.f32.mrb[0].mxu0
        %v9522 = vadd.f32 %v9441, %v9521
        %v9523 = vpop.f32.mrb[0].mxu0
        %9524 = vmatprep.mubr.f32.mxu0 0.0
        %9525 = vmatmul.mubr.f32.gmra.mrb[0].mxu0 %v9447
        %v9526 = vpop.f32.mrb[0].mxu0
        %v9527 = vadd.f32 %v9441, %v9526
        %v9528 = vpop.f32.mrb[0].mxu0
        %9529 = vmatprep.mubr.f32.mxu0 0.0
        %9530 = vmatmul.mubr.f32.gmra.mrb[0].mxu0 %v9450
        %v9531 = vpop.f32.mrb[0].mxu0
        %v9532 = vadd.f32 %v9441, %v9531
        %v9533 = vpop.f32.mrb[0].mxu0
        %9534 = vmatprep.mubr.f32.mxu0 0.0
        %9535 = vmatmul.mubr.f32.gmra.mrb[0].mxu0 %v9453
        %v9536 = vpop.f32.mrb[0].mxu0
        %v9537 = vadd.f32 %v9441, %v9536
        %v9538 = vpop.f32.mrb[0].mxu0
        %9539 = vdwg.mxu0
        %v9540 = vmul.f32 %v9522, 0.5
        %v9541 = vmul.f32 %v9527, 0.5
        %v9542 = vmul.f32 %v9532, 0.5
        %v9543 = vmul.f32 %v9537, 0.5
        %v9544 = vmul.f32 %v9522, 0.70710677
        %v9545 = vmul.f32 %v9527, 0.70710677
        %v9546 = vmul.f32 %v9532, 0.70710677
        %v9547 = vmul.f32 %v9537, 0.70710677
        %v9548 = verf.f32.pop %v9544
        %v9549 = verf.f32.pop %v9545
        %v9550 = verf.f32.pop %v9546
        %v9551 = verf.f32.pop %v9547
        %v9552 = vadd.f32 %v9548, 1.0
        %v9553 = vadd.f32 %v9549, 1.0
        %v9554 = vadd.f32 %v9550, 1.0
        %v9555 = vadd.f32 %v9551, 1.0
        %v9556 = vmul.f32 %v9540, %v9552
        %v9557 = vmul.f32 %v9541, %v9553
        %v9558 = vmul.f32 %v9542, %v9554
        %v9559 = vmul.f32 %v9543, %v9555
        %v9560 = vld [vmem:[%s83] sm:$0xff]
        %v9561 = vld [vmem:[%s83 + $0x8] sm:$0xff]
        %v9562 = vld [vmem:[%s83 + $0x10] sm:$0xff]
        %v9563 = vld [vmem:[%s83 + $0x18] sm:$0xff]
        %v9564 = vld [vmem:[%s83 + $0x20] sm:$0xff]
        %v9565 = vld [vmem:[%s83 + $0x28] sm:$0xff]
        %v9566 = vld [vmem:[%s83 + $0x30] sm:$0xff]
        %v9567 = vld [vmem:[%s83 + $0x38] sm:$0xff]
        %v9568 = vld [vmem:[#allocation34] sm:$0x1]
        %v9570 = vlaneseq
        %v9571 = vshrl.u32 %v9570, 7
        %v9572 = vsub.s32 0, %v9571
        %v9573 = vrot.slane %v9568, %v9572
        %v9576 = vsel %vm3721, %v9556, 0
        %v9579 = vsel %vm3721, %v9557, 0
        %v9582 = vsel %vm3721, %v9558, 0
        %v9585 = vsel %vm3721, %v9559, 0
        %9587 = vmatprep.subr.mxu0 0.0
        %9588 = vmatpush1.msra.mxu0 %v9560
        %9589 = vmatprep.subr.mxu0 0.0
        %9590 = vmatpush1.msra.mxu0 %v9561
        %9591 = vmatprep.subr.mxu0 0.0
        %9592 = vmatpush1.msra.mxu0 %v9562
        %9593 = vmatprep.subr.mxu0 0.0
        %9594 = vmatpush1.msra.mxu0 %v9563
        %9595 = vmatprep.subr.mxu0 0.0
        %9596 = vmatpush1.msra.mxu0 %v9564
        %9597 = vmatprep.subr.mxu0 0.0
        %9598 = vmatpush1.msra.mxu0 %v9565
        %9599 = vmatprep.subr.mxu0 0.0
        %9600 = vmatpush1.msra.mxu0 %v9566
        %9601 = vmatprep.subr.mxu0 0.0
        %9602 = vmatpush1.msra.mxu0 %v9567
        %9603 = vmatprep.subr.mxu0 0.0
        %9604 = vmatpush1.msra.mxu0 0.0
        %9605 = vmatprep.subr.mxu0 0.0
        %9606 = vmatpush1.msra.mxu0 0.0
        %9607 = vmatprep.subr.mxu0 0.0
        %9608 = vmatpush1.msra.mxu0 0.0
        %9609 = vmatprep.subr.mxu0 0.0
        %9610 = vmatpush1.msra.mxu0 0.0
        %9611 = vmatprep.subr.mxu0 0.0
        %9612 = vmatpush1.msra.mxu0 0.0
        %9613 = vmatprep.subr.mxu0 0.0
        %9614 = vmatpush1.msra.mxu0 0.0
        %9615 = vmatprep.subr.mxu0 0.0
        %9616 = vmatpush1.msra.mxu0 0.0
        %9617 = vmatprep.subr.mxu0 0.0
        %9618 = vmatpush1.msra.mxu0 0.0
        %9619 = vmatprep.subr.mxu0 0.0
        %9620 = vmatpush1.msra.mxu0 0.0
        %9621 = vmatprep.subr.mxu0 0.0
        %9622 = vmatpush1.msra.mxu0 0.0
        %9623 = vmatprep.subr.mxu0 0.0
        %9624 = vmatpush1.msra.mxu0 0.0
        %9625 = vmatprep.subr.mxu0 0.0
        %9626 = vmatpush1.msra.mxu0 0.0
        %9627 = vmatprep.subr.mxu0 0.0
        %9628 = vmatpush1.msra.mxu0 0.0
        %9629 = vmatprep.subr.mxu0 0.0
        %9630 = vmatpush1.msra.mxu0 0.0
        %9631 = vmatprep.subr.mxu0 0.0
        %9632 = vmatpush1.msra.mxu0 0.0
        %9633 = vmatprep.subr.mxu0 0.0
        %9634 = vmatpush1.msra.mxu0 0.0
        %9635 = vmatprep.subr.mxu0 0.0
        %9636 = vmatpush1.msra.mxu0 0.0
        %9637 = vmatprep.subr.mxu0 0.0
        %9638 = vmatpush1.msra.mxu0 0.0
        %9639 = vmatprep.subr.mxu0 0.0
        %9640 = vmatpush1.msra.mxu0 0.0
        %9641 = vmatprep.subr.mxu0 0.0
        %9642 = vmatpush1.msra.mxu0 0.0
        %9643 = vmatprep.subr.mxu0 0.0
        %9644 = vmatpush1.msra.mxu0 0.0
        %9645 = vmatprep.subr.mxu0 0.0
        %9646 = vmatpush1.msra.mxu0 0.0
        %9647 = vmatprep.subr.mxu0 0.0
        %9648 = vmatpush1.msra.mxu0 0.0
        %9649 = vmatprep.subr.mxu0 0.0
        %9650 = vmatpush1.msra.mxu0 0.0
        %9651 = vmatprep.mubr.f32.mxu0 0.0
        %9652 = vmatmul.mubr.f32.gmra.mrb[0].mxu0 %v9576
        %v9653 = vpop.f32.mrb[0].mxu0
        %v9654 = vadd.f32 %v9573, %v9653
        %v9655 = vpop.f32.mrb[0].mxu0
        %9656 = vmatprep.mubr.f32.mxu0 0.0
        %9657 = vmatmul.mubr.f32.gmra.mrb[0].mxu0 %v9579
        %v9658 = vpop.f32.mrb[0].mxu0
        %v9659 = vadd.f32 %v9573, %v9658
        %v9660 = vpop.f32.mrb[0].mxu0
        %9661 = vmatprep.mubr.f32.mxu0 0.0
        %9662 = vmatmul.mubr.f32.gmra.mrb[0].mxu0 %v9582
        %v9663 = vpop.f32.mrb[0].mxu0
        %v9664 = vadd.f32 %v9573, %v9663
        %v9665 = vpop.f32.mrb[0].mxu0
        %9666 = vmatprep.mubr.f32.mxu0 0.0
        %9667 = vmatmul.mubr.f32.gmra.mrb[0].mxu0 %v9585
        %v9668 = vpop.f32.mrb[0].mxu0
        %v9669 = vadd.f32 %v9573, %v9668
        %v9670 = vpop.f32.mrb[0].mxu0
        %9671 = vdwg.mxu0
        %v9672 = vadd.f32 %v9428, %v9654
        %v9673 = vadd.f32 %v9429, %v9659
        %v9674 = vadd.f32 %v9430, %v9664
        %v9675 = vadd.f32 %v9431, %v9669
        %v9676 = vld [vmem:[#allocation36] sm:$0x1]
        %v9677 = vld [vmem:[#allocation37] sm:$0x1]
        %v9678 = vsel %vm1692, %v9672, 0.0
        %9679 = vadd.xlane.f32.xlu0 %v9678
        %v9680 = vpop.xlane.xlu0 %9679
        %v9681 = vsel %vm1692, %v9673, 0.0
        %9682 = vadd.xlane.f32.xlu0 %v9681
        %v9683 = vpop.xlane.xlu0 %9682
        %v9684 = vsel %vm1692, %v9674, 0.0
        %9685 = vadd.xlane.f32.xlu0 %v9684
        %v9686 = vpop.xlane.xlu0 %9685
        %v9687 = vsel %vm3513, %v9675, 0.0
        %9688 = vadd.xlane.f32.xlu0 %v9687
        %v9689 = vpop.xlane.xlu0 %9688
        %v9690 = vmul.f32 %v9680, %v3517
        %v9691 = vmul.f32 %v9683, %v3517
        %v9692 = vmul.f32 %v9686, %v3517
        %v9693 = vmul.f32 %v9689, %v3517
        %v9694 = vsub.f32 %v9672, %v9690
        %v9695 = vsub.f32 %v9673, %v9691
        %v9696 = vsub.f32 %v9674, %v9692
        %v9697 = vsub.f32 %v9675, %v9693
        %v9698 = vmul.f32 %v9694, %v9694
        %v9699 = vmul.f32 %v9695, %v9695
        %v9700 = vmul.f32 %v9696, %v9696
        %v9701 = vmul.f32 %v9697, %v9697
        %v9702 = vsel %vm1692, %v9698, 0.0
        %9703 = vadd.xlane.f32.xlu0 %v9702
        %v9704 = vpop.xlane.xlu0 %9703
        %v9705 = vsel %vm1692, %v9699, 0.0
        %9706 = vadd.xlane.f32.xlu0 %v9705
        %v9707 = vpop.xlane.xlu0 %9706
        %v9708 = vsel %vm1692, %v9700, 0.0
        %9709 = vadd.xlane.f32.xlu0 %v9708
        %v9710 = vpop.xlane.xlu0 %9709
        %v9711 = vsel %vm3513, %v9701, 0.0
        %9712 = vadd.xlane.f32.xlu0 %v9711
        %v9713 = vpop.xlane.xlu0 %9712
        %v9714 = vmul.f32 %v9704, %v3517
        %v9715 = vmul.f32 %v9707, %v3517
        %v9716 = vmul.f32 %v9710, %v3517
        %v9717 = vmul.f32 %v9713, %v3517
        %v9718 = vadd.f32 %v9714, 1e-05
        %v9719 = vadd.f32 %v9715, 1e-05
        %v9720 = vadd.f32 %v9716, 1e-05
        %v9721 = vadd.f32 %v9717, 1e-05
        %v9722 = vrsqrt.pop %v9718
        %v9723 = vrsqrt.pop %v9719
        %v9724 = vrsqrt.pop %v9720
        %v9725 = vrsqrt.pop %v9721
        %v9726 = vmul.f32 %v9694, %v9722
        %v9727 = vmul.f32 %v9695, %v9723
        %v9728 = vmul.f32 %v9696, %v9724
        %v9729 = vmul.f32 %v9697, %v9725
        %v9731 = vlaneseq
        %v9732 = vshrl.u32 %v9731, 7
        %v9733 = vsub.s32 0, %v9732
        %v9734 = vrot.slane %v9676, %v9733
        %v9736 = vmul.f32 %v9726, %v9734
        %v9737 = vmul.f32 %v9727, %v9734
        %v9738 = vmul.f32 %v9728, %v9734
        %v9739 = vmul.f32 %v9729, %v9734
        %v9741 = vlaneseq
        %v9742 = vshrl.u32 %v9741, 7
        %v9743 = vsub.s32 0, %v9742
        %v9744 = vrot.slane %v9677, %v9743
        %v9746 = vadd.f32 %v9736, %v9744
        %v9747 = vadd.f32 %v9737, %v9744
        %v9748 = vadd.f32 %v9738, %v9744
        %v9749 = vadd.f32 %v9739, %v9744
        %9750 = vst.msk [vmem:[%s1659] sm:$0xff] %vm1692, %v9746
        %9751 = vst.msk [vmem:[%s1659 + $0x8] sm:$0xff] %vm1692, %v9747
        %9752 = vst.msk [vmem:[%s1659 + $0x10] sm:$0xff] %vm1692, %v9748
        %9753 = vst.msk [vmem:[%s1659 + $0x18] sm:$0x3f] %vm3513, %v9749
        %p9754 = scmp.lt.s32.totalorder %s115, 1
        %s9755 = scalar_select %p9754, %s115, 1
        %s9756 = smul.addr %s9755, 4
        %s9757 = smul.addr %s9756, 8
        %s9758 = scalar_lea.vmem %s91, %s9757
        // Predicated region
        $region297: #{encoder_layer_forward.1} parent=199 // pred_check
          %p9759 = pneg %p1083
        $region298: #{encoder_layer_forward.1} parent=199 // pred_check_branch
          %9761 = sbr.rel (%p9759) target = $region300
        $region299: #{encoder_layer_forward.1} parent=199 // pred_region
          _
        $region300: #{encoder_layer_forward.1} parent=199 // pred_fallthru
          _
      $region200: #{encoder_layer_forward.1} parent=5 // pred_fallthru
        _
      %p9762 = scmp.le.s32.totalorder 2, %s110
      // Predicated region
      $region301: #{encoder_layer_forward.1} parent=5 // pred_check
        %p9763 = pneg %p9762
      $region302: #{encoder_layer_forward.1} parent=5 // pred_check_branch
        %9765 = sbr.rel (%p9763) target = $region304
      $region303: #{encoder_layer_forward.1} parent=5 // pred_region
        %s9766 = ssub.s32 %s110, 2
        // Predicated region
        $region305: #{encoder_layer_forward.1} parent=303 // pred_check
          %p9767 = pneg %p1089
        $region306: #{encoder_layer_forward.1} parent=303 // pred_check_branch
          %9769 = sbr.rel (%p9767) target = $region308
        $region307: #{encoder_layer_forward.1} parent=303 // pred_region
          %p9770 = scmp.lt.s32.totalorder %s116, 1
          %s9771 = scalar_select %p9770, %s116, 1
          %s9772 = smul.addr %s9771, 4
          %s9773 = smul.addr %s9772, 8
          %s9774 = scalar_lea.vmem %s91, %s9773
        $region308: #{encoder_layer_forward.1} parent=303 // pred_fallthru
          _
      $region304: #{encoder_layer_forward.1} parent=5 // pred_fallthru
        _
    $region6: #{encoder_layer_forward.1} parent=1 // loop_footer
      %s114 = sadd.s32 1, %s110
    $region7: #{encoder_layer_forward.1} parent=1 // loop_footer_branch
      %109 = sbr.rel target = $region3
    $region8: #{encoder_layer_forward.1} parent=1 // loop_exit
      _
    %9775 = vsyncpa [#allocation3], 1
    %s9776 = scalar_lea.sflag [#allocation3], 1
    %9777 = vsyncpa %s9776, 1
    %9778 = vsyncpa [#allocation5], 1
    %9779 = vsyncpa [#allocation8], 1
    %9780 = vsyncpa [#allocation11], 1
    %9781 = vsyncpa [#allocation14], 1
    %9782 = vsyncpa [#allocation17], 1
    %9783 = vsyncpa [#allocation20], 1
    %9784 = vsyncpa [#allocation23], 1
    %9785 = vsyncpa [#allocation26], 1
    %9786 = vsyncpa [#allocation29], 1
    %9787 = vsyncpa [#allocation32], 1
    %9788 = vsyncpa [#allocation35], 1
    %9789 = vsyncpa [#allocation38], 1

</llo_original>
